<compile_context>
chip_gen: v7x
topology: tpu7x:2x2x1
jax: 0.10.0
libtpu: 0.0.40
codegen_flags: <defaults>
</compile_context>

<pallas_src>
import math

import jax
import jax.numpy as jnp
from jax.experimental import pallas as pl
from jax.experimental.pallas import tpu as pltpu

FEATURE_NUM = 512
CLS_NUM = 2800
MARGIN = 0.5
SCALE = 1.5
EPS = 1e-12  # torch.nn.functional.normalize default eps

COS_M = math.cos(MARGIN)
SIN_M = math.sin(MARGIN)
LOG64 = math.log(64.0)


# --------------------------------------------------------------------------- #
# One-time weight preparation
# --------------------------------------------------------------------------- #
def _w_prep_kernel(w_ref, wn_ref):
    """Column-normalize w (f32) and store as bf16: wn[:, c] = w[:, c] / ||w[:, c]||."""
    w = w_ref[...]                                         # (F, C) f32
    ssq = jnp.sum(w * w, axis=0, keepdims=True)            # (1, C) f32
    # 1 / max(||w_col||, EPS)  ==  rsqrt(max(||w_col||^2, EPS^2))
    col_inv = jax.lax.rsqrt(jnp.maximum(ssq, EPS * EPS))
    wn_ref[...] = (w * col_inv).astype(jnp.bfloat16)


def prepare_weights(w):
    """Fold the per-class 1/||w_col|| into w and cast to bf16 (once per weights)."""
    F, C = w.shape
    return pl.pallas_call(
        _w_prep_kernel,
        out_shape=jax.ShapeDtypeStruct((F, C), jnp.bfloat16),
        in_specs=[pl.BlockSpec(memory_space=pltpu.MemorySpace.VMEM)],
        out_specs=pl.BlockSpec(memory_space=pltpu.MemorySpace.VMEM),
        compiler_params=pltpu.CompilerParams(vmem_limit_bytes=32 * 1024 * 1024),
    )(w)


# --------------------------------------------------------------------------- #
# Forward kernel: log(Arcface(x) * 64) for one (TB, C) output tile
# --------------------------------------------------------------------------- #
def _arcface_log_kernel(x_ref, wn_ref, o_ref):
    """
    x_ref:  (TB, F) f32
    wn_ref: (F, C)  bf16 column-normalized weights (resident across the batch grid)
    o_ref:  (TB, C) f32 (or bf16 if requested)
    """
    x = x_ref[...]

    # Fold 1/||x|| and 1/SCALE into a single per-row scale on the small (TB, F) side.
    ssq = jnp.sum(x * x, axis=1, keepdims=True)                        # (TB, 1)
    row_scale = jax.lax.rsqrt(jnp.maximum(ssq, EPS * EPS)) * (1.0 / SCALE)
    x_scaled = (x * row_scale).astype(jnp.bfloat16)                    # (TB, F)

    # bf16 MXU matmul, f32 accumulation.  Weights are pre-normalized, so this
    # IS cosa = (x_n @ w_n) / SCALE directly (no per-step (TB, C) rescale).
    cosa = jnp.dot(x_scaled, wn_ref[...], preferred_element_type=jnp.float32)

    # cos(acos(cosa) + m) == cosa*cos(m) - sqrt(1 - cosa^2)*sin(m);
    # |cosa| <= 1/SCALE keeps the sqrt argument well away from 0.
    sin_a = jnp.sqrt(jnp.maximum(1.0 - cosa * cosa, 0.0))
    cos_am = cosa * COS_M - sin_a * SIN_M

    e_cos = jnp.exp(cosa * SCALE)
    e_top = jnp.exp(cos_am * SCALE)
    denom = jnp.sum(e_cos, axis=1, keepdims=True) - e_cos + e_top

    # log(64 * e_top / denom) in log-space: no (TB, C) divide, one log on the EUP.
    o_ref[...] = (LOG64 + cos_am * SCALE - jnp.log(denom)).astype(o_ref.dtype)


# --------------------------------------------------------------------------- #
# Tile-size / VMEM-limit selection
# --------------------------------------------------------------------------- #
def _default_tile_and_vmem():
    """Generation-dependent (batch_tile, scoped_vmem_limit_bytes)."""
    kind = ""
    try:
        kind = jax.devices()[0].device_kind.lower()
    except Exception:
        pass
    if "7" in kind:
        # v7x: only 64 MiB VMEM per TensorCore -> smaller tile & limit.
        return 256, 56 * 1024 * 1024
    if "v5" in kind or "v6" in kind:
        # v5e / v6e: 128 MiB physical VMEM -> large batch tile amortizes per-step
        # overhead and MXU RHS re-streaming (biggest relative win on v5e).
        return 512, 100 * 1024 * 1024
    # Unknown chip: conservative config that fits every generation.
    return 256, 56 * 1024 * 1024


def _pick_batch_tile(B, block_b):
    """Batch tile: block_b for large B; for small B, try >= 2 grid steps (v7x megacore)."""
    if B > block_b:
        return block_b
    half = -(-B // 2)                  # ceil(B / 2)
    tb = ((half + 7) // 8) * 8         # sublane-aligned
    if tb >= B:
        return B                       # single step anyway; full-B block is always legal
    return tb


# --------------------------------------------------------------------------- #
# Forward wrapper
# --------------------------------------------------------------------------- #
def fc_forward(x, w_n_bf16, *, block_b=None, vmem_limit_bytes=None,
               out_dtype=jnp.float32):
    """Pallas equivalent of fc().forward(x): log(Arcface(512, 2800)(x))."""
    B, F = x.shape
    Fw, C = w_n_bf16.shape
    assert F == Fw

    tb_default, vmem_default = _default_tile_and_vmem()
    if block_b is None:
        block_b = tb_default
    if vmem_limit_bytes is None:
        vmem_limit_bytes = vmem_default

    tb = _pick_batch_tile(B, block_b)
    grid = (pl.cdiv(B, tb),)           # batch-only grid; C stays un-tiled (a C-split
                                       # would need a two-pass / online denominator)
    return pl.pallas_call(
        _arcface_log_kernel,
        out_shape=jax.ShapeDtypeStruct((B, C), out_dtype),
        grid=grid,
        in_specs=[
            pl.BlockSpec((tb, F), lambda i: (i, 0)),
            pl.BlockSpec((F, C), lambda i: (0, 0)),   # resident normalized weights
        ],
        out_specs=pl.BlockSpec((tb, C), lambda i: (i, 0)),
        compiler_params=pltpu.CompilerParams(
            dimension_semantics=("parallel",),        # megacore-splittable on v7x
            vmem_limit_bytes=vmem_limit_bytes,
        ),
    )(x, w_n_bf16)


def fc_apply(x, w):
    """Full forward from raw f32 weights (prep + main kernel)."""
    return fc_forward(x, prepare_weights(w))


# --------------------------------------------------------------------------- #
# Pure-JAX reference of the PyTorch forward (f32 throughout)
# --------------------------------------------------------------------------- #
def fc_reference(x, w):
    x_n = x / jnp.maximum(jnp.linalg.norm(x, axis=1, keepdims=True), EPS)
    w_n = w / jnp.maximum(jnp.linalg.norm(w, axis=0, keepdims=True), EPS)
    cosa = (x_n @ w_n) / SCALE
    a = jnp.arccos(cosa)
    e_top = jnp.exp(jnp.cos(a + MARGIN) * SCALE)
    e_cos = jnp.exp(cosa * SCALE)
    arcsoftmax = e_top / (jnp.sum(e_cos, axis=1, keepdims=True) - e_cos + e_top)
    return jnp.log(arcsoftmax * 64.0)


if __name__ == "__main__":
    key = jax.random.PRNGKey(0)
    kx, kw, kx2 = jax.random.split(key, 3)

    # Deterministic stand-in for nn.Parameter(torch.randn(512, 2800)).
    w = jax.random.normal(kw, (FEATURE_NUM, CLS_NUM), dtype=jnp.float32)
    w_n_bf16 = prepare_weights(w)

    # Small inference-style batch (single grid step).
    batch = 2
    x = jax.random.normal(kx, (batch, FEATURE_NUM), dtype=jnp.float32)
    out = jax.block_until_ready(fc_forward(x, w_n_bf16))
    ref = fc_reference(x, w)
    assert out.shape == (batch, CLS_NUM)
    # bf16 normalized-weight storage costs a few 1e-4 in the log outputs; the
    # norms, matmul accumulation and epilogue stay f32, so a modest tolerance
    # against the pure-f32 reference holds.
    assert jnp.allclose(out, ref, atol=2e-3, rtol=2e-3), (
        float(jnp.max(jnp.abs(out - ref)))
    )

    # Larger batch exercising the multi-step batch grid (ragged last tile).
    x2 = jax.random.normal(kx2, (24, FEATURE_NUM), dtype=jnp.float32)
    out2 = jax.block_until_ready(fc_forward(x2, w_n_bf16))
    ref2 = fc_reference(x2, w)
    assert jnp.allclose(out2, ref2, atol=2e-3, rtol=2e-3), (
        float(jnp.max(jnp.abs(out2 - ref2)))
    )

    print("KERNEL_OK")
</pallas_src>

<mosaic_0001>
module attributes {stable_mosaic.version = 11 : i64} {
  func.func @_w_prep_kernel(%arg0: memref<512x2800xf32, #tpu.memory_space<vmem>>, %arg1: memref<512x2800xbf16, #tpu.memory_space<vmem>>) attributes {dimension_semantics = [], scalar_prefetch = 0 : i64, scratch_operands = 0 : i64, tpu.core_type = #tpu.core_type<tc>} {
    %c0 = arith.constant 0 : index
    %c0_0 = arith.constant 0 : index
    %0 = vector.load %arg0[%c0, %c0_0] : memref<512x2800xf32, #tpu.memory_space<vmem>>, vector<512x2800xf32>
    %1 = arith.mulf %0, %0 : vector<512x2800xf32>
    %cst = arith.constant dense<0.000000e+00> : vector<2800xf32>
    %2 = vector.multi_reduction <add>, %1, %cst [0] : vector<512x2800xf32> to vector<2800xf32>
    %3 = vector.shape_cast %2 : vector<2800xf32> to vector<1x2800xf32>
    %cst_1 = arith.constant 1.000000e-24 : f32
    %4 = vector.broadcast %cst_1 : f32 to vector<1x2800xf32>
    %5 = arith.maximumf %3, %4 : vector<1x2800xf32>
    %6 = math.rsqrt %5 : vector<1x2800xf32>
    %7 = vector.broadcast %6 : vector<1x2800xf32> to vector<512x2800xf32>
    %8 = arith.mulf %0, %7 : vector<512x2800xf32>
    %9 = arith.truncf %8 : vector<512x2800xf32> to vector<512x2800xbf16>
    %c0_2 = arith.constant 0 : index
    %c0_3 = arith.constant 0 : index
    %10 = vector.load %arg1[%c0_2, %c0_3] : memref<512x2800xbf16, #tpu.memory_space<vmem>>, vector<512x2800xbf16>
    tpu.vector_store %arg1[%c0_2, %c0_3], %9 {strides = array<i32>} : memref<512x2800xbf16, #tpu.memory_space<vmem>>, vector<512x2800xbf16>,
    return
  }
}

</mosaic_0001>

<llo_original>
// kernel: tpu_custom_call.1
$region0: #{tpu_custom_call.1}
  #allocation0 [shape = 'u32[]', space=smem, size = 0x4, offset = 0x4, fixed_abs, tag = 'smem constant byte address 0x4 - core index']
  #allocation1 [shape = 'u32[144,128]{1,0:T(1,128)}', space=vmem, size = 0x12000, scoped, tag = 'internal scratch']
  %s0 = inlined_call_operand.vmem [shape: f32[512,2800], index: 0, kind: input, shape index: {}]
  %s1 = inlined_call_operand.vmem [shape: bf16[512,2800], index: 1, kind: output, shape index: {}]
  %s2 = sld [smem:[#allocation0]]
  $region14: #{tpu_custom_call.1} parent=0
    _
  %s4 = ssub.s32 1, %s2
  %s5 = scalar_select 0, %s4, %s2
  // Predicated region
  $region2: #{tpu_custom_call.1} parent=0 // pred_check
    _
  $region3: #{tpu_custom_call.1} parent=0 // pred_check_branch
    %7 = sbr.rel (0) target = $region5
  $region4: #{tpu_custom_call.1} parent=0 // pred_region
    _
  $region5: #{tpu_custom_call.1} parent=0 // pred_fallthru
    _
  %v8 = vld [vmem:[%s0] sm:$0xff]
  %v9 = vld [vmem:[%s0 + $0x8] sm:$0xff]
  %v10 = vld [vmem:[%s0 + $0x10] sm:$0xff]
  %v11 = vld [vmem:[%s0 + $0x18] sm:$0xff]
  %v12 = vld [vmem:[%s0 + $0x20] sm:$0xff]
  %v13 = vld [vmem:[%s0 + $0x28] sm:$0xff]
  %v14 = vld [vmem:[%s0 + $0x30] sm:$0xff]
  %v15 = vld [vmem:[%s0 + $0x38] sm:$0xff]
  %v16 = vld [vmem:[%s0 + $0x40] sm:$0xff]
  %v17 = vld [vmem:[%s0 + $0x48] sm:$0xff]
  %v18 = vld [vmem:[%s0 + $0x50] sm:$0xff]
  %v19 = vld [vmem:[%s0 + $0x58] sm:$0xff]
  %v20 = vld [vmem:[%s0 + $0x60] sm:$0xff]
  %v21 = vld [vmem:[%s0 + $0x68] sm:$0xff]
  %v22 = vld [vmem:[%s0 + $0x70] sm:$0xff]
  %v23 = vld [vmem:[%s0 + $0x78] sm:$0xff]
  %v24 = vld [vmem:[%s0 + $0x80] sm:$0xff]
  %v25 = vld [vmem:[%s0 + $0x88] sm:$0xff]
  %v26 = vld [vmem:[%s0 + $0x90] sm:$0xff]
  %v27 = vld [vmem:[%s0 + $0x98] sm:$0xff]
  %v28 = vld [vmem:[%s0 + $0xa0] sm:$0xff]
  %v29 = vld [vmem:[%s0 + $0xa8] sm:$0xff]
  %v30 = vld [vmem:[%s0 + $0xb0] sm:$0xff]
  %v31 = vld [vmem:[%s0 + $0xb8] sm:$0xff]
  %v32 = vld [vmem:[%s0 + $0xc0] sm:$0xff]
  %v33 = vld [vmem:[%s0 + $0xc8] sm:$0xff]
  %v34 = vld [vmem:[%s0 + $0xd0] sm:$0xff]
  %v35 = vld [vmem:[%s0 + $0xd8] sm:$0xff]
  %v36 = vld [vmem:[%s0 + $0xe0] sm:$0xff]
  %v37 = vld [vmem:[%s0 + $0xe8] sm:$0xff]
  %v38 = vld [vmem:[%s0 + $0xf0] sm:$0xff]
  %v39 = vld [vmem:[%s0 + $0xf8] sm:$0xff]
  %v40 = vld [vmem:[%s0 + $0x100] sm:$0xff]
  %v41 = vld [vmem:[%s0 + $0x108] sm:$0xff]
  %v42 = vld [vmem:[%s0 + $0x110] sm:$0xff]
  %v43 = vld [vmem:[%s0 + $0x118] sm:$0xff]
  %v44 = vld [vmem:[%s0 + $0x120] sm:$0xff]
  %v45 = vld [vmem:[%s0 + $0x128] sm:$0xff]
  %v46 = vld [vmem:[%s0 + $0x130] sm:$0xff]
  %v47 = vld [vmem:[%s0 + $0x138] sm:$0xff]
  %v48 = vld [vmem:[%s0 + $0x140] sm:$0xff]
  %v49 = vld [vmem:[%s0 + $0x148] sm:$0xff]
  %v50 = vld [vmem:[%s0 + $0x150] sm:$0xff]
  %v51 = vld [vmem:[%s0 + $0x158] sm:$0xff]
  %v52 = vld [vmem:[%s0 + $0x160] sm:$0xff]
  %v53 = vld [vmem:[%s0 + $0x168] sm:$0xff]
  %v54 = vld [vmem:[%s0 + $0x170] sm:$0xff]
  %v55 = vld [vmem:[%s0 + $0x178] sm:$0xff]
  %v56 = vld [vmem:[%s0 + $0x180] sm:$0xff]
  %v57 = vld [vmem:[%s0 + $0x188] sm:$0xff]
  %v58 = vld [vmem:[%s0 + $0x190] sm:$0xff]
  %v59 = vld [vmem:[%s0 + $0x198] sm:$0xff]
  %v60 = vld [vmem:[%s0 + $0x1a0] sm:$0xff]
  %v61 = vld [vmem:[%s0 + $0x1a8] sm:$0xff]
  %v62 = vld [vmem:[%s0 + $0x1b0] sm:$0xff]
  %v63 = vld [vmem:[%s0 + $0x1b8] sm:$0xff]
  %v64 = vld [vmem:[%s0 + $0x1c0] sm:$0xff]
  %v65 = vld [vmem:[%s0 + $0x1c8] sm:$0xff]
  %v66 = vld [vmem:[%s0 + $0x1d0] sm:$0xff]
  %v67 = vld [vmem:[%s0 + $0x1d8] sm:$0xff]
  %v68 = vld [vmem:[%s0 + $0x1e0] sm:$0xff]
  %v69 = vld [vmem:[%s0 + $0x1e8] sm:$0xff]
  %v70 = vld [vmem:[%s0 + $0x1f0] sm:$0xff]
  %v71 = vld [vmem:[%s0 + $0x1f8] sm:$0xff]
  %v72 = vld [vmem:[%s0 + $0x200] sm:$0xff]
  %v73 = vld [vmem:[%s0 + $0x208] sm:$0xff]
  %v74 = vld [vmem:[%s0 + $0x210] sm:$0xff]
  %v75 = vld [vmem:[%s0 + $0x218] sm:$0xff]
  %v76 = vld [vmem:[%s0 + $0x220] sm:$0xff]
  %v77 = vld [vmem:[%s0 + $0x228] sm:$0xff]
  %v78 = vld [vmem:[%s0 + $0x230] sm:$0xff]
  %v79 = vld [vmem:[%s0 + $0x238] sm:$0xff]
  %v80 = vld [vmem:[%s0 + $0x240] sm:$0xff]
  %v81 = vld [vmem:[%s0 + $0x248] sm:$0xff]
  %v82 = vld [vmem:[%s0 + $0x250] sm:$0xff]
  %v83 = vld [vmem:[%s0 + $0x258] sm:$0xff]
  %v84 = vld [vmem:[%s0 + $0x260] sm:$0xff]
  %v85 = vld [vmem:[%s0 + $0x268] sm:$0xff]
  %v86 = vld [vmem:[%s0 + $0x270] sm:$0xff]
  %v87 = vld [vmem:[%s0 + $0x278] sm:$0xff]
  %v88 = vld [vmem:[%s0 + $0x280] sm:$0xff]
  %v89 = vld [vmem:[%s0 + $0x288] sm:$0xff]
  %v90 = vld [vmem:[%s0 + $0x290] sm:$0xff]
  %v91 = vld [vmem:[%s0 + $0x298] sm:$0xff]
  %v92 = vld [vmem:[%s0 + $0x2a0] sm:$0xff]
  %v93 = vld [vmem:[%s0 + $0x2a8] sm:$0xff]
  %v94 = vld [vmem:[%s0 + $0x2b0] sm:$0xff]
  %v95 = vld [vmem:[%s0 + $0x2b8] sm:$0xff]
  %v96 = vld [vmem:[%s0 + $0x2c0] sm:$0xff]
  %v97 = vld [vmem:[%s0 + $0x2c8] sm:$0xff]
  %v98 = vld [vmem:[%s0 + $0x2d0] sm:$0xff]
  %v99 = vld [vmem:[%s0 + $0x2d8] sm:$0xff]
  %v100 = vld [vmem:[%s0 + $0x2e0] sm:$0xff]
  %v101 = vld [vmem:[%s0 + $0x2e8] sm:$0xff]
  %v102 = vld [vmem:[%s0 + $0x2f0] sm:$0xff]
  %v103 = vld [vmem:[%s0 + $0x2f8] sm:$0xff]
  %v104 = vld [vmem:[%s0 + $0x300] sm:$0xff]
  %v105 = vld [vmem:[%s0 + $0x308] sm:$0xff]
  %v106 = vld [vmem:[%s0 + $0x310] sm:$0xff]
  %v107 = vld [vmem:[%s0 + $0x318] sm:$0xff]
  %v108 = vld [vmem:[%s0 + $0x320] sm:$0xff]
  %v109 = vld [vmem:[%s0 + $0x328] sm:$0xff]
  %v110 = vld [vmem:[%s0 + $0x330] sm:$0xff]
  %v111 = vld [vmem:[%s0 + $0x338] sm:$0xff]
  %v112 = vld [vmem:[%s0 + $0x340] sm:$0xff]
  %v113 = vld [vmem:[%s0 + $0x348] sm:$0xff]
  %v114 = vld [vmem:[%s0 + $0x350] sm:$0xff]
  %v115 = vld [vmem:[%s0 + $0x358] sm:$0xff]
  %v116 = vld [vmem:[%s0 + $0x360] sm:$0xff]
  %v117 = vld [vmem:[%s0 + $0x368] sm:$0xff]
  %v118 = vld [vmem:[%s0 + $0x370] sm:$0xff]
  %v119 = vld [vmem:[%s0 + $0x378] sm:$0xff]
  %v120 = vld [vmem:[%s0 + $0x380] sm:$0xff]
  %v121 = vld [vmem:[%s0 + $0x388] sm:$0xff]
  %v122 = vld [vmem:[%s0 + $0x390] sm:$0xff]
  %v123 = vld [vmem:[%s0 + $0x398] sm:$0xff]
  %v124 = vld [vmem:[%s0 + $0x3a0] sm:$0xff]
  %v125 = vld [vmem:[%s0 + $0x3a8] sm:$0xff]
  %v126 = vld [vmem:[%s0 + $0x3b0] sm:$0xff]
  %v127 = vld [vmem:[%s0 + $0x3b8] sm:$0xff]
  %v128 = vld [vmem:[%s0 + $0x3c0] sm:$0xff]
  %v129 = vld [vmem:[%s0 + $0x3c8] sm:$0xff]
  %v130 = vld [vmem:[%s0 + $0x3d0] sm:$0xff]
  %v131 = vld [vmem:[%s0 + $0x3d8] sm:$0xff]
  %v132 = vld [vmem:[%s0 + $0x3e0] sm:$0xff]
  %v133 = vld [vmem:[%s0 + $0x3e8] sm:$0xff]
  %v134 = vld [vmem:[%s0 + $0x3f0] sm:$0xff]
  %v135 = vld [vmem:[%s0 + $0x3f8] sm:$0xff]
  %v136 = vld [vmem:[%s0 + $0x400] sm:$0xff]
  %v137 = vld [vmem:[%s0 + $0x408] sm:$0xff]
  %v138 = vld [vmem:[%s0 + $0x410] sm:$0xff]
  %v139 = vld [vmem:[%s0 + $0x418] sm:$0xff]
  %v140 = vld [vmem:[%s0 + $0x420] sm:$0xff]
  %v141 = vld [vmem:[%s0 + $0x428] sm:$0xff]
  %v142 = vld [vmem:[%s0 + $0x430] sm:$0xff]
  %v143 = vld [vmem:[%s0 + $0x438] sm:$0xff]
  %v144 = vld [vmem:[%s0 + $0x440] sm:$0xff]
  %v145 = vld [vmem:[%s0 + $0x448] sm:$0xff]
  %v146 = vld [vmem:[%s0 + $0x450] sm:$0xff]
  %v147 = vld [vmem:[%s0 + $0x458] sm:$0xff]
  %v148 = vld [vmem:[%s0 + $0x460] sm:$0xff]
  %v149 = vld [vmem:[%s0 + $0x468] sm:$0xff]
  %v150 = vld [vmem:[%s0 + $0x470] sm:$0xff]
  %v151 = vld [vmem:[%s0 + $0x478] sm:$0xff]
  %v152 = vld [vmem:[%s0 + $0x480] sm:$0xff]
  %v153 = vld [vmem:[%s0 + $0x488] sm:$0xff]
  %v154 = vld [vmem:[%s0 + $0x490] sm:$0xff]
  %v155 = vld [vmem:[%s0 + $0x498] sm:$0xff]
  %v156 = vld [vmem:[%s0 + $0x4a0] sm:$0xff]
  %v157 = vld [vmem:[%s0 + $0x4a8] sm:$0xff]
  %v158 = vld [vmem:[%s0 + $0x4b0] sm:$0xff]
  %v159 = vld [vmem:[%s0 + $0x4b8] sm:$0xff]
  %v160 = vld [vmem:[%s0 + $0x4c0] sm:$0xff]
  %v161 = vld [vmem:[%s0 + $0x4c8] sm:$0xff]
  %v162 = vld [vmem:[%s0 + $0x4d0] sm:$0xff]
  %v163 = vld [vmem:[%s0 + $0x4d8] sm:$0xff]
  %v164 = vld [vmem:[%s0 + $0x4e0] sm:$0xff]
  %v165 = vld [vmem:[%s0 + $0x4e8] sm:$0xff]
  %v166 = vld [vmem:[%s0 + $0x4f0] sm:$0xff]
  %v167 = vld [vmem:[%s0 + $0x4f8] sm:$0xff]
  %v168 = vld [vmem:[%s0 + $0x500] sm:$0xff]
  %v169 = vld [vmem:[%s0 + $0x508] sm:$0xff]
  %v170 = vld [vmem:[%s0 + $0x510] sm:$0xff]
  %v171 = vld [vmem:[%s0 + $0x518] sm:$0xff]
  %v172 = vld [vmem:[%s0 + $0x520] sm:$0xff]
  %v173 = vld [vmem:[%s0 + $0x528] sm:$0xff]
  %v174 = vld [vmem:[%s0 + $0x530] sm:$0xff]
  %v175 = vld [vmem:[%s0 + $0x538] sm:$0xff]
  %v176 = vld [vmem:[%s0 + $0x540] sm:$0xff]
  %v177 = vld [vmem:[%s0 + $0x548] sm:$0xff]
  %v178 = vld [vmem:[%s0 + $0x550] sm:$0xff]
  %v179 = vld [vmem:[%s0 + $0x558] sm:$0xff]
  %v180 = vld [vmem:[%s0 + $0x560] sm:$0xff]
  %v181 = vld [vmem:[%s0 + $0x568] sm:$0xff]
  %v182 = vld [vmem:[%s0 + $0x570] sm:$0xff]
  %v183 = vld [vmem:[%s0 + $0x578] sm:$0xff]
  %v184 = vld [vmem:[%s0 + $0x580] sm:$0xff]
  %v185 = vld [vmem:[%s0 + $0x588] sm:$0xff]
  %v186 = vld [vmem:[%s0 + $0x590] sm:$0xff]
  %v187 = vld [vmem:[%s0 + $0x598] sm:$0xff]
  %v188 = vld [vmem:[%s0 + $0x5a0] sm:$0xff]
  %v189 = vld [vmem:[%s0 + $0x5a8] sm:$0xff]
  %v190 = vld [vmem:[%s0 + $0x5b0] sm:$0xff]
  %v191 = vld [vmem:[%s0 + $0x5b8] sm:$0xff]
  %v192 = vld [vmem:[%s0 + $0x5c0] sm:$0xff]
  %v193 = vld [vmem:[%s0 + $0x5c8] sm:$0xff]
  %v194 = vld [vmem:[%s0 + $0x5d0] sm:$0xff]
  %v195 = vld [vmem:[%s0 + $0x5d8] sm:$0xff]
  %v196 = vld [vmem:[%s0 + $0x5e0] sm:$0xff]
  %v197 = vld [vmem:[%s0 + $0x5e8] sm:$0xff]
  %v198 = vld [vmem:[%s0 + $0x5f0] sm:$0xff]
  %v199 = vld [vmem:[%s0 + $0x5f8] sm:$0xff]
  %v200 = vld [vmem:[%s0 + $0x600] sm:$0xff]
  %v201 = vld [vmem:[%s0 + $0x608] sm:$0xff]
  %v202 = vld [vmem:[%s0 + $0x610] sm:$0xff]
  %v203 = vld [vmem:[%s0 + $0x618] sm:$0xff]
  %v204 = vld [vmem:[%s0 + $0x620] sm:$0xff]
  %v205 = vld [vmem:[%s0 + $0x628] sm:$0xff]
  %v206 = vld [vmem:[%s0 + $0x630] sm:$0xff]
  %v207 = vld [vmem:[%s0 + $0x638] sm:$0xff]
  %v208 = vld [vmem:[%s0 + $0x640] sm:$0xff]
  %v209 = vld [vmem:[%s0 + $0x648] sm:$0xff]
  %v210 = vld [vmem:[%s0 + $0x650] sm:$0xff]
  %v211 = vld [vmem:[%s0 + $0x658] sm:$0xff]
  %v212 = vld [vmem:[%s0 + $0x660] sm:$0xff]
  %v213 = vld [vmem:[%s0 + $0x668] sm:$0xff]
  %v214 = vld [vmem:[%s0 + $0x670] sm:$0xff]
  %v215 = vld [vmem:[%s0 + $0x678] sm:$0xff]
  %v216 = vld [vmem:[%s0 + $0x680] sm:$0xff]
  %v217 = vld [vmem:[%s0 + $0x688] sm:$0xff]
  %v218 = vld [vmem:[%s0 + $0x690] sm:$0xff]
  %v219 = vld [vmem:[%s0 + $0x698] sm:$0xff]
  %v220 = vld [vmem:[%s0 + $0x6a0] sm:$0xff]
  %v221 = vld [vmem:[%s0 + $0x6a8] sm:$0xff]
  %v222 = vld [vmem:[%s0 + $0x6b0] sm:$0xff]
  %v223 = vld [vmem:[%s0 + $0x6b8] sm:$0xff]
  %v224 = vld [vmem:[%s0 + $0x6c0] sm:$0xff]
  %v225 = vld [vmem:[%s0 + $0x6c8] sm:$0xff]
  %v226 = vld [vmem:[%s0 + $0x6d0] sm:$0xff]
  %v227 = vld [vmem:[%s0 + $0x6d8] sm:$0xff]
  %v228 = vld [vmem:[%s0 + $0x6e0] sm:$0xff]
  %v229 = vld [vmem:[%s0 + $0x6e8] sm:$0xff]
  %v230 = vld [vmem:[%s0 + $0x6f0] sm:$0xff]
  %v231 = vld [vmem:[%s0 + $0x6f8] sm:$0xff]
  %v232 = vld [vmem:[%s0 + $0x700] sm:$0xff]
  %v233 = vld [vmem:[%s0 + $0x708] sm:$0xff]
  %v234 = vld [vmem:[%s0 + $0x710] sm:$0xff]
  %v235 = vld [vmem:[%s0 + $0x718] sm:$0xff]
  %v236 = vld [vmem:[%s0 + $0x720] sm:$0xff]
  %v237 = vld [vmem:[%s0 + $0x728] sm:$0xff]
  %v238 = vld [vmem:[%s0 + $0x730] sm:$0xff]
  %v239 = vld [vmem:[%s0 + $0x738] sm:$0xff]
  %v240 = vld [vmem:[%s0 + $0x740] sm:$0xff]
  %v241 = vld [vmem:[%s0 + $0x748] sm:$0xff]
  %v242 = vld [vmem:[%s0 + $0x750] sm:$0xff]
  %v243 = vld [vmem:[%s0 + $0x758] sm:$0xff]
  %v244 = vld [vmem:[%s0 + $0x760] sm:$0xff]
  %v245 = vld [vmem:[%s0 + $0x768] sm:$0xff]
  %v246 = vld [vmem:[%s0 + $0x770] sm:$0xff]
  %v247 = vld [vmem:[%s0 + $0x778] sm:$0xff]
  %v248 = vld [vmem:[%s0 + $0x780] sm:$0xff]
  %v249 = vld [vmem:[%s0 + $0x788] sm:$0xff]
  %v250 = vld [vmem:[%s0 + $0x790] sm:$0xff]
  %v251 = vld [vmem:[%s0 + $0x798] sm:$0xff]
  %v252 = vld [vmem:[%s0 + $0x7a0] sm:$0xff]
  %v253 = vld [vmem:[%s0 + $0x7a8] sm:$0xff]
  %v254 = vld [vmem:[%s0 + $0x7b0] sm:$0xff]
  %v255 = vld [vmem:[%s0 + $0x7b8] sm:$0xff]
  %v256 = vld [vmem:[%s0 + $0x7c0] sm:$0xff]
  %v257 = vld [vmem:[%s0 + $0x7c8] sm:$0xff]
  %v258 = vld [vmem:[%s0 + $0x7d0] sm:$0xff]
  %v259 = vld [vmem:[%s0 + $0x7d8] sm:$0xff]
  %v260 = vld [vmem:[%s0 + $0x7e0] sm:$0xff]
  %v261 = vld [vmem:[%s0 + $0x7e8] sm:$0xff]
  %v262 = vld [vmem:[%s0 + $0x7f0] sm:$0xff]
  %v263 = vld [vmem:[%s0 + $0x7f8] sm:$0xff]
  %v264 = vld [vmem:[%s0 + $0x800] sm:$0xff]
  %v265 = vld [vmem:[%s0 + $0x808] sm:$0xff]
  %v266 = vld [vmem:[%s0 + $0x810] sm:$0xff]
  %v267 = vld [vmem:[%s0 + $0x818] sm:$0xff]
  %v268 = vld [vmem:[%s0 + $0x820] sm:$0xff]
  %v269 = vld [vmem:[%s0 + $0x828] sm:$0xff]
  %v270 = vld [vmem:[%s0 + $0x830] sm:$0xff]
  %v271 = vld [vmem:[%s0 + $0x838] sm:$0xff]
  %v272 = vld [vmem:[%s0 + $0x840] sm:$0xff]
  %v273 = vld [vmem:[%s0 + $0x848] sm:$0xff]
  %v274 = vld [vmem:[%s0 + $0x850] sm:$0xff]
  %v275 = vld [vmem:[%s0 + $0x858] sm:$0xff]
  %v276 = vld [vmem:[%s0 + $0x860] sm:$0xff]
  %v277 = vld [vmem:[%s0 + $0x868] sm:$0xff]
  %v278 = vld [vmem:[%s0 + $0x870] sm:$0xff]
  %v279 = vld [vmem:[%s0 + $0x878] sm:$0xff]
  %v280 = vld [vmem:[%s0 + $0x880] sm:$0xff]
  %v281 = vld [vmem:[%s0 + $0x888] sm:$0xff]
  %v282 = vld [vmem:[%s0 + $0x890] sm:$0xff]
  %v283 = vld [vmem:[%s0 + $0x898] sm:$0xff]
  %v284 = vld [vmem:[%s0 + $0x8a0] sm:$0xff]
  %v285 = vld [vmem:[%s0 + $0x8a8] sm:$0xff]
  %v286 = vld [vmem:[%s0 + $0x8b0] sm:$0xff]
  %v287 = vld [vmem:[%s0 + $0x8b8] sm:$0xff]
  %v288 = vld [vmem:[%s0 + $0x8c0] sm:$0xff]
  %v289 = vld [vmem:[%s0 + $0x8c8] sm:$0xff]
  %v290 = vld [vmem:[%s0 + $0x8d0] sm:$0xff]
  %v291 = vld [vmem:[%s0 + $0x8d8] sm:$0xff]
  %v292 = vld [vmem:[%s0 + $0x8e0] sm:$0xff]
  %v293 = vld [vmem:[%s0 + $0x8e8] sm:$0xff]
  %v294 = vld [vmem:[%s0 + $0x8f0] sm:$0xff]
  %v295 = vld [vmem:[%s0 + $0x8f8] sm:$0xff]
  %v296 = vld [vmem:[%s0 + $0x900] sm:$0xff]
  %v297 = vld [vmem:[%s0 + $0x908] sm:$0xff]
  %v298 = vld [vmem:[%s0 + $0x910] sm:$0xff]
  %v299 = vld [vmem:[%s0 + $0x918] sm:$0xff]
  %v300 = vld [vmem:[%s0 + $0x920] sm:$0xff]
  %v301 = vld [vmem:[%s0 + $0x928] sm:$0xff]
  %v302 = vld [vmem:[%s0 + $0x930] sm:$0xff]
  %v303 = vld [vmem:[%s0 + $0x938] sm:$0xff]
  %v304 = vld [vmem:[%s0 + $0x940] sm:$0xff]
  %v305 = vld [vmem:[%s0 + $0x948] sm:$0xff]
  %v306 = vld [vmem:[%s0 + $0x950] sm:$0xff]
  %v307 = vld [vmem:[%s0 + $0x958] sm:$0xff]
  %v308 = vld [vmem:[%s0 + $0x960] sm:$0xff]
  %v309 = vld [vmem:[%s0 + $0x968] sm:$0xff]
  %v310 = vld [vmem:[%s0 + $0x970] sm:$0xff]
  %v311 = vld [vmem:[%s0 + $0x978] sm:$0xff]
  %v312 = vld [vmem:[%s0 + $0x980] sm:$0xff]
  %v313 = vld [vmem:[%s0 + $0x988] sm:$0xff]
  %v314 = vld [vmem:[%s0 + $0x990] sm:$0xff]
  %v315 = vld [vmem:[%s0 + $0x998] sm:$0xff]
  %v316 = vld [vmem:[%s0 + $0x9a0] sm:$0xff]
  %v317 = vld [vmem:[%s0 + $0x9a8] sm:$0xff]
  %v318 = vld [vmem:[%s0 + $0x9b0] sm:$0xff]
  %v319 = vld [vmem:[%s0 + $0x9b8] sm:$0xff]
  %v320 = vld [vmem:[%s0 + $0x9c0] sm:$0xff]
  %v321 = vld [vmem:[%s0 + $0x9c8] sm:$0xff]
  %v322 = vld [vmem:[%s0 + $0x9d0] sm:$0xff]
  %v323 = vld [vmem:[%s0 + $0x9d8] sm:$0xff]
  %v324 = vld [vmem:[%s0 + $0x9e0] sm:$0xff]
  %v325 = vld [vmem:[%s0 + $0x9e8] sm:$0xff]
  %v326 = vld [vmem:[%s0 + $0x9f0] sm:$0xff]
  %v327 = vld [vmem:[%s0 + $0x9f8] sm:$0xff]
  %v328 = vld [vmem:[%s0 + $0xa00] sm:$0xff]
  %v329 = vld [vmem:[%s0 + $0xa08] sm:$0xff]
  %v330 = vld [vmem:[%s0 + $0xa10] sm:$0xff]
  %v331 = vld [vmem:[%s0 + $0xa18] sm:$0xff]
  %v332 = vld [vmem:[%s0 + $0xa20] sm:$0xff]
  %v333 = vld [vmem:[%s0 + $0xa28] sm:$0xff]
  %v334 = vld [vmem:[%s0 + $0xa30] sm:$0xff]
  %v335 = vld [vmem:[%s0 + $0xa38] sm:$0xff]
  %v336 = vld [vmem:[%s0 + $0xa40] sm:$0xff]
  %v337 = vld [vmem:[%s0 + $0xa48] sm:$0xff]
  %v338 = vld [vmem:[%s0 + $0xa50] sm:$0xff]
  %v339 = vld [vmem:[%s0 + $0xa58] sm:$0xff]
  %v340 = vld [vmem:[%s0 + $0xa60] sm:$0xff]
  %v341 = vld [vmem:[%s0 + $0xa68] sm:$0xff]
  %v342 = vld [vmem:[%s0 + $0xa70] sm:$0xff]
  %v343 = vld [vmem:[%s0 + $0xa78] sm:$0xff]
  %v344 = vld [vmem:[%s0 + $0xa80] sm:$0xff]
  %v345 = vld [vmem:[%s0 + $0xa88] sm:$0xff]
  %v346 = vld [vmem:[%s0 + $0xa90] sm:$0xff]
  %v347 = vld [vmem:[%s0 + $0xa98] sm:$0xff]
  %v348 = vld [vmem:[%s0 + $0xaa0] sm:$0xff]
  %v349 = vld [vmem:[%s0 + $0xaa8] sm:$0xff]
  %v350 = vld [vmem:[%s0 + $0xab0] sm:$0xff]
  %v351 = vld [vmem:[%s0 + $0xab8] sm:$0xff]
  %v352 = vld [vmem:[%s0 + $0xac0] sm:$0xff]
  %v353 = vld [vmem:[%s0 + $0xac8] sm:$0xff]
  %v354 = vld [vmem:[%s0 + $0xad0] sm:$0xff]
  %v355 = vld [vmem:[%s0 + $0xad8] sm:$0xff]
  %v356 = vld [vmem:[%s0 + $0xae0] sm:$0xff]
  %v357 = vld [vmem:[%s0 + $0xae8] sm:$0xff]
  %v358 = vld [vmem:[%s0 + $0xaf0] sm:$0xff]
  %v359 = vld [vmem:[%s0 + $0xaf8] sm:$0xff]
  %v360 = vld [vmem:[%s0 + $0xb00] sm:$0xff]
  %v361 = vld [vmem:[%s0 + $0xb08] sm:$0xff]
  %v362 = vld [vmem:[%s0 + $0xb10] sm:$0xff]
  %v363 = vld [vmem:[%s0 + $0xb18] sm:$0xff]
  %v364 = vld [vmem:[%s0 + $0xb20] sm:$0xff]
  %v365 = vld [vmem:[%s0 + $0xb28] sm:$0xff]
  %v366 = vld [vmem:[%s0 + $0xb30] sm:$0xff]
  %v367 = vld [vmem:[%s0 + $0xb38] sm:$0xff]
  %v368 = vld [vmem:[%s0 + $0xb40] sm:$0xff]
  %v369 = vld [vmem:[%s0 + $0xb48] sm:$0xff]
  %v370 = vld [vmem:[%s0 + $0xb50] sm:$0xff]
  %v371 = vld [vmem:[%s0 + $0xb58] sm:$0xff]
  %v372 = vld [vmem:[%s0 + $0xb60] sm:$0xff]
  %v373 = vld [vmem:[%s0 + $0xb68] sm:$0xff]
  %v374 = vld [vmem:[%s0 + $0xb70] sm:$0xff]
  %v375 = vld [vmem:[%s0 + $0xb78] sm:$0xff]
  %v376 = vld [vmem:[%s0 + $0xb80] sm:$0xff]
  %v377 = vld [vmem:[%s0 + $0xb88] sm:$0xff]
  %v378 = vld [vmem:[%s0 + $0xb90] sm:$0xff]
  %v379 = vld [vmem:[%s0 + $0xb98] sm:$0xff]
  %v380 = vld [vmem:[%s0 + $0xba0] sm:$0xff]
  %v381 = vld [vmem:[%s0 + $0xba8] sm:$0xff]
  %v382 = vld [vmem:[%s0 + $0xbb0] sm:$0xff]
  %v383 = vld [vmem:[%s0 + $0xbb8] sm:$0xff]
  %v384 = vld [vmem:[%s0 + $0xbc0] sm:$0xff]
  %v385 = vld [vmem:[%s0 + $0xbc8] sm:$0xff]
  %v386 = vld [vmem:[%s0 + $0xbd0] sm:$0xff]
  %v387 = vld [vmem:[%s0 + $0xbd8] sm:$0xff]
  %v388 = vld [vmem:[%s0 + $0xbe0] sm:$0xff]
  %v389 = vld [vmem:[%s0 + $0xbe8] sm:$0xff]
  %v390 = vld [vmem:[%s0 + $0xbf0] sm:$0xff]
  %v391 = vld [vmem:[%s0 + $0xbf8] sm:$0xff]
  %v392 = vld [vmem:[%s0 + $0xc00] sm:$0xff]
  %v393 = vld [vmem:[%s0 + $0xc08] sm:$0xff]
  %v394 = vld [vmem:[%s0 + $0xc10] sm:$0xff]
  %v395 = vld [vmem:[%s0 + $0xc18] sm:$0xff]
  %v396 = vld [vmem:[%s0 + $0xc20] sm:$0xff]
  %v397 = vld [vmem:[%s0 + $0xc28] sm:$0xff]
  %v398 = vld [vmem:[%s0 + $0xc30] sm:$0xff]
  %v399 = vld [vmem:[%s0 + $0xc38] sm:$0xff]
  %v400 = vld [vmem:[%s0 + $0xc40] sm:$0xff]
  %v401 = vld [vmem:[%s0 + $0xc48] sm:$0xff]
  %v402 = vld [vmem:[%s0 + $0xc50] sm:$0xff]
  %v403 = vld [vmem:[%s0 + $0xc58] sm:$0xff]
  %v404 = vld [vmem:[%s0 + $0xc60] sm:$0xff]
  %v405 = vld [vmem:[%s0 + $0xc68] sm:$0xff]
  %v406 = vld [vmem:[%s0 + $0xc70] sm:$0xff]
  %v407 = vld [vmem:[%s0 + $0xc78] sm:$0xff]
  %v408 = vld [vmem:[%s0 + $0xc80] sm:$0xff]
  %v409 = vld [vmem:[%s0 + $0xc88] sm:$0xff]
  %v410 = vld [vmem:[%s0 + $0xc90] sm:$0xff]
  %v411 = vld [vmem:[%s0 + $0xc98] sm:$0xff]
  %v412 = vld [vmem:[%s0 + $0xca0] sm:$0xff]
  %v413 = vld [vmem:[%s0 + $0xca8] sm:$0xff]
  %v414 = vld [vmem:[%s0 + $0xcb0] sm:$0xff]
  %v415 = vld [vmem:[%s0 + $0xcb8] sm:$0xff]
  %v416 = vld [vmem:[%s0 + $0xcc0] sm:$0xff]
  %v417 = vld [vmem:[%s0 + $0xcc8] sm:$0xff]
  %v418 = vld [vmem:[%s0 + $0xcd0] sm:$0xff]
  %v419 = vld [vmem:[%s0 + $0xcd8] sm:$0xff]
  %v420 = vld [vmem:[%s0 + $0xce0] sm:$0xff]
  %v421 = vld [vmem:[%s0 + $0xce8] sm:$0xff]
  %v422 = vld [vmem:[%s0 + $0xcf0] sm:$0xff]
  %v423 = vld [vmem:[%s0 + $0xcf8] sm:$0xff]
  %v424 = vld [vmem:[%s0 + $0xd00] sm:$0xff]
  %v425 = vld [vmem:[%s0 + $0xd08] sm:$0xff]
  %v426 = vld [vmem:[%s0 + $0xd10] sm:$0xff]
  %v427 = vld [vmem:[%s0 + $0xd18] sm:$0xff]
  %v428 = vld [vmem:[%s0 + $0xd20] sm:$0xff]
  %v429 = vld [vmem:[%s0 + $0xd28] sm:$0xff]
  %v430 = vld [vmem:[%s0 + $0xd30] sm:$0xff]
  %v431 = vld [vmem:[%s0 + $0xd38] sm:$0xff]
  %v432 = vld [vmem:[%s0 + $0xd40] sm:$0xff]
  %v433 = vld [vmem:[%s0 + $0xd48] sm:$0xff]
  %v434 = vld [vmem:[%s0 + $0xd50] sm:$0xff]
  %v435 = vld [vmem:[%s0 + $0xd58] sm:$0xff]
  %v436 = vld [vmem:[%s0 + $0xd60] sm:$0xff]
  %v437 = vld [vmem:[%s0 + $0xd68] sm:$0xff]
  %v438 = vld [vmem:[%s0 + $0xd70] sm:$0xff]
  %v439 = vld [vmem:[%s0 + $0xd78] sm:$0xff]
  %v440 = vld [vmem:[%s0 + $0xd80] sm:$0xff]
  %v441 = vld [vmem:[%s0 + $0xd88] sm:$0xff]
  %v442 = vld [vmem:[%s0 + $0xd90] sm:$0xff]
  %v443 = vld [vmem:[%s0 + $0xd98] sm:$0xff]
  %v444 = vld [vmem:[%s0 + $0xda0] sm:$0xff]
  %v445 = vld [vmem:[%s0 + $0xda8] sm:$0xff]
  %v446 = vld [vmem:[%s0 + $0xdb0] sm:$0xff]
  %v447 = vld [vmem:[%s0 + $0xdb8] sm:$0xff]
  %v448 = vld [vmem:[%s0 + $0xdc0] sm:$0xff]
  %v449 = vld [vmem:[%s0 + $0xdc8] sm:$0xff]
  %v450 = vld [vmem:[%s0 + $0xdd0] sm:$0xff]
  %v451 = vld [vmem:[%s0 + $0xdd8] sm:$0xff]
  %v452 = vld [vmem:[%s0 + $0xde0] sm:$0xff]
  %v453 = vld [vmem:[%s0 + $0xde8] sm:$0xff]
  %v454 = vld [vmem:[%s0 + $0xdf0] sm:$0xff]
  %v455 = vld [vmem:[%s0 + $0xdf8] sm:$0xff]
  %v456 = vld [vmem:[%s0 + $0xe00] sm:$0xff]
  %v457 = vld [vmem:[%s0 + $0xe08] sm:$0xff]
  %v458 = vld [vmem:[%s0 + $0xe10] sm:$0xff]
  %v459 = vld [vmem:[%s0 + $0xe18] sm:$0xff]
  %v460 = vld [vmem:[%s0 + $0xe20] sm:$0xff]
  %v461 = vld [vmem:[%s0 + $0xe28] sm:$0xff]
  %v462 = vld [vmem:[%s0 + $0xe30] sm:$0xff]
  %v463 = vld [vmem:[%s0 + $0xe38] sm:$0xff]
  %v464 = vld [vmem:[%s0 + $0xe40] sm:$0xff]
  %v465 = vld [vmem:[%s0 + $0xe48] sm:$0xff]
  %v466 = vld [vmem:[%s0 + $0xe50] sm:$0xff]
  %v467 = vld [vmem:[%s0 + $0xe58] sm:$0xff]
  %v468 = vld [vmem:[%s0 + $0xe60] sm:$0xff]
  %v469 = vld [vmem:[%s0 + $0xe68] sm:$0xff]
  %v470 = vld [vmem:[%s0 + $0xe70] sm:$0xff]
  %v471 = vld [vmem:[%s0 + $0xe78] sm:$0xff]
  %v472 = vld [vmem:[%s0 + $0xe80] sm:$0xff]
  %v473 = vld [vmem:[%s0 + $0xe88] sm:$0xff]
  %v474 = vld [vmem:[%s0 + $0xe90] sm:$0xff]
  %v475 = vld [vmem:[%s0 + $0xe98] sm:$0xff]
  %v476 = vld [vmem:[%s0 + $0xea0] sm:$0xff]
  %v477 = vld [vmem:[%s0 + $0xea8] sm:$0xff]
  %v478 = vld [vmem:[%s0 + $0xeb0] sm:$0xff]
  %v479 = vld [vmem:[%s0 + $0xeb8] sm:$0xff]
  %v480 = vld [vmem:[%s0 + $0xec0] sm:$0xff]
  %v481 = vld [vmem:[%s0 + $0xec8] sm:$0xff]
  %v482 = vld [vmem:[%s0 + $0xed0] sm:$0xff]
  %v483 = vld [vmem:[%s0 + $0xed8] sm:$0xff]
  %v484 = vld [vmem:[%s0 + $0xee0] sm:$0xff]
  %v485 = vld [vmem:[%s0 + $0xee8] sm:$0xff]
  %v486 = vld [vmem:[%s0 + $0xef0] sm:$0xff]
  %v487 = vld [vmem:[%s0 + $0xef8] sm:$0xff]
  %v488 = vld [vmem:[%s0 + $0xf00] sm:$0xff]
  %v489 = vld [vmem:[%s0 + $0xf08] sm:$0xff]
  %v490 = vld [vmem:[%s0 + $0xf10] sm:$0xff]
  %v491 = vld [vmem:[%s0 + $0xf18] sm:$0xff]
  %v492 = vld [vmem:[%s0 + $0xf20] sm:$0xff]
  %v493 = vld [vmem:[%s0 + $0xf28] sm:$0xff]
  %v494 = vld [vmem:[%s0 + $0xf30] sm:$0xff]
  %v495 = vld [vmem:[%s0 + $0xf38] sm:$0xff]
  %v496 = vld [vmem:[%s0 + $0xf40] sm:$0xff]
  %v497 = vld [vmem:[%s0 + $0xf48] sm:$0xff]
  %v498 = vld [vmem:[%s0 + $0xf50] sm:$0xff]
  %v499 = vld [vmem:[%s0 + $0xf58] sm:$0xff]
  %v500 = vld [vmem:[%s0 + $0xf60] sm:$0xff]
  %v501 = vld [vmem:[%s0 + $0xf68] sm:$0xff]
  %v502 = vld [vmem:[%s0 + $0xf70] sm:$0xff]
  %v503 = vld [vmem:[%s0 + $0xf78] sm:$0xff]
  %v504 = vld [vmem:[%s0 + $0xf80] sm:$0xff]
  %v505 = vld [vmem:[%s0 + $0xf88] sm:$0xff]
  %v506 = vld [vmem:[%s0 + $0xf90] sm:$0xff]
  %v507 = vld [vmem:[%s0 + $0xf98] sm:$0xff]
  %v508 = vld [vmem:[%s0 + $0xfa0] sm:$0xff]
  %v509 = vld [vmem:[%s0 + $0xfa8] sm:$0xff]
  %v510 = vld [vmem:[%s0 + $0xfb0] sm:$0xff]
  %v511 = vld [vmem:[%s0 + $0xfb8] sm:$0xff]
  %v512 = vld [vmem:[%s0 + $0xfc0] sm:$0xff]
  %v513 = vld [vmem:[%s0 + $0xfc8] sm:$0xff]
  %v514 = vld [vmem:[%s0 + $0xfd0] sm:$0xff]
  %v515 = vld [vmem:[%s0 + $0xfd8] sm:$0xff]
  %v516 = vld [vmem:[%s0 + $0xfe0] sm:$0xff]
  %v517 = vld [vmem:[%s0 + $0xfe8] sm:$0xff]
  %v518 = vld [vmem:[%s0 + $0xff0] sm:$0xff]
  %v519 = vld [vmem:[%s0 + $0xff8] sm:$0xff]
  %v520 = vld [vmem:[%s0 + $0x1000] sm:$0xff]
  %v521 = vld [vmem:[%s0 + $0x1008] sm:$0xff]
  %v522 = vld [vmem:[%s0 + $0x1010] sm:$0xff]
  %v523 = vld [vmem:[%s0 + $0x1018] sm:$0xff]
  %v524 = vld [vmem:[%s0 + $0x1020] sm:$0xff]
  %v525 = vld [vmem:[%s0 + $0x1028] sm:$0xff]
  %v526 = vld [vmem:[%s0 + $0x1030] sm:$0xff]
  %v527 = vld [vmem:[%s0 + $0x1038] sm:$0xff]
  %v528 = vld [vmem:[%s0 + $0x1040] sm:$0xff]
  %v529 = vld [vmem:[%s0 + $0x1048] sm:$0xff]
  %v530 = vld [vmem:[%s0 + $0x1050] sm:$0xff]
  %v531 = vld [vmem:[%s0 + $0x1058] sm:$0xff]
  %v532 = vld [vmem:[%s0 + $0x1060] sm:$0xff]
  %v533 = vld [vmem:[%s0 + $0x1068] sm:$0xff]
  %v534 = vld [vmem:[%s0 + $0x1070] sm:$0xff]
  %v535 = vld [vmem:[%s0 + $0x1078] sm:$0xff]
  %v536 = vld [vmem:[%s0 + $0x1080] sm:$0xff]
  %v537 = vld [vmem:[%s0 + $0x1088] sm:$0xff]
  %v538 = vld [vmem:[%s0 + $0x1090] sm:$0xff]
  %v539 = vld [vmem:[%s0 + $0x1098] sm:$0xff]
  %v540 = vld [vmem:[%s0 + $0x10a0] sm:$0xff]
  %v541 = vld [vmem:[%s0 + $0x10a8] sm:$0xff]
  %v542 = vld [vmem:[%s0 + $0x10b0] sm:$0xff]
  %v543 = vld [vmem:[%s0 + $0x10b8] sm:$0xff]
  %v544 = vld [vmem:[%s0 + $0x10c0] sm:$0xff]
  %v545 = vld [vmem:[%s0 + $0x10c8] sm:$0xff]
  %v546 = vld [vmem:[%s0 + $0x10d0] sm:$0xff]
  %v547 = vld [vmem:[%s0 + $0x10d8] sm:$0xff]
  %v548 = vld [vmem:[%s0 + $0x10e0] sm:$0xff]
  %v549 = vld [vmem:[%s0 + $0x10e8] sm:$0xff]
  %v550 = vld [vmem:[%s0 + $0x10f0] sm:$0xff]
  %v551 = vld [vmem:[%s0 + $0x10f8] sm:$0xff]
  %v552 = vld [vmem:[%s0 + $0x1100] sm:$0xff]
  %v553 = vld [vmem:[%s0 + $0x1108] sm:$0xff]
  %v554 = vld [vmem:[%s0 + $0x1110] sm:$0xff]
  %v555 = vld [vmem:[%s0 + $0x1118] sm:$0xff]
  %v556 = vld [vmem:[%s0 + $0x1120] sm:$0xff]
  %v557 = vld [vmem:[%s0 + $0x1128] sm:$0xff]
  %v558 = vld [vmem:[%s0 + $0x1130] sm:$0xff]
  %v559 = vld [vmem:[%s0 + $0x1138] sm:$0xff]
  %v560 = vld [vmem:[%s0 + $0x1140] sm:$0xff]
  %v561 = vld [vmem:[%s0 + $0x1148] sm:$0xff]
  %v562 = vld [vmem:[%s0 + $0x1150] sm:$0xff]
  %v563 = vld [vmem:[%s0 + $0x1158] sm:$0xff]
  %v564 = vld [vmem:[%s0 + $0x1160] sm:$0xff]
  %v565 = vld [vmem:[%s0 + $0x1168] sm:$0xff]
  %v566 = vld [vmem:[%s0 + $0x1170] sm:$0xff]
  %v567 = vld [vmem:[%s0 + $0x1178] sm:$0xff]
  %v568 = vld [vmem:[%s0 + $0x1180] sm:$0xff]
  %v569 = vld [vmem:[%s0 + $0x1188] sm:$0xff]
  %v570 = vld [vmem:[%s0 + $0x1190] sm:$0xff]
  %v571 = vld [vmem:[%s0 + $0x1198] sm:$0xff]
  %v572 = vld [vmem:[%s0 + $0x11a0] sm:$0xff]
  %v573 = vld [vmem:[%s0 + $0x11a8] sm:$0xff]
  %v574 = vld [vmem:[%s0 + $0x11b0] sm:$0xff]
  %v575 = vld [vmem:[%s0 + $0x11b8] sm:$0xff]
  %v576 = vld [vmem:[%s0 + $0x11c0] sm:$0xff]
  %v577 = vld [vmem:[%s0 + $0x11c8] sm:$0xff]
  %v578 = vld [vmem:[%s0 + $0x11d0] sm:$0xff]
  %v579 = vld [vmem:[%s0 + $0x11d8] sm:$0xff]
  %v580 = vld [vmem:[%s0 + $0x11e0] sm:$0xff]
  %v581 = vld [vmem:[%s0 + $0x11e8] sm:$0xff]
  %v582 = vld [vmem:[%s0 + $0x11f0] sm:$0xff]
  %v583 = vld [vmem:[%s0 + $0x11f8] sm:$0xff]
  %v584 = vld [vmem:[%s0 + $0x1200] sm:$0xff]
  %v585 = vld [vmem:[%s0 + $0x1208] sm:$0xff]
  %v586 = vld [vmem:[%s0 + $0x1210] sm:$0xff]
  %v587 = vld [vmem:[%s0 + $0x1218] sm:$0xff]
  %v588 = vld [vmem:[%s0 + $0x1220] sm:$0xff]
  %v589 = vld [vmem:[%s0 + $0x1228] sm:$0xff]
  %v590 = vld [vmem:[%s0 + $0x1230] sm:$0xff]
  %v591 = vld [vmem:[%s0 + $0x1238] sm:$0xff]
  %v592 = vld [vmem:[%s0 + $0x1240] sm:$0xff]
  %v593 = vld [vmem:[%s0 + $0x1248] sm:$0xff]
  %v594 = vld [vmem:[%s0 + $0x1250] sm:$0xff]
  %v595 = vld [vmem:[%s0 + $0x1258] sm:$0xff]
  %v596 = vld [vmem:[%s0 + $0x1260] sm:$0xff]
  %v597 = vld [vmem:[%s0 + $0x1268] sm:$0xff]
  %v598 = vld [vmem:[%s0 + $0x1270] sm:$0xff]
  %v599 = vld [vmem:[%s0 + $0x1278] sm:$0xff]
  %v600 = vld [vmem:[%s0 + $0x1280] sm:$0xff]
  %v601 = vld [vmem:[%s0 + $0x1288] sm:$0xff]
  %v602 = vld [vmem:[%s0 + $0x1290] sm:$0xff]
  %v603 = vld [vmem:[%s0 + $0x1298] sm:$0xff]
  %v604 = vld [vmem:[%s0 + $0x12a0] sm:$0xff]
  %v605 = vld [vmem:[%s0 + $0x12a8] sm:$0xff]
  %v606 = vld [vmem:[%s0 + $0x12b0] sm:$0xff]
  %v607 = vld [vmem:[%s0 + $0x12b8] sm:$0xff]
  %v608 = vld [vmem:[%s0 + $0x12c0] sm:$0xff]
  %v609 = vld [vmem:[%s0 + $0x12c8] sm:$0xff]
  %v610 = vld [vmem:[%s0 + $0x12d0] sm:$0xff]
  %v611 = vld [vmem:[%s0 + $0x12d8] sm:$0xff]
  %v612 = vld [vmem:[%s0 + $0x12e0] sm:$0xff]
  %v613 = vld [vmem:[%s0 + $0x12e8] sm:$0xff]
  %v614 = vld [vmem:[%s0 + $0x12f0] sm:$0xff]
  %v615 = vld [vmem:[%s0 + $0x12f8] sm:$0xff]
  %v616 = vld [vmem:[%s0 + $0x1300] sm:$0xff]
  %v617 = vld [vmem:[%s0 + $0x1308] sm:$0xff]
  %v618 = vld [vmem:[%s0 + $0x1310] sm:$0xff]
  %v619 = vld [vmem:[%s0 + $0x1318] sm:$0xff]
  %v620 = vld [vmem:[%s0 + $0x1320] sm:$0xff]
  %v621 = vld [vmem:[%s0 + $0x1328] sm:$0xff]
  %v622 = vld [vmem:[%s0 + $0x1330] sm:$0xff]
  %v623 = vld [vmem:[%s0 + $0x1338] sm:$0xff]
  %v624 = vld [vmem:[%s0 + $0x1340] sm:$0xff]
  %v625 = vld [vmem:[%s0 + $0x1348] sm:$0xff]
  %v626 = vld [vmem:[%s0 + $0x1350] sm:$0xff]
  %v627 = vld [vmem:[%s0 + $0x1358] sm:$0xff]
  %v628 = vld [vmem:[%s0 + $0x1360] sm:$0xff]
  %v629 = vld [vmem:[%s0 + $0x1368] sm:$0xff]
  %v630 = vld [vmem:[%s0 + $0x1370] sm:$0xff]
  %v631 = vld [vmem:[%s0 + $0x1378] sm:$0xff]
  %v632 = vld [vmem:[%s0 + $0x1380] sm:$0xff]
  %v633 = vld [vmem:[%s0 + $0x1388] sm:$0xff]
  %v634 = vld [vmem:[%s0 + $0x1390] sm:$0xff]
  %v635 = vld [vmem:[%s0 + $0x1398] sm:$0xff]
  %v636 = vld [vmem:[%s0 + $0x13a0] sm:$0xff]
  %v637 = vld [vmem:[%s0 + $0x13a8] sm:$0xff]
  %v638 = vld [vmem:[%s0 + $0x13b0] sm:$0xff]
  %v639 = vld [vmem:[%s0 + $0x13b8] sm:$0xff]
  %v640 = vld [vmem:[%s0 + $0x13c0] sm:$0xff]
  %v641 = vld [vmem:[%s0 + $0x13c8] sm:$0xff]
  %v642 = vld [vmem:[%s0 + $0x13d0] sm:$0xff]
  %v643 = vld [vmem:[%s0 + $0x13d8] sm:$0xff]
  %v644 = vld [vmem:[%s0 + $0x13e0] sm:$0xff]
  %v645 = vld [vmem:[%s0 + $0x13e8] sm:$0xff]
  %v646 = vld [vmem:[%s0 + $0x13f0] sm:$0xff]
  %v647 = vld [vmem:[%s0 + $0x13f8] sm:$0xff]
  %v648 = vld [vmem:[%s0 + $0x1400] sm:$0xff]
  %v649 = vld [vmem:[%s0 + $0x1408] sm:$0xff]
  %v650 = vld [vmem:[%s0 + $0x1410] sm:$0xff]
  %v651 = vld [vmem:[%s0 + $0x1418] sm:$0xff]
  %v652 = vld [vmem:[%s0 + $0x1420] sm:$0xff]
  %v653 = vld [vmem:[%s0 + $0x1428] sm:$0xff]
  %v654 = vld [vmem:[%s0 + $0x1430] sm:$0xff]
  %v655 = vld [vmem:[%s0 + $0x1438] sm:$0xff]
  %v656 = vld [vmem:[%s0 + $0x1440] sm:$0xff]
  %v657 = vld [vmem:[%s0 + $0x1448] sm:$0xff]
  %v658 = vld [vmem:[%s0 + $0x1450] sm:$0xff]
  %v659 = vld [vmem:[%s0 + $0x1458] sm:$0xff]
  %v660 = vld [vmem:[%s0 + $0x1460] sm:$0xff]
  %v661 = vld [vmem:[%s0 + $0x1468] sm:$0xff]
  %v662 = vld [vmem:[%s0 + $0x1470] sm:$0xff]
  %v663 = vld [vmem:[%s0 + $0x1478] sm:$0xff]
  %v664 = vld [vmem:[%s0 + $0x1480] sm:$0xff]
  %v665 = vld [vmem:[%s0 + $0x1488] sm:$0xff]
  %v666 = vld [vmem:[%s0 + $0x1490] sm:$0xff]
  %v667 = vld [vmem:[%s0 + $0x1498] sm:$0xff]
  %v668 = vld [vmem:[%s0 + $0x14a0] sm:$0xff]
  %v669 = vld [vmem:[%s0 + $0x14a8] sm:$0xff]
  %v670 = vld [vmem:[%s0 + $0x14b0] sm:$0xff]
  %v671 = vld [vmem:[%s0 + $0x14b8] sm:$0xff]
  %v672 = vld [vmem:[%s0 + $0x14c0] sm:$0xff]
  %v673 = vld [vmem:[%s0 + $0x14c8] sm:$0xff]
  %v674 = vld [vmem:[%s0 + $0x14d0] sm:$0xff]
  %v675 = vld [vmem:[%s0 + $0x14d8] sm:$0xff]
  %v676 = vld [vmem:[%s0 + $0x14e0] sm:$0xff]
  %v677 = vld [vmem:[%s0 + $0x14e8] sm:$0xff]
  %v678 = vld [vmem:[%s0 + $0x14f0] sm:$0xff]
  %v679 = vld [vmem:[%s0 + $0x14f8] sm:$0xff]
  %v680 = vld [vmem:[%s0 + $0x1500] sm:$0xff]
  %v681 = vld [vmem:[%s0 + $0x1508] sm:$0xff]
  %v682 = vld [vmem:[%s0 + $0x1510] sm:$0xff]
  %v683 = vld [vmem:[%s0 + $0x1518] sm:$0xff]
  %v684 = vld [vmem:[%s0 + $0x1520] sm:$0xff]
  %v685 = vld [vmem:[%s0 + $0x1528] sm:$0xff]
  %v686 = vld [vmem:[%s0 + $0x1530] sm:$0xff]
  %v687 = vld [vmem:[%s0 + $0x1538] sm:$0xff]
  %v688 = vld [vmem:[%s0 + $0x1540] sm:$0xff]
  %v689 = vld [vmem:[%s0 + $0x1548] sm:$0xff]
  %v690 = vld [vmem:[%s0 + $0x1550] sm:$0xff]
  %v691 = vld [vmem:[%s0 + $0x1558] sm:$0xff]
  %v692 = vld [vmem:[%s0 + $0x1560] sm:$0xff]
  %v693 = vld [vmem:[%s0 + $0x1568] sm:$0xff]
  %v694 = vld [vmem:[%s0 + $0x1570] sm:$0xff]
  %v695 = vld [vmem:[%s0 + $0x1578] sm:$0xff]
  %v696 = vld [vmem:[%s0 + $0x1580] sm:$0xff]
  %v697 = vld [vmem:[%s0 + $0x1588] sm:$0xff]
  %v698 = vld [vmem:[%s0 + $0x1590] sm:$0xff]
  %v699 = vld [vmem:[%s0 + $0x1598] sm:$0xff]
  %v700 = vld [vmem:[%s0 + $0x15a0] sm:$0xff]
  %v701 = vld [vmem:[%s0 + $0x15a8] sm:$0xff]
  %v702 = vld [vmem:[%s0 + $0x15b0] sm:$0xff]
  %v703 = vld [vmem:[%s0 + $0x15b8] sm:$0xff]
  %v704 = vld [vmem:[%s0 + $0x15c0] sm:$0xff]
  %v705 = vld [vmem:[%s0 + $0x15c8] sm:$0xff]
  %v706 = vld [vmem:[%s0 + $0x15d0] sm:$0xff]
  %v707 = vld [vmem:[%s0 + $0x15d8] sm:$0xff]
  %v708 = vld [vmem:[%s0 + $0x15e0] sm:$0xff]
  %v709 = vld [vmem:[%s0 + $0x15e8] sm:$0xff]
  %v710 = vld [vmem:[%s0 + $0x15f0] sm:$0xff]
  %v711 = vld [vmem:[%s0 + $0x15f8] sm:$0xff]
  %v712 = vld [vmem:[%s0 + $0x1600] sm:$0xff]
  %v713 = vld [vmem:[%s0 + $0x1608] sm:$0xff]
  %v714 = vld [vmem:[%s0 + $0x1610] sm:$0xff]
  %v715 = vld [vmem:[%s0 + $0x1618] sm:$0xff]
  %v716 = vld [vmem:[%s0 + $0x1620] sm:$0xff]
  %v717 = vld [vmem:[%s0 + $0x1628] sm:$0xff]
  %v718 = vld [vmem:[%s0 + $0x1630] sm:$0xff]
  %v719 = vld [vmem:[%s0 + $0x1638] sm:$0xff]
  %v720 = vld [vmem:[%s0 + $0x1640] sm:$0xff]
  %v721 = vld [vmem:[%s0 + $0x1648] sm:$0xff]
  %v722 = vld [vmem:[%s0 + $0x1650] sm:$0xff]
  %v723 = vld [vmem:[%s0 + $0x1658] sm:$0xff]
  %v724 = vld [vmem:[%s0 + $0x1660] sm:$0xff]
  %v725 = vld [vmem:[%s0 + $0x1668] sm:$0xff]
  %v726 = vld [vmem:[%s0 + $0x1670] sm:$0xff]
  %v727 = vld [vmem:[%s0 + $0x1678] sm:$0xff]
  %v728 = vld [vmem:[%s0 + $0x1680] sm:$0xff]
  %v729 = vld [vmem:[%s0 + $0x1688] sm:$0xff]
  %v730 = vld [vmem:[%s0 + $0x1690] sm:$0xff]
  %v731 = vld [vmem:[%s0 + $0x1698] sm:$0xff]
  %v732 = vld [vmem:[%s0 + $0x16a0] sm:$0xff]
  %v733 = vld [vmem:[%s0 + $0x16a8] sm:$0xff]
  %v734 = vld [vmem:[%s0 + $0x16b0] sm:$0xff]
  %v735 = vld [vmem:[%s0 + $0x16b8] sm:$0xff]
  %v736 = vld [vmem:[%s0 + $0x16c0] sm:$0xff]
  %v737 = vld [vmem:[%s0 + $0x16c8] sm:$0xff]
  %v738 = vld [vmem:[%s0 + $0x16d0] sm:$0xff]
  %v739 = vld [vmem:[%s0 + $0x16d8] sm:$0xff]
  %v740 = vld [vmem:[%s0 + $0x16e0] sm:$0xff]
  %v741 = vld [vmem:[%s0 + $0x16e8] sm:$0xff]
  %v742 = vld [vmem:[%s0 + $0x16f0] sm:$0xff]
  %v743 = vld [vmem:[%s0 + $0x16f8] sm:$0xff]
  %v744 = vld [vmem:[%s0 + $0x1700] sm:$0xff]
  %v745 = vld [vmem:[%s0 + $0x1708] sm:$0xff]
  %v746 = vld [vmem:[%s0 + $0x1710] sm:$0xff]
  %v747 = vld [vmem:[%s0 + $0x1718] sm:$0xff]
  %v748 = vld [vmem:[%s0 + $0x1720] sm:$0xff]
  %v749 = vld [vmem:[%s0 + $0x1728] sm:$0xff]
  %v750 = vld [vmem:[%s0 + $0x1730] sm:$0xff]
  %v751 = vld [vmem:[%s0 + $0x1738] sm:$0xff]
  %v752 = vld [vmem:[%s0 + $0x1740] sm:$0xff]
  %v753 = vld [vmem:[%s0 + $0x1748] sm:$0xff]
  %v754 = vld [vmem:[%s0 + $0x1750] sm:$0xff]
  %v755 = vld [vmem:[%s0 + $0x1758] sm:$0xff]
  %v756 = vld [vmem:[%s0 + $0x1760] sm:$0xff]
  %v757 = vld [vmem:[%s0 + $0x1768] sm:$0xff]
  %v758 = vld [vmem:[%s0 + $0x1770] sm:$0xff]
  %v759 = vld [vmem:[%s0 + $0x1778] sm:$0xff]
  %v760 = vld [vmem:[%s0 + $0x1780] sm:$0xff]
  %v761 = vld [vmem:[%s0 + $0x1788] sm:$0xff]
  %v762 = vld [vmem:[%s0 + $0x1790] sm:$0xff]
  %v763 = vld [vmem:[%s0 + $0x1798] sm:$0xff]
  %v764 = vld [vmem:[%s0 + $0x17a0] sm:$0xff]
  %v765 = vld [vmem:[%s0 + $0x17a8] sm:$0xff]
  %v766 = vld [vmem:[%s0 + $0x17b0] sm:$0xff]
  %v767 = vld [vmem:[%s0 + $0x17b8] sm:$0xff]
  %v768 = vld [vmem:[%s0 + $0x17c0] sm:$0xff]
  %v769 = vld [vmem:[%s0 + $0x17c8] sm:$0xff]
  %v770 = vld [vmem:[%s0 + $0x17d0] sm:$0xff]
  %v771 = vld [vmem:[%s0 + $0x17d8] sm:$0xff]
  %v772 = vld [vmem:[%s0 + $0x17e0] sm:$0xff]
  %v773 = vld [vmem:[%s0 + $0x17e8] sm:$0xff]
  %v774 = vld [vmem:[%s0 + $0x17f0] sm:$0xff]
  %v775 = vld [vmem:[%s0 + $0x17f8] sm:$0xff]
  %v776 = vld [vmem:[%s0 + $0x1800] sm:$0xff]
  %v777 = vld [vmem:[%s0 + $0x1808] sm:$0xff]
  %v778 = vld [vmem:[%s0 + $0x1810] sm:$0xff]
  %v779 = vld [vmem:[%s0 + $0x1818] sm:$0xff]
  %v780 = vld [vmem:[%s0 + $0x1820] sm:$0xff]
  %v781 = vld [vmem:[%s0 + $0x1828] sm:$0xff]
  %v782 = vld [vmem:[%s0 + $0x1830] sm:$0xff]
  %v783 = vld [vmem:[%s0 + $0x1838] sm:$0xff]
  %v784 = vld [vmem:[%s0 + $0x1840] sm:$0xff]
  %v785 = vld [vmem:[%s0 + $0x1848] sm:$0xff]
  %v786 = vld [vmem:[%s0 + $0x1850] sm:$0xff]
  %v787 = vld [vmem:[%s0 + $0x1858] sm:$0xff]
  %v788 = vld [vmem:[%s0 + $0x1860] sm:$0xff]
  %v789 = vld [vmem:[%s0 + $0x1868] sm:$0xff]
  %v790 = vld [vmem:[%s0 + $0x1870] sm:$0xff]
  %v791 = vld [vmem:[%s0 + $0x1878] sm:$0xff]
  %v792 = vld [vmem:[%s0 + $0x1880] sm:$0xff]
  %v793 = vld [vmem:[%s0 + $0x1888] sm:$0xff]
  %v794 = vld [vmem:[%s0 + $0x1890] sm:$0xff]
  %v795 = vld [vmem:[%s0 + $0x1898] sm:$0xff]
  %v796 = vld [vmem:[%s0 + $0x18a0] sm:$0xff]
  %v797 = vld [vmem:[%s0 + $0x18a8] sm:$0xff]
  %v798 = vld [vmem:[%s0 + $0x18b0] sm:$0xff]
  %v799 = vld [vmem:[%s0 + $0x18b8] sm:$0xff]
  %v800 = vld [vmem:[%s0 + $0x18c0] sm:$0xff]
  %v801 = vld [vmem:[%s0 + $0x18c8] sm:$0xff]
  %v802 = vld [vmem:[%s0 + $0x18d0] sm:$0xff]
  %v803 = vld [vmem:[%s0 + $0x18d8] sm:$0xff]
  %v804 = vld [vmem:[%s0 + $0x18e0] sm:$0xff]
  %v805 = vld [vmem:[%s0 + $0x18e8] sm:$0xff]
  %v806 = vld [vmem:[%s0 + $0x18f0] sm:$0xff]
  %v807 = vld [vmem:[%s0 + $0x18f8] sm:$0xff]
  %v808 = vld [vmem:[%s0 + $0x1900] sm:$0xff]
  %v809 = vld [vmem:[%s0 + $0x1908] sm:$0xff]
  %v810 = vld [vmem:[%s0 + $0x1910] sm:$0xff]
  %v811 = vld [vmem:[%s0 + $0x1918] sm:$0xff]
  %v812 = vld [vmem:[%s0 + $0x1920] sm:$0xff]
  %v813 = vld [vmem:[%s0 + $0x1928] sm:$0xff]
  %v814 = vld [vmem:[%s0 + $0x1930] sm:$0xff]
  %v815 = vld [vmem:[%s0 + $0x1938] sm:$0xff]
  %v816 = vld [vmem:[%s0 + $0x1940] sm:$0xff]
  %v817 = vld [vmem:[%s0 + $0x1948] sm:$0xff]
  %v818 = vld [vmem:[%s0 + $0x1950] sm:$0xff]
  %v819 = vld [vmem:[%s0 + $0x1958] sm:$0xff]
  %v820 = vld [vmem:[%s0 + $0x1960] sm:$0xff]
  %v821 = vld [vmem:[%s0 + $0x1968] sm:$0xff]
  %v822 = vld [vmem:[%s0 + $0x1970] sm:$0xff]
  %v823 = vld [vmem:[%s0 + $0x1978] sm:$0xff]
  %v824 = vld [vmem:[%s0 + $0x1980] sm:$0xff]
  %v825 = vld [vmem:[%s0 + $0x1988] sm:$0xff]
  %v826 = vld [vmem:[%s0 + $0x1990] sm:$0xff]
  %v827 = vld [vmem:[%s0 + $0x1998] sm:$0xff]
  %v828 = vld [vmem:[%s0 + $0x19a0] sm:$0xff]
  %v829 = vld [vmem:[%s0 + $0x19a8] sm:$0xff]
  %v830 = vld [vmem:[%s0 + $0x19b0] sm:$0xff]
  %v831 = vld [vmem:[%s0 + $0x19b8] sm:$0xff]
  %v832 = vld [vmem:[%s0 + $0x19c0] sm:$0xff]
  %v833 = vld [vmem:[%s0 + $0x19c8] sm:$0xff]
  %v834 = vld [vmem:[%s0 + $0x19d0] sm:$0xff]
  %v835 = vld [vmem:[%s0 + $0x19d8] sm:$0xff]
  %v836 = vld [vmem:[%s0 + $0x19e0] sm:$0xff]
  %v837 = vld [vmem:[%s0 + $0x19e8] sm:$0xff]
  %v838 = vld [vmem:[%s0 + $0x19f0] sm:$0xff]
  %v839 = vld [vmem:[%s0 + $0x19f8] sm:$0xff]
  %v840 = vld [vmem:[%s0 + $0x1a00] sm:$0xff]
  %v841 = vld [vmem:[%s0 + $0x1a08] sm:$0xff]
  %v842 = vld [vmem:[%s0 + $0x1a10] sm:$0xff]
  %v843 = vld [vmem:[%s0 + $0x1a18] sm:$0xff]
  %v844 = vld [vmem:[%s0 + $0x1a20] sm:$0xff]
  %v845 = vld [vmem:[%s0 + $0x1a28] sm:$0xff]
  %v846 = vld [vmem:[%s0 + $0x1a30] sm:$0xff]
  %v847 = vld [vmem:[%s0 + $0x1a38] sm:$0xff]
  %v848 = vld [vmem:[%s0 + $0x1a40] sm:$0xff]
  %v849 = vld [vmem:[%s0 + $0x1a48] sm:$0xff]
  %v850 = vld [vmem:[%s0 + $0x1a50] sm:$0xff]
  %v851 = vld [vmem:[%s0 + $0x1a58] sm:$0xff]
  %v852 = vld [vmem:[%s0 + $0x1a60] sm:$0xff]
  %v853 = vld [vmem:[%s0 + $0x1a68] sm:$0xff]
  %v854 = vld [vmem:[%s0 + $0x1a70] sm:$0xff]
  %v855 = vld [vmem:[%s0 + $0x1a78] sm:$0xff]
  %v856 = vld [vmem:[%s0 + $0x1a80] sm:$0xff]
  %v857 = vld [vmem:[%s0 + $0x1a88] sm:$0xff]
  %v858 = vld [vmem:[%s0 + $0x1a90] sm:$0xff]
  %v859 = vld [vmem:[%s0 + $0x1a98] sm:$0xff]
  %v860 = vld [vmem:[%s0 + $0x1aa0] sm:$0xff]
  %v861 = vld [vmem:[%s0 + $0x1aa8] sm:$0xff]
  %v862 = vld [vmem:[%s0 + $0x1ab0] sm:$0xff]
  %v863 = vld [vmem:[%s0 + $0x1ab8] sm:$0xff]
  %v864 = vld [vmem:[%s0 + $0x1ac0] sm:$0xff]
  %v865 = vld [vmem:[%s0 + $0x1ac8] sm:$0xff]
  %v866 = vld [vmem:[%s0 + $0x1ad0] sm:$0xff]
  %v867 = vld [vmem:[%s0 + $0x1ad8] sm:$0xff]
  %v868 = vld [vmem:[%s0 + $0x1ae0] sm:$0xff]
  %v869 = vld [vmem:[%s0 + $0x1ae8] sm:$0xff]
  %v870 = vld [vmem:[%s0 + $0x1af0] sm:$0xff]
  %v871 = vld [vmem:[%s0 + $0x1af8] sm:$0xff]
  %v872 = vld [vmem:[%s0 + $0x1b00] sm:$0xff]
  %v873 = vld [vmem:[%s0 + $0x1b08] sm:$0xff]
  %v874 = vld [vmem:[%s0 + $0x1b10] sm:$0xff]
  %v875 = vld [vmem:[%s0 + $0x1b18] sm:$0xff]
  %v876 = vld [vmem:[%s0 + $0x1b20] sm:$0xff]
  %v877 = vld [vmem:[%s0 + $0x1b28] sm:$0xff]
  %v878 = vld [vmem:[%s0 + $0x1b30] sm:$0xff]
  %v879 = vld [vmem:[%s0 + $0x1b38] sm:$0xff]
  %v880 = vld [vmem:[%s0 + $0x1b40] sm:$0xff]
  %v881 = vld [vmem:[%s0 + $0x1b48] sm:$0xff]
  %v882 = vld [vmem:[%s0 + $0x1b50] sm:$0xff]
  %v883 = vld [vmem:[%s0 + $0x1b58] sm:$0xff]
  %v884 = vld [vmem:[%s0 + $0x1b60] sm:$0xff]
  %v885 = vld [vmem:[%s0 + $0x1b68] sm:$0xff]
  %v886 = vld [vmem:[%s0 + $0x1b70] sm:$0xff]
  %v887 = vld [vmem:[%s0 + $0x1b78] sm:$0xff]
  %v888 = vld [vmem:[%s0 + $0x1b80] sm:$0xff]
  %v889 = vld [vmem:[%s0 + $0x1b88] sm:$0xff]
  %v890 = vld [vmem:[%s0 + $0x1b90] sm:$0xff]
  %v891 = vld [vmem:[%s0 + $0x1b98] sm:$0xff]
  %v892 = vld [vmem:[%s0 + $0x1ba0] sm:$0xff]
  %v893 = vld [vmem:[%s0 + $0x1ba8] sm:$0xff]
  %v894 = vld [vmem:[%s0 + $0x1bb0] sm:$0xff]
  %v895 = vld [vmem:[%s0 + $0x1bb8] sm:$0xff]
  %v896 = vld [vmem:[%s0 + $0x1bc0] sm:$0xff]
  %v897 = vld [vmem:[%s0 + $0x1bc8] sm:$0xff]
  %v898 = vld [vmem:[%s0 + $0x1bd0] sm:$0xff]
  %v899 = vld [vmem:[%s0 + $0x1bd8] sm:$0xff]
  %v900 = vld [vmem:[%s0 + $0x1be0] sm:$0xff]
  %v901 = vld [vmem:[%s0 + $0x1be8] sm:$0xff]
  %v902 = vld [vmem:[%s0 + $0x1bf0] sm:$0xff]
  %v903 = vld [vmem:[%s0 + $0x1bf8] sm:$0xff]
  %v904 = vld [vmem:[%s0 + $0x1c00] sm:$0xff]
  %v905 = vld [vmem:[%s0 + $0x1c08] sm:$0xff]
  %v906 = vld [vmem:[%s0 + $0x1c10] sm:$0xff]
  %v907 = vld [vmem:[%s0 + $0x1c18] sm:$0xff]
  %v908 = vld [vmem:[%s0 + $0x1c20] sm:$0xff]
  %v909 = vld [vmem:[%s0 + $0x1c28] sm:$0xff]
  %v910 = vld [vmem:[%s0 + $0x1c30] sm:$0xff]
  %v911 = vld [vmem:[%s0 + $0x1c38] sm:$0xff]
  %v912 = vld [vmem:[%s0 + $0x1c40] sm:$0xff]
  %v913 = vld [vmem:[%s0 + $0x1c48] sm:$0xff]
  %v914 = vld [vmem:[%s0 + $0x1c50] sm:$0xff]
  %v915 = vld [vmem:[%s0 + $0x1c58] sm:$0xff]
  %v916 = vld [vmem:[%s0 + $0x1c60] sm:$0xff]
  %v917 = vld [vmem:[%s0 + $0x1c68] sm:$0xff]
  %v918 = vld [vmem:[%s0 + $0x1c70] sm:$0xff]
  %v919 = vld [vmem:[%s0 + $0x1c78] sm:$0xff]
  %v920 = vld [vmem:[%s0 + $0x1c80] sm:$0xff]
  %v921 = vld [vmem:[%s0 + $0x1c88] sm:$0xff]
  %v922 = vld [vmem:[%s0 + $0x1c90] sm:$0xff]
  %v923 = vld [vmem:[%s0 + $0x1c98] sm:$0xff]
  %v924 = vld [vmem:[%s0 + $0x1ca0] sm:$0xff]
  %v925 = vld [vmem:[%s0 + $0x1ca8] sm:$0xff]
  %v926 = vld [vmem:[%s0 + $0x1cb0] sm:$0xff]
  %v927 = vld [vmem:[%s0 + $0x1cb8] sm:$0xff]
  %v928 = vld [vmem:[%s0 + $0x1cc0] sm:$0xff]
  %v929 = vld [vmem:[%s0 + $0x1cc8] sm:$0xff]
  %v930 = vld [vmem:[%s0 + $0x1cd0] sm:$0xff]
  %v931 = vld [vmem:[%s0 + $0x1cd8] sm:$0xff]
  %v932 = vld [vmem:[%s0 + $0x1ce0] sm:$0xff]
  %v933 = vld [vmem:[%s0 + $0x1ce8] sm:$0xff]
  %v934 = vld [vmem:[%s0 + $0x1cf0] sm:$0xff]
  %v935 = vld [vmem:[%s0 + $0x1cf8] sm:$0xff]
  %v936 = vld [vmem:[%s0 + $0x1d00] sm:$0xff]
  %v937 = vld [vmem:[%s0 + $0x1d08] sm:$0xff]
  %v938 = vld [vmem:[%s0 + $0x1d10] sm:$0xff]
  %v939 = vld [vmem:[%s0 + $0x1d18] sm:$0xff]
  %v940 = vld [vmem:[%s0 + $0x1d20] sm:$0xff]
  %v941 = vld [vmem:[%s0 + $0x1d28] sm:$0xff]
  %v942 = vld [vmem:[%s0 + $0x1d30] sm:$0xff]
  %v943 = vld [vmem:[%s0 + $0x1d38] sm:$0xff]
  %v944 = vld [vmem:[%s0 + $0x1d40] sm:$0xff]
  %v945 = vld [vmem:[%s0 + $0x1d48] sm:$0xff]
  %v946 = vld [vmem:[%s0 + $0x1d50] sm:$0xff]
  %v947 = vld [vmem:[%s0 + $0x1d58] sm:$0xff]
  %v948 = vld [vmem:[%s0 + $0x1d60] sm:$0xff]
  %v949 = vld [vmem:[%s0 + $0x1d68] sm:$0xff]
  %v950 = vld [vmem:[%s0 + $0x1d70] sm:$0xff]
  %v951 = vld [vmem:[%s0 + $0x1d78] sm:$0xff]
  %v952 = vld [vmem:[%s0 + $0x1d80] sm:$0xff]
  %v953 = vld [vmem:[%s0 + $0x1d88] sm:$0xff]
  %v954 = vld [vmem:[%s0 + $0x1d90] sm:$0xff]
  %v955 = vld [vmem:[%s0 + $0x1d98] sm:$0xff]
  %v956 = vld [vmem:[%s0 + $0x1da0] sm:$0xff]
  %v957 = vld [vmem:[%s0 + $0x1da8] sm:$0xff]
  %v958 = vld [vmem:[%s0 + $0x1db0] sm:$0xff]
  %v959 = vld [vmem:[%s0 + $0x1db8] sm:$0xff]
  %v960 = vld [vmem:[%s0 + $0x1dc0] sm:$0xff]
  %v961 = vld [vmem:[%s0 + $0x1dc8] sm:$0xff]
  %v962 = vld [vmem:[%s0 + $0x1dd0] sm:$0xff]
  %v963 = vld [vmem:[%s0 + $0x1dd8] sm:$0xff]
  %v964 = vld [vmem:[%s0 + $0x1de0] sm:$0xff]
  %v965 = vld [vmem:[%s0 + $0x1de8] sm:$0xff]
  %v966 = vld [vmem:[%s0 + $0x1df0] sm:$0xff]
  %v967 = vld [vmem:[%s0 + $0x1df8] sm:$0xff]
  %v968 = vld [vmem:[%s0 + $0x1e00] sm:$0xff]
  %v969 = vld [vmem:[%s0 + $0x1e08] sm:$0xff]
  %v970 = vld [vmem:[%s0 + $0x1e10] sm:$0xff]
  %v971 = vld [vmem:[%s0 + $0x1e18] sm:$0xff]
  %v972 = vld [vmem:[%s0 + $0x1e20] sm:$0xff]
  %v973 = vld [vmem:[%s0 + $0x1e28] sm:$0xff]
  %v974 = vld [vmem:[%s0 + $0x1e30] sm:$0xff]
  %v975 = vld [vmem:[%s0 + $0x1e38] sm:$0xff]
  %v976 = vld [vmem:[%s0 + $0x1e40] sm:$0xff]
  %v977 = vld [vmem:[%s0 + $0x1e48] sm:$0xff]
  %v978 = vld [vmem:[%s0 + $0x1e50] sm:$0xff]
  %v979 = vld [vmem:[%s0 + $0x1e58] sm:$0xff]
  %v980 = vld [vmem:[%s0 + $0x1e60] sm:$0xff]
  %v981 = vld [vmem:[%s0 + $0x1e68] sm:$0xff]
  %v982 = vld [vmem:[%s0 + $0x1e70] sm:$0xff]
  %v983 = vld [vmem:[%s0 + $0x1e78] sm:$0xff]
  %v984 = vld [vmem:[%s0 + $0x1e80] sm:$0xff]
  %v985 = vld [vmem:[%s0 + $0x1e88] sm:$0xff]
  %v986 = vld [vmem:[%s0 + $0x1e90] sm:$0xff]
  %v987 = vld [vmem:[%s0 + $0x1e98] sm:$0xff]
  %v988 = vld [vmem:[%s0 + $0x1ea0] sm:$0xff]
  %v989 = vld [vmem:[%s0 + $0x1ea8] sm:$0xff]
  %v990 = vld [vmem:[%s0 + $0x1eb0] sm:$0xff]
  %v991 = vld [vmem:[%s0 + $0x1eb8] sm:$0xff]
  %v992 = vld [vmem:[%s0 + $0x1ec0] sm:$0xff]
  %v993 = vld [vmem:[%s0 + $0x1ec8] sm:$0xff]
  %v994 = vld [vmem:[%s0 + $0x1ed0] sm:$0xff]
  %v995 = vld [vmem:[%s0 + $0x1ed8] sm:$0xff]
  %v996 = vld [vmem:[%s0 + $0x1ee0] sm:$0xff]
  %v997 = vld [vmem:[%s0 + $0x1ee8] sm:$0xff]
  %v998 = vld [vmem:[%s0 + $0x1ef0] sm:$0xff]
  %v999 = vld [vmem:[%s0 + $0x1ef8] sm:$0xff]
  %v1000 = vld [vmem:[%s0 + $0x1f00] sm:$0xff]
  %v1001 = vld [vmem:[%s0 + $0x1f08] sm:$0xff]
  %v1002 = vld [vmem:[%s0 + $0x1f10] sm:$0xff]
  %v1003 = vld [vmem:[%s0 + $0x1f18] sm:$0xff]
  %v1004 = vld [vmem:[%s0 + $0x1f20] sm:$0xff]
  %v1005 = vld [vmem:[%s0 + $0x1f28] sm:$0xff]
  %v1006 = vld [vmem:[%s0 + $0x1f30] sm:$0xff]
  %v1007 = vld [vmem:[%s0 + $0x1f38] sm:$0xff]
  %v1008 = vld [vmem:[%s0 + $0x1f40] sm:$0xff]
  %v1009 = vld [vmem:[%s0 + $0x1f48] sm:$0xff]
  %v1010 = vld [vmem:[%s0 + $0x1f50] sm:$0xff]
  %v1011 = vld [vmem:[%s0 + $0x1f58] sm:$0xff]
  %v1012 = vld [vmem:[%s0 + $0x1f60] sm:$0xff]
  %v1013 = vld [vmem:[%s0 + $0x1f68] sm:$0xff]
  %v1014 = vld [vmem:[%s0 + $0x1f70] sm:$0xff]
  %v1015 = vld [vmem:[%s0 + $0x1f78] sm:$0xff]
  %v1016 = vld [vmem:[%s0 + $0x1f80] sm:$0xff]
  %v1017 = vld [vmem:[%s0 + $0x1f88] sm:$0xff]
  %v1018 = vld [vmem:[%s0 + $0x1f90] sm:$0xff]
  %v1019 = vld [vmem:[%s0 + $0x1f98] sm:$0xff]
  %v1020 = vld [vmem:[%s0 + $0x1fa0] sm:$0xff]
  %v1021 = vld [vmem:[%s0 + $0x1fa8] sm:$0xff]
  %v1022 = vld [vmem:[%s0 + $0x1fb0] sm:$0xff]
  %v1023 = vld [vmem:[%s0 + $0x1fb8] sm:$0xff]
  %v1024 = vld [vmem:[%s0 + $0x1fc0] sm:$0xff]
  %v1025 = vld [vmem:[%s0 + $0x1fc8] sm:$0xff]
  %v1026 = vld [vmem:[%s0 + $0x1fd0] sm:$0xff]
  %v1027 = vld [vmem:[%s0 + $0x1fd8] sm:$0xff]
  %v1028 = vld [vmem:[%s0 + $0x1fe0] sm:$0xff]
  %v1029 = vld [vmem:[%s0 + $0x1fe8] sm:$0xff]
  %v1030 = vld [vmem:[%s0 + $0x1ff0] sm:$0xff]
  %v1031 = vld [vmem:[%s0 + $0x1ff8] sm:$0xff]
  %v1032 = vld [vmem:[%s0 + $0x2000] sm:$0xff]
  %v1033 = vld [vmem:[%s0 + $0x2008] sm:$0xff]
  %v1034 = vld [vmem:[%s0 + $0x2010] sm:$0xff]
  %v1035 = vld [vmem:[%s0 + $0x2018] sm:$0xff]
  %v1036 = vld [vmem:[%s0 + $0x2020] sm:$0xff]
  %v1037 = vld [vmem:[%s0 + $0x2028] sm:$0xff]
  %v1038 = vld [vmem:[%s0 + $0x2030] sm:$0xff]
  %v1039 = vld [vmem:[%s0 + $0x2038] sm:$0xff]
  %v1040 = vld [vmem:[%s0 + $0x2040] sm:$0xff]
  %v1041 = vld [vmem:[%s0 + $0x2048] sm:$0xff]
  %v1042 = vld [vmem:[%s0 + $0x2050] sm:$0xff]
  %v1043 = vld [vmem:[%s0 + $0x2058] sm:$0xff]
  %v1044 = vld [vmem:[%s0 + $0x2060] sm:$0xff]
  %v1045 = vld [vmem:[%s0 + $0x2068] sm:$0xff]
  %v1046 = vld [vmem:[%s0 + $0x2070] sm:$0xff]
  %v1047 = vld [vmem:[%s0 + $0x2078] sm:$0xff]
  %v1048 = vld [vmem:[%s0 + $0x2080] sm:$0xff]
  %v1049 = vld [vmem:[%s0 + $0x2088] sm:$0xff]
  %v1050 = vld [vmem:[%s0 + $0x2090] sm:$0xff]
  %v1051 = vld [vmem:[%s0 + $0x2098] sm:$0xff]
  %v1052 = vld [vmem:[%s0 + $0x20a0] sm:$0xff]
  %v1053 = vld [vmem:[%s0 + $0x20a8] sm:$0xff]
  %v1054 = vld [vmem:[%s0 + $0x20b0] sm:$0xff]
  %v1055 = vld [vmem:[%s0 + $0x20b8] sm:$0xff]
  %v1056 = vld [vmem:[%s0 + $0x20c0] sm:$0xff]
  %v1057 = vld [vmem:[%s0 + $0x20c8] sm:$0xff]
  %v1058 = vld [vmem:[%s0 + $0x20d0] sm:$0xff]
  %v1059 = vld [vmem:[%s0 + $0x20d8] sm:$0xff]
  %v1060 = vld [vmem:[%s0 + $0x20e0] sm:$0xff]
  %v1061 = vld [vmem:[%s0 + $0x20e8] sm:$0xff]
  %v1062 = vld [vmem:[%s0 + $0x20f0] sm:$0xff]
  %v1063 = vld [vmem:[%s0 + $0x20f8] sm:$0xff]
  %v1064 = vld [vmem:[%s0 + $0x2100] sm:$0xff]
  %v1065 = vld [vmem:[%s0 + $0x2108] sm:$0xff]
  %v1066 = vld [vmem:[%s0 + $0x2110] sm:$0xff]
  %v1067 = vld [vmem:[%s0 + $0x2118] sm:$0xff]
  %v1068 = vld [vmem:[%s0 + $0x2120] sm:$0xff]
  %v1069 = vld [vmem:[%s0 + $0x2128] sm:$0xff]
  %v1070 = vld [vmem:[%s0 + $0x2130] sm:$0xff]
  %v1071 = vld [vmem:[%s0 + $0x2138] sm:$0xff]
  %v1072 = vld [vmem:[%s0 + $0x2140] sm:$0xff]
  %v1073 = vld [vmem:[%s0 + $0x2148] sm:$0xff]
  %v1074 = vld [vmem:[%s0 + $0x2150] sm:$0xff]
  %v1075 = vld [vmem:[%s0 + $0x2158] sm:$0xff]
  %v1076 = vld [vmem:[%s0 + $0x2160] sm:$0xff]
  %v1077 = vld [vmem:[%s0 + $0x2168] sm:$0xff]
  %v1078 = vld [vmem:[%s0 + $0x2170] sm:$0xff]
  %v1079 = vld [vmem:[%s0 + $0x2178] sm:$0xff]
  %v1080 = vld [vmem:[%s0 + $0x2180] sm:$0xff]
  %v1081 = vld [vmem:[%s0 + $0x2188] sm:$0xff]
  %v1082 = vld [vmem:[%s0 + $0x2190] sm:$0xff]
  %v1083 = vld [vmem:[%s0 + $0x2198] sm:$0xff]
  %v1084 = vld [vmem:[%s0 + $0x21a0] sm:$0xff]
  %v1085 = vld [vmem:[%s0 + $0x21a8] sm:$0xff]
  %v1086 = vld [vmem:[%s0 + $0x21b0] sm:$0xff]
  %v1087 = vld [vmem:[%s0 + $0x21b8] sm:$0xff]
  %v1088 = vld [vmem:[%s0 + $0x21c0] sm:$0xff]
  %v1089 = vld [vmem:[%s0 + $0x21c8] sm:$0xff]
  %v1090 = vld [vmem:[%s0 + $0x21d0] sm:$0xff]
  %v1091 = vld [vmem:[%s0 + $0x21d8] sm:$0xff]
  %v1092 = vld [vmem:[%s0 + $0x21e0] sm:$0xff]
  %v1093 = vld [vmem:[%s0 + $0x21e8] sm:$0xff]
  %v1094 = vld [vmem:[%s0 + $0x21f0] sm:$0xff]
  %v1095 = vld [vmem:[%s0 + $0x21f8] sm:$0xff]
  %v1096 = vld [vmem:[%s0 + $0x2200] sm:$0xff]
  %v1097 = vld [vmem:[%s0 + $0x2208] sm:$0xff]
  %v1098 = vld [vmem:[%s0 + $0x2210] sm:$0xff]
  %v1099 = vld [vmem:[%s0 + $0x2218] sm:$0xff]
  %v1100 = vld [vmem:[%s0 + $0x2220] sm:$0xff]
  %v1101 = vld [vmem:[%s0 + $0x2228] sm:$0xff]
  %v1102 = vld [vmem:[%s0 + $0x2230] sm:$0xff]
  %v1103 = vld [vmem:[%s0 + $0x2238] sm:$0xff]
  %v1104 = vld [vmem:[%s0 + $0x2240] sm:$0xff]
  %v1105 = vld [vmem:[%s0 + $0x2248] sm:$0xff]
  %v1106 = vld [vmem:[%s0 + $0x2250] sm:$0xff]
  %v1107 = vld [vmem:[%s0 + $0x2258] sm:$0xff]
  %v1108 = vld [vmem:[%s0 + $0x2260] sm:$0xff]
  %v1109 = vld [vmem:[%s0 + $0x2268] sm:$0xff]
  %v1110 = vld [vmem:[%s0 + $0x2270] sm:$0xff]
  %v1111 = vld [vmem:[%s0 + $0x2278] sm:$0xff]
  %v1112 = vld [vmem:[%s0 + $0x2280] sm:$0xff]
  %v1113 = vld [vmem:[%s0 + $0x2288] sm:$0xff]
  %v1114 = vld [vmem:[%s0 + $0x2290] sm:$0xff]
  %v1115 = vld [vmem:[%s0 + $0x2298] sm:$0xff]
  %v1116 = vld [vmem:[%s0 + $0x22a0] sm:$0xff]
  %v1117 = vld [vmem:[%s0 + $0x22a8] sm:$0xff]
  %v1118 = vld [vmem:[%s0 + $0x22b0] sm:$0xff]
  %v1119 = vld [vmem:[%s0 + $0x22b8] sm:$0xff]
  %v1120 = vld [vmem:[%s0 + $0x22c0] sm:$0xff]
  %v1121 = vld [vmem:[%s0 + $0x22c8] sm:$0xff]
  %v1122 = vld [vmem:[%s0 + $0x22d0] sm:$0xff]
  %v1123 = vld [vmem:[%s0 + $0x22d8] sm:$0xff]
  %v1124 = vld [vmem:[%s0 + $0x22e0] sm:$0xff]
  %v1125 = vld [vmem:[%s0 + $0x22e8] sm:$0xff]
  %v1126 = vld [vmem:[%s0 + $0x22f0] sm:$0xff]
  %v1127 = vld [vmem:[%s0 + $0x22f8] sm:$0xff]
  %v1128 = vld [vmem:[%s0 + $0x2300] sm:$0xff]
  %v1129 = vld [vmem:[%s0 + $0x2308] sm:$0xff]
  %v1130 = vld [vmem:[%s0 + $0x2310] sm:$0xff]
  %v1131 = vld [vmem:[%s0 + $0x2318] sm:$0xff]
  %v1132 = vld [vmem:[%s0 + $0x2320] sm:$0xff]
  %v1133 = vld [vmem:[%s0 + $0x2328] sm:$0xff]
  %v1134 = vld [vmem:[%s0 + $0x2330] sm:$0xff]
  %v1135 = vld [vmem:[%s0 + $0x2338] sm:$0xff]
  %v1136 = vld [vmem:[%s0 + $0x2340] sm:$0xff]
  %v1137 = vld [vmem:[%s0 + $0x2348] sm:$0xff]
  %v1138 = vld [vmem:[%s0 + $0x2350] sm:$0xff]
  %v1139 = vld [vmem:[%s0 + $0x2358] sm:$0xff]
  %v1140 = vld [vmem:[%s0 + $0x2360] sm:$0xff]
  %v1141 = vld [vmem:[%s0 + $0x2368] sm:$0xff]
  %v1142 = vld [vmem:[%s0 + $0x2370] sm:$0xff]
  %v1143 = vld [vmem:[%s0 + $0x2378] sm:$0xff]
  %v1144 = vld [vmem:[%s0 + $0x2380] sm:$0xff]
  %v1145 = vld [vmem:[%s0 + $0x2388] sm:$0xff]
  %v1146 = vld [vmem:[%s0 + $0x2390] sm:$0xff]
  %v1147 = vld [vmem:[%s0 + $0x2398] sm:$0xff]
  %v1148 = vld [vmem:[%s0 + $0x23a0] sm:$0xff]
  %v1149 = vld [vmem:[%s0 + $0x23a8] sm:$0xff]
  %v1150 = vld [vmem:[%s0 + $0x23b0] sm:$0xff]
  %v1151 = vld [vmem:[%s0 + $0x23b8] sm:$0xff]
  %v1152 = vld [vmem:[%s0 + $0x23c0] sm:$0xff]
  %v1153 = vld [vmem:[%s0 + $0x23c8] sm:$0xff]
  %v1154 = vld [vmem:[%s0 + $0x23d0] sm:$0xff]
  %v1155 = vld [vmem:[%s0 + $0x23d8] sm:$0xff]
  %v1156 = vld [vmem:[%s0 + $0x23e0] sm:$0xff]
  %v1157 = vld [vmem:[%s0 + $0x23e8] sm:$0xff]
  %v1158 = vld [vmem:[%s0 + $0x23f0] sm:$0xff]
  %v1159 = vld [vmem:[%s0 + $0x23f8] sm:$0xff]
  %v1160 = vld [vmem:[%s0 + $0x2400] sm:$0xff]
  %v1161 = vld [vmem:[%s0 + $0x2408] sm:$0xff]
  %v1162 = vld [vmem:[%s0 + $0x2410] sm:$0xff]
  %v1163 = vld [vmem:[%s0 + $0x2418] sm:$0xff]
  %v1164 = vld [vmem:[%s0 + $0x2420] sm:$0xff]
  %v1165 = vld [vmem:[%s0 + $0x2428] sm:$0xff]
  %v1166 = vld [vmem:[%s0 + $0x2430] sm:$0xff]
  %v1167 = vld [vmem:[%s0 + $0x2438] sm:$0xff]
  %v1168 = vld [vmem:[%s0 + $0x2440] sm:$0xff]
  %v1169 = vld [vmem:[%s0 + $0x2448] sm:$0xff]
  %v1170 = vld [vmem:[%s0 + $0x2450] sm:$0xff]
  %v1171 = vld [vmem:[%s0 + $0x2458] sm:$0xff]
  %v1172 = vld [vmem:[%s0 + $0x2460] sm:$0xff]
  %v1173 = vld [vmem:[%s0 + $0x2468] sm:$0xff]
  %v1174 = vld [vmem:[%s0 + $0x2470] sm:$0xff]
  %v1175 = vld [vmem:[%s0 + $0x2478] sm:$0xff]
  %v1176 = vld [vmem:[%s0 + $0x2480] sm:$0xff]
  %v1177 = vld [vmem:[%s0 + $0x2488] sm:$0xff]
  %v1178 = vld [vmem:[%s0 + $0x2490] sm:$0xff]
  %v1179 = vld [vmem:[%s0 + $0x2498] sm:$0xff]
  %v1180 = vld [vmem:[%s0 + $0x24a0] sm:$0xff]
  %v1181 = vld [vmem:[%s0 + $0x24a8] sm:$0xff]
  %v1182 = vld [vmem:[%s0 + $0x24b0] sm:$0xff]
  %v1183 = vld [vmem:[%s0 + $0x24b8] sm:$0xff]
  %v1184 = vld [vmem:[%s0 + $0x24c0] sm:$0xff]
  %v1185 = vld [vmem:[%s0 + $0x24c8] sm:$0xff]
  %v1186 = vld [vmem:[%s0 + $0x24d0] sm:$0xff]
  %v1187 = vld [vmem:[%s0 + $0x24d8] sm:$0xff]
  %v1188 = vld [vmem:[%s0 + $0x24e0] sm:$0xff]
  %v1189 = vld [vmem:[%s0 + $0x24e8] sm:$0xff]
  %v1190 = vld [vmem:[%s0 + $0x24f0] sm:$0xff]
  %v1191 = vld [vmem:[%s0 + $0x24f8] sm:$0xff]
  %v1192 = vld [vmem:[%s0 + $0x2500] sm:$0xff]
  %v1193 = vld [vmem:[%s0 + $0x2508] sm:$0xff]
  %v1194 = vld [vmem:[%s0 + $0x2510] sm:$0xff]
  %v1195 = vld [vmem:[%s0 + $0x2518] sm:$0xff]
  %v1196 = vld [vmem:[%s0 + $0x2520] sm:$0xff]
  %v1197 = vld [vmem:[%s0 + $0x2528] sm:$0xff]
  %v1198 = vld [vmem:[%s0 + $0x2530] sm:$0xff]
  %v1199 = vld [vmem:[%s0 + $0x2538] sm:$0xff]
  %v1200 = vld [vmem:[%s0 + $0x2540] sm:$0xff]
  %v1201 = vld [vmem:[%s0 + $0x2548] sm:$0xff]
  %v1202 = vld [vmem:[%s0 + $0x2550] sm:$0xff]
  %v1203 = vld [vmem:[%s0 + $0x2558] sm:$0xff]
  %v1204 = vld [vmem:[%s0 + $0x2560] sm:$0xff]
  %v1205 = vld [vmem:[%s0 + $0x2568] sm:$0xff]
  %v1206 = vld [vmem:[%s0 + $0x2570] sm:$0xff]
  %v1207 = vld [vmem:[%s0 + $0x2578] sm:$0xff]
  %v1208 = vld [vmem:[%s0 + $0x2580] sm:$0xff]
  %v1209 = vld [vmem:[%s0 + $0x2588] sm:$0xff]
  %v1210 = vld [vmem:[%s0 + $0x2590] sm:$0xff]
  %v1211 = vld [vmem:[%s0 + $0x2598] sm:$0xff]
  %v1212 = vld [vmem:[%s0 + $0x25a0] sm:$0xff]
  %v1213 = vld [vmem:[%s0 + $0x25a8] sm:$0xff]
  %v1214 = vld [vmem:[%s0 + $0x25b0] sm:$0xff]
  %v1215 = vld [vmem:[%s0 + $0x25b8] sm:$0xff]
  %v1216 = vld [vmem:[%s0 + $0x25c0] sm:$0xff]
  %v1217 = vld [vmem:[%s0 + $0x25c8] sm:$0xff]
  %v1218 = vld [vmem:[%s0 + $0x25d0] sm:$0xff]
  %v1219 = vld [vmem:[%s0 + $0x25d8] sm:$0xff]
  %v1220 = vld [vmem:[%s0 + $0x25e0] sm:$0xff]
  %v1221 = vld [vmem:[%s0 + $0x25e8] sm:$0xff]
  %v1222 = vld [vmem:[%s0 + $0x25f0] sm:$0xff]
  %v1223 = vld [vmem:[%s0 + $0x25f8] sm:$0xff]
  %v1224 = vld [vmem:[%s0 + $0x2600] sm:$0xff]
  %v1225 = vld [vmem:[%s0 + $0x2608] sm:$0xff]
  %v1226 = vld [vmem:[%s0 + $0x2610] sm:$0xff]
  %v1227 = vld [vmem:[%s0 + $0x2618] sm:$0xff]
  %v1228 = vld [vmem:[%s0 + $0x2620] sm:$0xff]
  %v1229 = vld [vmem:[%s0 + $0x2628] sm:$0xff]
  %v1230 = vld [vmem:[%s0 + $0x2630] sm:$0xff]
  %v1231 = vld [vmem:[%s0 + $0x2638] sm:$0xff]
  %v1232 = vld [vmem:[%s0 + $0x2640] sm:$0xff]
  %v1233 = vld [vmem:[%s0 + $0x2648] sm:$0xff]
  %v1234 = vld [vmem:[%s0 + $0x2650] sm:$0xff]
  %v1235 = vld [vmem:[%s0 + $0x2658] sm:$0xff]
  %v1236 = vld [vmem:[%s0 + $0x2660] sm:$0xff]
  %v1237 = vld [vmem:[%s0 + $0x2668] sm:$0xff]
  %v1238 = vld [vmem:[%s0 + $0x2670] sm:$0xff]
  %v1239 = vld [vmem:[%s0 + $0x2678] sm:$0xff]
  %v1240 = vld [vmem:[%s0 + $0x2680] sm:$0xff]
  %v1241 = vld [vmem:[%s0 + $0x2688] sm:$0xff]
  %v1242 = vld [vmem:[%s0 + $0x2690] sm:$0xff]
  %v1243 = vld [vmem:[%s0 + $0x2698] sm:$0xff]
  %v1244 = vld [vmem:[%s0 + $0x26a0] sm:$0xff]
  %v1245 = vld [vmem:[%s0 + $0x26a8] sm:$0xff]
  %v1246 = vld [vmem:[%s0 + $0x26b0] sm:$0xff]
  %v1247 = vld [vmem:[%s0 + $0x26b8] sm:$0xff]
  %v1248 = vld [vmem:[%s0 + $0x26c0] sm:$0xff]
  %v1249 = vld [vmem:[%s0 + $0x26c8] sm:$0xff]
  %v1250 = vld [vmem:[%s0 + $0x26d0] sm:$0xff]
  %v1251 = vld [vmem:[%s0 + $0x26d8] sm:$0xff]
  %v1252 = vld [vmem:[%s0 + $0x26e0] sm:$0xff]
  %v1253 = vld [vmem:[%s0 + $0x26e8] sm:$0xff]
  %v1254 = vld [vmem:[%s0 + $0x26f0] sm:$0xff]
  %v1255 = vld [vmem:[%s0 + $0x26f8] sm:$0xff]
  %v1256 = vld [vmem:[%s0 + $0x2700] sm:$0xff]
  %v1257 = vld [vmem:[%s0 + $0x2708] sm:$0xff]
  %v1258 = vld [vmem:[%s0 + $0x2710] sm:$0xff]
  %v1259 = vld [vmem:[%s0 + $0x2718] sm:$0xff]
  %v1260 = vld [vmem:[%s0 + $0x2720] sm:$0xff]
  %v1261 = vld [vmem:[%s0 + $0x2728] sm:$0xff]
  %v1262 = vld [vmem:[%s0 + $0x2730] sm:$0xff]
  %v1263 = vld [vmem:[%s0 + $0x2738] sm:$0xff]
  %v1264 = vld [vmem:[%s0 + $0x2740] sm:$0xff]
  %v1265 = vld [vmem:[%s0 + $0x2748] sm:$0xff]
  %v1266 = vld [vmem:[%s0 + $0x2750] sm:$0xff]
  %v1267 = vld [vmem:[%s0 + $0x2758] sm:$0xff]
  %v1268 = vld [vmem:[%s0 + $0x2760] sm:$0xff]
  %v1269 = vld [vmem:[%s0 + $0x2768] sm:$0xff]
  %v1270 = vld [vmem:[%s0 + $0x2770] sm:$0xff]
  %v1271 = vld [vmem:[%s0 + $0x2778] sm:$0xff]
  %v1272 = vld [vmem:[%s0 + $0x2780] sm:$0xff]
  %v1273 = vld [vmem:[%s0 + $0x2788] sm:$0xff]
  %v1274 = vld [vmem:[%s0 + $0x2790] sm:$0xff]
  %v1275 = vld [vmem:[%s0 + $0x2798] sm:$0xff]
  %v1276 = vld [vmem:[%s0 + $0x27a0] sm:$0xff]
  %v1277 = vld [vmem:[%s0 + $0x27a8] sm:$0xff]
  %v1278 = vld [vmem:[%s0 + $0x27b0] sm:$0xff]
  %v1279 = vld [vmem:[%s0 + $0x27b8] sm:$0xff]
  %v1280 = vld [vmem:[%s0 + $0x27c0] sm:$0xff]
  %v1281 = vld [vmem:[%s0 + $0x27c8] sm:$0xff]
  %v1282 = vld [vmem:[%s0 + $0x27d0] sm:$0xff]
  %v1283 = vld [vmem:[%s0 + $0x27d8] sm:$0xff]
  %v1284 = vld [vmem:[%s0 + $0x27e0] sm:$0xff]
  %v1285 = vld [vmem:[%s0 + $0x27e8] sm:$0xff]
  %v1286 = vld [vmem:[%s0 + $0x27f0] sm:$0xff]
  %v1287 = vld [vmem:[%s0 + $0x27f8] sm:$0xff]
  %v1288 = vld [vmem:[%s0 + $0x2800] sm:$0xff]
  %v1289 = vld [vmem:[%s0 + $0x2808] sm:$0xff]
  %v1290 = vld [vmem:[%s0 + $0x2810] sm:$0xff]
  %v1291 = vld [vmem:[%s0 + $0x2818] sm:$0xff]
  %v1292 = vld [vmem:[%s0 + $0x2820] sm:$0xff]
  %v1293 = vld [vmem:[%s0 + $0x2828] sm:$0xff]
  %v1294 = vld [vmem:[%s0 + $0x2830] sm:$0xff]
  %v1295 = vld [vmem:[%s0 + $0x2838] sm:$0xff]
  %v1296 = vld [vmem:[%s0 + $0x2840] sm:$0xff]
  %v1297 = vld [vmem:[%s0 + $0x2848] sm:$0xff]
  %v1298 = vld [vmem:[%s0 + $0x2850] sm:$0xff]
  %v1299 = vld [vmem:[%s0 + $0x2858] sm:$0xff]
  %v1300 = vld [vmem:[%s0 + $0x2860] sm:$0xff]
  %v1301 = vld [vmem:[%s0 + $0x2868] sm:$0xff]
  %v1302 = vld [vmem:[%s0 + $0x2870] sm:$0xff]
  %v1303 = vld [vmem:[%s0 + $0x2878] sm:$0xff]
  %v1304 = vld [vmem:[%s0 + $0x2880] sm:$0xff]
  %v1305 = vld [vmem:[%s0 + $0x2888] sm:$0xff]
  %v1306 = vld [vmem:[%s0 + $0x2890] sm:$0xff]
  %v1307 = vld [vmem:[%s0 + $0x2898] sm:$0xff]
  %v1308 = vld [vmem:[%s0 + $0x28a0] sm:$0xff]
  %v1309 = vld [vmem:[%s0 + $0x28a8] sm:$0xff]
  %v1310 = vld [vmem:[%s0 + $0x28b0] sm:$0xff]
  %v1311 = vld [vmem:[%s0 + $0x28b8] sm:$0xff]
  %v1312 = vld [vmem:[%s0 + $0x28c0] sm:$0xff]
  %v1313 = vld [vmem:[%s0 + $0x28c8] sm:$0xff]
  %v1314 = vld [vmem:[%s0 + $0x28d0] sm:$0xff]
  %v1315 = vld [vmem:[%s0 + $0x28d8] sm:$0xff]
  %v1316 = vld [vmem:[%s0 + $0x28e0] sm:$0xff]
  %v1317 = vld [vmem:[%s0 + $0x28e8] sm:$0xff]
  %v1318 = vld [vmem:[%s0 + $0x28f0] sm:$0xff]
  %v1319 = vld [vmem:[%s0 + $0x28f8] sm:$0xff]
  %v1320 = vld [vmem:[%s0 + $0x2900] sm:$0xff]
  %v1321 = vld [vmem:[%s0 + $0x2908] sm:$0xff]
  %v1322 = vld [vmem:[%s0 + $0x2910] sm:$0xff]
  %v1323 = vld [vmem:[%s0 + $0x2918] sm:$0xff]
  %v1324 = vld [vmem:[%s0 + $0x2920] sm:$0xff]
  %v1325 = vld [vmem:[%s0 + $0x2928] sm:$0xff]
  %v1326 = vld [vmem:[%s0 + $0x2930] sm:$0xff]
  %v1327 = vld [vmem:[%s0 + $0x2938] sm:$0xff]
  %v1328 = vld [vmem:[%s0 + $0x2940] sm:$0xff]
  %v1329 = vld [vmem:[%s0 + $0x2948] sm:$0xff]
  %v1330 = vld [vmem:[%s0 + $0x2950] sm:$0xff]
  %v1331 = vld [vmem:[%s0 + $0x2958] sm:$0xff]
  %v1332 = vld [vmem:[%s0 + $0x2960] sm:$0xff]
  %v1333 = vld [vmem:[%s0 + $0x2968] sm:$0xff]
  %v1334 = vld [vmem:[%s0 + $0x2970] sm:$0xff]
  %v1335 = vld [vmem:[%s0 + $0x2978] sm:$0xff]
  %v1336 = vld [vmem:[%s0 + $0x2980] sm:$0xff]
  %v1337 = vld [vmem:[%s0 + $0x2988] sm:$0xff]
  %v1338 = vld [vmem:[%s0 + $0x2990] sm:$0xff]
  %v1339 = vld [vmem:[%s0 + $0x2998] sm:$0xff]
  %v1340 = vld [vmem:[%s0 + $0x29a0] sm:$0xff]
  %v1341 = vld [vmem:[%s0 + $0x29a8] sm:$0xff]
  %v1342 = vld [vmem:[%s0 + $0x29b0] sm:$0xff]
  %v1343 = vld [vmem:[%s0 + $0x29b8] sm:$0xff]
  %v1344 = vld [vmem:[%s0 + $0x29c0] sm:$0xff]
  %v1345 = vld [vmem:[%s0 + $0x29c8] sm:$0xff]
  %v1346 = vld [vmem:[%s0 + $0x29d0] sm:$0xff]
  %v1347 = vld [vmem:[%s0 + $0x29d8] sm:$0xff]
  %v1348 = vld [vmem:[%s0 + $0x29e0] sm:$0xff]
  %v1349 = vld [vmem:[%s0 + $0x29e8] sm:$0xff]
  %v1350 = vld [vmem:[%s0 + $0x29f0] sm:$0xff]
  %v1351 = vld [vmem:[%s0 + $0x29f8] sm:$0xff]
  %v1352 = vld [vmem:[%s0 + $0x2a00] sm:$0xff]
  %v1353 = vld [vmem:[%s0 + $0x2a08] sm:$0xff]
  %v1354 = vld [vmem:[%s0 + $0x2a10] sm:$0xff]
  %v1355 = vld [vmem:[%s0 + $0x2a18] sm:$0xff]
  %v1356 = vld [vmem:[%s0 + $0x2a20] sm:$0xff]
  %v1357 = vld [vmem:[%s0 + $0x2a28] sm:$0xff]
  %v1358 = vld [vmem:[%s0 + $0x2a30] sm:$0xff]
  %v1359 = vld [vmem:[%s0 + $0x2a38] sm:$0xff]
  %v1360 = vld [vmem:[%s0 + $0x2a40] sm:$0xff]
  %v1361 = vld [vmem:[%s0 + $0x2a48] sm:$0xff]
  %v1362 = vld [vmem:[%s0 + $0x2a50] sm:$0xff]
  %v1363 = vld [vmem:[%s0 + $0x2a58] sm:$0xff]
  %v1364 = vld [vmem:[%s0 + $0x2a60] sm:$0xff]
  %v1365 = vld [vmem:[%s0 + $0x2a68] sm:$0xff]
  %v1366 = vld [vmem:[%s0 + $0x2a70] sm:$0xff]
  %v1367 = vld [vmem:[%s0 + $0x2a78] sm:$0xff]
  %v1368 = vld [vmem:[%s0 + $0x2a80] sm:$0xff]
  %v1369 = vld [vmem:[%s0 + $0x2a88] sm:$0xff]
  %v1370 = vld [vmem:[%s0 + $0x2a90] sm:$0xff]
  %v1371 = vld [vmem:[%s0 + $0x2a98] sm:$0xff]
  %v1372 = vld [vmem:[%s0 + $0x2aa0] sm:$0xff]
  %v1373 = vld [vmem:[%s0 + $0x2aa8] sm:$0xff]
  %v1374 = vld [vmem:[%s0 + $0x2ab0] sm:$0xff]
  %v1375 = vld [vmem:[%s0 + $0x2ab8] sm:$0xff]
  %v1376 = vld [vmem:[%s0 + $0x2ac0] sm:$0xff]
  %v1377 = vld [vmem:[%s0 + $0x2ac8] sm:$0xff]
  %v1378 = vld [vmem:[%s0 + $0x2ad0] sm:$0xff]
  %v1379 = vld [vmem:[%s0 + $0x2ad8] sm:$0xff]
  %v1380 = vld [vmem:[%s0 + $0x2ae0] sm:$0xff]
  %v1381 = vld [vmem:[%s0 + $0x2ae8] sm:$0xff]
  %v1382 = vld [vmem:[%s0 + $0x2af0] sm:$0xff]
  %v1383 = vld [vmem:[%s0 + $0x2af8] sm:$0xff]
  %v1384 = vld [vmem:[%s0 + $0x2b00] sm:$0xff]
  %v1385 = vld [vmem:[%s0 + $0x2b08] sm:$0xff]
  %v1386 = vld [vmem:[%s0 + $0x2b10] sm:$0xff]
  %v1387 = vld [vmem:[%s0 + $0x2b18] sm:$0xff]
  %v1388 = vld [vmem:[%s0 + $0x2b20] sm:$0xff]
  %v1389 = vld [vmem:[%s0 + $0x2b28] sm:$0xff]
  %v1390 = vld [vmem:[%s0 + $0x2b30] sm:$0xff]
  %v1391 = vld [vmem:[%s0 + $0x2b38] sm:$0xff]
  %v1392 = vld [vmem:[%s0 + $0x2b40] sm:$0xff]
  %v1393 = vld [vmem:[%s0 + $0x2b48] sm:$0xff]
  %v1394 = vld [vmem:[%s0 + $0x2b50] sm:$0xff]
  %v1395 = vld [vmem:[%s0 + $0x2b58] sm:$0xff]
  %v1396 = vld [vmem:[%s0 + $0x2b60] sm:$0xff]
  %v1397 = vld [vmem:[%s0 + $0x2b68] sm:$0xff]
  %v1398 = vld [vmem:[%s0 + $0x2b70] sm:$0xff]
  %v1399 = vld [vmem:[%s0 + $0x2b78] sm:$0xff]
  %v1400 = vld [vmem:[%s0 + $0x2b80] sm:$0xff]
  %v1401 = vld [vmem:[%s0 + $0x2b88] sm:$0xff]
  %v1402 = vld [vmem:[%s0 + $0x2b90] sm:$0xff]
  %v1403 = vld [vmem:[%s0 + $0x2b98] sm:$0xff]
  %v1404 = vld [vmem:[%s0 + $0x2ba0] sm:$0xff]
  %v1405 = vld [vmem:[%s0 + $0x2ba8] sm:$0xff]
  %v1406 = vld [vmem:[%s0 + $0x2bb0] sm:$0xff]
  %v1407 = vld [vmem:[%s0 + $0x2bb8] sm:$0xff]
  %v1408 = vld [vmem:[%s0 + $0x2bc0] sm:$0xff]
  %v1409 = vld [vmem:[%s0 + $0x2bc8] sm:$0xff]
  %v1410 = vld [vmem:[%s0 + $0x2bd0] sm:$0xff]
  %v1411 = vld [vmem:[%s0 + $0x2bd8] sm:$0xff]
  %v1412 = vld [vmem:[%s0 + $0x2be0] sm:$0xff]
  %v1413 = vld [vmem:[%s0 + $0x2be8] sm:$0xff]
  %v1414 = vld [vmem:[%s0 + $0x2bf0] sm:$0xff]
  %v1415 = vld [vmem:[%s0 + $0x2bf8] sm:$0xff]
  %v1416 = vmul.f32 %v8, %v8
  %v1417 = vmul.f32 %v9, %v9
  %v1418 = vmul.f32 %v10, %v10
  %v1419 = vmul.f32 %v11, %v11
  %v1420 = vmul.f32 %v12, %v12
  %v1421 = vmul.f32 %v13, %v13
  %v1422 = vmul.f32 %v14, %v14
  %v1423 = vmul.f32 %v15, %v15
  %v1424 = vmul.f32 %v16, %v16
  %v1425 = vmul.f32 %v17, %v17
  %v1426 = vmul.f32 %v18, %v18
  %v1427 = vmul.f32 %v19, %v19
  %v1428 = vmul.f32 %v20, %v20
  %v1429 = vmul.f32 %v21, %v21
  %v1430 = vmul.f32 %v22, %v22
  %v1431 = vmul.f32 %v23, %v23
  %v1432 = vmul.f32 %v24, %v24
  %v1433 = vmul.f32 %v25, %v25
  %v1434 = vmul.f32 %v26, %v26
  %v1435 = vmul.f32 %v27, %v27
  %v1436 = vmul.f32 %v28, %v28
  %v1437 = vmul.f32 %v29, %v29
  %v1438 = vmul.f32 %v30, %v30
  %v1439 = vmul.f32 %v31, %v31
  %v1440 = vmul.f32 %v32, %v32
  %v1441 = vmul.f32 %v33, %v33
  %v1442 = vmul.f32 %v34, %v34
  %v1443 = vmul.f32 %v35, %v35
  %v1444 = vmul.f32 %v36, %v36
  %v1445 = vmul.f32 %v37, %v37
  %v1446 = vmul.f32 %v38, %v38
  %v1447 = vmul.f32 %v39, %v39
  %v1448 = vmul.f32 %v40, %v40
  %v1449 = vmul.f32 %v41, %v41
  %v1450 = vmul.f32 %v42, %v42
  %v1451 = vmul.f32 %v43, %v43
  %v1452 = vmul.f32 %v44, %v44
  %v1453 = vmul.f32 %v45, %v45
  %v1454 = vmul.f32 %v46, %v46
  %v1455 = vmul.f32 %v47, %v47
  %v1456 = vmul.f32 %v48, %v48
  %v1457 = vmul.f32 %v49, %v49
  %v1458 = vmul.f32 %v50, %v50
  %v1459 = vmul.f32 %v51, %v51
  %v1460 = vmul.f32 %v52, %v52
  %v1461 = vmul.f32 %v53, %v53
  %v1462 = vmul.f32 %v54, %v54
  %v1463 = vmul.f32 %v55, %v55
  %v1464 = vmul.f32 %v56, %v56
  %v1465 = vmul.f32 %v57, %v57
  %v1466 = vmul.f32 %v58, %v58
  %v1467 = vmul.f32 %v59, %v59
  %v1468 = vmul.f32 %v60, %v60
  %v1469 = vmul.f32 %v61, %v61
  %v1470 = vmul.f32 %v62, %v62
  %v1471 = vmul.f32 %v63, %v63
  %v1472 = vmul.f32 %v64, %v64
  %v1473 = vmul.f32 %v65, %v65
  %v1474 = vmul.f32 %v66, %v66
  %v1475 = vmul.f32 %v67, %v67
  %v1476 = vmul.f32 %v68, %v68
  %v1477 = vmul.f32 %v69, %v69
  %v1478 = vmul.f32 %v70, %v70
  %v1479 = vmul.f32 %v71, %v71
  %v1480 = vmul.f32 %v72, %v72
  %v1481 = vmul.f32 %v73, %v73
  %v1482 = vmul.f32 %v74, %v74
  %v1483 = vmul.f32 %v75, %v75
  %v1484 = vmul.f32 %v76, %v76
  %v1485 = vmul.f32 %v77, %v77
  %v1486 = vmul.f32 %v78, %v78
  %v1487 = vmul.f32 %v79, %v79
  %v1488 = vmul.f32 %v80, %v80
  %v1489 = vmul.f32 %v81, %v81
  %v1490 = vmul.f32 %v82, %v82
  %v1491 = vmul.f32 %v83, %v83
  %v1492 = vmul.f32 %v84, %v84
  %v1493 = vmul.f32 %v85, %v85
  %v1494 = vmul.f32 %v86, %v86
  %v1495 = vmul.f32 %v87, %v87
  %v1496 = vmul.f32 %v88, %v88
  %v1497 = vmul.f32 %v89, %v89
  %v1498 = vmul.f32 %v90, %v90
  %v1499 = vmul.f32 %v91, %v91
  %v1500 = vmul.f32 %v92, %v92
  %v1501 = vmul.f32 %v93, %v93
  %v1502 = vmul.f32 %v94, %v94
  %v1503 = vmul.f32 %v95, %v95
  %v1504 = vmul.f32 %v96, %v96
  %v1505 = vmul.f32 %v97, %v97
  %v1506 = vmul.f32 %v98, %v98
  %v1507 = vmul.f32 %v99, %v99
  %v1508 = vmul.f32 %v100, %v100
  %v1509 = vmul.f32 %v101, %v101
  %v1510 = vmul.f32 %v102, %v102
  %v1511 = vmul.f32 %v103, %v103
  %v1512 = vmul.f32 %v104, %v104
  %v1513 = vmul.f32 %v105, %v105
  %v1514 = vmul.f32 %v106, %v106
  %v1515 = vmul.f32 %v107, %v107
  %v1516 = vmul.f32 %v108, %v108
  %v1517 = vmul.f32 %v109, %v109
  %v1518 = vmul.f32 %v110, %v110
  %v1519 = vmul.f32 %v111, %v111
  %v1520 = vmul.f32 %v112, %v112
  %v1521 = vmul.f32 %v113, %v113
  %v1522 = vmul.f32 %v114, %v114
  %v1523 = vmul.f32 %v115, %v115
  %v1524 = vmul.f32 %v116, %v116
  %v1525 = vmul.f32 %v117, %v117
  %v1526 = vmul.f32 %v118, %v118
  %v1527 = vmul.f32 %v119, %v119
  %v1528 = vmul.f32 %v120, %v120
  %v1529 = vmul.f32 %v121, %v121
  %v1530 = vmul.f32 %v122, %v122
  %v1531 = vmul.f32 %v123, %v123
  %v1532 = vmul.f32 %v124, %v124
  %v1533 = vmul.f32 %v125, %v125
  %v1534 = vmul.f32 %v126, %v126
  %v1535 = vmul.f32 %v127, %v127
  %v1536 = vmul.f32 %v128, %v128
  %v1537 = vmul.f32 %v129, %v129
  %v1538 = vmul.f32 %v130, %v130
  %v1539 = vmul.f32 %v131, %v131
  %v1540 = vmul.f32 %v132, %v132
  %v1541 = vmul.f32 %v133, %v133
  %v1542 = vmul.f32 %v134, %v134
  %v1543 = vmul.f32 %v135, %v135
  %v1544 = vmul.f32 %v136, %v136
  %v1545 = vmul.f32 %v137, %v137
  %v1546 = vmul.f32 %v138, %v138
  %v1547 = vmul.f32 %v139, %v139
  %v1548 = vmul.f32 %v140, %v140
  %v1549 = vmul.f32 %v141, %v141
  %v1550 = vmul.f32 %v142, %v142
  %v1551 = vmul.f32 %v143, %v143
  %v1552 = vmul.f32 %v144, %v144
  %v1553 = vmul.f32 %v145, %v145
  %v1554 = vmul.f32 %v146, %v146
  %v1555 = vmul.f32 %v147, %v147
  %v1556 = vmul.f32 %v148, %v148
  %v1557 = vmul.f32 %v149, %v149
  %v1558 = vmul.f32 %v150, %v150
  %v1559 = vmul.f32 %v151, %v151
  %v1560 = vmul.f32 %v152, %v152
  %v1561 = vmul.f32 %v153, %v153
  %v1562 = vmul.f32 %v154, %v154
  %v1563 = vmul.f32 %v155, %v155
  %v1564 = vmul.f32 %v156, %v156
  %v1565 = vmul.f32 %v157, %v157
  %v1566 = vmul.f32 %v158, %v158
  %v1567 = vmul.f32 %v159, %v159
  %v1568 = vmul.f32 %v160, %v160
  %v1569 = vmul.f32 %v161, %v161
  %v1570 = vmul.f32 %v162, %v162
  %v1571 = vmul.f32 %v163, %v163
  %v1572 = vmul.f32 %v164, %v164
  %v1573 = vmul.f32 %v165, %v165
  %v1574 = vmul.f32 %v166, %v166
  %v1575 = vmul.f32 %v167, %v167
  %v1576 = vmul.f32 %v168, %v168
  %v1577 = vmul.f32 %v169, %v169
  %v1578 = vmul.f32 %v170, %v170
  %v1579 = vmul.f32 %v171, %v171
  %v1580 = vmul.f32 %v172, %v172
  %v1581 = vmul.f32 %v173, %v173
  %v1582 = vmul.f32 %v174, %v174
  %v1583 = vmul.f32 %v175, %v175
  %v1584 = vmul.f32 %v176, %v176
  %v1585 = vmul.f32 %v177, %v177
  %v1586 = vmul.f32 %v178, %v178
  %v1587 = vmul.f32 %v179, %v179
  %v1588 = vmul.f32 %v180, %v180
  %v1589 = vmul.f32 %v181, %v181
  %v1590 = vmul.f32 %v182, %v182
  %v1591 = vmul.f32 %v183, %v183
  %v1592 = vmul.f32 %v184, %v184
  %v1593 = vmul.f32 %v185, %v185
  %v1594 = vmul.f32 %v186, %v186
  %v1595 = vmul.f32 %v187, %v187
  %v1596 = vmul.f32 %v188, %v188
  %v1597 = vmul.f32 %v189, %v189
  %v1598 = vmul.f32 %v190, %v190
  %v1599 = vmul.f32 %v191, %v191
  %v1600 = vmul.f32 %v192, %v192
  %v1601 = vmul.f32 %v193, %v193
  %v1602 = vmul.f32 %v194, %v194
  %v1603 = vmul.f32 %v195, %v195
  %v1604 = vmul.f32 %v196, %v196
  %v1605 = vmul.f32 %v197, %v197
  %v1606 = vmul.f32 %v198, %v198
  %v1607 = vmul.f32 %v199, %v199
  %v1608 = vmul.f32 %v200, %v200
  %v1609 = vmul.f32 %v201, %v201
  %v1610 = vmul.f32 %v202, %v202
  %v1611 = vmul.f32 %v203, %v203
  %v1612 = vmul.f32 %v204, %v204
  %v1613 = vmul.f32 %v205, %v205
  %v1614 = vmul.f32 %v206, %v206
  %v1615 = vmul.f32 %v207, %v207
  %v1616 = vmul.f32 %v208, %v208
  %v1617 = vmul.f32 %v209, %v209
  %v1618 = vmul.f32 %v210, %v210
  %v1619 = vmul.f32 %v211, %v211
  %v1620 = vmul.f32 %v212, %v212
  %v1621 = vmul.f32 %v213, %v213
  %v1622 = vmul.f32 %v214, %v214
  %v1623 = vmul.f32 %v215, %v215
  %v1624 = vmul.f32 %v216, %v216
  %v1625 = vmul.f32 %v217, %v217
  %v1626 = vmul.f32 %v218, %v218
  %v1627 = vmul.f32 %v219, %v219
  %v1628 = vmul.f32 %v220, %v220
  %v1629 = vmul.f32 %v221, %v221
  %v1630 = vmul.f32 %v222, %v222
  %v1631 = vmul.f32 %v223, %v223
  %v1632 = vmul.f32 %v224, %v224
  %v1633 = vmul.f32 %v225, %v225
  %v1634 = vmul.f32 %v226, %v226
  %v1635 = vmul.f32 %v227, %v227
  %v1636 = vmul.f32 %v228, %v228
  %v1637 = vmul.f32 %v229, %v229
  %v1638 = vmul.f32 %v230, %v230
  %v1639 = vmul.f32 %v231, %v231
  %v1640 = vmul.f32 %v232, %v232
  %v1641 = vmul.f32 %v233, %v233
  %v1642 = vmul.f32 %v234, %v234
  %v1643 = vmul.f32 %v235, %v235
  %v1644 = vmul.f32 %v236, %v236
  %v1645 = vmul.f32 %v237, %v237
  %v1646 = vmul.f32 %v238, %v238
  %v1647 = vmul.f32 %v239, %v239
  %v1648 = vmul.f32 %v240, %v240
  %v1649 = vmul.f32 %v241, %v241
  %v1650 = vmul.f32 %v242, %v242
  %v1651 = vmul.f32 %v243, %v243
  %v1652 = vmul.f32 %v244, %v244
  %v1653 = vmul.f32 %v245, %v245
  %v1654 = vmul.f32 %v246, %v246
  %v1655 = vmul.f32 %v247, %v247
  %v1656 = vmul.f32 %v248, %v248
  %v1657 = vmul.f32 %v249, %v249
  %v1658 = vmul.f32 %v250, %v250
  %v1659 = vmul.f32 %v251, %v251
  %v1660 = vmul.f32 %v252, %v252
  %v1661 = vmul.f32 %v253, %v253
  %v1662 = vmul.f32 %v254, %v254
  %v1663 = vmul.f32 %v255, %v255
  %v1664 = vmul.f32 %v256, %v256
  %v1665 = vmul.f32 %v257, %v257
  %v1666 = vmul.f32 %v258, %v258
  %v1667 = vmul.f32 %v259, %v259
  %v1668 = vmul.f32 %v260, %v260
  %v1669 = vmul.f32 %v261, %v261
  %v1670 = vmul.f32 %v262, %v262
  %v1671 = vmul.f32 %v263, %v263
  %v1672 = vmul.f32 %v264, %v264
  %v1673 = vmul.f32 %v265, %v265
  %v1674 = vmul.f32 %v266, %v266
  %v1675 = vmul.f32 %v267, %v267
  %v1676 = vmul.f32 %v268, %v268
  %v1677 = vmul.f32 %v269, %v269
  %v1678 = vmul.f32 %v270, %v270
  %v1679 = vmul.f32 %v271, %v271
  %v1680 = vmul.f32 %v272, %v272
  %v1681 = vmul.f32 %v273, %v273
  %v1682 = vmul.f32 %v274, %v274
  %v1683 = vmul.f32 %v275, %v275
  %v1684 = vmul.f32 %v276, %v276
  %v1685 = vmul.f32 %v277, %v277
  %v1686 = vmul.f32 %v278, %v278
  %v1687 = vmul.f32 %v279, %v279
  %v1688 = vmul.f32 %v280, %v280
  %v1689 = vmul.f32 %v281, %v281
  %v1690 = vmul.f32 %v282, %v282
  %v1691 = vmul.f32 %v283, %v283
  %v1692 = vmul.f32 %v284, %v284
  %v1693 = vmul.f32 %v285, %v285
  %v1694 = vmul.f32 %v286, %v286
  %v1695 = vmul.f32 %v287, %v287
  %v1696 = vmul.f32 %v288, %v288
  %v1697 = vmul.f32 %v289, %v289
  %v1698 = vmul.f32 %v290, %v290
  %v1699 = vmul.f32 %v291, %v291
  %v1700 = vmul.f32 %v292, %v292
  %v1701 = vmul.f32 %v293, %v293
  %v1702 = vmul.f32 %v294, %v294
  %v1703 = vmul.f32 %v295, %v295
  %v1704 = vmul.f32 %v296, %v296
  %v1705 = vmul.f32 %v297, %v297
  %v1706 = vmul.f32 %v298, %v298
  %v1707 = vmul.f32 %v299, %v299
  %v1708 = vmul.f32 %v300, %v300
  %v1709 = vmul.f32 %v301, %v301
  %v1710 = vmul.f32 %v302, %v302
  %v1711 = vmul.f32 %v303, %v303
  %v1712 = vmul.f32 %v304, %v304
  %v1713 = vmul.f32 %v305, %v305
  %v1714 = vmul.f32 %v306, %v306
  %v1715 = vmul.f32 %v307, %v307
  %v1716 = vmul.f32 %v308, %v308
  %v1717 = vmul.f32 %v309, %v309
  %v1718 = vmul.f32 %v310, %v310
  %v1719 = vmul.f32 %v311, %v311
  %v1720 = vmul.f32 %v312, %v312
  %v1721 = vmul.f32 %v313, %v313
  %v1722 = vmul.f32 %v314, %v314
  %v1723 = vmul.f32 %v315, %v315
  %v1724 = vmul.f32 %v316, %v316
  %v1725 = vmul.f32 %v317, %v317
  %v1726 = vmul.f32 %v318, %v318
  %v1727 = vmul.f32 %v319, %v319
  %v1728 = vmul.f32 %v320, %v320
  %v1729 = vmul.f32 %v321, %v321
  %v1730 = vmul.f32 %v322, %v322
  %v1731 = vmul.f32 %v323, %v323
  %v1732 = vmul.f32 %v324, %v324
  %v1733 = vmul.f32 %v325, %v325
  %v1734 = vmul.f32 %v326, %v326
  %v1735 = vmul.f32 %v327, %v327
  %v1736 = vmul.f32 %v328, %v328
  %v1737 = vmul.f32 %v329, %v329
  %v1738 = vmul.f32 %v330, %v330
  %v1739 = vmul.f32 %v331, %v331
  %v1740 = vmul.f32 %v332, %v332
  %v1741 = vmul.f32 %v333, %v333
  %v1742 = vmul.f32 %v334, %v334
  %v1743 = vmul.f32 %v335, %v335
  %v1744 = vmul.f32 %v336, %v336
  %v1745 = vmul.f32 %v337, %v337
  %v1746 = vmul.f32 %v338, %v338
  %v1747 = vmul.f32 %v339, %v339
  %v1748 = vmul.f32 %v340, %v340
  %v1749 = vmul.f32 %v341, %v341
  %v1750 = vmul.f32 %v342, %v342
  %v1751 = vmul.f32 %v343, %v343
  %v1752 = vmul.f32 %v344, %v344
  %v1753 = vmul.f32 %v345, %v345
  %v1754 = vmul.f32 %v346, %v346
  %v1755 = vmul.f32 %v347, %v347
  %v1756 = vmul.f32 %v348, %v348
  %v1757 = vmul.f32 %v349, %v349
  %v1758 = vmul.f32 %v350, %v350
  %v1759 = vmul.f32 %v351, %v351
  %v1760 = vmul.f32 %v352, %v352
  %v1761 = vmul.f32 %v353, %v353
  %v1762 = vmul.f32 %v354, %v354
  %v1763 = vmul.f32 %v355, %v355
  %v1764 = vmul.f32 %v356, %v356
  %v1765 = vmul.f32 %v357, %v357
  %v1766 = vmul.f32 %v358, %v358
  %v1767 = vmul.f32 %v359, %v359
  %v1768 = vmul.f32 %v360, %v360
  %v1769 = vmul.f32 %v361, %v361
  %v1770 = vmul.f32 %v362, %v362
  %v1771 = vmul.f32 %v363, %v363
  %v1772 = vmul.f32 %v364, %v364
  %v1773 = vmul.f32 %v365, %v365
  %v1774 = vmul.f32 %v366, %v366
  %v1775 = vmul.f32 %v367, %v367
  %v1776 = vmul.f32 %v368, %v368
  %v1777 = vmul.f32 %v369, %v369
  %v1778 = vmul.f32 %v370, %v370
  %v1779 = vmul.f32 %v371, %v371
  %v1780 = vmul.f32 %v372, %v372
  %v1781 = vmul.f32 %v373, %v373
  %v1782 = vmul.f32 %v374, %v374
  %v1783 = vmul.f32 %v375, %v375
  %v1784 = vmul.f32 %v376, %v376
  %v1785 = vmul.f32 %v377, %v377
  %v1786 = vmul.f32 %v378, %v378
  %v1787 = vmul.f32 %v379, %v379
  %v1788 = vmul.f32 %v380, %v380
  %v1789 = vmul.f32 %v381, %v381
  %v1790 = vmul.f32 %v382, %v382
  %v1791 = vmul.f32 %v383, %v383
  %v1792 = vmul.f32 %v384, %v384
  %v1793 = vmul.f32 %v385, %v385
  %v1794 = vmul.f32 %v386, %v386
  %v1795 = vmul.f32 %v387, %v387
  %v1796 = vmul.f32 %v388, %v388
  %v1797 = vmul.f32 %v389, %v389
  %v1798 = vmul.f32 %v390, %v390
  %v1799 = vmul.f32 %v391, %v391
  %v1800 = vmul.f32 %v392, %v392
  %v1801 = vmul.f32 %v393, %v393
  %v1802 = vmul.f32 %v394, %v394
  %v1803 = vmul.f32 %v395, %v395
  %v1804 = vmul.f32 %v396, %v396
  %v1805 = vmul.f32 %v397, %v397
  %v1806 = vmul.f32 %v398, %v398
  %v1807 = vmul.f32 %v399, %v399
  %v1808 = vmul.f32 %v400, %v400
  %v1809 = vmul.f32 %v401, %v401
  %v1810 = vmul.f32 %v402, %v402
  %v1811 = vmul.f32 %v403, %v403
  %v1812 = vmul.f32 %v404, %v404
  %v1813 = vmul.f32 %v405, %v405
  %v1814 = vmul.f32 %v406, %v406
  %v1815 = vmul.f32 %v407, %v407
  %v1816 = vmul.f32 %v408, %v408
  %v1817 = vmul.f32 %v409, %v409
  %v1818 = vmul.f32 %v410, %v410
  %v1819 = vmul.f32 %v411, %v411
  %v1820 = vmul.f32 %v412, %v412
  %v1821 = vmul.f32 %v413, %v413
  %v1822 = vmul.f32 %v414, %v414
  %v1823 = vmul.f32 %v415, %v415
  %v1824 = vmul.f32 %v416, %v416
  %v1825 = vmul.f32 %v417, %v417
  %v1826 = vmul.f32 %v418, %v418
  %v1827 = vmul.f32 %v419, %v419
  %v1828 = vmul.f32 %v420, %v420
  %v1829 = vmul.f32 %v421, %v421
  %v1830 = vmul.f32 %v422, %v422
  %v1831 = vmul.f32 %v423, %v423
  %v1832 = vmul.f32 %v424, %v424
  %v1833 = vmul.f32 %v425, %v425
  %v1834 = vmul.f32 %v426, %v426
  %v1835 = vmul.f32 %v427, %v427
  %v1836 = vmul.f32 %v428, %v428
  %v1837 = vmul.f32 %v429, %v429
  %v1838 = vmul.f32 %v430, %v430
  %v1839 = vmul.f32 %v431, %v431
  %v1840 = vmul.f32 %v432, %v432
  %v1841 = vmul.f32 %v433, %v433
  %v1842 = vmul.f32 %v434, %v434
  %v1843 = vmul.f32 %v435, %v435
  %v1844 = vmul.f32 %v436, %v436
  %v1845 = vmul.f32 %v437, %v437
  %v1846 = vmul.f32 %v438, %v438
  %v1847 = vmul.f32 %v439, %v439
  %v1848 = vmul.f32 %v440, %v440
  %v1849 = vmul.f32 %v441, %v441
  %v1850 = vmul.f32 %v442, %v442
  %v1851 = vmul.f32 %v443, %v443
  %v1852 = vmul.f32 %v444, %v444
  %v1853 = vmul.f32 %v445, %v445
  %v1854 = vmul.f32 %v446, %v446
  %v1855 = vmul.f32 %v447, %v447
  %v1856 = vmul.f32 %v448, %v448
  %v1857 = vmul.f32 %v449, %v449
  %v1858 = vmul.f32 %v450, %v450
  %v1859 = vmul.f32 %v451, %v451
  %v1860 = vmul.f32 %v452, %v452
  %v1861 = vmul.f32 %v453, %v453
  %v1862 = vmul.f32 %v454, %v454
  %v1863 = vmul.f32 %v455, %v455
  %v1864 = vmul.f32 %v456, %v456
  %v1865 = vmul.f32 %v457, %v457
  %v1866 = vmul.f32 %v458, %v458
  %v1867 = vmul.f32 %v459, %v459
  %v1868 = vmul.f32 %v460, %v460
  %v1869 = vmul.f32 %v461, %v461
  %v1870 = vmul.f32 %v462, %v462
  %v1871 = vmul.f32 %v463, %v463
  %v1872 = vmul.f32 %v464, %v464
  %v1873 = vmul.f32 %v465, %v465
  %v1874 = vmul.f32 %v466, %v466
  %v1875 = vmul.f32 %v467, %v467
  %v1876 = vmul.f32 %v468, %v468
  %v1877 = vmul.f32 %v469, %v469
  %v1878 = vmul.f32 %v470, %v470
  %v1879 = vmul.f32 %v471, %v471
  %v1880 = vmul.f32 %v472, %v472
  %v1881 = vmul.f32 %v473, %v473
  %v1882 = vmul.f32 %v474, %v474
  %v1883 = vmul.f32 %v475, %v475
  %v1884 = vmul.f32 %v476, %v476
  %v1885 = vmul.f32 %v477, %v477
  %v1886 = vmul.f32 %v478, %v478
  %v1887 = vmul.f32 %v479, %v479
  %v1888 = vmul.f32 %v480, %v480
  %v1889 = vmul.f32 %v481, %v481
  %v1890 = vmul.f32 %v482, %v482
  %v1891 = vmul.f32 %v483, %v483
  %v1892 = vmul.f32 %v484, %v484
  %v1893 = vmul.f32 %v485, %v485
  %v1894 = vmul.f32 %v486, %v486
  %v1895 = vmul.f32 %v487, %v487
  %v1896 = vmul.f32 %v488, %v488
  %v1897 = vmul.f32 %v489, %v489
  %v1898 = vmul.f32 %v490, %v490
  %v1899 = vmul.f32 %v491, %v491
  %v1900 = vmul.f32 %v492, %v492
  %v1901 = vmul.f32 %v493, %v493
  %v1902 = vmul.f32 %v494, %v494
  %v1903 = vmul.f32 %v495, %v495
  %v1904 = vmul.f32 %v496, %v496
  %v1905 = vmul.f32 %v497, %v497
  %v1906 = vmul.f32 %v498, %v498
  %v1907 = vmul.f32 %v499, %v499
  %v1908 = vmul.f32 %v500, %v500
  %v1909 = vmul.f32 %v501, %v501
  %v1910 = vmul.f32 %v502, %v502
  %v1911 = vmul.f32 %v503, %v503
  %v1912 = vmul.f32 %v504, %v504
  %v1913 = vmul.f32 %v505, %v505
  %v1914 = vmul.f32 %v506, %v506
  %v1915 = vmul.f32 %v507, %v507
  %v1916 = vmul.f32 %v508, %v508
  %v1917 = vmul.f32 %v509, %v509
  %v1918 = vmul.f32 %v510, %v510
  %v1919 = vmul.f32 %v511, %v511
  %v1920 = vmul.f32 %v512, %v512
  %v1921 = vmul.f32 %v513, %v513
  %v1922 = vmul.f32 %v514, %v514
  %v1923 = vmul.f32 %v515, %v515
  %v1924 = vmul.f32 %v516, %v516
  %v1925 = vmul.f32 %v517, %v517
  %v1926 = vmul.f32 %v518, %v518
  %v1927 = vmul.f32 %v519, %v519
  %v1928 = vmul.f32 %v520, %v520
  %v1929 = vmul.f32 %v521, %v521
  %v1930 = vmul.f32 %v522, %v522
  %v1931 = vmul.f32 %v523, %v523
  %v1932 = vmul.f32 %v524, %v524
  %v1933 = vmul.f32 %v525, %v525
  %v1934 = vmul.f32 %v526, %v526
  %v1935 = vmul.f32 %v527, %v527
  %v1936 = vmul.f32 %v528, %v528
  %v1937 = vmul.f32 %v529, %v529
  %v1938 = vmul.f32 %v530, %v530
  %v1939 = vmul.f32 %v531, %v531
  %v1940 = vmul.f32 %v532, %v532
  %v1941 = vmul.f32 %v533, %v533
  %v1942 = vmul.f32 %v534, %v534
  %v1943 = vmul.f32 %v535, %v535
  %v1944 = vmul.f32 %v536, %v536
  %v1945 = vmul.f32 %v537, %v537
  %v1946 = vmul.f32 %v538, %v538
  %v1947 = vmul.f32 %v539, %v539
  %v1948 = vmul.f32 %v540, %v540
  %v1949 = vmul.f32 %v541, %v541
  %v1950 = vmul.f32 %v542, %v542
  %v1951 = vmul.f32 %v543, %v543
  %v1952 = vmul.f32 %v544, %v544
  %v1953 = vmul.f32 %v545, %v545
  %v1954 = vmul.f32 %v546, %v546
  %v1955 = vmul.f32 %v547, %v547
  %v1956 = vmul.f32 %v548, %v548
  %v1957 = vmul.f32 %v549, %v549
  %v1958 = vmul.f32 %v550, %v550
  %v1959 = vmul.f32 %v551, %v551
  %v1960 = vmul.f32 %v552, %v552
  %v1961 = vmul.f32 %v553, %v553
  %v1962 = vmul.f32 %v554, %v554
  %v1963 = vmul.f32 %v555, %v555
  %v1964 = vmul.f32 %v556, %v556
  %v1965 = vmul.f32 %v557, %v557
  %v1966 = vmul.f32 %v558, %v558
  %v1967 = vmul.f32 %v559, %v559
  %v1968 = vmul.f32 %v560, %v560
  %v1969 = vmul.f32 %v561, %v561
  %v1970 = vmul.f32 %v562, %v562
  %v1971 = vmul.f32 %v563, %v563
  %v1972 = vmul.f32 %v564, %v564
  %v1973 = vmul.f32 %v565, %v565
  %v1974 = vmul.f32 %v566, %v566
  %v1975 = vmul.f32 %v567, %v567
  %v1976 = vmul.f32 %v568, %v568
  %v1977 = vmul.f32 %v569, %v569
  %v1978 = vmul.f32 %v570, %v570
  %v1979 = vmul.f32 %v571, %v571
  %v1980 = vmul.f32 %v572, %v572
  %v1981 = vmul.f32 %v573, %v573
  %v1982 = vmul.f32 %v574, %v574
  %v1983 = vmul.f32 %v575, %v575
  %v1984 = vmul.f32 %v576, %v576
  %v1985 = vmul.f32 %v577, %v577
  %v1986 = vmul.f32 %v578, %v578
  %v1987 = vmul.f32 %v579, %v579
  %v1988 = vmul.f32 %v580, %v580
  %v1989 = vmul.f32 %v581, %v581
  %v1990 = vmul.f32 %v582, %v582
  %v1991 = vmul.f32 %v583, %v583
  %v1992 = vmul.f32 %v584, %v584
  %v1993 = vmul.f32 %v585, %v585
  %v1994 = vmul.f32 %v586, %v586
  %v1995 = vmul.f32 %v587, %v587
  %v1996 = vmul.f32 %v588, %v588
  %v1997 = vmul.f32 %v589, %v589
  %v1998 = vmul.f32 %v590, %v590
  %v1999 = vmul.f32 %v591, %v591
  %v2000 = vmul.f32 %v592, %v592
  %v2001 = vmul.f32 %v593, %v593
  %v2002 = vmul.f32 %v594, %v594
  %v2003 = vmul.f32 %v595, %v595
  %v2004 = vmul.f32 %v596, %v596
  %v2005 = vmul.f32 %v597, %v597
  %v2006 = vmul.f32 %v598, %v598
  %v2007 = vmul.f32 %v599, %v599
  %v2008 = vmul.f32 %v600, %v600
  %v2009 = vmul.f32 %v601, %v601
  %v2010 = vmul.f32 %v602, %v602
  %v2011 = vmul.f32 %v603, %v603
  %v2012 = vmul.f32 %v604, %v604
  %v2013 = vmul.f32 %v605, %v605
  %v2014 = vmul.f32 %v606, %v606
  %v2015 = vmul.f32 %v607, %v607
  %v2016 = vmul.f32 %v608, %v608
  %v2017 = vmul.f32 %v609, %v609
  %v2018 = vmul.f32 %v610, %v610
  %v2019 = vmul.f32 %v611, %v611
  %v2020 = vmul.f32 %v612, %v612
  %v2021 = vmul.f32 %v613, %v613
  %v2022 = vmul.f32 %v614, %v614
  %v2023 = vmul.f32 %v615, %v615
  %v2024 = vmul.f32 %v616, %v616
  %v2025 = vmul.f32 %v617, %v617
  %v2026 = vmul.f32 %v618, %v618
  %v2027 = vmul.f32 %v619, %v619
  %v2028 = vmul.f32 %v620, %v620
  %v2029 = vmul.f32 %v621, %v621
  %v2030 = vmul.f32 %v622, %v622
  %v2031 = vmul.f32 %v623, %v623
  %v2032 = vmul.f32 %v624, %v624
  %v2033 = vmul.f32 %v625, %v625
  %v2034 = vmul.f32 %v626, %v626
  %v2035 = vmul.f32 %v627, %v627
  %v2036 = vmul.f32 %v628, %v628
  %v2037 = vmul.f32 %v629, %v629
  %v2038 = vmul.f32 %v630, %v630
  %v2039 = vmul.f32 %v631, %v631
  %v2040 = vmul.f32 %v632, %v632
  %v2041 = vmul.f32 %v633, %v633
  %v2042 = vmul.f32 %v634, %v634
  %v2043 = vmul.f32 %v635, %v635
  %v2044 = vmul.f32 %v636, %v636
  %v2045 = vmul.f32 %v637, %v637
  %v2046 = vmul.f32 %v638, %v638
  %v2047 = vmul.f32 %v639, %v639
  %v2048 = vmul.f32 %v640, %v640
  %v2049 = vmul.f32 %v641, %v641
  %v2050 = vmul.f32 %v642, %v642
  %v2051 = vmul.f32 %v643, %v643
  %v2052 = vmul.f32 %v644, %v644
  %v2053 = vmul.f32 %v645, %v645
  %v2054 = vmul.f32 %v646, %v646
  %v2055 = vmul.f32 %v647, %v647
  %v2056 = vmul.f32 %v648, %v648
  %v2057 = vmul.f32 %v649, %v649
  %v2058 = vmul.f32 %v650, %v650
  %v2059 = vmul.f32 %v651, %v651
  %v2060 = vmul.f32 %v652, %v652
  %v2061 = vmul.f32 %v653, %v653
  %v2062 = vmul.f32 %v654, %v654
  %v2063 = vmul.f32 %v655, %v655
  %v2064 = vmul.f32 %v656, %v656
  %v2065 = vmul.f32 %v657, %v657
  %v2066 = vmul.f32 %v658, %v658
  %v2067 = vmul.f32 %v659, %v659
  %v2068 = vmul.f32 %v660, %v660
  %v2069 = vmul.f32 %v661, %v661
  %v2070 = vmul.f32 %v662, %v662
  %v2071 = vmul.f32 %v663, %v663
  %v2072 = vmul.f32 %v664, %v664
  %v2073 = vmul.f32 %v665, %v665
  %v2074 = vmul.f32 %v666, %v666
  %v2075 = vmul.f32 %v667, %v667
  %v2076 = vmul.f32 %v668, %v668
  %v2077 = vmul.f32 %v669, %v669
  %v2078 = vmul.f32 %v670, %v670
  %v2079 = vmul.f32 %v671, %v671
  %v2080 = vmul.f32 %v672, %v672
  %v2081 = vmul.f32 %v673, %v673
  %v2082 = vmul.f32 %v674, %v674
  %v2083 = vmul.f32 %v675, %v675
  %v2084 = vmul.f32 %v676, %v676
  %v2085 = vmul.f32 %v677, %v677
  %v2086 = vmul.f32 %v678, %v678
  %v2087 = vmul.f32 %v679, %v679
  %v2088 = vmul.f32 %v680, %v680
  %v2089 = vmul.f32 %v681, %v681
  %v2090 = vmul.f32 %v682, %v682
  %v2091 = vmul.f32 %v683, %v683
  %v2092 = vmul.f32 %v684, %v684
  %v2093 = vmul.f32 %v685, %v685
  %v2094 = vmul.f32 %v686, %v686
  %v2095 = vmul.f32 %v687, %v687
  %v2096 = vmul.f32 %v688, %v688
  %v2097 = vmul.f32 %v689, %v689
  %v2098 = vmul.f32 %v690, %v690
  %v2099 = vmul.f32 %v691, %v691
  %v2100 = vmul.f32 %v692, %v692
  %v2101 = vmul.f32 %v693, %v693
  %v2102 = vmul.f32 %v694, %v694
  %v2103 = vmul.f32 %v695, %v695
  %v2104 = vmul.f32 %v696, %v696
  %v2105 = vmul.f32 %v697, %v697
  %v2106 = vmul.f32 %v698, %v698
  %v2107 = vmul.f32 %v699, %v699
  %v2108 = vmul.f32 %v700, %v700
  %v2109 = vmul.f32 %v701, %v701
  %v2110 = vmul.f32 %v702, %v702
  %v2111 = vmul.f32 %v703, %v703
  %v2112 = vmul.f32 %v704, %v704
  %v2113 = vmul.f32 %v705, %v705
  %v2114 = vmul.f32 %v706, %v706
  %v2115 = vmul.f32 %v707, %v707
  %v2116 = vmul.f32 %v708, %v708
  %v2117 = vmul.f32 %v709, %v709
  %v2118 = vmul.f32 %v710, %v710
  %v2119 = vmul.f32 %v711, %v711
  %v2120 = vmul.f32 %v712, %v712
  %v2121 = vmul.f32 %v713, %v713
  %v2122 = vmul.f32 %v714, %v714
  %v2123 = vmul.f32 %v715, %v715
  %v2124 = vmul.f32 %v716, %v716
  %v2125 = vmul.f32 %v717, %v717
  %v2126 = vmul.f32 %v718, %v718
  %v2127 = vmul.f32 %v719, %v719
  %v2128 = vmul.f32 %v720, %v720
  %v2129 = vmul.f32 %v721, %v721
  %v2130 = vmul.f32 %v722, %v722
  %v2131 = vmul.f32 %v723, %v723
  %v2132 = vmul.f32 %v724, %v724
  %v2133 = vmul.f32 %v725, %v725
  %v2134 = vmul.f32 %v726, %v726
  %v2135 = vmul.f32 %v727, %v727
  %v2136 = vmul.f32 %v728, %v728
  %v2137 = vmul.f32 %v729, %v729
  %v2138 = vmul.f32 %v730, %v730
  %v2139 = vmul.f32 %v731, %v731
  %v2140 = vmul.f32 %v732, %v732
  %v2141 = vmul.f32 %v733, %v733
  %v2142 = vmul.f32 %v734, %v734
  %v2143 = vmul.f32 %v735, %v735
  %v2144 = vmul.f32 %v736, %v736
  %v2145 = vmul.f32 %v737, %v737
  %v2146 = vmul.f32 %v738, %v738
  %v2147 = vmul.f32 %v739, %v739
  %v2148 = vmul.f32 %v740, %v740
  %v2149 = vmul.f32 %v741, %v741
  %v2150 = vmul.f32 %v742, %v742
  %v2151 = vmul.f32 %v743, %v743
  %v2152 = vmul.f32 %v744, %v744
  %v2153 = vmul.f32 %v745, %v745
  %v2154 = vmul.f32 %v746, %v746
  %v2155 = vmul.f32 %v747, %v747
  %v2156 = vmul.f32 %v748, %v748
  %v2157 = vmul.f32 %v749, %v749
  %v2158 = vmul.f32 %v750, %v750
  %v2159 = vmul.f32 %v751, %v751
  %v2160 = vmul.f32 %v752, %v752
  %v2161 = vmul.f32 %v753, %v753
  %v2162 = vmul.f32 %v754, %v754
  %v2163 = vmul.f32 %v755, %v755
  %v2164 = vmul.f32 %v756, %v756
  %v2165 = vmul.f32 %v757, %v757
  %v2166 = vmul.f32 %v758, %v758
  %v2167 = vmul.f32 %v759, %v759
  %v2168 = vmul.f32 %v760, %v760
  %v2169 = vmul.f32 %v761, %v761
  %v2170 = vmul.f32 %v762, %v762
  %v2171 = vmul.f32 %v763, %v763
  %v2172 = vmul.f32 %v764, %v764
  %v2173 = vmul.f32 %v765, %v765
  %v2174 = vmul.f32 %v766, %v766
  %v2175 = vmul.f32 %v767, %v767
  %v2176 = vmul.f32 %v768, %v768
  %v2177 = vmul.f32 %v769, %v769
  %v2178 = vmul.f32 %v770, %v770
  %v2179 = vmul.f32 %v771, %v771
  %v2180 = vmul.f32 %v772, %v772
  %v2181 = vmul.f32 %v773, %v773
  %v2182 = vmul.f32 %v774, %v774
  %v2183 = vmul.f32 %v775, %v775
  %v2184 = vmul.f32 %v776, %v776
  %v2185 = vmul.f32 %v777, %v777
  %v2186 = vmul.f32 %v778, %v778
  %v2187 = vmul.f32 %v779, %v779
  %v2188 = vmul.f32 %v780, %v780
  %v2189 = vmul.f32 %v781, %v781
  %v2190 = vmul.f32 %v782, %v782
  %v2191 = vmul.f32 %v783, %v783
  %v2192 = vmul.f32 %v784, %v784
  %v2193 = vmul.f32 %v785, %v785
  %v2194 = vmul.f32 %v786, %v786
  %v2195 = vmul.f32 %v787, %v787
  %v2196 = vmul.f32 %v788, %v788
  %v2197 = vmul.f32 %v789, %v789
  %v2198 = vmul.f32 %v790, %v790
  %v2199 = vmul.f32 %v791, %v791
  %v2200 = vmul.f32 %v792, %v792
  %v2201 = vmul.f32 %v793, %v793
  %v2202 = vmul.f32 %v794, %v794
  %v2203 = vmul.f32 %v795, %v795
  %v2204 = vmul.f32 %v796, %v796
  %v2205 = vmul.f32 %v797, %v797
  %v2206 = vmul.f32 %v798, %v798
  %v2207 = vmul.f32 %v799, %v799
  %v2208 = vmul.f32 %v800, %v800
  %v2209 = vmul.f32 %v801, %v801
  %v2210 = vmul.f32 %v802, %v802
  %v2211 = vmul.f32 %v803, %v803
  %v2212 = vmul.f32 %v804, %v804
  %v2213 = vmul.f32 %v805, %v805
  %v2214 = vmul.f32 %v806, %v806
  %v2215 = vmul.f32 %v807, %v807
  %v2216 = vmul.f32 %v808, %v808
  %v2217 = vmul.f32 %v809, %v809
  %v2218 = vmul.f32 %v810, %v810
  %v2219 = vmul.f32 %v811, %v811
  %v2220 = vmul.f32 %v812, %v812
  %v2221 = vmul.f32 %v813, %v813
  %v2222 = vmul.f32 %v814, %v814
  %v2223 = vmul.f32 %v815, %v815
  %v2224 = vmul.f32 %v816, %v816
  %v2225 = vmul.f32 %v817, %v817
  %v2226 = vmul.f32 %v818, %v818
  %v2227 = vmul.f32 %v819, %v819
  %v2228 = vmul.f32 %v820, %v820
  %v2229 = vmul.f32 %v821, %v821
  %v2230 = vmul.f32 %v822, %v822
  %v2231 = vmul.f32 %v823, %v823
  %v2232 = vmul.f32 %v824, %v824
  %v2233 = vmul.f32 %v825, %v825
  %v2234 = vmul.f32 %v826, %v826
  %v2235 = vmul.f32 %v827, %v827
  %v2236 = vmul.f32 %v828, %v828
  %v2237 = vmul.f32 %v829, %v829
  %v2238 = vmul.f32 %v830, %v830
  %v2239 = vmul.f32 %v831, %v831
  %v2240 = vmul.f32 %v832, %v832
  %v2241 = vmul.f32 %v833, %v833
  %v2242 = vmul.f32 %v834, %v834
  %v2243 = vmul.f32 %v835, %v835
  %v2244 = vmul.f32 %v836, %v836
  %v2245 = vmul.f32 %v837, %v837
  %v2246 = vmul.f32 %v838, %v838
  %v2247 = vmul.f32 %v839, %v839
  %v2248 = vmul.f32 %v840, %v840
  %v2249 = vmul.f32 %v841, %v841
  %v2250 = vmul.f32 %v842, %v842
  %v2251 = vmul.f32 %v843, %v843
  %v2252 = vmul.f32 %v844, %v844
  %v2253 = vmul.f32 %v845, %v845
  %v2254 = vmul.f32 %v846, %v846
  %v2255 = vmul.f32 %v847, %v847
  %v2256 = vmul.f32 %v848, %v848
  %v2257 = vmul.f32 %v849, %v849
  %v2258 = vmul.f32 %v850, %v850
  %v2259 = vmul.f32 %v851, %v851
  %v2260 = vmul.f32 %v852, %v852
  %v2261 = vmul.f32 %v853, %v853
  %v2262 = vmul.f32 %v854, %v854
  %v2263 = vmul.f32 %v855, %v855
  %v2264 = vmul.f32 %v856, %v856
  %v2265 = vmul.f32 %v857, %v857
  %v2266 = vmul.f32 %v858, %v858
  %v2267 = vmul.f32 %v859, %v859
  %v2268 = vmul.f32 %v860, %v860
  %v2269 = vmul.f32 %v861, %v861
  %v2270 = vmul.f32 %v862, %v862
  %v2271 = vmul.f32 %v863, %v863
  %v2272 = vmul.f32 %v864, %v864
  %v2273 = vmul.f32 %v865, %v865
  %v2274 = vmul.f32 %v866, %v866
  %v2275 = vmul.f32 %v867, %v867
  %v2276 = vmul.f32 %v868, %v868
  %v2277 = vmul.f32 %v869, %v869
  %v2278 = vmul.f32 %v870, %v870
  %v2279 = vmul.f32 %v871, %v871
  %v2280 = vmul.f32 %v872, %v872
  %v2281 = vmul.f32 %v873, %v873
  %v2282 = vmul.f32 %v874, %v874
  %v2283 = vmul.f32 %v875, %v875
  %v2284 = vmul.f32 %v876, %v876
  %v2285 = vmul.f32 %v877, %v877
  %v2286 = vmul.f32 %v878, %v878
  %v2287 = vmul.f32 %v879, %v879
  %v2288 = vmul.f32 %v880, %v880
  %v2289 = vmul.f32 %v881, %v881
  %v2290 = vmul.f32 %v882, %v882
  %v2291 = vmul.f32 %v883, %v883
  %v2292 = vmul.f32 %v884, %v884
  %v2293 = vmul.f32 %v885, %v885
  %v2294 = vmul.f32 %v886, %v886
  %v2295 = vmul.f32 %v887, %v887
  %v2296 = vmul.f32 %v888, %v888
  %v2297 = vmul.f32 %v889, %v889
  %v2298 = vmul.f32 %v890, %v890
  %v2299 = vmul.f32 %v891, %v891
  %v2300 = vmul.f32 %v892, %v892
  %v2301 = vmul.f32 %v893, %v893
  %v2302 = vmul.f32 %v894, %v894
  %v2303 = vmul.f32 %v895, %v895
  %v2304 = vmul.f32 %v896, %v896
  %v2305 = vmul.f32 %v897, %v897
  %v2306 = vmul.f32 %v898, %v898
  %v2307 = vmul.f32 %v899, %v899
  %v2308 = vmul.f32 %v900, %v900
  %v2309 = vmul.f32 %v901, %v901
  %v2310 = vmul.f32 %v902, %v902
  %v2311 = vmul.f32 %v903, %v903
  %v2312 = vmul.f32 %v904, %v904
  %v2313 = vmul.f32 %v905, %v905
  %v2314 = vmul.f32 %v906, %v906
  %v2315 = vmul.f32 %v907, %v907
  %v2316 = vmul.f32 %v908, %v908
  %v2317 = vmul.f32 %v909, %v909
  %v2318 = vmul.f32 %v910, %v910
  %v2319 = vmul.f32 %v911, %v911
  %v2320 = vmul.f32 %v912, %v912
  %v2321 = vmul.f32 %v913, %v913
  %v2322 = vmul.f32 %v914, %v914
  %v2323 = vmul.f32 %v915, %v915
  %v2324 = vmul.f32 %v916, %v916
  %v2325 = vmul.f32 %v917, %v917
  %v2326 = vmul.f32 %v918, %v918
  %v2327 = vmul.f32 %v919, %v919
  %v2328 = vmul.f32 %v920, %v920
  %v2329 = vmul.f32 %v921, %v921
  %v2330 = vmul.f32 %v922, %v922
  %v2331 = vmul.f32 %v923, %v923
  %v2332 = vmul.f32 %v924, %v924
  %v2333 = vmul.f32 %v925, %v925
  %v2334 = vmul.f32 %v926, %v926
  %v2335 = vmul.f32 %v927, %v927
  %v2336 = vmul.f32 %v928, %v928
  %v2337 = vmul.f32 %v929, %v929
  %v2338 = vmul.f32 %v930, %v930
  %v2339 = vmul.f32 %v931, %v931
  %v2340 = vmul.f32 %v932, %v932
  %v2341 = vmul.f32 %v933, %v933
  %v2342 = vmul.f32 %v934, %v934
  %v2343 = vmul.f32 %v935, %v935
  %v2344 = vmul.f32 %v936, %v936
  %v2345 = vmul.f32 %v937, %v937
  %v2346 = vmul.f32 %v938, %v938
  %v2347 = vmul.f32 %v939, %v939
  %v2348 = vmul.f32 %v940, %v940
  %v2349 = vmul.f32 %v941, %v941
  %v2350 = vmul.f32 %v942, %v942
  %v2351 = vmul.f32 %v943, %v943
  %v2352 = vmul.f32 %v944, %v944
  %v2353 = vmul.f32 %v945, %v945
  %v2354 = vmul.f32 %v946, %v946
  %v2355 = vmul.f32 %v947, %v947
  %v2356 = vmul.f32 %v948, %v948
  %v2357 = vmul.f32 %v949, %v949
  %v2358 = vmul.f32 %v950, %v950
  %v2359 = vmul.f32 %v951, %v951
  %v2360 = vmul.f32 %v952, %v952
  %v2361 = vmul.f32 %v953, %v953
  %v2362 = vmul.f32 %v954, %v954
  %v2363 = vmul.f32 %v955, %v955
  %v2364 = vmul.f32 %v956, %v956
  %v2365 = vmul.f32 %v957, %v957
  %v2366 = vmul.f32 %v958, %v958
  %v2367 = vmul.f32 %v959, %v959
  %v2368 = vmul.f32 %v960, %v960
  %v2369 = vmul.f32 %v961, %v961
  %v2370 = vmul.f32 %v962, %v962
  %v2371 = vmul.f32 %v963, %v963
  %v2372 = vmul.f32 %v964, %v964
  %v2373 = vmul.f32 %v965, %v965
  %v2374 = vmul.f32 %v966, %v966
  %v2375 = vmul.f32 %v967, %v967
  %v2376 = vmul.f32 %v968, %v968
  %v2377 = vmul.f32 %v969, %v969
  %v2378 = vmul.f32 %v970, %v970
  %v2379 = vmul.f32 %v971, %v971
  %v2380 = vmul.f32 %v972, %v972
  %v2381 = vmul.f32 %v973, %v973
  %v2382 = vmul.f32 %v974, %v974
  %v2383 = vmul.f32 %v975, %v975
  %v2384 = vmul.f32 %v976, %v976
  %v2385 = vmul.f32 %v977, %v977
  %v2386 = vmul.f32 %v978, %v978
  %v2387 = vmul.f32 %v979, %v979
  %v2388 = vmul.f32 %v980, %v980
  %v2389 = vmul.f32 %v981, %v981
  %v2390 = vmul.f32 %v982, %v982
  %v2391 = vmul.f32 %v983, %v983
  %v2392 = vmul.f32 %v984, %v984
  %v2393 = vmul.f32 %v985, %v985
  %v2394 = vmul.f32 %v986, %v986
  %v2395 = vmul.f32 %v987, %v987
  %v2396 = vmul.f32 %v988, %v988
  %v2397 = vmul.f32 %v989, %v989
  %v2398 = vmul.f32 %v990, %v990
  %v2399 = vmul.f32 %v991, %v991
  %v2400 = vmul.f32 %v992, %v992
  %v2401 = vmul.f32 %v993, %v993
  %v2402 = vmul.f32 %v994, %v994
  %v2403 = vmul.f32 %v995, %v995
  %v2404 = vmul.f32 %v996, %v996
  %v2405 = vmul.f32 %v997, %v997
  %v2406 = vmul.f32 %v998, %v998
  %v2407 = vmul.f32 %v999, %v999
  %v2408 = vmul.f32 %v1000, %v1000
  %v2409 = vmul.f32 %v1001, %v1001
  %v2410 = vmul.f32 %v1002, %v1002
  %v2411 = vmul.f32 %v1003, %v1003
  %v2412 = vmul.f32 %v1004, %v1004
  %v2413 = vmul.f32 %v1005, %v1005
  %v2414 = vmul.f32 %v1006, %v1006
  %v2415 = vmul.f32 %v1007, %v1007
  %v2416 = vmul.f32 %v1008, %v1008
  %v2417 = vmul.f32 %v1009, %v1009
  %v2418 = vmul.f32 %v1010, %v1010
  %v2419 = vmul.f32 %v1011, %v1011
  %v2420 = vmul.f32 %v1012, %v1012
  %v2421 = vmul.f32 %v1013, %v1013
  %v2422 = vmul.f32 %v1014, %v1014
  %v2423 = vmul.f32 %v1015, %v1015
  %v2424 = vmul.f32 %v1016, %v1016
  %v2425 = vmul.f32 %v1017, %v1017
  %v2426 = vmul.f32 %v1018, %v1018
  %v2427 = vmul.f32 %v1019, %v1019
  %v2428 = vmul.f32 %v1020, %v1020
  %v2429 = vmul.f32 %v1021, %v1021
  %v2430 = vmul.f32 %v1022, %v1022
  %v2431 = vmul.f32 %v1023, %v1023
  %v2432 = vmul.f32 %v1024, %v1024
  %v2433 = vmul.f32 %v1025, %v1025
  %v2434 = vmul.f32 %v1026, %v1026
  %v2435 = vmul.f32 %v1027, %v1027
  %v2436 = vmul.f32 %v1028, %v1028
  %v2437 = vmul.f32 %v1029, %v1029
  %v2438 = vmul.f32 %v1030, %v1030
  %v2439 = vmul.f32 %v1031, %v1031
  %v2440 = vmul.f32 %v1032, %v1032
  %v2441 = vmul.f32 %v1033, %v1033
  %v2442 = vmul.f32 %v1034, %v1034
  %v2443 = vmul.f32 %v1035, %v1035
  %v2444 = vmul.f32 %v1036, %v1036
  %v2445 = vmul.f32 %v1037, %v1037
  %v2446 = vmul.f32 %v1038, %v1038
  %v2447 = vmul.f32 %v1039, %v1039
  %v2448 = vmul.f32 %v1040, %v1040
  %v2449 = vmul.f32 %v1041, %v1041
  %v2450 = vmul.f32 %v1042, %v1042
  %v2451 = vmul.f32 %v1043, %v1043
  %v2452 = vmul.f32 %v1044, %v1044
  %v2453 = vmul.f32 %v1045, %v1045
  %v2454 = vmul.f32 %v1046, %v1046
  %v2455 = vmul.f32 %v1047, %v1047
  %v2456 = vmul.f32 %v1048, %v1048
  %v2457 = vmul.f32 %v1049, %v1049
  %v2458 = vmul.f32 %v1050, %v1050
  %v2459 = vmul.f32 %v1051, %v1051
  %v2460 = vmul.f32 %v1052, %v1052
  %v2461 = vmul.f32 %v1053, %v1053
  %v2462 = vmul.f32 %v1054, %v1054
  %v2463 = vmul.f32 %v1055, %v1055
  %v2464 = vmul.f32 %v1056, %v1056
  %v2465 = vmul.f32 %v1057, %v1057
  %v2466 = vmul.f32 %v1058, %v1058
  %v2467 = vmul.f32 %v1059, %v1059
  %v2468 = vmul.f32 %v1060, %v1060
  %v2469 = vmul.f32 %v1061, %v1061
  %v2470 = vmul.f32 %v1062, %v1062
  %v2471 = vmul.f32 %v1063, %v1063
  %v2472 = vmul.f32 %v1064, %v1064
  %v2473 = vmul.f32 %v1065, %v1065
  %v2474 = vmul.f32 %v1066, %v1066
  %v2475 = vmul.f32 %v1067, %v1067
  %v2476 = vmul.f32 %v1068, %v1068
  %v2477 = vmul.f32 %v1069, %v1069
  %v2478 = vmul.f32 %v1070, %v1070
  %v2479 = vmul.f32 %v1071, %v1071
  %v2480 = vmul.f32 %v1072, %v1072
  %v2481 = vmul.f32 %v1073, %v1073
  %v2482 = vmul.f32 %v1074, %v1074
  %v2483 = vmul.f32 %v1075, %v1075
  %v2484 = vmul.f32 %v1076, %v1076
  %v2485 = vmul.f32 %v1077, %v1077
  %v2486 = vmul.f32 %v1078, %v1078
  %v2487 = vmul.f32 %v1079, %v1079
  %v2488 = vmul.f32 %v1080, %v1080
  %v2489 = vmul.f32 %v1081, %v1081
  %v2490 = vmul.f32 %v1082, %v1082
  %v2491 = vmul.f32 %v1083, %v1083
  %v2492 = vmul.f32 %v1084, %v1084
  %v2493 = vmul.f32 %v1085, %v1085
  %v2494 = vmul.f32 %v1086, %v1086
  %v2495 = vmul.f32 %v1087, %v1087
  %v2496 = vmul.f32 %v1088, %v1088
  %v2497 = vmul.f32 %v1089, %v1089
  %v2498 = vmul.f32 %v1090, %v1090
  %v2499 = vmul.f32 %v1091, %v1091
  %v2500 = vmul.f32 %v1092, %v1092
  %v2501 = vmul.f32 %v1093, %v1093
  %v2502 = vmul.f32 %v1094, %v1094
  %v2503 = vmul.f32 %v1095, %v1095
  %v2504 = vmul.f32 %v1096, %v1096
  %v2505 = vmul.f32 %v1097, %v1097
  %v2506 = vmul.f32 %v1098, %v1098
  %v2507 = vmul.f32 %v1099, %v1099
  %v2508 = vmul.f32 %v1100, %v1100
  %v2509 = vmul.f32 %v1101, %v1101
  %v2510 = vmul.f32 %v1102, %v1102
  %v2511 = vmul.f32 %v1103, %v1103
  %v2512 = vmul.f32 %v1104, %v1104
  %v2513 = vmul.f32 %v1105, %v1105
  %v2514 = vmul.f32 %v1106, %v1106
  %v2515 = vmul.f32 %v1107, %v1107
  %v2516 = vmul.f32 %v1108, %v1108
  %v2517 = vmul.f32 %v1109, %v1109
  %v2518 = vmul.f32 %v1110, %v1110
  %v2519 = vmul.f32 %v1111, %v1111
  %v2520 = vmul.f32 %v1112, %v1112
  %v2521 = vmul.f32 %v1113, %v1113
  %v2522 = vmul.f32 %v1114, %v1114
  %v2523 = vmul.f32 %v1115, %v1115
  %v2524 = vmul.f32 %v1116, %v1116
  %v2525 = vmul.f32 %v1117, %v1117
  %v2526 = vmul.f32 %v1118, %v1118
  %v2527 = vmul.f32 %v1119, %v1119
  %v2528 = vmul.f32 %v1120, %v1120
  %v2529 = vmul.f32 %v1121, %v1121
  %v2530 = vmul.f32 %v1122, %v1122
  %v2531 = vmul.f32 %v1123, %v1123
  %v2532 = vmul.f32 %v1124, %v1124
  %v2533 = vmul.f32 %v1125, %v1125
  %v2534 = vmul.f32 %v1126, %v1126
  %v2535 = vmul.f32 %v1127, %v1127
  %v2536 = vmul.f32 %v1128, %v1128
  %v2537 = vmul.f32 %v1129, %v1129
  %v2538 = vmul.f32 %v1130, %v1130
  %v2539 = vmul.f32 %v1131, %v1131
  %v2540 = vmul.f32 %v1132, %v1132
  %v2541 = vmul.f32 %v1133, %v1133
  %v2542 = vmul.f32 %v1134, %v1134
  %v2543 = vmul.f32 %v1135, %v1135
  %v2544 = vmul.f32 %v1136, %v1136
  %v2545 = vmul.f32 %v1137, %v1137
  %v2546 = vmul.f32 %v1138, %v1138
  %v2547 = vmul.f32 %v1139, %v1139
  %v2548 = vmul.f32 %v1140, %v1140
  %v2549 = vmul.f32 %v1141, %v1141
  %v2550 = vmul.f32 %v1142, %v1142
  %v2551 = vmul.f32 %v1143, %v1143
  %v2552 = vmul.f32 %v1144, %v1144
  %v2553 = vmul.f32 %v1145, %v1145
  %v2554 = vmul.f32 %v1146, %v1146
  %v2555 = vmul.f32 %v1147, %v1147
  %v2556 = vmul.f32 %v1148, %v1148
  %v2557 = vmul.f32 %v1149, %v1149
  %v2558 = vmul.f32 %v1150, %v1150
  %v2559 = vmul.f32 %v1151, %v1151
  %v2560 = vmul.f32 %v1152, %v1152
  %v2561 = vmul.f32 %v1153, %v1153
  %v2562 = vmul.f32 %v1154, %v1154
  %v2563 = vmul.f32 %v1155, %v1155
  %v2564 = vmul.f32 %v1156, %v1156
  %v2565 = vmul.f32 %v1157, %v1157
  %v2566 = vmul.f32 %v1158, %v1158
  %v2567 = vmul.f32 %v1159, %v1159
  %v2568 = vmul.f32 %v1160, %v1160
  %v2569 = vmul.f32 %v1161, %v1161
  %v2570 = vmul.f32 %v1162, %v1162
  %v2571 = vmul.f32 %v1163, %v1163
  %v2572 = vmul.f32 %v1164, %v1164
  %v2573 = vmul.f32 %v1165, %v1165
  %v2574 = vmul.f32 %v1166, %v1166
  %v2575 = vmul.f32 %v1167, %v1167
  %v2576 = vmul.f32 %v1168, %v1168
  %v2577 = vmul.f32 %v1169, %v1169
  %v2578 = vmul.f32 %v1170, %v1170
  %v2579 = vmul.f32 %v1171, %v1171
  %v2580 = vmul.f32 %v1172, %v1172
  %v2581 = vmul.f32 %v1173, %v1173
  %v2582 = vmul.f32 %v1174, %v1174
  %v2583 = vmul.f32 %v1175, %v1175
  %v2584 = vmul.f32 %v1176, %v1176
  %v2585 = vmul.f32 %v1177, %v1177
  %v2586 = vmul.f32 %v1178, %v1178
  %v2587 = vmul.f32 %v1179, %v1179
  %v2588 = vmul.f32 %v1180, %v1180
  %v2589 = vmul.f32 %v1181, %v1181
  %v2590 = vmul.f32 %v1182, %v1182
  %v2591 = vmul.f32 %v1183, %v1183
  %v2592 = vmul.f32 %v1184, %v1184
  %v2593 = vmul.f32 %v1185, %v1185
  %v2594 = vmul.f32 %v1186, %v1186
  %v2595 = vmul.f32 %v1187, %v1187
  %v2596 = vmul.f32 %v1188, %v1188
  %v2597 = vmul.f32 %v1189, %v1189
  %v2598 = vmul.f32 %v1190, %v1190
  %v2599 = vmul.f32 %v1191, %v1191
  %v2600 = vmul.f32 %v1192, %v1192
  %v2601 = vmul.f32 %v1193, %v1193
  %v2602 = vmul.f32 %v1194, %v1194
  %v2603 = vmul.f32 %v1195, %v1195
  %v2604 = vmul.f32 %v1196, %v1196
  %v2605 = vmul.f32 %v1197, %v1197
  %v2606 = vmul.f32 %v1198, %v1198
  %v2607 = vmul.f32 %v1199, %v1199
  %v2608 = vmul.f32 %v1200, %v1200
  %v2609 = vmul.f32 %v1201, %v1201
  %v2610 = vmul.f32 %v1202, %v1202
  %v2611 = vmul.f32 %v1203, %v1203
  %v2612 = vmul.f32 %v1204, %v1204
  %v2613 = vmul.f32 %v1205, %v1205
  %v2614 = vmul.f32 %v1206, %v1206
  %v2615 = vmul.f32 %v1207, %v1207
  %v2616 = vmul.f32 %v1208, %v1208
  %v2617 = vmul.f32 %v1209, %v1209
  %v2618 = vmul.f32 %v1210, %v1210
  %v2619 = vmul.f32 %v1211, %v1211
  %v2620 = vmul.f32 %v1212, %v1212
  %v2621 = vmul.f32 %v1213, %v1213
  %v2622 = vmul.f32 %v1214, %v1214
  %v2623 = vmul.f32 %v1215, %v1215
  %v2624 = vmul.f32 %v1216, %v1216
  %v2625 = vmul.f32 %v1217, %v1217
  %v2626 = vmul.f32 %v1218, %v1218
  %v2627 = vmul.f32 %v1219, %v1219
  %v2628 = vmul.f32 %v1220, %v1220
  %v2629 = vmul.f32 %v1221, %v1221
  %v2630 = vmul.f32 %v1222, %v1222
  %v2631 = vmul.f32 %v1223, %v1223
  %v2632 = vmul.f32 %v1224, %v1224
  %v2633 = vmul.f32 %v1225, %v1225
  %v2634 = vmul.f32 %v1226, %v1226
  %v2635 = vmul.f32 %v1227, %v1227
  %v2636 = vmul.f32 %v1228, %v1228
  %v2637 = vmul.f32 %v1229, %v1229
  %v2638 = vmul.f32 %v1230, %v1230
  %v2639 = vmul.f32 %v1231, %v1231
  %v2640 = vmul.f32 %v1232, %v1232
  %v2641 = vmul.f32 %v1233, %v1233
  %v2642 = vmul.f32 %v1234, %v1234
  %v2643 = vmul.f32 %v1235, %v1235
  %v2644 = vmul.f32 %v1236, %v1236
  %v2645 = vmul.f32 %v1237, %v1237
  %v2646 = vmul.f32 %v1238, %v1238
  %v2647 = vmul.f32 %v1239, %v1239
  %v2648 = vmul.f32 %v1240, %v1240
  %v2649 = vmul.f32 %v1241, %v1241
  %v2650 = vmul.f32 %v1242, %v1242
  %v2651 = vmul.f32 %v1243, %v1243
  %v2652 = vmul.f32 %v1244, %v1244
  %v2653 = vmul.f32 %v1245, %v1245
  %v2654 = vmul.f32 %v1246, %v1246
  %v2655 = vmul.f32 %v1247, %v1247
  %v2656 = vmul.f32 %v1248, %v1248
  %v2657 = vmul.f32 %v1249, %v1249
  %v2658 = vmul.f32 %v1250, %v1250
  %v2659 = vmul.f32 %v1251, %v1251
  %v2660 = vmul.f32 %v1252, %v1252
  %v2661 = vmul.f32 %v1253, %v1253
  %v2662 = vmul.f32 %v1254, %v1254
  %v2663 = vmul.f32 %v1255, %v1255
  %v2664 = vmul.f32 %v1256, %v1256
  %v2665 = vmul.f32 %v1257, %v1257
  %v2666 = vmul.f32 %v1258, %v1258
  %v2667 = vmul.f32 %v1259, %v1259
  %v2668 = vmul.f32 %v1260, %v1260
  %v2669 = vmul.f32 %v1261, %v1261
  %v2670 = vmul.f32 %v1262, %v1262
  %v2671 = vmul.f32 %v1263, %v1263
  %v2672 = vmul.f32 %v1264, %v1264
  %v2673 = vmul.f32 %v1265, %v1265
  %v2674 = vmul.f32 %v1266, %v1266
  %v2675 = vmul.f32 %v1267, %v1267
  %v2676 = vmul.f32 %v1268, %v1268
  %v2677 = vmul.f32 %v1269, %v1269
  %v2678 = vmul.f32 %v1270, %v1270
  %v2679 = vmul.f32 %v1271, %v1271
  %v2680 = vmul.f32 %v1272, %v1272
  %v2681 = vmul.f32 %v1273, %v1273
  %v2682 = vmul.f32 %v1274, %v1274
  %v2683 = vmul.f32 %v1275, %v1275
  %v2684 = vmul.f32 %v1276, %v1276
  %v2685 = vmul.f32 %v1277, %v1277
  %v2686 = vmul.f32 %v1278, %v1278
  %v2687 = vmul.f32 %v1279, %v1279
  %v2688 = vmul.f32 %v1280, %v1280
  %v2689 = vmul.f32 %v1281, %v1281
  %v2690 = vmul.f32 %v1282, %v1282
  %v2691 = vmul.f32 %v1283, %v1283
  %v2692 = vmul.f32 %v1284, %v1284
  %v2693 = vmul.f32 %v1285, %v1285
  %v2694 = vmul.f32 %v1286, %v1286
  %v2695 = vmul.f32 %v1287, %v1287
  %v2696 = vmul.f32 %v1288, %v1288
  %v2697 = vmul.f32 %v1289, %v1289
  %v2698 = vmul.f32 %v1290, %v1290
  %v2699 = vmul.f32 %v1291, %v1291
  %v2700 = vmul.f32 %v1292, %v1292
  %v2701 = vmul.f32 %v1293, %v1293
  %v2702 = vmul.f32 %v1294, %v1294
  %v2703 = vmul.f32 %v1295, %v1295
  %v2704 = vmul.f32 %v1296, %v1296
  %v2705 = vmul.f32 %v1297, %v1297
  %v2706 = vmul.f32 %v1298, %v1298
  %v2707 = vmul.f32 %v1299, %v1299
  %v2708 = vmul.f32 %v1300, %v1300
  %v2709 = vmul.f32 %v1301, %v1301
  %v2710 = vmul.f32 %v1302, %v1302
  %v2711 = vmul.f32 %v1303, %v1303
  %v2712 = vmul.f32 %v1304, %v1304
  %v2713 = vmul.f32 %v1305, %v1305
  %v2714 = vmul.f32 %v1306, %v1306
  %v2715 = vmul.f32 %v1307, %v1307
  %v2716 = vmul.f32 %v1308, %v1308
  %v2717 = vmul.f32 %v1309, %v1309
  %v2718 = vmul.f32 %v1310, %v1310
  %v2719 = vmul.f32 %v1311, %v1311
  %v2720 = vmul.f32 %v1312, %v1312
  %v2721 = vmul.f32 %v1313, %v1313
  %v2722 = vmul.f32 %v1314, %v1314
  %v2723 = vmul.f32 %v1315, %v1315
  %v2724 = vmul.f32 %v1316, %v1316
  %v2725 = vmul.f32 %v1317, %v1317
  %v2726 = vmul.f32 %v1318, %v1318
  %v2727 = vmul.f32 %v1319, %v1319
  %v2728 = vmul.f32 %v1320, %v1320
  %v2729 = vmul.f32 %v1321, %v1321
  %v2730 = vmul.f32 %v1322, %v1322
  %v2731 = vmul.f32 %v1323, %v1323
  %v2732 = vmul.f32 %v1324, %v1324
  %v2733 = vmul.f32 %v1325, %v1325
  %v2734 = vmul.f32 %v1326, %v1326
  %v2735 = vmul.f32 %v1327, %v1327
  %v2736 = vmul.f32 %v1328, %v1328
  %v2737 = vmul.f32 %v1329, %v1329
  %v2738 = vmul.f32 %v1330, %v1330
  %v2739 = vmul.f32 %v1331, %v1331
  %v2740 = vmul.f32 %v1332, %v1332
  %v2741 = vmul.f32 %v1333, %v1333
  %v2742 = vmul.f32 %v1334, %v1334
  %v2743 = vmul.f32 %v1335, %v1335
  %v2744 = vmul.f32 %v1336, %v1336
  %v2745 = vmul.f32 %v1337, %v1337
  %v2746 = vmul.f32 %v1338, %v1338
  %v2747 = vmul.f32 %v1339, %v1339
  %v2748 = vmul.f32 %v1340, %v1340
  %v2749 = vmul.f32 %v1341, %v1341
  %v2750 = vmul.f32 %v1342, %v1342
  %v2751 = vmul.f32 %v1343, %v1343
  %v2752 = vmul.f32 %v1344, %v1344
  %v2753 = vmul.f32 %v1345, %v1345
  %v2754 = vmul.f32 %v1346, %v1346
  %v2755 = vmul.f32 %v1347, %v1347
  %v2756 = vmul.f32 %v1348, %v1348
  %v2757 = vmul.f32 %v1349, %v1349
  %v2758 = vmul.f32 %v1350, %v1350
  %v2759 = vmul.f32 %v1351, %v1351
  %v2760 = vmul.f32 %v1352, %v1352
  %v2761 = vmul.f32 %v1353, %v1353
  %v2762 = vmul.f32 %v1354, %v1354
  %v2763 = vmul.f32 %v1355, %v1355
  %v2764 = vmul.f32 %v1356, %v1356
  %v2765 = vmul.f32 %v1357, %v1357
  %v2766 = vmul.f32 %v1358, %v1358
  %v2767 = vmul.f32 %v1359, %v1359
  %v2768 = vmul.f32 %v1360, %v1360
  %v2769 = vmul.f32 %v1361, %v1361
  %v2770 = vmul.f32 %v1362, %v1362
  %v2771 = vmul.f32 %v1363, %v1363
  %v2772 = vmul.f32 %v1364, %v1364
  %v2773 = vmul.f32 %v1365, %v1365
  %v2774 = vmul.f32 %v1366, %v1366
  %v2775 = vmul.f32 %v1367, %v1367
  %v2776 = vmul.f32 %v1368, %v1368
  %v2777 = vmul.f32 %v1369, %v1369
  %v2778 = vmul.f32 %v1370, %v1370
  %v2779 = vmul.f32 %v1371, %v1371
  %v2780 = vmul.f32 %v1372, %v1372
  %v2781 = vmul.f32 %v1373, %v1373
  %v2782 = vmul.f32 %v1374, %v1374
  %v2783 = vmul.f32 %v1375, %v1375
  %v2784 = vmul.f32 %v1376, %v1376
  %v2785 = vmul.f32 %v1377, %v1377
  %v2786 = vmul.f32 %v1378, %v1378
  %v2787 = vmul.f32 %v1379, %v1379
  %v2788 = vmul.f32 %v1380, %v1380
  %v2789 = vmul.f32 %v1381, %v1381
  %v2790 = vmul.f32 %v1382, %v1382
  %v2791 = vmul.f32 %v1383, %v1383
  %v2792 = vmul.f32 %v1384, %v1384
  %v2793 = vmul.f32 %v1385, %v1385
  %v2794 = vmul.f32 %v1386, %v1386
  %v2795 = vmul.f32 %v1387, %v1387
  %v2796 = vmul.f32 %v1388, %v1388
  %v2797 = vmul.f32 %v1389, %v1389
  %v2798 = vmul.f32 %v1390, %v1390
  %v2799 = vmul.f32 %v1391, %v1391
  %v2800 = vmul.f32 %v1392, %v1392
  %v2801 = vmul.f32 %v1393, %v1393
  %v2802 = vmul.f32 %v1394, %v1394
  %v2803 = vmul.f32 %v1395, %v1395
  %v2804 = vmul.f32 %v1396, %v1396
  %v2805 = vmul.f32 %v1397, %v1397
  %v2806 = vmul.f32 %v1398, %v1398
  %v2807 = vmul.f32 %v1399, %v1399
  %v2808 = vmul.f32 %v1400, %v1400
  %v2809 = vmul.f32 %v1401, %v1401
  %v2810 = vmul.f32 %v1402, %v1402
  %v2811 = vmul.f32 %v1403, %v1403
  %v2812 = vmul.f32 %v1404, %v1404
  %v2813 = vmul.f32 %v1405, %v1405
  %v2814 = vmul.f32 %v1406, %v1406
  %v2815 = vmul.f32 %v1407, %v1407
  %v2816 = vmul.f32 %v1408, %v1408
  %v2817 = vmul.f32 %v1409, %v1409
  %v2818 = vmul.f32 %v1410, %v1410
  %v2819 = vmul.f32 %v1411, %v1411
  %v2820 = vmul.f32 %v1412, %v1412
  %v2821 = vmul.f32 %v1413, %v1413
  %v2822 = vmul.f32 %v1414, %v1414
  %v2823 = vmul.f32 %v1415, %v1415
  %v2824 = vadd.f32 %v1416, %v1438
  %v2825 = vadd.f32 %v2824, %v1460
  %v2826 = vadd.f32 %v2825, %v1482
  %v2827 = vadd.f32 %v2826, %v1504
  %v2828 = vadd.f32 %v2827, %v1526
  %v2829 = vadd.f32 %v2828, %v1548
  %v2830 = vadd.f32 %v2829, %v1570
  %v2831 = vadd.f32 %v2830, %v1592
  %v2832 = vadd.f32 %v2831, %v1614
  %v2833 = vadd.f32 %v2832, %v1636
  %v2834 = vadd.f32 %v2833, %v1658
  %v2835 = vadd.f32 %v2834, %v1680
  %v2836 = vadd.f32 %v2835, %v1702
  %v2837 = vadd.f32 %v2836, %v1724
  %v2838 = vadd.f32 %v2837, %v1746
  %v2839 = vadd.f32 %v2838, %v1768
  %v2840 = vadd.f32 %v2839, %v1790
  %v2841 = vadd.f32 %v2840, %v1812
  %v2842 = vadd.f32 %v2841, %v1834
  %v2843 = vadd.f32 %v2842, %v1856
  %v2844 = vadd.f32 %v2843, %v1878
  %v2845 = vadd.f32 %v2844, %v1900
  %v2846 = vadd.f32 %v2845, %v1922
  %v2847 = vadd.f32 %v2846, %v1944
  %v2848 = vadd.f32 %v2847, %v1966
  %v2849 = vadd.f32 %v2848, %v1988
  %v2850 = vadd.f32 %v2849, %v2010
  %v2851 = vadd.f32 %v2850, %v2032
  %v2852 = vadd.f32 %v2851, %v2054
  %v2853 = vadd.f32 %v2852, %v2076
  %v2854 = vadd.f32 %v2853, %v2098
  %v2855 = vadd.f32 %v2854, %v2120
  %v2856 = vadd.f32 %v2855, %v2142
  %v2857 = vadd.f32 %v2856, %v2164
  %v2858 = vadd.f32 %v2857, %v2186
  %v2859 = vadd.f32 %v2858, %v2208
  %v2860 = vadd.f32 %v2859, %v2230
  %v2861 = vadd.f32 %v2860, %v2252
  %v2862 = vadd.f32 %v2861, %v2274
  %v2863 = vadd.f32 %v2862, %v2296
  %v2864 = vadd.f32 %v2863, %v2318
  %v2865 = vadd.f32 %v2864, %v2340
  %v2866 = vadd.f32 %v2865, %v2362
  %v2867 = vadd.f32 %v2866, %v2384
  %v2868 = vadd.f32 %v2867, %v2406
  %v2869 = vadd.f32 %v2868, %v2428
  %v2870 = vadd.f32 %v2869, %v2450
  %v2871 = vadd.f32 %v2870, %v2472
  %v2872 = vadd.f32 %v2871, %v2494
  %v2873 = vadd.f32 %v2872, %v2516
  %v2874 = vadd.f32 %v2873, %v2538
  %v2875 = vadd.f32 %v2874, %v2560
  %v2876 = vadd.f32 %v2875, %v2582
  %v2877 = vadd.f32 %v2876, %v2604
  %v2878 = vadd.f32 %v2877, %v2626
  %v2879 = vadd.f32 %v2878, %v2648
  %v2880 = vadd.f32 %v2879, %v2670
  %v2881 = vadd.f32 %v2880, %v2692
  %v2882 = vadd.f32 %v2881, %v2714
  %v2883 = vadd.f32 %v2882, %v2736
  %v2884 = vadd.f32 %v2883, %v2758
  %v2885 = vadd.f32 %v2884, %v2780
  %v2886 = vadd.f32 %v2885, %v2802
  %v2887 = vrot.slane %v2886, 4
  %v2888 = vadd.f32 %v2886, %v2887
  %v2889 = vrot.slane %v2888, 2
  %v2890 = vadd.f32 %v2888, %v2889
  %v2891 = vrot.slane %v2890, 1
  %v2892 = vadd.f32 %v2890, %v2891
  %v2893 = vadd.f32 %v1417, %v1439
  %v2894 = vadd.f32 %v2893, %v1461
  %v2895 = vadd.f32 %v2894, %v1483
  %v2896 = vadd.f32 %v2895, %v1505
  %v2897 = vadd.f32 %v2896, %v1527
  %v2898 = vadd.f32 %v2897, %v1549
  %v2899 = vadd.f32 %v2898, %v1571
  %v2900 = vadd.f32 %v2899, %v1593
  %v2901 = vadd.f32 %v2900, %v1615
  %v2902 = vadd.f32 %v2901, %v1637
  %v2903 = vadd.f32 %v2902, %v1659
  %v2904 = vadd.f32 %v2903, %v1681
  %v2905 = vadd.f32 %v2904, %v1703
  %v2906 = vadd.f32 %v2905, %v1725
  %v2907 = vadd.f32 %v2906, %v1747
  %v2908 = vadd.f32 %v2907, %v1769
  %v2909 = vadd.f32 %v2908, %v1791
  %v2910 = vadd.f32 %v2909, %v1813
  %v2911 = vadd.f32 %v2910, %v1835
  %v2912 = vadd.f32 %v2911, %v1857
  %v2913 = vadd.f32 %v2912, %v1879
  %v2914 = vadd.f32 %v2913, %v1901
  %v2915 = vadd.f32 %v2914, %v1923
  %v2916 = vadd.f32 %v2915, %v1945
  %v2917 = vadd.f32 %v2916, %v1967
  %v2918 = vadd.f32 %v2917, %v1989
  %v2919 = vadd.f32 %v2918, %v2011
  %v2920 = vadd.f32 %v2919, %v2033
  %v2921 = vadd.f32 %v2920, %v2055
  %v2922 = vadd.f32 %v2921, %v2077
  %v2923 = vadd.f32 %v2922, %v2099
  %v2924 = vadd.f32 %v2923, %v2121
  %v2925 = vadd.f32 %v2924, %v2143
  %v2926 = vadd.f32 %v2925, %v2165
  %v2927 = vadd.f32 %v2926, %v2187
  %v2928 = vadd.f32 %v2927, %v2209
  %v2929 = vadd.f32 %v2928, %v2231
  %v2930 = vadd.f32 %v2929, %v2253
  %v2931 = vadd.f32 %v2930, %v2275
  %v2932 = vadd.f32 %v2931, %v2297
  %v2933 = vadd.f32 %v2932, %v2319
  %v2934 = vadd.f32 %v2933, %v2341
  %v2935 = vadd.f32 %v2934, %v2363
  %v2936 = vadd.f32 %v2935, %v2385
  %v2937 = vadd.f32 %v2936, %v2407
  %v2938 = vadd.f32 %v2937, %v2429
  %v2939 = vadd.f32 %v2938, %v2451
  %v2940 = vadd.f32 %v2939, %v2473
  %v2941 = vadd.f32 %v2940, %v2495
  %v2942 = vadd.f32 %v2941, %v2517
  %v2943 = vadd.f32 %v2942, %v2539
  %v2944 = vadd.f32 %v2943, %v2561
  %v2945 = vadd.f32 %v2944, %v2583
  %v2946 = vadd.f32 %v2945, %v2605
  %v2947 = vadd.f32 %v2946, %v2627
  %v2948 = vadd.f32 %v2947, %v2649
  %v2949 = vadd.f32 %v2948, %v2671
  %v2950 = vadd.f32 %v2949, %v2693
  %v2951 = vadd.f32 %v2950, %v2715
  %v2952 = vadd.f32 %v2951, %v2737
  %v2953 = vadd.f32 %v2952, %v2759
  %v2954 = vadd.f32 %v2953, %v2781
  %v2955 = vadd.f32 %v2954, %v2803
  %v2956 = vrot.slane %v2955, 4
  %v2957 = vadd.f32 %v2955, %v2956
  %v2958 = vrot.slane %v2957, 2
  %v2959 = vadd.f32 %v2957, %v2958
  %v2960 = vrot.slane %v2959, 1
  %v2961 = vadd.f32 %v2959, %v2960
  %v2962 = vadd.f32 %v1418, %v1440
  %v2963 = vadd.f32 %v2962, %v1462
  %v2964 = vadd.f32 %v2963, %v1484
  %v2965 = vadd.f32 %v2964, %v1506
  %v2966 = vadd.f32 %v2965, %v1528
  %v2967 = vadd.f32 %v2966, %v1550
  %v2968 = vadd.f32 %v2967, %v1572
  %v2969 = vadd.f32 %v2968, %v1594
  %v2970 = vadd.f32 %v2969, %v1616
  %v2971 = vadd.f32 %v2970, %v1638
  %v2972 = vadd.f32 %v2971, %v1660
  %v2973 = vadd.f32 %v2972, %v1682
  %v2974 = vadd.f32 %v2973, %v1704
  %v2975 = vadd.f32 %v2974, %v1726
  %v2976 = vadd.f32 %v2975, %v1748
  %v2977 = vadd.f32 %v2976, %v1770
  %v2978 = vadd.f32 %v2977, %v1792
  %v2979 = vadd.f32 %v2978, %v1814
  %v2980 = vadd.f32 %v2979, %v1836
  %v2981 = vadd.f32 %v2980, %v1858
  %v2982 = vadd.f32 %v2981, %v1880
  %v2983 = vadd.f32 %v2982, %v1902
  %v2984 = vadd.f32 %v2983, %v1924
  %v2985 = vadd.f32 %v2984, %v1946
  %v2986 = vadd.f32 %v2985, %v1968
  %v2987 = vadd.f32 %v2986, %v1990
  %v2988 = vadd.f32 %v2987, %v2012
  %v2989 = vadd.f32 %v2988, %v2034
  %v2990 = vadd.f32 %v2989, %v2056
  %v2991 = vadd.f32 %v2990, %v2078
  %v2992 = vadd.f32 %v2991, %v2100
  %v2993 = vadd.f32 %v2992, %v2122
  %v2994 = vadd.f32 %v2993, %v2144
  %v2995 = vadd.f32 %v2994, %v2166
  %v2996 = vadd.f32 %v2995, %v2188
  %v2997 = vadd.f32 %v2996, %v2210
  %v2998 = vadd.f32 %v2997, %v2232
  %v2999 = vadd.f32 %v2998, %v2254
  %v3000 = vadd.f32 %v2999, %v2276
  %v3001 = vadd.f32 %v3000, %v2298
  %v3002 = vadd.f32 %v3001, %v2320
  %v3003 = vadd.f32 %v3002, %v2342
  %v3004 = vadd.f32 %v3003, %v2364
  %v3005 = vadd.f32 %v3004, %v2386
  %v3006 = vadd.f32 %v3005, %v2408
  %v3007 = vadd.f32 %v3006, %v2430
  %v3008 = vadd.f32 %v3007, %v2452
  %v3009 = vadd.f32 %v3008, %v2474
  %v3010 = vadd.f32 %v3009, %v2496
  %v3011 = vadd.f32 %v3010, %v2518
  %v3012 = vadd.f32 %v3011, %v2540
  %v3013 = vadd.f32 %v3012, %v2562
  %v3014 = vadd.f32 %v3013, %v2584
  %v3015 = vadd.f32 %v3014, %v2606
  %v3016 = vadd.f32 %v3015, %v2628
  %v3017 = vadd.f32 %v3016, %v2650
  %v3018 = vadd.f32 %v3017, %v2672
  %v3019 = vadd.f32 %v3018, %v2694
  %v3020 = vadd.f32 %v3019, %v2716
  %v3021 = vadd.f32 %v3020, %v2738
  %v3022 = vadd.f32 %v3021, %v2760
  %v3023 = vadd.f32 %v3022, %v2782
  %v3024 = vadd.f32 %v3023, %v2804
  %v3025 = vrot.slane %v3024, 4
  %v3026 = vadd.f32 %v3024, %v3025
  %v3027 = vrot.slane %v3026, 2
  %v3028 = vadd.f32 %v3026, %v3027
  %v3029 = vrot.slane %v3028, 1
  %v3030 = vadd.f32 %v3028, %v3029
  %v3031 = vadd.f32 %v1419, %v1441
  %v3032 = vadd.f32 %v3031, %v1463
  %v3033 = vadd.f32 %v3032, %v1485
  %v3034 = vadd.f32 %v3033, %v1507
  %v3035 = vadd.f32 %v3034, %v1529
  %v3036 = vadd.f32 %v3035, %v1551
  %v3037 = vadd.f32 %v3036, %v1573
  %v3038 = vadd.f32 %v3037, %v1595
  %v3039 = vadd.f32 %v3038, %v1617
  %v3040 = vadd.f32 %v3039, %v1639
  %v3041 = vadd.f32 %v3040, %v1661
  %v3042 = vadd.f32 %v3041, %v1683
  %v3043 = vadd.f32 %v3042, %v1705
  %v3044 = vadd.f32 %v3043, %v1727
  %v3045 = vadd.f32 %v3044, %v1749
  %v3046 = vadd.f32 %v3045, %v1771
  %v3047 = vadd.f32 %v3046, %v1793
  %v3048 = vadd.f32 %v3047, %v1815
  %v3049 = vadd.f32 %v3048, %v1837
  %v3050 = vadd.f32 %v3049, %v1859
  %v3051 = vadd.f32 %v3050, %v1881
  %v3052 = vadd.f32 %v3051, %v1903
  %v3053 = vadd.f32 %v3052, %v1925
  %v3054 = vadd.f32 %v3053, %v1947
  %v3055 = vadd.f32 %v3054, %v1969
  %v3056 = vadd.f32 %v3055, %v1991
  %v3057 = vadd.f32 %v3056, %v2013
  %v3058 = vadd.f32 %v3057, %v2035
  %v3059 = vadd.f32 %v3058, %v2057
  %v3060 = vadd.f32 %v3059, %v2079
  %v3061 = vadd.f32 %v3060, %v2101
  %v3062 = vadd.f32 %v3061, %v2123
  %v3063 = vadd.f32 %v3062, %v2145
  %v3064 = vadd.f32 %v3063, %v2167
  %v3065 = vadd.f32 %v3064, %v2189
  %v3066 = vadd.f32 %v3065, %v2211
  %v3067 = vadd.f32 %v3066, %v2233
  %v3068 = vadd.f32 %v3067, %v2255
  %v3069 = vadd.f32 %v3068, %v2277
  %v3070 = vadd.f32 %v3069, %v2299
  %v3071 = vadd.f32 %v3070, %v2321
  %v3072 = vadd.f32 %v3071, %v2343
  %v3073 = vadd.f32 %v3072, %v2365
  %v3074 = vadd.f32 %v3073, %v2387
  %v3075 = vadd.f32 %v3074, %v2409
  %v3076 = vadd.f32 %v3075, %v2431
  %v3077 = vadd.f32 %v3076, %v2453
  %v3078 = vadd.f32 %v3077, %v2475
  %v3079 = vadd.f32 %v3078, %v2497
  %v3080 = vadd.f32 %v3079, %v2519
  %v3081 = vadd.f32 %v3080, %v2541
  %v3082 = vadd.f32 %v3081, %v2563
  %v3083 = vadd.f32 %v3082, %v2585
  %v3084 = vadd.f32 %v3083, %v2607
  %v3085 = vadd.f32 %v3084, %v2629
  %v3086 = vadd.f32 %v3085, %v2651
  %v3087 = vadd.f32 %v3086, %v2673
  %v3088 = vadd.f32 %v3087, %v2695
  %v3089 = vadd.f32 %v3088, %v2717
  %v3090 = vadd.f32 %v3089, %v2739
  %v3091 = vadd.f32 %v3090, %v2761
  %v3092 = vadd.f32 %v3091, %v2783
  %v3093 = vadd.f32 %v3092, %v2805
  %v3094 = vrot.slane %v3093, 4
  %v3095 = vadd.f32 %v3093, %v3094
  %v3096 = vrot.slane %v3095, 2
  %v3097 = vadd.f32 %v3095, %v3096
  %v3098 = vrot.slane %v3097, 1
  %v3099 = vadd.f32 %v3097, %v3098
  %v3100 = vadd.f32 %v1420, %v1442
  %v3101 = vadd.f32 %v3100, %v1464
  %v3102 = vadd.f32 %v3101, %v1486
  %v3103 = vadd.f32 %v3102, %v1508
  %v3104 = vadd.f32 %v3103, %v1530
  %v3105 = vadd.f32 %v3104, %v1552
  %v3106 = vadd.f32 %v3105, %v1574
  %v3107 = vadd.f32 %v3106, %v1596
  %v3108 = vadd.f32 %v3107, %v1618
  %v3109 = vadd.f32 %v3108, %v1640
  %v3110 = vadd.f32 %v3109, %v1662
  %v3111 = vadd.f32 %v3110, %v1684
  %v3112 = vadd.f32 %v3111, %v1706
  %v3113 = vadd.f32 %v3112, %v1728
  %v3114 = vadd.f32 %v3113, %v1750
  %v3115 = vadd.f32 %v3114, %v1772
  %v3116 = vadd.f32 %v3115, %v1794
  %v3117 = vadd.f32 %v3116, %v1816
  %v3118 = vadd.f32 %v3117, %v1838
  %v3119 = vadd.f32 %v3118, %v1860
  %v3120 = vadd.f32 %v3119, %v1882
  %v3121 = vadd.f32 %v3120, %v1904
  %v3122 = vadd.f32 %v3121, %v1926
  %v3123 = vadd.f32 %v3122, %v1948
  %v3124 = vadd.f32 %v3123, %v1970
  %v3125 = vadd.f32 %v3124, %v1992
  %v3126 = vadd.f32 %v3125, %v2014
  %v3127 = vadd.f32 %v3126, %v2036
  %v3128 = vadd.f32 %v3127, %v2058
  %v3129 = vadd.f32 %v3128, %v2080
  %v3130 = vadd.f32 %v3129, %v2102
  %v3131 = vadd.f32 %v3130, %v2124
  %v3132 = vadd.f32 %v3131, %v2146
  %v3133 = vadd.f32 %v3132, %v2168
  %v3134 = vadd.f32 %v3133, %v2190
  %v3135 = vadd.f32 %v3134, %v2212
  %v3136 = vadd.f32 %v3135, %v2234
  %v3137 = vadd.f32 %v3136, %v2256
  %v3138 = vadd.f32 %v3137, %v2278
  %v3139 = vadd.f32 %v3138, %v2300
  %v3140 = vadd.f32 %v3139, %v2322
  %v3141 = vadd.f32 %v3140, %v2344
  %v3142 = vadd.f32 %v3141, %v2366
  %v3143 = vadd.f32 %v3142, %v2388
  %v3144 = vadd.f32 %v3143, %v2410
  %v3145 = vadd.f32 %v3144, %v2432
  %v3146 = vadd.f32 %v3145, %v2454
  %v3147 = vadd.f32 %v3146, %v2476
  %v3148 = vadd.f32 %v3147, %v2498
  %v3149 = vadd.f32 %v3148, %v2520
  %v3150 = vadd.f32 %v3149, %v2542
  %v3151 = vadd.f32 %v3150, %v2564
  %v3152 = vadd.f32 %v3151, %v2586
  %v3153 = vadd.f32 %v3152, %v2608
  %v3154 = vadd.f32 %v3153, %v2630
  %v3155 = vadd.f32 %v3154, %v2652
  %v3156 = vadd.f32 %v3155, %v2674
  %v3157 = vadd.f32 %v3156, %v2696
  %v3158 = vadd.f32 %v3157, %v2718
  %v3159 = vadd.f32 %v3158, %v2740
  %v3160 = vadd.f32 %v3159, %v2762
  %v3161 = vadd.f32 %v3160, %v2784
  %v3162 = vadd.f32 %v3161, %v2806
  %v3163 = vrot.slane %v3162, 4
  %v3164 = vadd.f32 %v3162, %v3163
  %v3165 = vrot.slane %v3164, 2
  %v3166 = vadd.f32 %v3164, %v3165
  %v3167 = vrot.slane %v3166, 1
  %v3168 = vadd.f32 %v3166, %v3167
  %v3169 = vadd.f32 %v1421, %v1443
  %v3170 = vadd.f32 %v3169, %v1465
  %v3171 = vadd.f32 %v3170, %v1487
  %v3172 = vadd.f32 %v3171, %v1509
  %v3173 = vadd.f32 %v3172, %v1531
  %v3174 = vadd.f32 %v3173, %v1553
  %v3175 = vadd.f32 %v3174, %v1575
  %v3176 = vadd.f32 %v3175, %v1597
  %v3177 = vadd.f32 %v3176, %v1619
  %v3178 = vadd.f32 %v3177, %v1641
  %v3179 = vadd.f32 %v3178, %v1663
  %v3180 = vadd.f32 %v3179, %v1685
  %v3181 = vadd.f32 %v3180, %v1707
  %v3182 = vadd.f32 %v3181, %v1729
  %v3183 = vadd.f32 %v3182, %v1751
  %v3184 = vadd.f32 %v3183, %v1773
  %v3185 = vadd.f32 %v3184, %v1795
  %v3186 = vadd.f32 %v3185, %v1817
  %v3187 = vadd.f32 %v3186, %v1839
  %v3188 = vadd.f32 %v3187, %v1861
  %v3189 = vadd.f32 %v3188, %v1883
  %v3190 = vadd.f32 %v3189, %v1905
  %v3191 = vadd.f32 %v3190, %v1927
  %v3192 = vadd.f32 %v3191, %v1949
  %v3193 = vadd.f32 %v3192, %v1971
  %v3194 = vadd.f32 %v3193, %v1993
  %v3195 = vadd.f32 %v3194, %v2015
  %v3196 = vadd.f32 %v3195, %v2037
  %v3197 = vadd.f32 %v3196, %v2059
  %v3198 = vadd.f32 %v3197, %v2081
  %v3199 = vadd.f32 %v3198, %v2103
  %v3200 = vadd.f32 %v3199, %v2125
  %v3201 = vadd.f32 %v3200, %v2147
  %v3202 = vadd.f32 %v3201, %v2169
  %v3203 = vadd.f32 %v3202, %v2191
  %v3204 = vadd.f32 %v3203, %v2213
  %v3205 = vadd.f32 %v3204, %v2235
  %v3206 = vadd.f32 %v3205, %v2257
  %v3207 = vadd.f32 %v3206, %v2279
  %v3208 = vadd.f32 %v3207, %v2301
  %v3209 = vadd.f32 %v3208, %v2323
  %v3210 = vadd.f32 %v3209, %v2345
  %v3211 = vadd.f32 %v3210, %v2367
  %v3212 = vadd.f32 %v3211, %v2389
  %v3213 = vadd.f32 %v3212, %v2411
  %v3214 = vadd.f32 %v3213, %v2433
  %v3215 = vadd.f32 %v3214, %v2455
  %v3216 = vadd.f32 %v3215, %v2477
  %v3217 = vadd.f32 %v3216, %v2499
  %v3218 = vadd.f32 %v3217, %v2521
  %v3219 = vadd.f32 %v3218, %v2543
  %v3220 = vadd.f32 %v3219, %v2565
  %v3221 = vadd.f32 %v3220, %v2587
  %v3222 = vadd.f32 %v3221, %v2609
  %v3223 = vadd.f32 %v3222, %v2631
  %v3224 = vadd.f32 %v3223, %v2653
  %v3225 = vadd.f32 %v3224, %v2675
  %v3226 = vadd.f32 %v3225, %v2697
  %v3227 = vadd.f32 %v3226, %v2719
  %v3228 = vadd.f32 %v3227, %v2741
  %v3229 = vadd.f32 %v3228, %v2763
  %v3230 = vadd.f32 %v3229, %v2785
  %v3231 = vadd.f32 %v3230, %v2807
  %v3232 = vrot.slane %v3231, 4
  %v3233 = vadd.f32 %v3231, %v3232
  %v3234 = vrot.slane %v3233, 2
  %v3235 = vadd.f32 %v3233, %v3234
  %v3236 = vrot.slane %v3235, 1
  %v3237 = vadd.f32 %v3235, %v3236
  %v3238 = vadd.f32 %v1422, %v1444
  %v3239 = vadd.f32 %v3238, %v1466
  %v3240 = vadd.f32 %v3239, %v1488
  %v3241 = vadd.f32 %v3240, %v1510
  %v3242 = vadd.f32 %v3241, %v1532
  %v3243 = vadd.f32 %v3242, %v1554
  %v3244 = vadd.f32 %v3243, %v1576
  %v3245 = vadd.f32 %v3244, %v1598
  %v3246 = vadd.f32 %v3245, %v1620
  %v3247 = vadd.f32 %v3246, %v1642
  %v3248 = vadd.f32 %v3247, %v1664
  %v3249 = vadd.f32 %v3248, %v1686
  %v3250 = vadd.f32 %v3249, %v1708
  %v3251 = vadd.f32 %v3250, %v1730
  %v3252 = vadd.f32 %v3251, %v1752
  %v3253 = vadd.f32 %v3252, %v1774
  %v3254 = vadd.f32 %v3253, %v1796
  %v3255 = vadd.f32 %v3254, %v1818
  %v3256 = vadd.f32 %v3255, %v1840
  %v3257 = vadd.f32 %v3256, %v1862
  %v3258 = vadd.f32 %v3257, %v1884
  %v3259 = vadd.f32 %v3258, %v1906
  %v3260 = vadd.f32 %v3259, %v1928
  %v3261 = vadd.f32 %v3260, %v1950
  %v3262 = vadd.f32 %v3261, %v1972
  %v3263 = vadd.f32 %v3262, %v1994
  %v3264 = vadd.f32 %v3263, %v2016
  %v3265 = vadd.f32 %v3264, %v2038
  %v3266 = vadd.f32 %v3265, %v2060
  %v3267 = vadd.f32 %v3266, %v2082
  %v3268 = vadd.f32 %v3267, %v2104
  %v3269 = vadd.f32 %v3268, %v2126
  %v3270 = vadd.f32 %v3269, %v2148
  %v3271 = vadd.f32 %v3270, %v2170
  %v3272 = vadd.f32 %v3271, %v2192
  %v3273 = vadd.f32 %v3272, %v2214
  %v3274 = vadd.f32 %v3273, %v2236
  %v3275 = vadd.f32 %v3274, %v2258
  %v3276 = vadd.f32 %v3275, %v2280
  %v3277 = vadd.f32 %v3276, %v2302
  %v3278 = vadd.f32 %v3277, %v2324
  %v3279 = vadd.f32 %v3278, %v2346
  %v3280 = vadd.f32 %v3279, %v2368
  %v3281 = vadd.f32 %v3280, %v2390
  %v3282 = vadd.f32 %v3281, %v2412
  %v3283 = vadd.f32 %v3282, %v2434
  %v3284 = vadd.f32 %v3283, %v2456
  %v3285 = vadd.f32 %v3284, %v2478
  %v3286 = vadd.f32 %v3285, %v2500
  %v3287 = vadd.f32 %v3286, %v2522
  %v3288 = vadd.f32 %v3287, %v2544
  %v3289 = vadd.f32 %v3288, %v2566
  %v3290 = vadd.f32 %v3289, %v2588
  %v3291 = vadd.f32 %v3290, %v2610
  %v3292 = vadd.f32 %v3291, %v2632
  %v3293 = vadd.f32 %v3292, %v2654
  %v3294 = vadd.f32 %v3293, %v2676
  %v3295 = vadd.f32 %v3294, %v2698
  %v3296 = vadd.f32 %v3295, %v2720
  %v3297 = vadd.f32 %v3296, %v2742
  %v3298 = vadd.f32 %v3297, %v2764
  %v3299 = vadd.f32 %v3298, %v2786
  %v3300 = vadd.f32 %v3299, %v2808
  %v3301 = vrot.slane %v3300, 4
  %v3302 = vadd.f32 %v3300, %v3301
  %v3303 = vrot.slane %v3302, 2
  %v3304 = vadd.f32 %v3302, %v3303
  %v3305 = vrot.slane %v3304, 1
  %v3306 = vadd.f32 %v3304, %v3305
  %v3307 = vadd.f32 %v1423, %v1445
  %v3308 = vadd.f32 %v3307, %v1467
  %v3309 = vadd.f32 %v3308, %v1489
  %v3310 = vadd.f32 %v3309, %v1511
  %v3311 = vadd.f32 %v3310, %v1533
  %v3312 = vadd.f32 %v3311, %v1555
  %v3313 = vadd.f32 %v3312, %v1577
  %v3314 = vadd.f32 %v3313, %v1599
  %v3315 = vadd.f32 %v3314, %v1621
  %v3316 = vadd.f32 %v3315, %v1643
  %v3317 = vadd.f32 %v3316, %v1665
  %v3318 = vadd.f32 %v3317, %v1687
  %v3319 = vadd.f32 %v3318, %v1709
  %v3320 = vadd.f32 %v3319, %v1731
  %v3321 = vadd.f32 %v3320, %v1753
  %v3322 = vadd.f32 %v3321, %v1775
  %v3323 = vadd.f32 %v3322, %v1797
  %v3324 = vadd.f32 %v3323, %v1819
  %v3325 = vadd.f32 %v3324, %v1841
  %v3326 = vadd.f32 %v3325, %v1863
  %v3327 = vadd.f32 %v3326, %v1885
  %v3328 = vadd.f32 %v3327, %v1907
  %v3329 = vadd.f32 %v3328, %v1929
  %v3330 = vadd.f32 %v3329, %v1951
  %v3331 = vadd.f32 %v3330, %v1973
  %v3332 = vadd.f32 %v3331, %v1995
  %v3333 = vadd.f32 %v3332, %v2017
  %v3334 = vadd.f32 %v3333, %v2039
  %v3335 = vadd.f32 %v3334, %v2061
  %v3336 = vadd.f32 %v3335, %v2083
  %v3337 = vadd.f32 %v3336, %v2105
  %v3338 = vadd.f32 %v3337, %v2127
  %v3339 = vadd.f32 %v3338, %v2149
  %v3340 = vadd.f32 %v3339, %v2171
  %v3341 = vadd.f32 %v3340, %v2193
  %v3342 = vadd.f32 %v3341, %v2215
  %v3343 = vadd.f32 %v3342, %v2237
  %v3344 = vadd.f32 %v3343, %v2259
  %v3345 = vadd.f32 %v3344, %v2281
  %v3346 = vadd.f32 %v3345, %v2303
  %v3347 = vadd.f32 %v3346, %v2325
  %v3348 = vadd.f32 %v3347, %v2347
  %v3349 = vadd.f32 %v3348, %v2369
  %v3350 = vadd.f32 %v3349, %v2391
  %v3351 = vadd.f32 %v3350, %v2413
  %v3352 = vadd.f32 %v3351, %v2435
  %v3353 = vadd.f32 %v3352, %v2457
  %v3354 = vadd.f32 %v3353, %v2479
  %v3355 = vadd.f32 %v3354, %v2501
  %v3356 = vadd.f32 %v3355, %v2523
  %v3357 = vadd.f32 %v3356, %v2545
  %v3358 = vadd.f32 %v3357, %v2567
  %v3359 = vadd.f32 %v3358, %v2589
  %v3360 = vadd.f32 %v3359, %v2611
  %v3361 = vadd.f32 %v3360, %v2633
  %v3362 = vadd.f32 %v3361, %v2655
  %v3363 = vadd.f32 %v3362, %v2677
  %v3364 = vadd.f32 %v3363, %v2699
  %v3365 = vadd.f32 %v3364, %v2721
  %v3366 = vadd.f32 %v3365, %v2743
  %v3367 = vadd.f32 %v3366, %v2765
  %v3368 = vadd.f32 %v3367, %v2787
  %v3369 = vadd.f32 %v3368, %v2809
  %v3370 = vrot.slane %v3369, 4
  %v3371 = vadd.f32 %v3369, %v3370
  %v3372 = vrot.slane %v3371, 2
  %v3373 = vadd.f32 %v3371, %v3372
  %v3374 = vrot.slane %v3373, 1
  %v3375 = vadd.f32 %v3373, %v3374
  %v3376 = vadd.f32 %v1424, %v1446
  %v3377 = vadd.f32 %v3376, %v1468
  %v3378 = vadd.f32 %v3377, %v1490
  %v3379 = vadd.f32 %v3378, %v1512
  %v3380 = vadd.f32 %v3379, %v1534
  %v3381 = vadd.f32 %v3380, %v1556
  %v3382 = vadd.f32 %v3381, %v1578
  %v3383 = vadd.f32 %v3382, %v1600
  %v3384 = vadd.f32 %v3383, %v1622
  %v3385 = vadd.f32 %v3384, %v1644
  %v3386 = vadd.f32 %v3385, %v1666
  %v3387 = vadd.f32 %v3386, %v1688
  %v3388 = vadd.f32 %v3387, %v1710
  %v3389 = vadd.f32 %v3388, %v1732
  %v3390 = vadd.f32 %v3389, %v1754
  %v3391 = vadd.f32 %v3390, %v1776
  %v3392 = vadd.f32 %v3391, %v1798
  %v3393 = vadd.f32 %v3392, %v1820
  %v3394 = vadd.f32 %v3393, %v1842
  %v3395 = vadd.f32 %v3394, %v1864
  %v3396 = vadd.f32 %v3395, %v1886
  %v3397 = vadd.f32 %v3396, %v1908
  %v3398 = vadd.f32 %v3397, %v1930
  %v3399 = vadd.f32 %v3398, %v1952
  %v3400 = vadd.f32 %v3399, %v1974
  %v3401 = vadd.f32 %v3400, %v1996
  %v3402 = vadd.f32 %v3401, %v2018
  %v3403 = vadd.f32 %v3402, %v2040
  %v3404 = vadd.f32 %v3403, %v2062
  %v3405 = vadd.f32 %v3404, %v2084
  %v3406 = vadd.f32 %v3405, %v2106
  %v3407 = vadd.f32 %v3406, %v2128
  %v3408 = vadd.f32 %v3407, %v2150
  %v3409 = vadd.f32 %v3408, %v2172
  %v3410 = vadd.f32 %v3409, %v2194
  %v3411 = vadd.f32 %v3410, %v2216
  %v3412 = vadd.f32 %v3411, %v2238
  %v3413 = vadd.f32 %v3412, %v2260
  %v3414 = vadd.f32 %v3413, %v2282
  %v3415 = vadd.f32 %v3414, %v2304
  %v3416 = vadd.f32 %v3415, %v2326
  %v3417 = vadd.f32 %v3416, %v2348
  %v3418 = vadd.f32 %v3417, %v2370
  %v3419 = vadd.f32 %v3418, %v2392
  %v3420 = vadd.f32 %v3419, %v2414
  %v3421 = vadd.f32 %v3420, %v2436
  %v3422 = vadd.f32 %v3421, %v2458
  %v3423 = vadd.f32 %v3422, %v2480
  %v3424 = vadd.f32 %v3423, %v2502
  %v3425 = vadd.f32 %v3424, %v2524
  %v3426 = vadd.f32 %v3425, %v2546
  %v3427 = vadd.f32 %v3426, %v2568
  %v3428 = vadd.f32 %v3427, %v2590
  %v3429 = vadd.f32 %v3428, %v2612
  %v3430 = vadd.f32 %v3429, %v2634
  %v3431 = vadd.f32 %v3430, %v2656
  %v3432 = vadd.f32 %v3431, %v2678
  %v3433 = vadd.f32 %v3432, %v2700
  %v3434 = vadd.f32 %v3433, %v2722
  %v3435 = vadd.f32 %v3434, %v2744
  %v3436 = vadd.f32 %v3435, %v2766
  %v3437 = vadd.f32 %v3436, %v2788
  %v3438 = vadd.f32 %v3437, %v2810
  %v3439 = vrot.slane %v3438, 4
  %v3440 = vadd.f32 %v3438, %v3439
  %v3441 = vrot.slane %v3440, 2
  %v3442 = vadd.f32 %v3440, %v3441
  %v3443 = vrot.slane %v3442, 1
  %v3444 = vadd.f32 %v3442, %v3443
  %v3445 = vadd.f32 %v1425, %v1447
  %v3446 = vadd.f32 %v3445, %v1469
  %v3447 = vadd.f32 %v3446, %v1491
  %v3448 = vadd.f32 %v3447, %v1513
  %v3449 = vadd.f32 %v3448, %v1535
  %v3450 = vadd.f32 %v3449, %v1557
  %v3451 = vadd.f32 %v3450, %v1579
  %v3452 = vadd.f32 %v3451, %v1601
  %v3453 = vadd.f32 %v3452, %v1623
  %v3454 = vadd.f32 %v3453, %v1645
  %v3455 = vadd.f32 %v3454, %v1667
  %v3456 = vadd.f32 %v3455, %v1689
  %v3457 = vadd.f32 %v3456, %v1711
  %v3458 = vadd.f32 %v3457, %v1733
  %v3459 = vadd.f32 %v3458, %v1755
  %v3460 = vadd.f32 %v3459, %v1777
  %v3461 = vadd.f32 %v3460, %v1799
  %v3462 = vadd.f32 %v3461, %v1821
  %v3463 = vadd.f32 %v3462, %v1843
  %v3464 = vadd.f32 %v3463, %v1865
  %v3465 = vadd.f32 %v3464, %v1887
  %v3466 = vadd.f32 %v3465, %v1909
  %v3467 = vadd.f32 %v3466, %v1931
  %v3468 = vadd.f32 %v3467, %v1953
  %v3469 = vadd.f32 %v3468, %v1975
  %v3470 = vadd.f32 %v3469, %v1997
  %v3471 = vadd.f32 %v3470, %v2019
  %v3472 = vadd.f32 %v3471, %v2041
  %v3473 = vadd.f32 %v3472, %v2063
  %v3474 = vadd.f32 %v3473, %v2085
  %v3475 = vadd.f32 %v3474, %v2107
  %v3476 = vadd.f32 %v3475, %v2129
  %v3477 = vadd.f32 %v3476, %v2151
  %v3478 = vadd.f32 %v3477, %v2173
  %v3479 = vadd.f32 %v3478, %v2195
  %v3480 = vadd.f32 %v3479, %v2217
  %v3481 = vadd.f32 %v3480, %v2239
  %v3482 = vadd.f32 %v3481, %v2261
  %v3483 = vadd.f32 %v3482, %v2283
  %v3484 = vadd.f32 %v3483, %v2305
  %v3485 = vadd.f32 %v3484, %v2327
  %v3486 = vadd.f32 %v3485, %v2349
  %v3487 = vadd.f32 %v3486, %v2371
  %v3488 = vadd.f32 %v3487, %v2393
  %v3489 = vadd.f32 %v3488, %v2415
  %v3490 = vadd.f32 %v3489, %v2437
  %v3491 = vadd.f32 %v3490, %v2459
  %v3492 = vadd.f32 %v3491, %v2481
  %v3493 = vadd.f32 %v3492, %v2503
  %v3494 = vadd.f32 %v3493, %v2525
  %v3495 = vadd.f32 %v3494, %v2547
  %v3496 = vadd.f32 %v3495, %v2569
  %v3497 = vadd.f32 %v3496, %v2591
  %v3498 = vadd.f32 %v3497, %v2613
  %v3499 = vadd.f32 %v3498, %v2635
  %v3500 = vadd.f32 %v3499, %v2657
  %v3501 = vadd.f32 %v3500, %v2679
  %v3502 = vadd.f32 %v3501, %v2701
  %v3503 = vadd.f32 %v3502, %v2723
  %v3504 = vadd.f32 %v3503, %v2745
  %v3505 = vadd.f32 %v3504, %v2767
  %v3506 = vadd.f32 %v3505, %v2789
  %v3507 = vadd.f32 %v3506, %v2811
  %v3508 = vrot.slane %v3507, 4
  %v3509 = vadd.f32 %v3507, %v3508
  %v3510 = vrot.slane %v3509, 2
  %v3511 = vadd.f32 %v3509, %v3510
  %v3512 = vrot.slane %v3511, 1
  %v3513 = vadd.f32 %v3511, %v3512
  %v3514 = vadd.f32 %v1426, %v1448
  %v3515 = vadd.f32 %v3514, %v1470
  %v3516 = vadd.f32 %v3515, %v1492
  %v3517 = vadd.f32 %v3516, %v1514
  %v3518 = vadd.f32 %v3517, %v1536
  %v3519 = vadd.f32 %v3518, %v1558
  %v3520 = vadd.f32 %v3519, %v1580
  %v3521 = vadd.f32 %v3520, %v1602
  %v3522 = vadd.f32 %v3521, %v1624
  %v3523 = vadd.f32 %v3522, %v1646
  %v3524 = vadd.f32 %v3523, %v1668
  %v3525 = vadd.f32 %v3524, %v1690
  %v3526 = vadd.f32 %v3525, %v1712
  %v3527 = vadd.f32 %v3526, %v1734
  %v3528 = vadd.f32 %v3527, %v1756
  %v3529 = vadd.f32 %v3528, %v1778
  %v3530 = vadd.f32 %v3529, %v1800
  %v3531 = vadd.f32 %v3530, %v1822
  %v3532 = vadd.f32 %v3531, %v1844
  %v3533 = vadd.f32 %v3532, %v1866
  %v3534 = vadd.f32 %v3533, %v1888
  %v3535 = vadd.f32 %v3534, %v1910
  %v3536 = vadd.f32 %v3535, %v1932
  %v3537 = vadd.f32 %v3536, %v1954
  %v3538 = vadd.f32 %v3537, %v1976
  %v3539 = vadd.f32 %v3538, %v1998
  %v3540 = vadd.f32 %v3539, %v2020
  %v3541 = vadd.f32 %v3540, %v2042
  %v3542 = vadd.f32 %v3541, %v2064
  %v3543 = vadd.f32 %v3542, %v2086
  %v3544 = vadd.f32 %v3543, %v2108
  %v3545 = vadd.f32 %v3544, %v2130
  %v3546 = vadd.f32 %v3545, %v2152
  %v3547 = vadd.f32 %v3546, %v2174
  %v3548 = vadd.f32 %v3547, %v2196
  %v3549 = vadd.f32 %v3548, %v2218
  %v3550 = vadd.f32 %v3549, %v2240
  %v3551 = vadd.f32 %v3550, %v2262
  %v3552 = vadd.f32 %v3551, %v2284
  %v3553 = vadd.f32 %v3552, %v2306
  %v3554 = vadd.f32 %v3553, %v2328
  %v3555 = vadd.f32 %v3554, %v2350
  %v3556 = vadd.f32 %v3555, %v2372
  %v3557 = vadd.f32 %v3556, %v2394
  %v3558 = vadd.f32 %v3557, %v2416
  %v3559 = vadd.f32 %v3558, %v2438
  %v3560 = vadd.f32 %v3559, %v2460
  %v3561 = vadd.f32 %v3560, %v2482
  %v3562 = vadd.f32 %v3561, %v2504
  %v3563 = vadd.f32 %v3562, %v2526
  %v3564 = vadd.f32 %v3563, %v2548
  %v3565 = vadd.f32 %v3564, %v2570
  %v3566 = vadd.f32 %v3565, %v2592
  %v3567 = vadd.f32 %v3566, %v2614
  %v3568 = vadd.f32 %v3567, %v2636
  %v3569 = vadd.f32 %v3568, %v2658
  %v3570 = vadd.f32 %v3569, %v2680
  %v3571 = vadd.f32 %v3570, %v2702
  %v3572 = vadd.f32 %v3571, %v2724
  %v3573 = vadd.f32 %v3572, %v2746
  %v3574 = vadd.f32 %v3573, %v2768
  %v3575 = vadd.f32 %v3574, %v2790
  %v3576 = vadd.f32 %v3575, %v2812
  %v3577 = vrot.slane %v3576, 4
  %v3578 = vadd.f32 %v3576, %v3577
  %v3579 = vrot.slane %v3578, 2
  %v3580 = vadd.f32 %v3578, %v3579
  %v3581 = vrot.slane %v3580, 1
  %v3582 = vadd.f32 %v3580, %v3581
  %v3583 = vadd.f32 %v1427, %v1449
  %v3584 = vadd.f32 %v3583, %v1471
  %v3585 = vadd.f32 %v3584, %v1493
  %v3586 = vadd.f32 %v3585, %v1515
  %v3587 = vadd.f32 %v3586, %v1537
  %v3588 = vadd.f32 %v3587, %v1559
  %v3589 = vadd.f32 %v3588, %v1581
  %v3590 = vadd.f32 %v3589, %v1603
  %v3591 = vadd.f32 %v3590, %v1625
  %v3592 = vadd.f32 %v3591, %v1647
  %v3593 = vadd.f32 %v3592, %v1669
  %v3594 = vadd.f32 %v3593, %v1691
  %v3595 = vadd.f32 %v3594, %v1713
  %v3596 = vadd.f32 %v3595, %v1735
  %v3597 = vadd.f32 %v3596, %v1757
  %v3598 = vadd.f32 %v3597, %v1779
  %v3599 = vadd.f32 %v3598, %v1801
  %v3600 = vadd.f32 %v3599, %v1823
  %v3601 = vadd.f32 %v3600, %v1845
  %v3602 = vadd.f32 %v3601, %v1867
  %v3603 = vadd.f32 %v3602, %v1889
  %v3604 = vadd.f32 %v3603, %v1911
  %v3605 = vadd.f32 %v3604, %v1933
  %v3606 = vadd.f32 %v3605, %v1955
  %v3607 = vadd.f32 %v3606, %v1977
  %v3608 = vadd.f32 %v3607, %v1999
  %v3609 = vadd.f32 %v3608, %v2021
  %v3610 = vadd.f32 %v3609, %v2043
  %v3611 = vadd.f32 %v3610, %v2065
  %v3612 = vadd.f32 %v3611, %v2087
  %v3613 = vadd.f32 %v3612, %v2109
  %v3614 = vadd.f32 %v3613, %v2131
  %v3615 = vadd.f32 %v3614, %v2153
  %v3616 = vadd.f32 %v3615, %v2175
  %v3617 = vadd.f32 %v3616, %v2197
  %v3618 = vadd.f32 %v3617, %v2219
  %v3619 = vadd.f32 %v3618, %v2241
  %v3620 = vadd.f32 %v3619, %v2263
  %v3621 = vadd.f32 %v3620, %v2285
  %v3622 = vadd.f32 %v3621, %v2307
  %v3623 = vadd.f32 %v3622, %v2329
  %v3624 = vadd.f32 %v3623, %v2351
  %v3625 = vadd.f32 %v3624, %v2373
  %v3626 = vadd.f32 %v3625, %v2395
  %v3627 = vadd.f32 %v3626, %v2417
  %v3628 = vadd.f32 %v3627, %v2439
  %v3629 = vadd.f32 %v3628, %v2461
  %v3630 = vadd.f32 %v3629, %v2483
  %v3631 = vadd.f32 %v3630, %v2505
  %v3632 = vadd.f32 %v3631, %v2527
  %v3633 = vadd.f32 %v3632, %v2549
  %v3634 = vadd.f32 %v3633, %v2571
  %v3635 = vadd.f32 %v3634, %v2593
  %v3636 = vadd.f32 %v3635, %v2615
  %v3637 = vadd.f32 %v3636, %v2637
  %v3638 = vadd.f32 %v3637, %v2659
  %v3639 = vadd.f32 %v3638, %v2681
  %v3640 = vadd.f32 %v3639, %v2703
  %v3641 = vadd.f32 %v3640, %v2725
  %v3642 = vadd.f32 %v3641, %v2747
  %v3643 = vadd.f32 %v3642, %v2769
  %v3644 = vadd.f32 %v3643, %v2791
  %v3645 = vadd.f32 %v3644, %v2813
  %v3646 = vrot.slane %v3645, 4
  %v3647 = vadd.f32 %v3645, %v3646
  %v3648 = vrot.slane %v3647, 2
  %v3649 = vadd.f32 %v3647, %v3648
  %v3650 = vrot.slane %v3649, 1
  %v3651 = vadd.f32 %v3649, %v3650
  %v3652 = vadd.f32 %v1428, %v1450
  %v3653 = vadd.f32 %v3652, %v1472
  %v3654 = vadd.f32 %v3653, %v1494
  %v3655 = vadd.f32 %v3654, %v1516
  %v3656 = vadd.f32 %v3655, %v1538
  %v3657 = vadd.f32 %v3656, %v1560
  %v3658 = vadd.f32 %v3657, %v1582
  %v3659 = vadd.f32 %v3658, %v1604
  %v3660 = vadd.f32 %v3659, %v1626
  %v3661 = vadd.f32 %v3660, %v1648
  %v3662 = vadd.f32 %v3661, %v1670
  %v3663 = vadd.f32 %v3662, %v1692
  %v3664 = vadd.f32 %v3663, %v1714
  %v3665 = vadd.f32 %v3664, %v1736
  %v3666 = vadd.f32 %v3665, %v1758
  %v3667 = vadd.f32 %v3666, %v1780
  %v3668 = vadd.f32 %v3667, %v1802
  %v3669 = vadd.f32 %v3668, %v1824
  %v3670 = vadd.f32 %v3669, %v1846
  %v3671 = vadd.f32 %v3670, %v1868
  %v3672 = vadd.f32 %v3671, %v1890
  %v3673 = vadd.f32 %v3672, %v1912
  %v3674 = vadd.f32 %v3673, %v1934
  %v3675 = vadd.f32 %v3674, %v1956
  %v3676 = vadd.f32 %v3675, %v1978
  %v3677 = vadd.f32 %v3676, %v2000
  %v3678 = vadd.f32 %v3677, %v2022
  %v3679 = vadd.f32 %v3678, %v2044
  %v3680 = vadd.f32 %v3679, %v2066
  %v3681 = vadd.f32 %v3680, %v2088
  %v3682 = vadd.f32 %v3681, %v2110
  %v3683 = vadd.f32 %v3682, %v2132
  %v3684 = vadd.f32 %v3683, %v2154
  %v3685 = vadd.f32 %v3684, %v2176
  %v3686 = vadd.f32 %v3685, %v2198
  %v3687 = vadd.f32 %v3686, %v2220
  %v3688 = vadd.f32 %v3687, %v2242
  %v3689 = vadd.f32 %v3688, %v2264
  %v3690 = vadd.f32 %v3689, %v2286
  %v3691 = vadd.f32 %v3690, %v2308
  %v3692 = vadd.f32 %v3691, %v2330
  %v3693 = vadd.f32 %v3692, %v2352
  %v3694 = vadd.f32 %v3693, %v2374
  %v3695 = vadd.f32 %v3694, %v2396
  %v3696 = vadd.f32 %v3695, %v2418
  %v3697 = vadd.f32 %v3696, %v2440
  %v3698 = vadd.f32 %v3697, %v2462
  %v3699 = vadd.f32 %v3698, %v2484
  %v3700 = vadd.f32 %v3699, %v2506
  %v3701 = vadd.f32 %v3700, %v2528
  %v3702 = vadd.f32 %v3701, %v2550
  %v3703 = vadd.f32 %v3702, %v2572
  %v3704 = vadd.f32 %v3703, %v2594
  %v3705 = vadd.f32 %v3704, %v2616
  %v3706 = vadd.f32 %v3705, %v2638
  %v3707 = vadd.f32 %v3706, %v2660
  %v3708 = vadd.f32 %v3707, %v2682
  %v3709 = vadd.f32 %v3708, %v2704
  %v3710 = vadd.f32 %v3709, %v2726
  %v3711 = vadd.f32 %v3710, %v2748
  %v3712 = vadd.f32 %v3711, %v2770
  %v3713 = vadd.f32 %v3712, %v2792
  %v3714 = vadd.f32 %v3713, %v2814
  %v3715 = vrot.slane %v3714, 4
  %v3716 = vadd.f32 %v3714, %v3715
  %v3717 = vrot.slane %v3716, 2
  %v3718 = vadd.f32 %v3716, %v3717
  %v3719 = vrot.slane %v3718, 1
  %v3720 = vadd.f32 %v3718, %v3719
  %v3721 = vadd.f32 %v1429, %v1451
  %v3722 = vadd.f32 %v3721, %v1473
  %v3723 = vadd.f32 %v3722, %v1495
  %v3724 = vadd.f32 %v3723, %v1517
  %v3725 = vadd.f32 %v3724, %v1539
  %v3726 = vadd.f32 %v3725, %v1561
  %v3727 = vadd.f32 %v3726, %v1583
  %v3728 = vadd.f32 %v3727, %v1605
  %v3729 = vadd.f32 %v3728, %v1627
  %v3730 = vadd.f32 %v3729, %v1649
  %v3731 = vadd.f32 %v3730, %v1671
  %v3732 = vadd.f32 %v3731, %v1693
  %v3733 = vadd.f32 %v3732, %v1715
  %v3734 = vadd.f32 %v3733, %v1737
  %v3735 = vadd.f32 %v3734, %v1759
  %v3736 = vadd.f32 %v3735, %v1781
  %v3737 = vadd.f32 %v3736, %v1803
  %v3738 = vadd.f32 %v3737, %v1825
  %v3739 = vadd.f32 %v3738, %v1847
  %v3740 = vadd.f32 %v3739, %v1869
  %v3741 = vadd.f32 %v3740, %v1891
  %v3742 = vadd.f32 %v3741, %v1913
  %v3743 = vadd.f32 %v3742, %v1935
  %v3744 = vadd.f32 %v3743, %v1957
  %v3745 = vadd.f32 %v3744, %v1979
  %v3746 = vadd.f32 %v3745, %v2001
  %v3747 = vadd.f32 %v3746, %v2023
  %v3748 = vadd.f32 %v3747, %v2045
  %v3749 = vadd.f32 %v3748, %v2067
  %v3750 = vadd.f32 %v3749, %v2089
  %v3751 = vadd.f32 %v3750, %v2111
  %v3752 = vadd.f32 %v3751, %v2133
  %v3753 = vadd.f32 %v3752, %v2155
  %v3754 = vadd.f32 %v3753, %v2177
  %v3755 = vadd.f32 %v3754, %v2199
  %v3756 = vadd.f32 %v3755, %v2221
  %v3757 = vadd.f32 %v3756, %v2243
  %v3758 = vadd.f32 %v3757, %v2265
  %v3759 = vadd.f32 %v3758, %v2287
  %v3760 = vadd.f32 %v3759, %v2309
  %v3761 = vadd.f32 %v3760, %v2331
  %v3762 = vadd.f32 %v3761, %v2353
  %v3763 = vadd.f32 %v3762, %v2375
  %v3764 = vadd.f32 %v3763, %v2397
  %v3765 = vadd.f32 %v3764, %v2419
  %v3766 = vadd.f32 %v3765, %v2441
  %v3767 = vadd.f32 %v3766, %v2463
  %v3768 = vadd.f32 %v3767, %v2485
  %v3769 = vadd.f32 %v3768, %v2507
  %v3770 = vadd.f32 %v3769, %v2529
  %v3771 = vadd.f32 %v3770, %v2551
  %v3772 = vadd.f32 %v3771, %v2573
  %v3773 = vadd.f32 %v3772, %v2595
  %v3774 = vadd.f32 %v3773, %v2617
  %v3775 = vadd.f32 %v3774, %v2639
  %v3776 = vadd.f32 %v3775, %v2661
  %v3777 = vadd.f32 %v3776, %v2683
  %v3778 = vadd.f32 %v3777, %v2705
  %v3779 = vadd.f32 %v3778, %v2727
  %v3780 = vadd.f32 %v3779, %v2749
  %v3781 = vadd.f32 %v3780, %v2771
  %v3782 = vadd.f32 %v3781, %v2793
  %v3783 = vadd.f32 %v3782, %v2815
  %v3784 = vrot.slane %v3783, 4
  %v3785 = vadd.f32 %v3783, %v3784
  %v3786 = vrot.slane %v3785, 2
  %v3787 = vadd.f32 %v3785, %v3786
  %v3788 = vrot.slane %v3787, 1
  %v3789 = vadd.f32 %v3787, %v3788
  %v3790 = vadd.f32 %v1430, %v1452
  %v3791 = vadd.f32 %v3790, %v1474
  %v3792 = vadd.f32 %v3791, %v1496
  %v3793 = vadd.f32 %v3792, %v1518
  %v3794 = vadd.f32 %v3793, %v1540
  %v3795 = vadd.f32 %v3794, %v1562
  %v3796 = vadd.f32 %v3795, %v1584
  %v3797 = vadd.f32 %v3796, %v1606
  %v3798 = vadd.f32 %v3797, %v1628
  %v3799 = vadd.f32 %v3798, %v1650
  %v3800 = vadd.f32 %v3799, %v1672
  %v3801 = vadd.f32 %v3800, %v1694
  %v3802 = vadd.f32 %v3801, %v1716
  %v3803 = vadd.f32 %v3802, %v1738
  %v3804 = vadd.f32 %v3803, %v1760
  %v3805 = vadd.f32 %v3804, %v1782
  %v3806 = vadd.f32 %v3805, %v1804
  %v3807 = vadd.f32 %v3806, %v1826
  %v3808 = vadd.f32 %v3807, %v1848
  %v3809 = vadd.f32 %v3808, %v1870
  %v3810 = vadd.f32 %v3809, %v1892
  %v3811 = vadd.f32 %v3810, %v1914
  %v3812 = vadd.f32 %v3811, %v1936
  %v3813 = vadd.f32 %v3812, %v1958
  %v3814 = vadd.f32 %v3813, %v1980
  %v3815 = vadd.f32 %v3814, %v2002
  %v3816 = vadd.f32 %v3815, %v2024
  %v3817 = vadd.f32 %v3816, %v2046
  %v3818 = vadd.f32 %v3817, %v2068
  %v3819 = vadd.f32 %v3818, %v2090
  %v3820 = vadd.f32 %v3819, %v2112
  %v3821 = vadd.f32 %v3820, %v2134
  %v3822 = vadd.f32 %v3821, %v2156
  %v3823 = vadd.f32 %v3822, %v2178
  %v3824 = vadd.f32 %v3823, %v2200
  %v3825 = vadd.f32 %v3824, %v2222
  %v3826 = vadd.f32 %v3825, %v2244
  %v3827 = vadd.f32 %v3826, %v2266
  %v3828 = vadd.f32 %v3827, %v2288
  %v3829 = vadd.f32 %v3828, %v2310
  %v3830 = vadd.f32 %v3829, %v2332
  %v3831 = vadd.f32 %v3830, %v2354
  %v3832 = vadd.f32 %v3831, %v2376
  %v3833 = vadd.f32 %v3832, %v2398
  %v3834 = vadd.f32 %v3833, %v2420
  %v3835 = vadd.f32 %v3834, %v2442
  %v3836 = vadd.f32 %v3835, %v2464
  %v3837 = vadd.f32 %v3836, %v2486
  %v3838 = vadd.f32 %v3837, %v2508
  %v3839 = vadd.f32 %v3838, %v2530
  %v3840 = vadd.f32 %v3839, %v2552
  %v3841 = vadd.f32 %v3840, %v2574
  %v3842 = vadd.f32 %v3841, %v2596
  %v3843 = vadd.f32 %v3842, %v2618
  %v3844 = vadd.f32 %v3843, %v2640
  %v3845 = vadd.f32 %v3844, %v2662
  %v3846 = vadd.f32 %v3845, %v2684
  %v3847 = vadd.f32 %v3846, %v2706
  %v3848 = vadd.f32 %v3847, %v2728
  %v3849 = vadd.f32 %v3848, %v2750
  %v3850 = vadd.f32 %v3849, %v2772
  %v3851 = vadd.f32 %v3850, %v2794
  %v3852 = vadd.f32 %v3851, %v2816
  %v3853 = vrot.slane %v3852, 4
  %v3854 = vadd.f32 %v3852, %v3853
  %v3855 = vrot.slane %v3854, 2
  %v3856 = vadd.f32 %v3854, %v3855
  %v3857 = vrot.slane %v3856, 1
  %v3858 = vadd.f32 %v3856, %v3857
  %v3859 = vadd.f32 %v1431, %v1453
  %v3860 = vadd.f32 %v3859, %v1475
  %v3861 = vadd.f32 %v3860, %v1497
  %v3862 = vadd.f32 %v3861, %v1519
  %v3863 = vadd.f32 %v3862, %v1541
  %v3864 = vadd.f32 %v3863, %v1563
  %v3865 = vadd.f32 %v3864, %v1585
  %v3866 = vadd.f32 %v3865, %v1607
  %v3867 = vadd.f32 %v3866, %v1629
  %v3868 = vadd.f32 %v3867, %v1651
  %v3869 = vadd.f32 %v3868, %v1673
  %v3870 = vadd.f32 %v3869, %v1695
  %v3871 = vadd.f32 %v3870, %v1717
  %v3872 = vadd.f32 %v3871, %v1739
  %v3873 = vadd.f32 %v3872, %v1761
  %v3874 = vadd.f32 %v3873, %v1783
  %v3875 = vadd.f32 %v3874, %v1805
  %v3876 = vadd.f32 %v3875, %v1827
  %v3877 = vadd.f32 %v3876, %v1849
  %v3878 = vadd.f32 %v3877, %v1871
  %v3879 = vadd.f32 %v3878, %v1893
  %v3880 = vadd.f32 %v3879, %v1915
  %v3881 = vadd.f32 %v3880, %v1937
  %v3882 = vadd.f32 %v3881, %v1959
  %v3883 = vadd.f32 %v3882, %v1981
  %v3884 = vadd.f32 %v3883, %v2003
  %v3885 = vadd.f32 %v3884, %v2025
  %v3886 = vadd.f32 %v3885, %v2047
  %v3887 = vadd.f32 %v3886, %v2069
  %v3888 = vadd.f32 %v3887, %v2091
  %v3889 = vadd.f32 %v3888, %v2113
  %v3890 = vadd.f32 %v3889, %v2135
  %v3891 = vadd.f32 %v3890, %v2157
  %v3892 = vadd.f32 %v3891, %v2179
  %v3893 = vadd.f32 %v3892, %v2201
  %v3894 = vadd.f32 %v3893, %v2223
  %v3895 = vadd.f32 %v3894, %v2245
  %v3896 = vadd.f32 %v3895, %v2267
  %v3897 = vadd.f32 %v3896, %v2289
  %v3898 = vadd.f32 %v3897, %v2311
  %v3899 = vadd.f32 %v3898, %v2333
  %v3900 = vadd.f32 %v3899, %v2355
  %v3901 = vadd.f32 %v3900, %v2377
  %v3902 = vadd.f32 %v3901, %v2399
  %v3903 = vadd.f32 %v3902, %v2421
  %v3904 = vadd.f32 %v3903, %v2443
  %v3905 = vadd.f32 %v3904, %v2465
  %v3906 = vadd.f32 %v3905, %v2487
  %v3907 = vadd.f32 %v3906, %v2509
  %v3908 = vadd.f32 %v3907, %v2531
  %v3909 = vadd.f32 %v3908, %v2553
  %v3910 = vadd.f32 %v3909, %v2575
  %v3911 = vadd.f32 %v3910, %v2597
  %v3912 = vadd.f32 %v3911, %v2619
  %v3913 = vadd.f32 %v3912, %v2641
  %v3914 = vadd.f32 %v3913, %v2663
  %v3915 = vadd.f32 %v3914, %v2685
  %v3916 = vadd.f32 %v3915, %v2707
  %v3917 = vadd.f32 %v3916, %v2729
  %v3918 = vadd.f32 %v3917, %v2751
  %v3919 = vadd.f32 %v3918, %v2773
  %v3920 = vadd.f32 %v3919, %v2795
  %v3921 = vadd.f32 %v3920, %v2817
  %v3922 = vrot.slane %v3921, 4
  %v3923 = vadd.f32 %v3921, %v3922
  %v3924 = vrot.slane %v3923, 2
  %v3925 = vadd.f32 %v3923, %v3924
  %v3926 = vrot.slane %v3925, 1
  %v3927 = vadd.f32 %v3925, %v3926
  %v3928 = vadd.f32 %v1432, %v1454
  %v3929 = vadd.f32 %v3928, %v1476
  %v3930 = vadd.f32 %v3929, %v1498
  %v3931 = vadd.f32 %v3930, %v1520
  %v3932 = vadd.f32 %v3931, %v1542
  %v3933 = vadd.f32 %v3932, %v1564
  %v3934 = vadd.f32 %v3933, %v1586
  %v3935 = vadd.f32 %v3934, %v1608
  %v3936 = vadd.f32 %v3935, %v1630
  %v3937 = vadd.f32 %v3936, %v1652
  %v3938 = vadd.f32 %v3937, %v1674
  %v3939 = vadd.f32 %v3938, %v1696
  %v3940 = vadd.f32 %v3939, %v1718
  %v3941 = vadd.f32 %v3940, %v1740
  %v3942 = vadd.f32 %v3941, %v1762
  %v3943 = vadd.f32 %v3942, %v1784
  %v3944 = vadd.f32 %v3943, %v1806
  %v3945 = vadd.f32 %v3944, %v1828
  %v3946 = vadd.f32 %v3945, %v1850
  %v3947 = vadd.f32 %v3946, %v1872
  %v3948 = vadd.f32 %v3947, %v1894
  %v3949 = vadd.f32 %v3948, %v1916
  %v3950 = vadd.f32 %v3949, %v1938
  %v3951 = vadd.f32 %v3950, %v1960
  %v3952 = vadd.f32 %v3951, %v1982
  %v3953 = vadd.f32 %v3952, %v2004
  %v3954 = vadd.f32 %v3953, %v2026
  %v3955 = vadd.f32 %v3954, %v2048
  %v3956 = vadd.f32 %v3955, %v2070
  %v3957 = vadd.f32 %v3956, %v2092
  %v3958 = vadd.f32 %v3957, %v2114
  %v3959 = vadd.f32 %v3958, %v2136
  %v3960 = vadd.f32 %v3959, %v2158
  %v3961 = vadd.f32 %v3960, %v2180
  %v3962 = vadd.f32 %v3961, %v2202
  %v3963 = vadd.f32 %v3962, %v2224
  %v3964 = vadd.f32 %v3963, %v2246
  %v3965 = vadd.f32 %v3964, %v2268
  %v3966 = vadd.f32 %v3965, %v2290
  %v3967 = vadd.f32 %v3966, %v2312
  %v3968 = vadd.f32 %v3967, %v2334
  %v3969 = vadd.f32 %v3968, %v2356
  %v3970 = vadd.f32 %v3969, %v2378
  %v3971 = vadd.f32 %v3970, %v2400
  %v3972 = vadd.f32 %v3971, %v2422
  %v3973 = vadd.f32 %v3972, %v2444
  %v3974 = vadd.f32 %v3973, %v2466
  %v3975 = vadd.f32 %v3974, %v2488
  %v3976 = vadd.f32 %v3975, %v2510
  %v3977 = vadd.f32 %v3976, %v2532
  %v3978 = vadd.f32 %v3977, %v2554
  %v3979 = vadd.f32 %v3978, %v2576
  %v3980 = vadd.f32 %v3979, %v2598
  %v3981 = vadd.f32 %v3980, %v2620
  %v3982 = vadd.f32 %v3981, %v2642
  %v3983 = vadd.f32 %v3982, %v2664
  %v3984 = vadd.f32 %v3983, %v2686
  %v3985 = vadd.f32 %v3984, %v2708
  %v3986 = vadd.f32 %v3985, %v2730
  %v3987 = vadd.f32 %v3986, %v2752
  %v3988 = vadd.f32 %v3987, %v2774
  %v3989 = vadd.f32 %v3988, %v2796
  %v3990 = vadd.f32 %v3989, %v2818
  %v3991 = vrot.slane %v3990, 4
  %v3992 = vadd.f32 %v3990, %v3991
  %v3993 = vrot.slane %v3992, 2
  %v3994 = vadd.f32 %v3992, %v3993
  %v3995 = vrot.slane %v3994, 1
  %v3996 = vadd.f32 %v3994, %v3995
  %v3997 = vadd.f32 %v1433, %v1455
  %v3998 = vadd.f32 %v3997, %v1477
  %v3999 = vadd.f32 %v3998, %v1499
  %v4000 = vadd.f32 %v3999, %v1521
  %v4001 = vadd.f32 %v4000, %v1543
  %v4002 = vadd.f32 %v4001, %v1565
  %v4003 = vadd.f32 %v4002, %v1587
  %v4004 = vadd.f32 %v4003, %v1609
  %v4005 = vadd.f32 %v4004, %v1631
  %v4006 = vadd.f32 %v4005, %v1653
  %v4007 = vadd.f32 %v4006, %v1675
  %v4008 = vadd.f32 %v4007, %v1697
  %v4009 = vadd.f32 %v4008, %v1719
  %v4010 = vadd.f32 %v4009, %v1741
  %v4011 = vadd.f32 %v4010, %v1763
  %v4012 = vadd.f32 %v4011, %v1785
  %v4013 = vadd.f32 %v4012, %v1807
  %v4014 = vadd.f32 %v4013, %v1829
  %v4015 = vadd.f32 %v4014, %v1851
  %v4016 = vadd.f32 %v4015, %v1873
  %v4017 = vadd.f32 %v4016, %v1895
  %v4018 = vadd.f32 %v4017, %v1917
  %v4019 = vadd.f32 %v4018, %v1939
  %v4020 = vadd.f32 %v4019, %v1961
  %v4021 = vadd.f32 %v4020, %v1983
  %v4022 = vadd.f32 %v4021, %v2005
  %v4023 = vadd.f32 %v4022, %v2027
  %v4024 = vadd.f32 %v4023, %v2049
  %v4025 = vadd.f32 %v4024, %v2071
  %v4026 = vadd.f32 %v4025, %v2093
  %v4027 = vadd.f32 %v4026, %v2115
  %v4028 = vadd.f32 %v4027, %v2137
  %v4029 = vadd.f32 %v4028, %v2159
  %v4030 = vadd.f32 %v4029, %v2181
  %v4031 = vadd.f32 %v4030, %v2203
  %v4032 = vadd.f32 %v4031, %v2225
  %v4033 = vadd.f32 %v4032, %v2247
  %v4034 = vadd.f32 %v4033, %v2269
  %v4035 = vadd.f32 %v4034, %v2291
  %v4036 = vadd.f32 %v4035, %v2313
  %v4037 = vadd.f32 %v4036, %v2335
  %v4038 = vadd.f32 %v4037, %v2357
  %v4039 = vadd.f32 %v4038, %v2379
  %v4040 = vadd.f32 %v4039, %v2401
  %v4041 = vadd.f32 %v4040, %v2423
  %v4042 = vadd.f32 %v4041, %v2445
  %v4043 = vadd.f32 %v4042, %v2467
  %v4044 = vadd.f32 %v4043, %v2489
  %v4045 = vadd.f32 %v4044, %v2511
  %v4046 = vadd.f32 %v4045, %v2533
  %v4047 = vadd.f32 %v4046, %v2555
  %v4048 = vadd.f32 %v4047, %v2577
  %v4049 = vadd.f32 %v4048, %v2599
  %v4050 = vadd.f32 %v4049, %v2621
  %v4051 = vadd.f32 %v4050, %v2643
  %v4052 = vadd.f32 %v4051, %v2665
  %v4053 = vadd.f32 %v4052, %v2687
  %v4054 = vadd.f32 %v4053, %v2709
  %v4055 = vadd.f32 %v4054, %v2731
  %v4056 = vadd.f32 %v4055, %v2753
  %v4057 = vadd.f32 %v4056, %v2775
  %v4058 = vadd.f32 %v4057, %v2797
  %v4059 = vadd.f32 %v4058, %v2819
  %v4060 = vrot.slane %v4059, 4
  %v4061 = vadd.f32 %v4059, %v4060
  %v4062 = vrot.slane %v4061, 2
  %v4063 = vadd.f32 %v4061, %v4062
  %v4064 = vrot.slane %v4063, 1
  %v4065 = vadd.f32 %v4063, %v4064
  %v4066 = vadd.f32 %v1434, %v1456
  %v4067 = vadd.f32 %v4066, %v1478
  %v4068 = vadd.f32 %v4067, %v1500
  %v4069 = vadd.f32 %v4068, %v1522
  %v4070 = vadd.f32 %v4069, %v1544
  %v4071 = vadd.f32 %v4070, %v1566
  %v4072 = vadd.f32 %v4071, %v1588
  %v4073 = vadd.f32 %v4072, %v1610
  %v4074 = vadd.f32 %v4073, %v1632
  %v4075 = vadd.f32 %v4074, %v1654
  %v4076 = vadd.f32 %v4075, %v1676
  %v4077 = vadd.f32 %v4076, %v1698
  %v4078 = vadd.f32 %v4077, %v1720
  %v4079 = vadd.f32 %v4078, %v1742
  %v4080 = vadd.f32 %v4079, %v1764
  %v4081 = vadd.f32 %v4080, %v1786
  %v4082 = vadd.f32 %v4081, %v1808
  %v4083 = vadd.f32 %v4082, %v1830
  %v4084 = vadd.f32 %v4083, %v1852
  %v4085 = vadd.f32 %v4084, %v1874
  %v4086 = vadd.f32 %v4085, %v1896
  %v4087 = vadd.f32 %v4086, %v1918
  %v4088 = vadd.f32 %v4087, %v1940
  %v4089 = vadd.f32 %v4088, %v1962
  %v4090 = vadd.f32 %v4089, %v1984
  %v4091 = vadd.f32 %v4090, %v2006
  %v4092 = vadd.f32 %v4091, %v2028
  %v4093 = vadd.f32 %v4092, %v2050
  %v4094 = vadd.f32 %v4093, %v2072
  %v4095 = vadd.f32 %v4094, %v2094
  %v4096 = vadd.f32 %v4095, %v2116
  %v4097 = vadd.f32 %v4096, %v2138
  %v4098 = vadd.f32 %v4097, %v2160
  %v4099 = vadd.f32 %v4098, %v2182
  %v4100 = vadd.f32 %v4099, %v2204
  %v4101 = vadd.f32 %v4100, %v2226
  %v4102 = vadd.f32 %v4101, %v2248
  %v4103 = vadd.f32 %v4102, %v2270
  %v4104 = vadd.f32 %v4103, %v2292
  %v4105 = vadd.f32 %v4104, %v2314
  %v4106 = vadd.f32 %v4105, %v2336
  %v4107 = vadd.f32 %v4106, %v2358
  %v4108 = vadd.f32 %v4107, %v2380
  %v4109 = vadd.f32 %v4108, %v2402
  %v4110 = vadd.f32 %v4109, %v2424
  %v4111 = vadd.f32 %v4110, %v2446
  %v4112 = vadd.f32 %v4111, %v2468
  %v4113 = vadd.f32 %v4112, %v2490
  %v4114 = vadd.f32 %v4113, %v2512
  %v4115 = vadd.f32 %v4114, %v2534
  %v4116 = vadd.f32 %v4115, %v2556
  %v4117 = vadd.f32 %v4116, %v2578
  %v4118 = vadd.f32 %v4117, %v2600
  %v4119 = vadd.f32 %v4118, %v2622
  %v4120 = vadd.f32 %v4119, %v2644
  %v4121 = vadd.f32 %v4120, %v2666
  %v4122 = vadd.f32 %v4121, %v2688
  %v4123 = vadd.f32 %v4122, %v2710
  %v4124 = vadd.f32 %v4123, %v2732
  %v4125 = vadd.f32 %v4124, %v2754
  %v4126 = vadd.f32 %v4125, %v2776
  %v4127 = vadd.f32 %v4126, %v2798
  %v4128 = vadd.f32 %v4127, %v2820
  %v4129 = vrot.slane %v4128, 4
  %v4130 = vadd.f32 %v4128, %v4129
  %v4131 = vrot.slane %v4130, 2
  %v4132 = vadd.f32 %v4130, %v4131
  %v4133 = vrot.slane %v4132, 1
  %v4134 = vadd.f32 %v4132, %v4133
  %v4135 = vadd.f32 %v1435, %v1457
  %v4136 = vadd.f32 %v4135, %v1479
  %v4137 = vadd.f32 %v4136, %v1501
  %v4138 = vadd.f32 %v4137, %v1523
  %v4139 = vadd.f32 %v4138, %v1545
  %v4140 = vadd.f32 %v4139, %v1567
  %v4141 = vadd.f32 %v4140, %v1589
  %v4142 = vadd.f32 %v4141, %v1611
  %v4143 = vadd.f32 %v4142, %v1633
  %v4144 = vadd.f32 %v4143, %v1655
  %v4145 = vadd.f32 %v4144, %v1677
  %v4146 = vadd.f32 %v4145, %v1699
  %v4147 = vadd.f32 %v4146, %v1721
  %v4148 = vadd.f32 %v4147, %v1743
  %v4149 = vadd.f32 %v4148, %v1765
  %v4150 = vadd.f32 %v4149, %v1787
  %v4151 = vadd.f32 %v4150, %v1809
  %v4152 = vadd.f32 %v4151, %v1831
  %v4153 = vadd.f32 %v4152, %v1853
  %v4154 = vadd.f32 %v4153, %v1875
  %v4155 = vadd.f32 %v4154, %v1897
  %v4156 = vadd.f32 %v4155, %v1919
  %v4157 = vadd.f32 %v4156, %v1941
  %v4158 = vadd.f32 %v4157, %v1963
  %v4159 = vadd.f32 %v4158, %v1985
  %v4160 = vadd.f32 %v4159, %v2007
  %v4161 = vadd.f32 %v4160, %v2029
  %v4162 = vadd.f32 %v4161, %v2051
  %v4163 = vadd.f32 %v4162, %v2073
  %v4164 = vadd.f32 %v4163, %v2095
  %v4165 = vadd.f32 %v4164, %v2117
  %v4166 = vadd.f32 %v4165, %v2139
  %v4167 = vadd.f32 %v4166, %v2161
  %v4168 = vadd.f32 %v4167, %v2183
  %v4169 = vadd.f32 %v4168, %v2205
  %v4170 = vadd.f32 %v4169, %v2227
  %v4171 = vadd.f32 %v4170, %v2249
  %v4172 = vadd.f32 %v4171, %v2271
  %v4173 = vadd.f32 %v4172, %v2293
  %v4174 = vadd.f32 %v4173, %v2315
  %v4175 = vadd.f32 %v4174, %v2337
  %v4176 = vadd.f32 %v4175, %v2359
  %v4177 = vadd.f32 %v4176, %v2381
  %v4178 = vadd.f32 %v4177, %v2403
  %v4179 = vadd.f32 %v4178, %v2425
  %v4180 = vadd.f32 %v4179, %v2447
  %v4181 = vadd.f32 %v4180, %v2469
  %v4182 = vadd.f32 %v4181, %v2491
  %v4183 = vadd.f32 %v4182, %v2513
  %v4184 = vadd.f32 %v4183, %v2535
  %v4185 = vadd.f32 %v4184, %v2557
  %v4186 = vadd.f32 %v4185, %v2579
  %v4187 = vadd.f32 %v4186, %v2601
  %v4188 = vadd.f32 %v4187, %v2623
  %v4189 = vadd.f32 %v4188, %v2645
  %v4190 = vadd.f32 %v4189, %v2667
  %v4191 = vadd.f32 %v4190, %v2689
  %v4192 = vadd.f32 %v4191, %v2711
  %v4193 = vadd.f32 %v4192, %v2733
  %v4194 = vadd.f32 %v4193, %v2755
  %v4195 = vadd.f32 %v4194, %v2777
  %v4196 = vadd.f32 %v4195, %v2799
  %v4197 = vadd.f32 %v4196, %v2821
  %v4198 = vrot.slane %v4197, 4
  %v4199 = vadd.f32 %v4197, %v4198
  %v4200 = vrot.slane %v4199, 2
  %v4201 = vadd.f32 %v4199, %v4200
  %v4202 = vrot.slane %v4201, 1
  %v4203 = vadd.f32 %v4201, %v4202
  %v4204 = vadd.f32 %v1436, %v1458
  %v4205 = vadd.f32 %v4204, %v1480
  %v4206 = vadd.f32 %v4205, %v1502
  %v4207 = vadd.f32 %v4206, %v1524
  %v4208 = vadd.f32 %v4207, %v1546
  %v4209 = vadd.f32 %v4208, %v1568
  %v4210 = vadd.f32 %v4209, %v1590
  %v4211 = vadd.f32 %v4210, %v1612
  %v4212 = vadd.f32 %v4211, %v1634
  %v4213 = vadd.f32 %v4212, %v1656
  %v4214 = vadd.f32 %v4213, %v1678
  %v4215 = vadd.f32 %v4214, %v1700
  %v4216 = vadd.f32 %v4215, %v1722
  %v4217 = vadd.f32 %v4216, %v1744
  %v4218 = vadd.f32 %v4217, %v1766
  %v4219 = vadd.f32 %v4218, %v1788
  %v4220 = vadd.f32 %v4219, %v1810
  %v4221 = vadd.f32 %v4220, %v1832
  %v4222 = vadd.f32 %v4221, %v1854
  %v4223 = vadd.f32 %v4222, %v1876
  %v4224 = vadd.f32 %v4223, %v1898
  %v4225 = vadd.f32 %v4224, %v1920
  %v4226 = vadd.f32 %v4225, %v1942
  %v4227 = vadd.f32 %v4226, %v1964
  %v4228 = vadd.f32 %v4227, %v1986
  %v4229 = vadd.f32 %v4228, %v2008
  %v4230 = vadd.f32 %v4229, %v2030
  %v4231 = vadd.f32 %v4230, %v2052
  %v4232 = vadd.f32 %v4231, %v2074
  %v4233 = vadd.f32 %v4232, %v2096
  %v4234 = vadd.f32 %v4233, %v2118
  %v4235 = vadd.f32 %v4234, %v2140
  %v4236 = vadd.f32 %v4235, %v2162
  %v4237 = vadd.f32 %v4236, %v2184
  %v4238 = vadd.f32 %v4237, %v2206
  %v4239 = vadd.f32 %v4238, %v2228
  %v4240 = vadd.f32 %v4239, %v2250
  %v4241 = vadd.f32 %v4240, %v2272
  %v4242 = vadd.f32 %v4241, %v2294
  %v4243 = vadd.f32 %v4242, %v2316
  %v4244 = vadd.f32 %v4243, %v2338
  %v4245 = vadd.f32 %v4244, %v2360
  %v4246 = vadd.f32 %v4245, %v2382
  %v4247 = vadd.f32 %v4246, %v2404
  %v4248 = vadd.f32 %v4247, %v2426
  %v4249 = vadd.f32 %v4248, %v2448
  %v4250 = vadd.f32 %v4249, %v2470
  %v4251 = vadd.f32 %v4250, %v2492
  %v4252 = vadd.f32 %v4251, %v2514
  %v4253 = vadd.f32 %v4252, %v2536
  %v4254 = vadd.f32 %v4253, %v2558
  %v4255 = vadd.f32 %v4254, %v2580
  %v4256 = vadd.f32 %v4255, %v2602
  %v4257 = vadd.f32 %v4256, %v2624
  %v4258 = vadd.f32 %v4257, %v2646
  %v4259 = vadd.f32 %v4258, %v2668
  %v4260 = vadd.f32 %v4259, %v2690
  %v4261 = vadd.f32 %v4260, %v2712
  %v4262 = vadd.f32 %v4261, %v2734
  %v4263 = vadd.f32 %v4262, %v2756
  %v4264 = vadd.f32 %v4263, %v2778
  %v4265 = vadd.f32 %v4264, %v2800
  %v4266 = vadd.f32 %v4265, %v2822
  %v4267 = vrot.slane %v4266, 4
  %v4268 = vadd.f32 %v4266, %v4267
  %v4269 = vrot.slane %v4268, 2
  %v4270 = vadd.f32 %v4268, %v4269
  %v4271 = vrot.slane %v4270, 1
  %v4272 = vadd.f32 %v4270, %v4271
  %vm4273 = vcmask 916480
  %v4274 = vsel %vm4273, %v1437, 0.0
  %v4275 = vsel %vm4273, %v1459, 0.0
  %v4276 = vadd.f32 %v4274, %v4275
  %v4277 = vsel %vm4273, %v1481, 0.0
  %v4278 = vadd.f32 %v4276, %v4277
  %v4279 = vsel %vm4273, %v1503, 0.0
  %v4280 = vadd.f32 %v4278, %v4279
  %v4281 = vsel %vm4273, %v1525, 0.0
  %v4282 = vadd.f32 %v4280, %v4281
  %v4283 = vsel %vm4273, %v1547, 0.0
  %v4284 = vadd.f32 %v4282, %v4283
  %v4285 = vsel %vm4273, %v1569, 0.0
  %v4286 = vadd.f32 %v4284, %v4285
  %v4287 = vsel %vm4273, %v1591, 0.0
  %v4288 = vadd.f32 %v4286, %v4287
  %v4289 = vsel %vm4273, %v1613, 0.0
  %v4290 = vadd.f32 %v4288, %v4289
  %v4291 = vsel %vm4273, %v1635, 0.0
  %v4292 = vadd.f32 %v4290, %v4291
  %v4293 = vsel %vm4273, %v1657, 0.0
  %v4294 = vadd.f32 %v4292, %v4293
  %v4295 = vsel %vm4273, %v1679, 0.0
  %v4296 = vadd.f32 %v4294, %v4295
  %v4297 = vsel %vm4273, %v1701, 0.0
  %v4298 = vadd.f32 %v4296, %v4297
  %v4299 = vsel %vm4273, %v1723, 0.0
  %v4300 = vadd.f32 %v4298, %v4299
  %v4301 = vsel %vm4273, %v1745, 0.0
  %v4302 = vadd.f32 %v4300, %v4301
  %v4303 = vsel %vm4273, %v1767, 0.0
  %v4304 = vadd.f32 %v4302, %v4303
  %v4305 = vsel %vm4273, %v1789, 0.0
  %v4306 = vadd.f32 %v4304, %v4305
  %v4307 = vsel %vm4273, %v1811, 0.0
  %v4308 = vadd.f32 %v4306, %v4307
  %v4309 = vsel %vm4273, %v1833, 0.0
  %v4310 = vadd.f32 %v4308, %v4309
  %v4311 = vsel %vm4273, %v1855, 0.0
  %v4312 = vadd.f32 %v4310, %v4311
  %v4313 = vsel %vm4273, %v1877, 0.0
  %v4314 = vadd.f32 %v4312, %v4313
  %v4315 = vsel %vm4273, %v1899, 0.0
  %v4316 = vadd.f32 %v4314, %v4315
  %v4317 = vsel %vm4273, %v1921, 0.0
  %v4318 = vadd.f32 %v4316, %v4317
  %v4319 = vsel %vm4273, %v1943, 0.0
  %v4320 = vadd.f32 %v4318, %v4319
  %v4321 = vsel %vm4273, %v1965, 0.0
  %v4322 = vadd.f32 %v4320, %v4321
  %v4323 = vsel %vm4273, %v1987, 0.0
  %v4324 = vadd.f32 %v4322, %v4323
  %v4325 = vsel %vm4273, %v2009, 0.0
  %v4326 = vadd.f32 %v4324, %v4325
  %v4327 = vsel %vm4273, %v2031, 0.0
  %v4328 = vadd.f32 %v4326, %v4327
  %v4329 = vsel %vm4273, %v2053, 0.0
  %v4330 = vadd.f32 %v4328, %v4329
  %v4331 = vsel %vm4273, %v2075, 0.0
  %v4332 = vadd.f32 %v4330, %v4331
  %v4333 = vsel %vm4273, %v2097, 0.0
  %v4334 = vadd.f32 %v4332, %v4333
  %v4335 = vsel %vm4273, %v2119, 0.0
  %v4336 = vadd.f32 %v4334, %v4335
  %v4337 = vsel %vm4273, %v2141, 0.0
  %v4338 = vadd.f32 %v4336, %v4337
  %v4339 = vsel %vm4273, %v2163, 0.0
  %v4340 = vadd.f32 %v4338, %v4339
  %v4341 = vsel %vm4273, %v2185, 0.0
  %v4342 = vadd.f32 %v4340, %v4341
  %v4343 = vsel %vm4273, %v2207, 0.0
  %v4344 = vadd.f32 %v4342, %v4343
  %v4345 = vsel %vm4273, %v2229, 0.0
  %v4346 = vadd.f32 %v4344, %v4345
  %v4347 = vsel %vm4273, %v2251, 0.0
  %v4348 = vadd.f32 %v4346, %v4347
  %v4349 = vsel %vm4273, %v2273, 0.0
  %v4350 = vadd.f32 %v4348, %v4349
  %v4351 = vsel %vm4273, %v2295, 0.0
  %v4352 = vadd.f32 %v4350, %v4351
  %v4353 = vsel %vm4273, %v2317, 0.0
  %v4354 = vadd.f32 %v4352, %v4353
  %v4355 = vsel %vm4273, %v2339, 0.0
  %v4356 = vadd.f32 %v4354, %v4355
  %v4357 = vsel %vm4273, %v2361, 0.0
  %v4358 = vadd.f32 %v4356, %v4357
  %v4359 = vsel %vm4273, %v2383, 0.0
  %v4360 = vadd.f32 %v4358, %v4359
  %v4361 = vsel %vm4273, %v2405, 0.0
  %v4362 = vadd.f32 %v4360, %v4361
  %v4363 = vsel %vm4273, %v2427, 0.0
  %v4364 = vadd.f32 %v4362, %v4363
  %v4365 = vsel %vm4273, %v2449, 0.0
  %v4366 = vadd.f32 %v4364, %v4365
  %v4367 = vsel %vm4273, %v2471, 0.0
  %v4368 = vadd.f32 %v4366, %v4367
  %v4369 = vsel %vm4273, %v2493, 0.0
  %v4370 = vadd.f32 %v4368, %v4369
  %v4371 = vsel %vm4273, %v2515, 0.0
  %v4372 = vadd.f32 %v4370, %v4371
  %v4373 = vsel %vm4273, %v2537, 0.0
  %v4374 = vadd.f32 %v4372, %v4373
  %v4375 = vsel %vm4273, %v2559, 0.0
  %v4376 = vadd.f32 %v4374, %v4375
  %v4377 = vsel %vm4273, %v2581, 0.0
  %v4378 = vadd.f32 %v4376, %v4377
  %v4379 = vsel %vm4273, %v2603, 0.0
  %v4380 = vadd.f32 %v4378, %v4379
  %v4381 = vsel %vm4273, %v2625, 0.0
  %v4382 = vadd.f32 %v4380, %v4381
  %v4383 = vsel %vm4273, %v2647, 0.0
  %v4384 = vadd.f32 %v4382, %v4383
  %v4385 = vsel %vm4273, %v2669, 0.0
  %v4386 = vadd.f32 %v4384, %v4385
  %v4387 = vsel %vm4273, %v2691, 0.0
  %v4388 = vadd.f32 %v4386, %v4387
  %v4389 = vsel %vm4273, %v2713, 0.0
  %v4390 = vadd.f32 %v4388, %v4389
  %v4391 = vsel %vm4273, %v2735, 0.0
  %v4392 = vadd.f32 %v4390, %v4391
  %v4393 = vsel %vm4273, %v2757, 0.0
  %v4394 = vadd.f32 %v4392, %v4393
  %v4395 = vsel %vm4273, %v2779, 0.0
  %v4396 = vadd.f32 %v4394, %v4395
  %v4397 = vsel %vm4273, %v2801, 0.0
  %v4398 = vadd.f32 %v4396, %v4397
  %v4399 = vsel %vm4273, %v2823, 0.0
  %v4400 = vadd.f32 %v4398, %v4399
  %v4401 = vrot.slane %v4400, 4
  %v4402 = vadd.f32 %v4400, %v4401
  %v4403 = vrot.slane %v4402, 2
  %v4404 = vadd.f32 %v4402, %v4403
  %v4405 = vrot.slane %v4404, 1
  %v4406 = vadd.f32 %v4404, %v4405
  %v4407 = vmax.f32 %v2892, 1e-24
  %v4408 = vmax.f32 %v2961, 1e-24
  %v4409 = vmax.f32 %v3030, 1e-24
  %v4410 = vmax.f32 %v3099, 1e-24
  %v4411 = vmax.f32 %v3168, 1e-24
  %v4412 = vmax.f32 %v3237, 1e-24
  %v4413 = vmax.f32 %v3306, 1e-24
  %v4414 = vmax.f32 %v3375, 1e-24
  %v4415 = vmax.f32 %v3444, 1e-24
  %v4416 = vmax.f32 %v3513, 1e-24
  %v4417 = vmax.f32 %v3582, 1e-24
  %v4418 = vmax.f32 %v3651, 1e-24
  %v4419 = vmax.f32 %v3720, 1e-24
  %v4420 = vmax.f32 %v3789, 1e-24
  %v4421 = vmax.f32 %v3858, 1e-24
  %v4422 = vmax.f32 %v3927, 1e-24
  %v4423 = vmax.f32 %v3996, 1e-24
  %v4424 = vmax.f32 %v4065, 1e-24
  %v4425 = vmax.f32 %v4134, 1e-24
  %v4426 = vmax.f32 %v4203, 1e-24
  %v4427 = vmax.f32 %v4272, 1e-24
  %v4428 = vmax.f32 %v4406, 1e-24
  %v4429 = vrsqrt.pop %v4407
  %v4430 = vrsqrt.pop %v4408
  %v4431 = vrsqrt.pop %v4409
  %v4432 = vrsqrt.pop %v4410
  %v4433 = vrsqrt.pop %v4411
  %v4434 = vrsqrt.pop %v4412
  %v4435 = vrsqrt.pop %v4413
  %v4436 = vrsqrt.pop %v4414
  %v4437 = vrsqrt.pop %v4415
  %v4438 = vrsqrt.pop %v4416
  %v4439 = vrsqrt.pop %v4417
  %v4440 = vrsqrt.pop %v4418
  %v4441 = vrsqrt.pop %v4419
  %v4442 = vrsqrt.pop %v4420
  %v4443 = vrsqrt.pop %v4421
  %v4444 = vrsqrt.pop %v4422
  %v4445 = vrsqrt.pop %v4423
  %v4446 = vrsqrt.pop %v4424
  %v4447 = vrsqrt.pop %v4425
  %v4448 = vrsqrt.pop %v4426
  %v4449 = vrsqrt.pop %v4427
  %v4450 = vrsqrt.pop %v4428
  %v4451 = vmul.f32 %v8, %v4429
  %v4452 = vmul.f32 %v9, %v4430
  %v4453 = vmul.f32 %v10, %v4431
  %v4454 = vmul.f32 %v11, %v4432
  %v4455 = vmul.f32 %v12, %v4433
  %v4456 = vmul.f32 %v13, %v4434
  %v4457 = vmul.f32 %v14, %v4435
  %v4458 = vmul.f32 %v15, %v4436
  %v4459 = vmul.f32 %v16, %v4437
  %v4460 = vmul.f32 %v17, %v4438
  %v4461 = vmul.f32 %v18, %v4439
  %v4462 = vmul.f32 %v19, %v4440
  %v4463 = vmul.f32 %v20, %v4441
  %v4464 = vmul.f32 %v21, %v4442
  %v4465 = vmul.f32 %v22, %v4443
  %v4466 = vmul.f32 %v23, %v4444
  %v4467 = vmul.f32 %v24, %v4445
  %v4468 = vmul.f32 %v25, %v4446
  %v4469 = vmul.f32 %v26, %v4447
  %v4470 = vmul.f32 %v27, %v4448
  %v4471 = vmul.f32 %v28, %v4449
  %v4472 = vmul.f32 %v29, %v4450
  %v4473 = vmul.f32 %v30, %v4429
  %v4474 = vmul.f32 %v31, %v4430
  %v4475 = vmul.f32 %v32, %v4431
  %v4476 = vmul.f32 %v33, %v4432
  %v4477 = vmul.f32 %v34, %v4433
  %v4478 = vmul.f32 %v35, %v4434
  %v4479 = vmul.f32 %v36, %v4435
  %v4480 = vmul.f32 %v37, %v4436
  %v4481 = vmul.f32 %v38, %v4437
  %v4482 = vmul.f32 %v39, %v4438
  %v4483 = vmul.f32 %v40, %v4439
  %v4484 = vmul.f32 %v41, %v4440
  %v4485 = vmul.f32 %v42, %v4441
  %v4486 = vmul.f32 %v43, %v4442
  %v4487 = vmul.f32 %v44, %v4443
  %v4488 = vmul.f32 %v45, %v4444
  %v4489 = vmul.f32 %v46, %v4445
  %v4490 = vmul.f32 %v47, %v4446
  %v4491 = vmul.f32 %v48, %v4447
  %v4492 = vmul.f32 %v49, %v4448
  %v4493 = vmul.f32 %v50, %v4449
  %v4494 = vmul.f32 %v51, %v4450
  %v4495 = vmul.f32 %v52, %v4429
  %v4496 = vmul.f32 %v53, %v4430
  %v4497 = vmul.f32 %v54, %v4431
  %v4498 = vmul.f32 %v55, %v4432
  %v4499 = vmul.f32 %v56, %v4433
  %v4500 = vmul.f32 %v57, %v4434
  %v4501 = vmul.f32 %v58, %v4435
  %v4502 = vmul.f32 %v59, %v4436
  %v4503 = vmul.f32 %v60, %v4437
  %v4504 = vmul.f32 %v61, %v4438
  %v4505 = vmul.f32 %v62, %v4439
  %v4506 = vmul.f32 %v63, %v4440
  %v4507 = vmul.f32 %v64, %v4441
  %v4508 = vmul.f32 %v65, %v4442
  %v4509 = vmul.f32 %v66, %v4443
  %v4510 = vmul.f32 %v67, %v4444
  %v4511 = vmul.f32 %v68, %v4445
  %v4512 = vmul.f32 %v69, %v4446
  %v4513 = vmul.f32 %v70, %v4447
  %v4514 = vmul.f32 %v71, %v4448
  %v4515 = vmul.f32 %v72, %v4449
  %v4516 = vmul.f32 %v73, %v4450
  %v4517 = vmul.f32 %v74, %v4429
  %v4518 = vmul.f32 %v75, %v4430
  %v4519 = vmul.f32 %v76, %v4431
  %v4520 = vmul.f32 %v77, %v4432
  %v4521 = vmul.f32 %v78, %v4433
  %v4522 = vmul.f32 %v79, %v4434
  %v4523 = vmul.f32 %v80, %v4435
  %v4524 = vmul.f32 %v81, %v4436
  %v4525 = vmul.f32 %v82, %v4437
  %v4526 = vmul.f32 %v83, %v4438
  %v4527 = vmul.f32 %v84, %v4439
  %v4528 = vmul.f32 %v85, %v4440
  %v4529 = vmul.f32 %v86, %v4441
  %v4530 = vmul.f32 %v87, %v4442
  %v4531 = vmul.f32 %v88, %v4443
  %v4532 = vmul.f32 %v89, %v4444
  %v4533 = vmul.f32 %v90, %v4445
  %v4534 = vmul.f32 %v91, %v4446
  %v4535 = vmul.f32 %v92, %v4447
  %v4536 = vmul.f32 %v93, %v4448
  %v4537 = vmul.f32 %v94, %v4449
  %v4538 = vmul.f32 %v95, %v4450
  %v4539 = vmul.f32 %v96, %v4429
  %v4540 = vmul.f32 %v97, %v4430
  %v4541 = vmul.f32 %v98, %v4431
  %v4542 = vmul.f32 %v99, %v4432
  %v4543 = vmul.f32 %v100, %v4433
  %v4544 = vmul.f32 %v101, %v4434
  %v4545 = vmul.f32 %v102, %v4435
  %v4546 = vmul.f32 %v103, %v4436
  %v4547 = vmul.f32 %v104, %v4437
  %v4548 = vmul.f32 %v105, %v4438
  %v4549 = vmul.f32 %v106, %v4439
  %v4550 = vmul.f32 %v107, %v4440
  %v4551 = vmul.f32 %v108, %v4441
  %v4552 = vmul.f32 %v109, %v4442
  %v4553 = vmul.f32 %v110, %v4443
  %v4554 = vmul.f32 %v111, %v4444
  %v4555 = vmul.f32 %v112, %v4445
  %v4556 = vmul.f32 %v113, %v4446
  %v4557 = vmul.f32 %v114, %v4447
  %v4558 = vmul.f32 %v115, %v4448
  %v4559 = vmul.f32 %v116, %v4449
  %v4560 = vmul.f32 %v117, %v4450
  %v4561 = vmul.f32 %v118, %v4429
  %v4562 = vmul.f32 %v119, %v4430
  %v4563 = vmul.f32 %v120, %v4431
  %v4564 = vmul.f32 %v121, %v4432
  %v4565 = vmul.f32 %v122, %v4433
  %v4566 = vmul.f32 %v123, %v4434
  %v4567 = vmul.f32 %v124, %v4435
  %v4568 = vmul.f32 %v125, %v4436
  %v4569 = vmul.f32 %v126, %v4437
  %v4570 = vmul.f32 %v127, %v4438
  %v4571 = vmul.f32 %v128, %v4439
  %v4572 = vmul.f32 %v129, %v4440
  %v4573 = vmul.f32 %v130, %v4441
  %v4574 = vmul.f32 %v131, %v4442
  %v4575 = vmul.f32 %v132, %v4443
  %v4576 = vmul.f32 %v133, %v4444
  %v4577 = vmul.f32 %v134, %v4445
  %v4578 = vmul.f32 %v135, %v4446
  %v4579 = vmul.f32 %v136, %v4447
  %v4580 = vmul.f32 %v137, %v4448
  %v4581 = vmul.f32 %v138, %v4449
  %v4582 = vmul.f32 %v139, %v4450
  %v4583 = vmul.f32 %v140, %v4429
  %v4584 = vmul.f32 %v141, %v4430
  %v4585 = vmul.f32 %v142, %v4431
  %v4586 = vmul.f32 %v143, %v4432
  %v4587 = vmul.f32 %v144, %v4433
  %v4588 = vmul.f32 %v145, %v4434
  %v4589 = vmul.f32 %v146, %v4435
  %v4590 = vmul.f32 %v147, %v4436
  %v4591 = vmul.f32 %v148, %v4437
  %v4592 = vmul.f32 %v149, %v4438
  %v4593 = vmul.f32 %v150, %v4439
  %v4594 = vmul.f32 %v151, %v4440
  %v4595 = vmul.f32 %v152, %v4441
  %v4596 = vmul.f32 %v153, %v4442
  %v4597 = vmul.f32 %v154, %v4443
  %v4598 = vmul.f32 %v155, %v4444
  %v4599 = vmul.f32 %v156, %v4445
  %v4600 = vmul.f32 %v157, %v4446
  %v4601 = vmul.f32 %v158, %v4447
  %v4602 = vmul.f32 %v159, %v4448
  %v4603 = vmul.f32 %v160, %v4449
  %v4604 = vmul.f32 %v161, %v4450
  %v4605 = vmul.f32 %v162, %v4429
  %v4606 = vmul.f32 %v163, %v4430
  %v4607 = vmul.f32 %v164, %v4431
  %v4608 = vmul.f32 %v165, %v4432
  %v4609 = vmul.f32 %v166, %v4433
  %v4610 = vmul.f32 %v167, %v4434
  %v4611 = vmul.f32 %v168, %v4435
  %v4612 = vmul.f32 %v169, %v4436
  %v4613 = vmul.f32 %v170, %v4437
  %v4614 = vmul.f32 %v171, %v4438
  %v4615 = vmul.f32 %v172, %v4439
  %v4616 = vmul.f32 %v173, %v4440
  %v4617 = vmul.f32 %v174, %v4441
  %v4618 = vmul.f32 %v175, %v4442
  %v4619 = vmul.f32 %v176, %v4443
  %v4620 = vmul.f32 %v177, %v4444
  %v4621 = vmul.f32 %v178, %v4445
  %v4622 = vmul.f32 %v179, %v4446
  %v4623 = vmul.f32 %v180, %v4447
  %v4624 = vmul.f32 %v181, %v4448
  %v4625 = vmul.f32 %v182, %v4449
  %v4626 = vmul.f32 %v183, %v4450
  %v4627 = vmul.f32 %v184, %v4429
  %v4628 = vmul.f32 %v185, %v4430
  %v4629 = vmul.f32 %v186, %v4431
  %v4630 = vmul.f32 %v187, %v4432
  %v4631 = vmul.f32 %v188, %v4433
  %v4632 = vmul.f32 %v189, %v4434
  %v4633 = vmul.f32 %v190, %v4435
  %v4634 = vmul.f32 %v191, %v4436
  %v4635 = vmul.f32 %v192, %v4437
  %v4636 = vmul.f32 %v193, %v4438
  %v4637 = vmul.f32 %v194, %v4439
  %v4638 = vmul.f32 %v195, %v4440
  %v4639 = vmul.f32 %v196, %v4441
  %v4640 = vmul.f32 %v197, %v4442
  %v4641 = vmul.f32 %v198, %v4443
  %v4642 = vmul.f32 %v199, %v4444
  %v4643 = vmul.f32 %v200, %v4445
  %v4644 = vmul.f32 %v201, %v4446
  %v4645 = vmul.f32 %v202, %v4447
  %v4646 = vmul.f32 %v203, %v4448
  %v4647 = vmul.f32 %v204, %v4449
  %v4648 = vmul.f32 %v205, %v4450
  %v4649 = vmul.f32 %v206, %v4429
  %v4650 = vmul.f32 %v207, %v4430
  %v4651 = vmul.f32 %v208, %v4431
  %v4652 = vmul.f32 %v209, %v4432
  %v4653 = vmul.f32 %v210, %v4433
  %v4654 = vmul.f32 %v211, %v4434
  %v4655 = vmul.f32 %v212, %v4435
  %v4656 = vmul.f32 %v213, %v4436
  %v4657 = vmul.f32 %v214, %v4437
  %v4658 = vmul.f32 %v215, %v4438
  %v4659 = vmul.f32 %v216, %v4439
  %v4660 = vmul.f32 %v217, %v4440
  %v4661 = vmul.f32 %v218, %v4441
  %v4662 = vmul.f32 %v219, %v4442
  %v4663 = vmul.f32 %v220, %v4443
  %v4664 = vmul.f32 %v221, %v4444
  %v4665 = vmul.f32 %v222, %v4445
  %v4666 = vmul.f32 %v223, %v4446
  %v4667 = vmul.f32 %v224, %v4447
  %v4668 = vmul.f32 %v225, %v4448
  %v4669 = vmul.f32 %v226, %v4449
  %v4670 = vmul.f32 %v227, %v4450
  %v4671 = vmul.f32 %v228, %v4429
  %v4672 = vmul.f32 %v229, %v4430
  %v4673 = vmul.f32 %v230, %v4431
  %v4674 = vmul.f32 %v231, %v4432
  %v4675 = vmul.f32 %v232, %v4433
  %v4676 = vmul.f32 %v233, %v4434
  %v4677 = vmul.f32 %v234, %v4435
  %v4678 = vmul.f32 %v235, %v4436
  %v4679 = vmul.f32 %v236, %v4437
  %v4680 = vmul.f32 %v237, %v4438
  %v4681 = vmul.f32 %v238, %v4439
  %v4682 = vmul.f32 %v239, %v4440
  %v4683 = vmul.f32 %v240, %v4441
  %v4684 = vmul.f32 %v241, %v4442
  %v4685 = vmul.f32 %v242, %v4443
  %v4686 = vmul.f32 %v243, %v4444
  %v4687 = vmul.f32 %v244, %v4445
  %v4688 = vmul.f32 %v245, %v4446
  %v4689 = vmul.f32 %v246, %v4447
  %v4690 = vmul.f32 %v247, %v4448
  %v4691 = vmul.f32 %v248, %v4449
  %v4692 = vmul.f32 %v249, %v4450
  %v4693 = vmul.f32 %v250, %v4429
  %v4694 = vmul.f32 %v251, %v4430
  %v4695 = vmul.f32 %v252, %v4431
  %v4696 = vmul.f32 %v253, %v4432
  %v4697 = vmul.f32 %v254, %v4433
  %v4698 = vmul.f32 %v255, %v4434
  %v4699 = vmul.f32 %v256, %v4435
  %v4700 = vmul.f32 %v257, %v4436
  %v4701 = vmul.f32 %v258, %v4437
  %v4702 = vmul.f32 %v259, %v4438
  %v4703 = vmul.f32 %v260, %v4439
  %v4704 = vmul.f32 %v261, %v4440
  %v4705 = vmul.f32 %v262, %v4441
  %v4706 = vmul.f32 %v263, %v4442
  %v4707 = vmul.f32 %v264, %v4443
  %v4708 = vmul.f32 %v265, %v4444
  %v4709 = vmul.f32 %v266, %v4445
  %v4710 = vmul.f32 %v267, %v4446
  %v4711 = vmul.f32 %v268, %v4447
  %v4712 = vmul.f32 %v269, %v4448
  %v4713 = vmul.f32 %v270, %v4449
  %v4714 = vmul.f32 %v271, %v4450
  %v4715 = vmul.f32 %v272, %v4429
  %v4716 = vmul.f32 %v273, %v4430
  %v4717 = vmul.f32 %v274, %v4431
  %v4718 = vmul.f32 %v275, %v4432
  %v4719 = vmul.f32 %v276, %v4433
  %v4720 = vmul.f32 %v277, %v4434
  %v4721 = vmul.f32 %v278, %v4435
  %v4722 = vmul.f32 %v279, %v4436
  %v4723 = vmul.f32 %v280, %v4437
  %v4724 = vmul.f32 %v281, %v4438
  %v4725 = vmul.f32 %v282, %v4439
  %v4726 = vmul.f32 %v283, %v4440
  %v4727 = vmul.f32 %v284, %v4441
  %v4728 = vmul.f32 %v285, %v4442
  %v4729 = vmul.f32 %v286, %v4443
  %v4730 = vmul.f32 %v287, %v4444
  %v4731 = vmul.f32 %v288, %v4445
  %v4732 = vmul.f32 %v289, %v4446
  %v4733 = vmul.f32 %v290, %v4447
  %v4734 = vmul.f32 %v291, %v4448
  %v4735 = vmul.f32 %v292, %v4449
  %v4736 = vmul.f32 %v293, %v4450
  %v4737 = vmul.f32 %v294, %v4429
  %v4738 = vmul.f32 %v295, %v4430
  %v4739 = vmul.f32 %v296, %v4431
  %v4740 = vmul.f32 %v297, %v4432
  %v4741 = vmul.f32 %v298, %v4433
  %v4742 = vmul.f32 %v299, %v4434
  %v4743 = vmul.f32 %v300, %v4435
  %v4744 = vmul.f32 %v301, %v4436
  %v4745 = vmul.f32 %v302, %v4437
  %v4746 = vmul.f32 %v303, %v4438
  %v4747 = vmul.f32 %v304, %v4439
  %v4748 = vmul.f32 %v305, %v4440
  %v4749 = vmul.f32 %v306, %v4441
  %v4750 = vmul.f32 %v307, %v4442
  %v4751 = vmul.f32 %v308, %v4443
  %v4752 = vmul.f32 %v309, %v4444
  %v4753 = vmul.f32 %v310, %v4445
  %v4754 = vmul.f32 %v311, %v4446
  %v4755 = vmul.f32 %v312, %v4447
  %v4756 = vmul.f32 %v313, %v4448
  %v4757 = vmul.f32 %v314, %v4449
  %v4758 = vmul.f32 %v315, %v4450
  %v4759 = vmul.f32 %v316, %v4429
  %v4760 = vmul.f32 %v317, %v4430
  %v4761 = vmul.f32 %v318, %v4431
  %v4762 = vmul.f32 %v319, %v4432
  %v4763 = vmul.f32 %v320, %v4433
  %v4764 = vmul.f32 %v321, %v4434
  %v4765 = vmul.f32 %v322, %v4435
  %v4766 = vmul.f32 %v323, %v4436
  %v4767 = vmul.f32 %v324, %v4437
  %v4768 = vmul.f32 %v325, %v4438
  %v4769 = vmul.f32 %v326, %v4439
  %v4770 = vmul.f32 %v327, %v4440
  %v4771 = vmul.f32 %v328, %v4441
  %v4772 = vmul.f32 %v329, %v4442
  %v4773 = vmul.f32 %v330, %v4443
  %v4774 = vmul.f32 %v331, %v4444
  %v4775 = vmul.f32 %v332, %v4445
  %v4776 = vmul.f32 %v333, %v4446
  %v4777 = vmul.f32 %v334, %v4447
  %v4778 = vmul.f32 %v335, %v4448
  %v4779 = vmul.f32 %v336, %v4449
  %v4780 = vmul.f32 %v337, %v4450
  %v4781 = vmul.f32 %v338, %v4429
  %v4782 = vmul.f32 %v339, %v4430
  %v4783 = vmul.f32 %v340, %v4431
  %v4784 = vmul.f32 %v341, %v4432
  %v4785 = vmul.f32 %v342, %v4433
  %v4786 = vmul.f32 %v343, %v4434
  %v4787 = vmul.f32 %v344, %v4435
  %v4788 = vmul.f32 %v345, %v4436
  %v4789 = vmul.f32 %v346, %v4437
  %v4790 = vmul.f32 %v347, %v4438
  %v4791 = vmul.f32 %v348, %v4439
  %v4792 = vmul.f32 %v349, %v4440
  %v4793 = vmul.f32 %v350, %v4441
  %v4794 = vmul.f32 %v351, %v4442
  %v4795 = vmul.f32 %v352, %v4443
  %v4796 = vmul.f32 %v353, %v4444
  %v4797 = vmul.f32 %v354, %v4445
  %v4798 = vmul.f32 %v355, %v4446
  %v4799 = vmul.f32 %v356, %v4447
  %v4800 = vmul.f32 %v357, %v4448
  %v4801 = vmul.f32 %v358, %v4449
  %v4802 = vmul.f32 %v359, %v4450
  %v4803 = vmul.f32 %v360, %v4429
  %v4804 = vmul.f32 %v361, %v4430
  %v4805 = vmul.f32 %v362, %v4431
  %v4806 = vmul.f32 %v363, %v4432
  %v4807 = vmul.f32 %v364, %v4433
  %v4808 = vmul.f32 %v365, %v4434
  %v4809 = vmul.f32 %v366, %v4435
  %v4810 = vmul.f32 %v367, %v4436
  %v4811 = vmul.f32 %v368, %v4437
  %v4812 = vmul.f32 %v369, %v4438
  %v4813 = vmul.f32 %v370, %v4439
  %v4814 = vmul.f32 %v371, %v4440
  %v4815 = vmul.f32 %v372, %v4441
  %v4816 = vmul.f32 %v373, %v4442
  %v4817 = vmul.f32 %v374, %v4443
  %v4818 = vmul.f32 %v375, %v4444
  %v4819 = vmul.f32 %v376, %v4445
  %v4820 = vmul.f32 %v377, %v4446
  %v4821 = vmul.f32 %v378, %v4447
  %v4822 = vmul.f32 %v379, %v4448
  %v4823 = vmul.f32 %v380, %v4449
  %v4824 = vmul.f32 %v381, %v4450
  %v4825 = vmul.f32 %v382, %v4429
  %v4826 = vmul.f32 %v383, %v4430
  %v4827 = vmul.f32 %v384, %v4431
  %v4828 = vmul.f32 %v385, %v4432
  %v4829 = vmul.f32 %v386, %v4433
  %v4830 = vmul.f32 %v387, %v4434
  %v4831 = vmul.f32 %v388, %v4435
  %v4832 = vmul.f32 %v389, %v4436
  %v4833 = vmul.f32 %v390, %v4437
  %v4834 = vmul.f32 %v391, %v4438
  %v4835 = vmul.f32 %v392, %v4439
  %v4836 = vmul.f32 %v393, %v4440
  %v4837 = vmul.f32 %v394, %v4441
  %v4838 = vmul.f32 %v395, %v4442
  %v4839 = vmul.f32 %v396, %v4443
  %v4840 = vmul.f32 %v397, %v4444
  %v4841 = vmul.f32 %v398, %v4445
  %v4842 = vmul.f32 %v399, %v4446
  %v4843 = vmul.f32 %v400, %v4447
  %v4844 = vmul.f32 %v401, %v4448
  %v4845 = vmul.f32 %v402, %v4449
  %v4846 = vmul.f32 %v403, %v4450
  %v4847 = vmul.f32 %v404, %v4429
  %v4848 = vmul.f32 %v405, %v4430
  %v4849 = vmul.f32 %v406, %v4431
  %v4850 = vmul.f32 %v407, %v4432
  %v4851 = vmul.f32 %v408, %v4433
  %v4852 = vmul.f32 %v409, %v4434
  %v4853 = vmul.f32 %v410, %v4435
  %v4854 = vmul.f32 %v411, %v4436
  %v4855 = vmul.f32 %v412, %v4437
  %v4856 = vmul.f32 %v413, %v4438
  %v4857 = vmul.f32 %v414, %v4439
  %v4858 = vmul.f32 %v415, %v4440
  %v4859 = vmul.f32 %v416, %v4441
  %v4860 = vmul.f32 %v417, %v4442
  %v4861 = vmul.f32 %v418, %v4443
  %v4862 = vmul.f32 %v419, %v4444
  %v4863 = vmul.f32 %v420, %v4445
  %v4864 = vmul.f32 %v421, %v4446
  %v4865 = vmul.f32 %v422, %v4447
  %v4866 = vmul.f32 %v423, %v4448
  %v4867 = vmul.f32 %v424, %v4449
  %v4868 = vmul.f32 %v425, %v4450
  %v4869 = vmul.f32 %v426, %v4429
  %v4870 = vmul.f32 %v427, %v4430
  %v4871 = vmul.f32 %v428, %v4431
  %v4872 = vmul.f32 %v429, %v4432
  %v4873 = vmul.f32 %v430, %v4433
  %v4874 = vmul.f32 %v431, %v4434
  %v4875 = vmul.f32 %v432, %v4435
  %v4876 = vmul.f32 %v433, %v4436
  %v4877 = vmul.f32 %v434, %v4437
  %v4878 = vmul.f32 %v435, %v4438
  %v4879 = vmul.f32 %v436, %v4439
  %v4880 = vmul.f32 %v437, %v4440
  %v4881 = vmul.f32 %v438, %v4441
  %v4882 = vmul.f32 %v439, %v4442
  %v4883 = vmul.f32 %v440, %v4443
  %v4884 = vmul.f32 %v441, %v4444
  %v4885 = vmul.f32 %v442, %v4445
  %v4886 = vmul.f32 %v443, %v4446
  %v4887 = vmul.f32 %v444, %v4447
  %v4888 = vmul.f32 %v445, %v4448
  %v4889 = vmul.f32 %v446, %v4449
  %v4890 = vmul.f32 %v447, %v4450
  %v4891 = vmul.f32 %v448, %v4429
  %v4892 = vmul.f32 %v449, %v4430
  %v4893 = vmul.f32 %v450, %v4431
  %v4894 = vmul.f32 %v451, %v4432
  %v4895 = vmul.f32 %v452, %v4433
  %v4896 = vmul.f32 %v453, %v4434
  %v4897 = vmul.f32 %v454, %v4435
  %v4898 = vmul.f32 %v455, %v4436
  %v4899 = vmul.f32 %v456, %v4437
  %v4900 = vmul.f32 %v457, %v4438
  %v4901 = vmul.f32 %v458, %v4439
  %v4902 = vmul.f32 %v459, %v4440
  %v4903 = vmul.f32 %v460, %v4441
  %v4904 = vmul.f32 %v461, %v4442
  %v4905 = vmul.f32 %v462, %v4443
  %v4906 = vmul.f32 %v463, %v4444
  %v4907 = vmul.f32 %v464, %v4445
  %v4908 = vmul.f32 %v465, %v4446
  %v4909 = vmul.f32 %v466, %v4447
  %v4910 = vmul.f32 %v467, %v4448
  %v4911 = vmul.f32 %v468, %v4449
  %v4912 = vmul.f32 %v469, %v4450
  %v4913 = vmul.f32 %v470, %v4429
  %v4914 = vmul.f32 %v471, %v4430
  %v4915 = vmul.f32 %v472, %v4431
  %v4916 = vmul.f32 %v473, %v4432
  %v4917 = vmul.f32 %v474, %v4433
  %v4918 = vmul.f32 %v475, %v4434
  %v4919 = vmul.f32 %v476, %v4435
  %v4920 = vmul.f32 %v477, %v4436
  %v4921 = vmul.f32 %v478, %v4437
  %v4922 = vmul.f32 %v479, %v4438
  %v4923 = vmul.f32 %v480, %v4439
  %v4924 = vmul.f32 %v481, %v4440
  %v4925 = vmul.f32 %v482, %v4441
  %v4926 = vmul.f32 %v483, %v4442
  %v4927 = vmul.f32 %v484, %v4443
  %v4928 = vmul.f32 %v485, %v4444
  %v4929 = vmul.f32 %v486, %v4445
  %v4930 = vmul.f32 %v487, %v4446
  %v4931 = vmul.f32 %v488, %v4447
  %v4932 = vmul.f32 %v489, %v4448
  %v4933 = vmul.f32 %v490, %v4449
  %v4934 = vmul.f32 %v491, %v4450
  %v4935 = vmul.f32 %v492, %v4429
  %v4936 = vmul.f32 %v493, %v4430
  %v4937 = vmul.f32 %v494, %v4431
  %v4938 = vmul.f32 %v495, %v4432
  %v4939 = vmul.f32 %v496, %v4433
  %v4940 = vmul.f32 %v497, %v4434
  %v4941 = vmul.f32 %v498, %v4435
  %v4942 = vmul.f32 %v499, %v4436
  %v4943 = vmul.f32 %v500, %v4437
  %v4944 = vmul.f32 %v501, %v4438
  %v4945 = vmul.f32 %v502, %v4439
  %v4946 = vmul.f32 %v503, %v4440
  %v4947 = vmul.f32 %v504, %v4441
  %v4948 = vmul.f32 %v505, %v4442
  %v4949 = vmul.f32 %v506, %v4443
  %v4950 = vmul.f32 %v507, %v4444
  %v4951 = vmul.f32 %v508, %v4445
  %v4952 = vmul.f32 %v509, %v4446
  %v4953 = vmul.f32 %v510, %v4447
  %v4954 = vmul.f32 %v511, %v4448
  %v4955 = vmul.f32 %v512, %v4449
  %v4956 = vmul.f32 %v513, %v4450
  %v4957 = vmul.f32 %v514, %v4429
  %v4958 = vmul.f32 %v515, %v4430
  %v4959 = vmul.f32 %v516, %v4431
  %v4960 = vmul.f32 %v517, %v4432
  %v4961 = vmul.f32 %v518, %v4433
  %v4962 = vmul.f32 %v519, %v4434
  %v4963 = vmul.f32 %v520, %v4435
  %v4964 = vmul.f32 %v521, %v4436
  %v4965 = vmul.f32 %v522, %v4437
  %v4966 = vmul.f32 %v523, %v4438
  %v4967 = vmul.f32 %v524, %v4439
  %v4968 = vmul.f32 %v525, %v4440
  %v4969 = vmul.f32 %v526, %v4441
  %v4970 = vmul.f32 %v527, %v4442
  %v4971 = vmul.f32 %v528, %v4443
  %v4972 = vmul.f32 %v529, %v4444
  %v4973 = vmul.f32 %v530, %v4445
  %v4974 = vmul.f32 %v531, %v4446
  %v4975 = vmul.f32 %v532, %v4447
  %v4976 = vmul.f32 %v533, %v4448
  %v4977 = vmul.f32 %v534, %v4449
  %v4978 = vmul.f32 %v535, %v4450
  %v4979 = vmul.f32 %v536, %v4429
  %v4980 = vmul.f32 %v537, %v4430
  %v4981 = vmul.f32 %v538, %v4431
  %v4982 = vmul.f32 %v539, %v4432
  %v4983 = vmul.f32 %v540, %v4433
  %v4984 = vmul.f32 %v541, %v4434
  %v4985 = vmul.f32 %v542, %v4435
  %v4986 = vmul.f32 %v543, %v4436
  %v4987 = vmul.f32 %v544, %v4437
  %v4988 = vmul.f32 %v545, %v4438
  %v4989 = vmul.f32 %v546, %v4439
  %v4990 = vmul.f32 %v547, %v4440
  %v4991 = vmul.f32 %v548, %v4441
  %v4992 = vmul.f32 %v549, %v4442
  %v4993 = vmul.f32 %v550, %v4443
  %v4994 = vmul.f32 %v551, %v4444
  %v4995 = vmul.f32 %v552, %v4445
  %v4996 = vmul.f32 %v553, %v4446
  %v4997 = vmul.f32 %v554, %v4447
  %v4998 = vmul.f32 %v555, %v4448
  %v4999 = vmul.f32 %v556, %v4449
  %v5000 = vmul.f32 %v557, %v4450
  %v5001 = vmul.f32 %v558, %v4429
  %v5002 = vmul.f32 %v559, %v4430
  %v5003 = vmul.f32 %v560, %v4431
  %v5004 = vmul.f32 %v561, %v4432
  %v5005 = vmul.f32 %v562, %v4433
  %v5006 = vmul.f32 %v563, %v4434
  %v5007 = vmul.f32 %v564, %v4435
  %v5008 = vmul.f32 %v565, %v4436
  %v5009 = vmul.f32 %v566, %v4437
  %v5010 = vmul.f32 %v567, %v4438
  %v5011 = vmul.f32 %v568, %v4439
  %v5012 = vmul.f32 %v569, %v4440
  %v5013 = vmul.f32 %v570, %v4441
  %v5014 = vmul.f32 %v571, %v4442
  %v5015 = vmul.f32 %v572, %v4443
  %v5016 = vmul.f32 %v573, %v4444
  %v5017 = vmul.f32 %v574, %v4445
  %v5018 = vmul.f32 %v575, %v4446
  %v5019 = vmul.f32 %v576, %v4447
  %v5020 = vmul.f32 %v577, %v4448
  %v5021 = vmul.f32 %v578, %v4449
  %v5022 = vmul.f32 %v579, %v4450
  %v5023 = vmul.f32 %v580, %v4429
  %v5024 = vmul.f32 %v581, %v4430
  %v5025 = vmul.f32 %v582, %v4431
  %v5026 = vmul.f32 %v583, %v4432
  %v5027 = vmul.f32 %v584, %v4433
  %v5028 = vmul.f32 %v585, %v4434
  %v5029 = vmul.f32 %v586, %v4435
  %v5030 = vmul.f32 %v587, %v4436
  %v5031 = vmul.f32 %v588, %v4437
  %v5032 = vmul.f32 %v589, %v4438
  %v5033 = vmul.f32 %v590, %v4439
  %v5034 = vmul.f32 %v591, %v4440
  %v5035 = vmul.f32 %v592, %v4441
  %v5036 = vmul.f32 %v593, %v4442
  %v5037 = vmul.f32 %v594, %v4443
  %v5038 = vmul.f32 %v595, %v4444
  %v5039 = vmul.f32 %v596, %v4445
  %v5040 = vmul.f32 %v597, %v4446
  %v5041 = vmul.f32 %v598, %v4447
  %v5042 = vmul.f32 %v599, %v4448
  %v5043 = vmul.f32 %v600, %v4449
  %v5044 = vmul.f32 %v601, %v4450
  %v5045 = vmul.f32 %v602, %v4429
  %v5046 = vmul.f32 %v603, %v4430
  %v5047 = vmul.f32 %v604, %v4431
  %v5048 = vmul.f32 %v605, %v4432
  %v5049 = vmul.f32 %v606, %v4433
  %v5050 = vmul.f32 %v607, %v4434
  %v5051 = vmul.f32 %v608, %v4435
  %v5052 = vmul.f32 %v609, %v4436
  %v5053 = vmul.f32 %v610, %v4437
  %v5054 = vmul.f32 %v611, %v4438
  %v5055 = vmul.f32 %v612, %v4439
  %v5056 = vmul.f32 %v613, %v4440
  %v5057 = vmul.f32 %v614, %v4441
  %v5058 = vmul.f32 %v615, %v4442
  %v5059 = vmul.f32 %v616, %v4443
  %v5060 = vmul.f32 %v617, %v4444
  %v5061 = vmul.f32 %v618, %v4445
  %v5062 = vmul.f32 %v619, %v4446
  %v5063 = vmul.f32 %v620, %v4447
  %v5064 = vmul.f32 %v621, %v4448
  %v5065 = vmul.f32 %v622, %v4449
  %v5066 = vmul.f32 %v623, %v4450
  %v5067 = vmul.f32 %v624, %v4429
  %v5068 = vmul.f32 %v625, %v4430
  %v5069 = vmul.f32 %v626, %v4431
  %v5070 = vmul.f32 %v627, %v4432
  %v5071 = vmul.f32 %v628, %v4433
  %v5072 = vmul.f32 %v629, %v4434
  %v5073 = vmul.f32 %v630, %v4435
  %v5074 = vmul.f32 %v631, %v4436
  %v5075 = vmul.f32 %v632, %v4437
  %v5076 = vmul.f32 %v633, %v4438
  %v5077 = vmul.f32 %v634, %v4439
  %v5078 = vmul.f32 %v635, %v4440
  %v5079 = vmul.f32 %v636, %v4441
  %v5080 = vmul.f32 %v637, %v4442
  %v5081 = vmul.f32 %v638, %v4443
  %v5082 = vmul.f32 %v639, %v4444
  %v5083 = vmul.f32 %v640, %v4445
  %v5084 = vmul.f32 %v641, %v4446
  %v5085 = vmul.f32 %v642, %v4447
  %v5086 = vmul.f32 %v643, %v4448
  %v5087 = vmul.f32 %v644, %v4449
  %v5088 = vmul.f32 %v645, %v4450
  %v5089 = vmul.f32 %v646, %v4429
  %v5090 = vmul.f32 %v647, %v4430
  %v5091 = vmul.f32 %v648, %v4431
  %v5092 = vmul.f32 %v649, %v4432
  %v5093 = vmul.f32 %v650, %v4433
  %v5094 = vmul.f32 %v651, %v4434
  %v5095 = vmul.f32 %v652, %v4435
  %v5096 = vmul.f32 %v653, %v4436
  %v5097 = vmul.f32 %v654, %v4437
  %v5098 = vmul.f32 %v655, %v4438
  %v5099 = vmul.f32 %v656, %v4439
  %v5100 = vmul.f32 %v657, %v4440
  %v5101 = vmul.f32 %v658, %v4441
  %v5102 = vmul.f32 %v659, %v4442
  %v5103 = vmul.f32 %v660, %v4443
  %v5104 = vmul.f32 %v661, %v4444
  %v5105 = vmul.f32 %v662, %v4445
  %v5106 = vmul.f32 %v663, %v4446
  %v5107 = vmul.f32 %v664, %v4447
  %v5108 = vmul.f32 %v665, %v4448
  %v5109 = vmul.f32 %v666, %v4449
  %v5110 = vmul.f32 %v667, %v4450
  %v5111 = vmul.f32 %v668, %v4429
  %v5112 = vmul.f32 %v669, %v4430
  %v5113 = vmul.f32 %v670, %v4431
  %v5114 = vmul.f32 %v671, %v4432
  %v5115 = vmul.f32 %v672, %v4433
  %v5116 = vmul.f32 %v673, %v4434
  %v5117 = vmul.f32 %v674, %v4435
  %v5118 = vmul.f32 %v675, %v4436
  %v5119 = vmul.f32 %v676, %v4437
  %v5120 = vmul.f32 %v677, %v4438
  %v5121 = vmul.f32 %v678, %v4439
  %v5122 = vmul.f32 %v679, %v4440
  %v5123 = vmul.f32 %v680, %v4441
  %v5124 = vmul.f32 %v681, %v4442
  %v5125 = vmul.f32 %v682, %v4443
  %v5126 = vmul.f32 %v683, %v4444
  %v5127 = vmul.f32 %v684, %v4445
  %v5128 = vmul.f32 %v685, %v4446
  %v5129 = vmul.f32 %v686, %v4447
  %v5130 = vmul.f32 %v687, %v4448
  %v5131 = vmul.f32 %v688, %v4449
  %v5132 = vmul.f32 %v689, %v4450
  %v5133 = vmul.f32 %v690, %v4429
  %v5134 = vmul.f32 %v691, %v4430
  %v5135 = vmul.f32 %v692, %v4431
  %v5136 = vmul.f32 %v693, %v4432
  %v5137 = vmul.f32 %v694, %v4433
  %v5138 = vmul.f32 %v695, %v4434
  %v5139 = vmul.f32 %v696, %v4435
  %v5140 = vmul.f32 %v697, %v4436
  %v5141 = vmul.f32 %v698, %v4437
  %v5142 = vmul.f32 %v699, %v4438
  %v5143 = vmul.f32 %v700, %v4439
  %v5144 = vmul.f32 %v701, %v4440
  %v5145 = vmul.f32 %v702, %v4441
  %v5146 = vmul.f32 %v703, %v4442
  %v5147 = vmul.f32 %v704, %v4443
  %v5148 = vmul.f32 %v705, %v4444
  %v5149 = vmul.f32 %v706, %v4445
  %v5150 = vmul.f32 %v707, %v4446
  %v5151 = vmul.f32 %v708, %v4447
  %v5152 = vmul.f32 %v709, %v4448
  %v5153 = vmul.f32 %v710, %v4449
  %v5154 = vmul.f32 %v711, %v4450
  %v5155 = vmul.f32 %v712, %v4429
  %v5156 = vmul.f32 %v713, %v4430
  %v5157 = vmul.f32 %v714, %v4431
  %v5158 = vmul.f32 %v715, %v4432
  %v5159 = vmul.f32 %v716, %v4433
  %v5160 = vmul.f32 %v717, %v4434
  %v5161 = vmul.f32 %v718, %v4435
  %v5162 = vmul.f32 %v719, %v4436
  %v5163 = vmul.f32 %v720, %v4437
  %v5164 = vmul.f32 %v721, %v4438
  %v5165 = vmul.f32 %v722, %v4439
  %v5166 = vmul.f32 %v723, %v4440
  %v5167 = vmul.f32 %v724, %v4441
  %v5168 = vmul.f32 %v725, %v4442
  %v5169 = vmul.f32 %v726, %v4443
  %v5170 = vmul.f32 %v727, %v4444
  %v5171 = vmul.f32 %v728, %v4445
  %v5172 = vmul.f32 %v729, %v4446
  %v5173 = vmul.f32 %v730, %v4447
  %v5174 = vmul.f32 %v731, %v4448
  %v5175 = vmul.f32 %v732, %v4449
  %v5176 = vmul.f32 %v733, %v4450
  %v5177 = vmul.f32 %v734, %v4429
  %v5178 = vmul.f32 %v735, %v4430
  %v5179 = vmul.f32 %v736, %v4431
  %v5180 = vmul.f32 %v737, %v4432
  %v5181 = vmul.f32 %v738, %v4433
  %v5182 = vmul.f32 %v739, %v4434
  %v5183 = vmul.f32 %v740, %v4435
  %v5184 = vmul.f32 %v741, %v4436
  %v5185 = vmul.f32 %v742, %v4437
  %v5186 = vmul.f32 %v743, %v4438
  %v5187 = vmul.f32 %v744, %v4439
  %v5188 = vmul.f32 %v745, %v4440
  %v5189 = vmul.f32 %v746, %v4441
  %v5190 = vmul.f32 %v747, %v4442
  %v5191 = vmul.f32 %v748, %v4443
  %v5192 = vmul.f32 %v749, %v4444
  %v5193 = vmul.f32 %v750, %v4445
  %v5194 = vmul.f32 %v751, %v4446
  %v5195 = vmul.f32 %v752, %v4447
  %v5196 = vmul.f32 %v753, %v4448
  %v5197 = vmul.f32 %v754, %v4449
  %v5198 = vmul.f32 %v755, %v4450
  %v5199 = vmul.f32 %v756, %v4429
  %v5200 = vmul.f32 %v757, %v4430
  %v5201 = vmul.f32 %v758, %v4431
  %v5202 = vmul.f32 %v759, %v4432
  %v5203 = vmul.f32 %v760, %v4433
  %v5204 = vmul.f32 %v761, %v4434
  %v5205 = vmul.f32 %v762, %v4435
  %v5206 = vmul.f32 %v763, %v4436
  %v5207 = vmul.f32 %v764, %v4437
  %v5208 = vmul.f32 %v765, %v4438
  %v5209 = vmul.f32 %v766, %v4439
  %v5210 = vmul.f32 %v767, %v4440
  %v5211 = vmul.f32 %v768, %v4441
  %v5212 = vmul.f32 %v769, %v4442
  %v5213 = vmul.f32 %v770, %v4443
  %v5214 = vmul.f32 %v771, %v4444
  %v5215 = vmul.f32 %v772, %v4445
  %v5216 = vmul.f32 %v773, %v4446
  %v5217 = vmul.f32 %v774, %v4447
  %v5218 = vmul.f32 %v775, %v4448
  %v5219 = vmul.f32 %v776, %v4449
  %v5220 = vmul.f32 %v777, %v4450
  %v5221 = vmul.f32 %v778, %v4429
  %v5222 = vmul.f32 %v779, %v4430
  %v5223 = vmul.f32 %v780, %v4431
  %v5224 = vmul.f32 %v781, %v4432
  %v5225 = vmul.f32 %v782, %v4433
  %v5226 = vmul.f32 %v783, %v4434
  %v5227 = vmul.f32 %v784, %v4435
  %v5228 = vmul.f32 %v785, %v4436
  %v5229 = vmul.f32 %v786, %v4437
  %v5230 = vmul.f32 %v787, %v4438
  %v5231 = vmul.f32 %v788, %v4439
  %v5232 = vmul.f32 %v789, %v4440
  %v5233 = vmul.f32 %v790, %v4441
  %v5234 = vmul.f32 %v791, %v4442
  %v5235 = vmul.f32 %v792, %v4443
  %v5236 = vmul.f32 %v793, %v4444
  %v5237 = vmul.f32 %v794, %v4445
  %v5238 = vmul.f32 %v795, %v4446
  %v5239 = vmul.f32 %v796, %v4447
  %v5240 = vmul.f32 %v797, %v4448
  %v5241 = vmul.f32 %v798, %v4449
  %v5242 = vmul.f32 %v799, %v4450
  %v5243 = vmul.f32 %v800, %v4429
  %v5244 = vmul.f32 %v801, %v4430
  %v5245 = vmul.f32 %v802, %v4431
  %v5246 = vmul.f32 %v803, %v4432
  %v5247 = vmul.f32 %v804, %v4433
  %v5248 = vmul.f32 %v805, %v4434
  %v5249 = vmul.f32 %v806, %v4435
  %v5250 = vmul.f32 %v807, %v4436
  %v5251 = vmul.f32 %v808, %v4437
  %v5252 = vmul.f32 %v809, %v4438
  %v5253 = vmul.f32 %v810, %v4439
  %v5254 = vmul.f32 %v811, %v4440
  %v5255 = vmul.f32 %v812, %v4441
  %v5256 = vmul.f32 %v813, %v4442
  %v5257 = vmul.f32 %v814, %v4443
  %v5258 = vmul.f32 %v815, %v4444
  %v5259 = vmul.f32 %v816, %v4445
  %v5260 = vmul.f32 %v817, %v4446
  %v5261 = vmul.f32 %v818, %v4447
  %v5262 = vmul.f32 %v819, %v4448
  %v5263 = vmul.f32 %v820, %v4449
  %v5264 = vmul.f32 %v821, %v4450
  %v5265 = vmul.f32 %v822, %v4429
  %v5266 = vmul.f32 %v823, %v4430
  %v5267 = vmul.f32 %v824, %v4431
  %v5268 = vmul.f32 %v825, %v4432
  %v5269 = vmul.f32 %v826, %v4433
  %v5270 = vmul.f32 %v827, %v4434
  %v5271 = vmul.f32 %v828, %v4435
  %v5272 = vmul.f32 %v829, %v4436
  %v5273 = vmul.f32 %v830, %v4437
  %v5274 = vmul.f32 %v831, %v4438
  %v5275 = vmul.f32 %v832, %v4439
  %v5276 = vmul.f32 %v833, %v4440
  %v5277 = vmul.f32 %v834, %v4441
  %v5278 = vmul.f32 %v835, %v4442
  %v5279 = vmul.f32 %v836, %v4443
  %v5280 = vmul.f32 %v837, %v4444
  %v5281 = vmul.f32 %v838, %v4445
  %v5282 = vmul.f32 %v839, %v4446
  %v5283 = vmul.f32 %v840, %v4447
  %v5284 = vmul.f32 %v841, %v4448
  %v5285 = vmul.f32 %v842, %v4449
  %v5286 = vmul.f32 %v843, %v4450
  %v5287 = vmul.f32 %v844, %v4429
  %v5288 = vmul.f32 %v845, %v4430
  %v5289 = vmul.f32 %v846, %v4431
  %v5290 = vmul.f32 %v847, %v4432
  %v5291 = vmul.f32 %v848, %v4433
  %v5292 = vmul.f32 %v849, %v4434
  %v5293 = vmul.f32 %v850, %v4435
  %v5294 = vmul.f32 %v851, %v4436
  %v5295 = vmul.f32 %v852, %v4437
  %v5296 = vmul.f32 %v853, %v4438
  %v5297 = vmul.f32 %v854, %v4439
  %v5298 = vmul.f32 %v855, %v4440
  %v5299 = vmul.f32 %v856, %v4441
  %v5300 = vmul.f32 %v857, %v4442
  %v5301 = vmul.f32 %v858, %v4443
  %v5302 = vmul.f32 %v859, %v4444
  %v5303 = vmul.f32 %v860, %v4445
  %v5304 = vmul.f32 %v861, %v4446
  %v5305 = vmul.f32 %v862, %v4447
  %v5306 = vmul.f32 %v863, %v4448
  %v5307 = vmul.f32 %v864, %v4449
  %v5308 = vmul.f32 %v865, %v4450
  %v5309 = vmul.f32 %v866, %v4429
  %v5310 = vmul.f32 %v867, %v4430
  %v5311 = vmul.f32 %v868, %v4431
  %v5312 = vmul.f32 %v869, %v4432
  %v5313 = vmul.f32 %v870, %v4433
  %v5314 = vmul.f32 %v871, %v4434
  %v5315 = vmul.f32 %v872, %v4435
  %v5316 = vmul.f32 %v873, %v4436
  %v5317 = vmul.f32 %v874, %v4437
  %v5318 = vmul.f32 %v875, %v4438
  %v5319 = vmul.f32 %v876, %v4439
  %v5320 = vmul.f32 %v877, %v4440
  %v5321 = vmul.f32 %v878, %v4441
  %v5322 = vmul.f32 %v879, %v4442
  %v5323 = vmul.f32 %v880, %v4443
  %v5324 = vmul.f32 %v881, %v4444
  %v5325 = vmul.f32 %v882, %v4445
  %v5326 = vmul.f32 %v883, %v4446
  %v5327 = vmul.f32 %v884, %v4447
  %v5328 = vmul.f32 %v885, %v4448
  %v5329 = vmul.f32 %v886, %v4449
  %v5330 = vmul.f32 %v887, %v4450
  %v5331 = vmul.f32 %v888, %v4429
  %v5332 = vmul.f32 %v889, %v4430
  %v5333 = vmul.f32 %v890, %v4431
  %v5334 = vmul.f32 %v891, %v4432
  %v5335 = vmul.f32 %v892, %v4433
  %v5336 = vmul.f32 %v893, %v4434
  %v5337 = vmul.f32 %v894, %v4435
  %v5338 = vmul.f32 %v895, %v4436
  %v5339 = vmul.f32 %v896, %v4437
  %v5340 = vmul.f32 %v897, %v4438
  %v5341 = vmul.f32 %v898, %v4439
  %v5342 = vmul.f32 %v899, %v4440
  %v5343 = vmul.f32 %v900, %v4441
  %v5344 = vmul.f32 %v901, %v4442
  %v5345 = vmul.f32 %v902, %v4443
  %v5346 = vmul.f32 %v903, %v4444
  %v5347 = vmul.f32 %v904, %v4445
  %v5348 = vmul.f32 %v905, %v4446
  %v5349 = vmul.f32 %v906, %v4447
  %v5350 = vmul.f32 %v907, %v4448
  %v5351 = vmul.f32 %v908, %v4449
  %v5352 = vmul.f32 %v909, %v4450
  %v5353 = vmul.f32 %v910, %v4429
  %v5354 = vmul.f32 %v911, %v4430
  %v5355 = vmul.f32 %v912, %v4431
  %v5356 = vmul.f32 %v913, %v4432
  %v5357 = vmul.f32 %v914, %v4433
  %v5358 = vmul.f32 %v915, %v4434
  %v5359 = vmul.f32 %v916, %v4435
  %v5360 = vmul.f32 %v917, %v4436
  %v5361 = vmul.f32 %v918, %v4437
  %v5362 = vmul.f32 %v919, %v4438
  %v5363 = vmul.f32 %v920, %v4439
  %v5364 = vmul.f32 %v921, %v4440
  %v5365 = vmul.f32 %v922, %v4441
  %v5366 = vmul.f32 %v923, %v4442
  %v5367 = vmul.f32 %v924, %v4443
  %v5368 = vmul.f32 %v925, %v4444
  %v5369 = vmul.f32 %v926, %v4445
  %v5370 = vmul.f32 %v927, %v4446
  %v5371 = vmul.f32 %v928, %v4447
  %v5372 = vmul.f32 %v929, %v4448
  %v5373 = vmul.f32 %v930, %v4449
  %v5374 = vmul.f32 %v931, %v4450
  %v5375 = vmul.f32 %v932, %v4429
  %v5376 = vmul.f32 %v933, %v4430
  %v5377 = vmul.f32 %v934, %v4431
  %v5378 = vmul.f32 %v935, %v4432
  %v5379 = vmul.f32 %v936, %v4433
  %v5380 = vmul.f32 %v937, %v4434
  %v5381 = vmul.f32 %v938, %v4435
  %v5382 = vmul.f32 %v939, %v4436
  %v5383 = vmul.f32 %v940, %v4437
  %v5384 = vmul.f32 %v941, %v4438
  %v5385 = vmul.f32 %v942, %v4439
  %v5386 = vmul.f32 %v943, %v4440
  %v5387 = vmul.f32 %v944, %v4441
  %v5388 = vmul.f32 %v945, %v4442
  %v5389 = vmul.f32 %v946, %v4443
  %v5390 = vmul.f32 %v947, %v4444
  %v5391 = vmul.f32 %v948, %v4445
  %v5392 = vmul.f32 %v949, %v4446
  %v5393 = vmul.f32 %v950, %v4447
  %v5394 = vmul.f32 %v951, %v4448
  %v5395 = vmul.f32 %v952, %v4449
  %v5396 = vmul.f32 %v953, %v4450
  %v5397 = vmul.f32 %v954, %v4429
  %v5398 = vmul.f32 %v955, %v4430
  %v5399 = vmul.f32 %v956, %v4431
  %v5400 = vmul.f32 %v957, %v4432
  %v5401 = vmul.f32 %v958, %v4433
  %v5402 = vmul.f32 %v959, %v4434
  %v5403 = vmul.f32 %v960, %v4435
  %v5404 = vmul.f32 %v961, %v4436
  %v5405 = vmul.f32 %v962, %v4437
  %v5406 = vmul.f32 %v963, %v4438
  %v5407 = vmul.f32 %v964, %v4439
  %v5408 = vmul.f32 %v965, %v4440
  %v5409 = vmul.f32 %v966, %v4441
  %v5410 = vmul.f32 %v967, %v4442
  %v5411 = vmul.f32 %v968, %v4443
  %v5412 = vmul.f32 %v969, %v4444
  %v5413 = vmul.f32 %v970, %v4445
  %v5414 = vmul.f32 %v971, %v4446
  %v5415 = vmul.f32 %v972, %v4447
  %v5416 = vmul.f32 %v973, %v4448
  %v5417 = vmul.f32 %v974, %v4449
  %v5418 = vmul.f32 %v975, %v4450
  %v5419 = vmul.f32 %v976, %v4429
  %v5420 = vmul.f32 %v977, %v4430
  %v5421 = vmul.f32 %v978, %v4431
  %v5422 = vmul.f32 %v979, %v4432
  %v5423 = vmul.f32 %v980, %v4433
  %v5424 = vmul.f32 %v981, %v4434
  %v5425 = vmul.f32 %v982, %v4435
  %v5426 = vmul.f32 %v983, %v4436
  %v5427 = vmul.f32 %v984, %v4437
  %v5428 = vmul.f32 %v985, %v4438
  %v5429 = vmul.f32 %v986, %v4439
  %v5430 = vmul.f32 %v987, %v4440
  %v5431 = vmul.f32 %v988, %v4441
  %v5432 = vmul.f32 %v989, %v4442
  %v5433 = vmul.f32 %v990, %v4443
  %v5434 = vmul.f32 %v991, %v4444
  %v5435 = vmul.f32 %v992, %v4445
  %v5436 = vmul.f32 %v993, %v4446
  %v5437 = vmul.f32 %v994, %v4447
  %v5438 = vmul.f32 %v995, %v4448
  %v5439 = vmul.f32 %v996, %v4449
  %v5440 = vmul.f32 %v997, %v4450
  %v5441 = vmul.f32 %v998, %v4429
  %v5442 = vmul.f32 %v999, %v4430
  %v5443 = vmul.f32 %v1000, %v4431
  %v5444 = vmul.f32 %v1001, %v4432
  %v5445 = vmul.f32 %v1002, %v4433
  %v5446 = vmul.f32 %v1003, %v4434
  %v5447 = vmul.f32 %v1004, %v4435
  %v5448 = vmul.f32 %v1005, %v4436
  %v5449 = vmul.f32 %v1006, %v4437
  %v5450 = vmul.f32 %v1007, %v4438
  %v5451 = vmul.f32 %v1008, %v4439
  %v5452 = vmul.f32 %v1009, %v4440
  %v5453 = vmul.f32 %v1010, %v4441
  %v5454 = vmul.f32 %v1011, %v4442
  %v5455 = vmul.f32 %v1012, %v4443
  %v5456 = vmul.f32 %v1013, %v4444
  %v5457 = vmul.f32 %v1014, %v4445
  %v5458 = vmul.f32 %v1015, %v4446
  %v5459 = vmul.f32 %v1016, %v4447
  %v5460 = vmul.f32 %v1017, %v4448
  %v5461 = vmul.f32 %v1018, %v4449
  %v5462 = vmul.f32 %v1019, %v4450
  %v5463 = vmul.f32 %v1020, %v4429
  %v5464 = vmul.f32 %v1021, %v4430
  %v5465 = vmul.f32 %v1022, %v4431
  %v5466 = vmul.f32 %v1023, %v4432
  %v5467 = vmul.f32 %v1024, %v4433
  %v5468 = vmul.f32 %v1025, %v4434
  %v5469 = vmul.f32 %v1026, %v4435
  %v5470 = vmul.f32 %v1027, %v4436
  %v5471 = vmul.f32 %v1028, %v4437
  %v5472 = vmul.f32 %v1029, %v4438
  %v5473 = vmul.f32 %v1030, %v4439
  %v5474 = vmul.f32 %v1031, %v4440
  %v5475 = vmul.f32 %v1032, %v4441
  %v5476 = vmul.f32 %v1033, %v4442
  %v5477 = vmul.f32 %v1034, %v4443
  %v5478 = vmul.f32 %v1035, %v4444
  %v5479 = vmul.f32 %v1036, %v4445
  %v5480 = vmul.f32 %v1037, %v4446
  %v5481 = vmul.f32 %v1038, %v4447
  %v5482 = vmul.f32 %v1039, %v4448
  %v5483 = vmul.f32 %v1040, %v4449
  %v5484 = vmul.f32 %v1041, %v4450
  %v5485 = vmul.f32 %v1042, %v4429
  %v5486 = vmul.f32 %v1043, %v4430
  %v5487 = vmul.f32 %v1044, %v4431
  %v5488 = vmul.f32 %v1045, %v4432
  %v5489 = vmul.f32 %v1046, %v4433
  %v5490 = vmul.f32 %v1047, %v4434
  %v5491 = vmul.f32 %v1048, %v4435
  %v5492 = vmul.f32 %v1049, %v4436
  %v5493 = vmul.f32 %v1050, %v4437
  %v5494 = vmul.f32 %v1051, %v4438
  %v5495 = vmul.f32 %v1052, %v4439
  %v5496 = vmul.f32 %v1053, %v4440
  %v5497 = vmul.f32 %v1054, %v4441
  %v5498 = vmul.f32 %v1055, %v4442
  %v5499 = vmul.f32 %v1056, %v4443
  %v5500 = vmul.f32 %v1057, %v4444
  %v5501 = vmul.f32 %v1058, %v4445
  %v5502 = vmul.f32 %v1059, %v4446
  %v5503 = vmul.f32 %v1060, %v4447
  %v5504 = vmul.f32 %v1061, %v4448
  %v5505 = vmul.f32 %v1062, %v4449
  %v5506 = vmul.f32 %v1063, %v4450
  %v5507 = vmul.f32 %v1064, %v4429
  %v5508 = vmul.f32 %v1065, %v4430
  %v5509 = vmul.f32 %v1066, %v4431
  %v5510 = vmul.f32 %v1067, %v4432
  %v5511 = vmul.f32 %v1068, %v4433
  %v5512 = vmul.f32 %v1069, %v4434
  %v5513 = vmul.f32 %v1070, %v4435
  %v5514 = vmul.f32 %v1071, %v4436
  %v5515 = vmul.f32 %v1072, %v4437
  %v5516 = vmul.f32 %v1073, %v4438
  %v5517 = vmul.f32 %v1074, %v4439
  %v5518 = vmul.f32 %v1075, %v4440
  %v5519 = vmul.f32 %v1076, %v4441
  %v5520 = vmul.f32 %v1077, %v4442
  %v5521 = vmul.f32 %v1078, %v4443
  %v5522 = vmul.f32 %v1079, %v4444
  %v5523 = vmul.f32 %v1080, %v4445
  %v5524 = vmul.f32 %v1081, %v4446
  %v5525 = vmul.f32 %v1082, %v4447
  %v5526 = vmul.f32 %v1083, %v4448
  %v5527 = vmul.f32 %v1084, %v4449
  %v5528 = vmul.f32 %v1085, %v4450
  %v5529 = vmul.f32 %v1086, %v4429
  %v5530 = vmul.f32 %v1087, %v4430
  %v5531 = vmul.f32 %v1088, %v4431
  %v5532 = vmul.f32 %v1089, %v4432
  %v5533 = vmul.f32 %v1090, %v4433
  %v5534 = vmul.f32 %v1091, %v4434
  %v5535 = vmul.f32 %v1092, %v4435
  %v5536 = vmul.f32 %v1093, %v4436
  %v5537 = vmul.f32 %v1094, %v4437
  %v5538 = vmul.f32 %v1095, %v4438
  %v5539 = vmul.f32 %v1096, %v4439
  %v5540 = vmul.f32 %v1097, %v4440
  %v5541 = vmul.f32 %v1098, %v4441
  %v5542 = vmul.f32 %v1099, %v4442
  %v5543 = vmul.f32 %v1100, %v4443
  %v5544 = vmul.f32 %v1101, %v4444
  %v5545 = vmul.f32 %v1102, %v4445
  %v5546 = vmul.f32 %v1103, %v4446
  %v5547 = vmul.f32 %v1104, %v4447
  %v5548 = vmul.f32 %v1105, %v4448
  %v5549 = vmul.f32 %v1106, %v4449
  %v5550 = vmul.f32 %v1107, %v4450
  %v5551 = vmul.f32 %v1108, %v4429
  %v5552 = vmul.f32 %v1109, %v4430
  %v5553 = vmul.f32 %v1110, %v4431
  %v5554 = vmul.f32 %v1111, %v4432
  %v5555 = vmul.f32 %v1112, %v4433
  %v5556 = vmul.f32 %v1113, %v4434
  %v5557 = vmul.f32 %v1114, %v4435
  %v5558 = vmul.f32 %v1115, %v4436
  %v5559 = vmul.f32 %v1116, %v4437
  %v5560 = vmul.f32 %v1117, %v4438
  %v5561 = vmul.f32 %v1118, %v4439
  %v5562 = vmul.f32 %v1119, %v4440
  %v5563 = vmul.f32 %v1120, %v4441
  %v5564 = vmul.f32 %v1121, %v4442
  %v5565 = vmul.f32 %v1122, %v4443
  %v5566 = vmul.f32 %v1123, %v4444
  %v5567 = vmul.f32 %v1124, %v4445
  %v5568 = vmul.f32 %v1125, %v4446
  %v5569 = vmul.f32 %v1126, %v4447
  %v5570 = vmul.f32 %v1127, %v4448
  %v5571 = vmul.f32 %v1128, %v4449
  %v5572 = vmul.f32 %v1129, %v4450
  %v5573 = vmul.f32 %v1130, %v4429
  %v5574 = vmul.f32 %v1131, %v4430
  %v5575 = vmul.f32 %v1132, %v4431
  %v5576 = vmul.f32 %v1133, %v4432
  %v5577 = vmul.f32 %v1134, %v4433
  %v5578 = vmul.f32 %v1135, %v4434
  %v5579 = vmul.f32 %v1136, %v4435
  %v5580 = vmul.f32 %v1137, %v4436
  %v5581 = vmul.f32 %v1138, %v4437
  %v5582 = vmul.f32 %v1139, %v4438
  %v5583 = vmul.f32 %v1140, %v4439
  %v5584 = vmul.f32 %v1141, %v4440
  %v5585 = vmul.f32 %v1142, %v4441
  %v5586 = vmul.f32 %v1143, %v4442
  %v5587 = vmul.f32 %v1144, %v4443
  %v5588 = vmul.f32 %v1145, %v4444
  %v5589 = vmul.f32 %v1146, %v4445
  %v5590 = vmul.f32 %v1147, %v4446
  %v5591 = vmul.f32 %v1148, %v4447
  %v5592 = vmul.f32 %v1149, %v4448
  %v5593 = vmul.f32 %v1150, %v4449
  %v5594 = vmul.f32 %v1151, %v4450
  %v5595 = vmul.f32 %v1152, %v4429
  %v5596 = vmul.f32 %v1153, %v4430
  %v5597 = vmul.f32 %v1154, %v4431
  %v5598 = vmul.f32 %v1155, %v4432
  %v5599 = vmul.f32 %v1156, %v4433
  %v5600 = vmul.f32 %v1157, %v4434
  %v5601 = vmul.f32 %v1158, %v4435
  %v5602 = vmul.f32 %v1159, %v4436
  %v5603 = vmul.f32 %v1160, %v4437
  %v5604 = vmul.f32 %v1161, %v4438
  %v5605 = vmul.f32 %v1162, %v4439
  %v5606 = vmul.f32 %v1163, %v4440
  %v5607 = vmul.f32 %v1164, %v4441
  %v5608 = vmul.f32 %v1165, %v4442
  %v5609 = vmul.f32 %v1166, %v4443
  %v5610 = vmul.f32 %v1167, %v4444
  %v5611 = vmul.f32 %v1168, %v4445
  %v5612 = vmul.f32 %v1169, %v4446
  %v5613 = vmul.f32 %v1170, %v4447
  %v5614 = vmul.f32 %v1171, %v4448
  %v5615 = vmul.f32 %v1172, %v4449
  %v5616 = vmul.f32 %v1173, %v4450
  %v5617 = vmul.f32 %v1174, %v4429
  %v5618 = vmul.f32 %v1175, %v4430
  %v5619 = vmul.f32 %v1176, %v4431
  %v5620 = vmul.f32 %v1177, %v4432
  %v5621 = vmul.f32 %v1178, %v4433
  %v5622 = vmul.f32 %v1179, %v4434
  %v5623 = vmul.f32 %v1180, %v4435
  %v5624 = vmul.f32 %v1181, %v4436
  %v5625 = vmul.f32 %v1182, %v4437
  %v5626 = vmul.f32 %v1183, %v4438
  %v5627 = vmul.f32 %v1184, %v4439
  %v5628 = vmul.f32 %v1185, %v4440
  %v5629 = vmul.f32 %v1186, %v4441
  %v5630 = vmul.f32 %v1187, %v4442
  %v5631 = vmul.f32 %v1188, %v4443
  %v5632 = vmul.f32 %v1189, %v4444
  %v5633 = vmul.f32 %v1190, %v4445
  %v5634 = vmul.f32 %v1191, %v4446
  %v5635 = vmul.f32 %v1192, %v4447
  %v5636 = vmul.f32 %v1193, %v4448
  %v5637 = vmul.f32 %v1194, %v4449
  %v5638 = vmul.f32 %v1195, %v4450
  %v5639 = vmul.f32 %v1196, %v4429
  %v5640 = vmul.f32 %v1197, %v4430
  %v5641 = vmul.f32 %v1198, %v4431
  %v5642 = vmul.f32 %v1199, %v4432
  %v5643 = vmul.f32 %v1200, %v4433
  %v5644 = vmul.f32 %v1201, %v4434
  %v5645 = vmul.f32 %v1202, %v4435
  %v5646 = vmul.f32 %v1203, %v4436
  %v5647 = vmul.f32 %v1204, %v4437
  %v5648 = vmul.f32 %v1205, %v4438
  %v5649 = vmul.f32 %v1206, %v4439
  %v5650 = vmul.f32 %v1207, %v4440
  %v5651 = vmul.f32 %v1208, %v4441
  %v5652 = vmul.f32 %v1209, %v4442
  %v5653 = vmul.f32 %v1210, %v4443
  %v5654 = vmul.f32 %v1211, %v4444
  %v5655 = vmul.f32 %v1212, %v4445
  %v5656 = vmul.f32 %v1213, %v4446
  %v5657 = vmul.f32 %v1214, %v4447
  %v5658 = vmul.f32 %v1215, %v4448
  %v5659 = vmul.f32 %v1216, %v4449
  %v5660 = vmul.f32 %v1217, %v4450
  %v5661 = vmul.f32 %v1218, %v4429
  %v5662 = vmul.f32 %v1219, %v4430
  %v5663 = vmul.f32 %v1220, %v4431
  %v5664 = vmul.f32 %v1221, %v4432
  %v5665 = vmul.f32 %v1222, %v4433
  %v5666 = vmul.f32 %v1223, %v4434
  %v5667 = vmul.f32 %v1224, %v4435
  %v5668 = vmul.f32 %v1225, %v4436
  %v5669 = vmul.f32 %v1226, %v4437
  %v5670 = vmul.f32 %v1227, %v4438
  %v5671 = vmul.f32 %v1228, %v4439
  %v5672 = vmul.f32 %v1229, %v4440
  %v5673 = vmul.f32 %v1230, %v4441
  %v5674 = vmul.f32 %v1231, %v4442
  %v5675 = vmul.f32 %v1232, %v4443
  %v5676 = vmul.f32 %v1233, %v4444
  %v5677 = vmul.f32 %v1234, %v4445
  %v5678 = vmul.f32 %v1235, %v4446
  %v5679 = vmul.f32 %v1236, %v4447
  %v5680 = vmul.f32 %v1237, %v4448
  %v5681 = vmul.f32 %v1238, %v4449
  %v5682 = vmul.f32 %v1239, %v4450
  %v5683 = vmul.f32 %v1240, %v4429
  %v5684 = vmul.f32 %v1241, %v4430
  %v5685 = vmul.f32 %v1242, %v4431
  %v5686 = vmul.f32 %v1243, %v4432
  %v5687 = vmul.f32 %v1244, %v4433
  %v5688 = vmul.f32 %v1245, %v4434
  %v5689 = vmul.f32 %v1246, %v4435
  %v5690 = vmul.f32 %v1247, %v4436
  %v5691 = vmul.f32 %v1248, %v4437
  %v5692 = vmul.f32 %v1249, %v4438
  %v5693 = vmul.f32 %v1250, %v4439
  %v5694 = vmul.f32 %v1251, %v4440
  %v5695 = vmul.f32 %v1252, %v4441
  %v5696 = vmul.f32 %v1253, %v4442
  %v5697 = vmul.f32 %v1254, %v4443
  %v5698 = vmul.f32 %v1255, %v4444
  %v5699 = vmul.f32 %v1256, %v4445
  %v5700 = vmul.f32 %v1257, %v4446
  %v5701 = vmul.f32 %v1258, %v4447
  %v5702 = vmul.f32 %v1259, %v4448
  %v5703 = vmul.f32 %v1260, %v4449
  %v5704 = vmul.f32 %v1261, %v4450
  %v5705 = vmul.f32 %v1262, %v4429
  %v5706 = vmul.f32 %v1263, %v4430
  %v5707 = vmul.f32 %v1264, %v4431
  %v5708 = vmul.f32 %v1265, %v4432
  %v5709 = vmul.f32 %v1266, %v4433
  %v5710 = vmul.f32 %v1267, %v4434
  %v5711 = vmul.f32 %v1268, %v4435
  %v5712 = vmul.f32 %v1269, %v4436
  %v5713 = vmul.f32 %v1270, %v4437
  %v5714 = vmul.f32 %v1271, %v4438
  %v5715 = vmul.f32 %v1272, %v4439
  %v5716 = vmul.f32 %v1273, %v4440
  %v5717 = vmul.f32 %v1274, %v4441
  %v5718 = vmul.f32 %v1275, %v4442
  %v5719 = vmul.f32 %v1276, %v4443
  %v5720 = vmul.f32 %v1277, %v4444
  %v5721 = vmul.f32 %v1278, %v4445
  %v5722 = vmul.f32 %v1279, %v4446
  %v5723 = vmul.f32 %v1280, %v4447
  %v5724 = vmul.f32 %v1281, %v4448
  %v5725 = vmul.f32 %v1282, %v4449
  %v5726 = vmul.f32 %v1283, %v4450
  %v5727 = vmul.f32 %v1284, %v4429
  %v5728 = vmul.f32 %v1285, %v4430
  %v5729 = vmul.f32 %v1286, %v4431
  %v5730 = vmul.f32 %v1287, %v4432
  %v5731 = vmul.f32 %v1288, %v4433
  %v5732 = vmul.f32 %v1289, %v4434
  %v5733 = vmul.f32 %v1290, %v4435
  %v5734 = vmul.f32 %v1291, %v4436
  %v5735 = vmul.f32 %v1292, %v4437
  %v5736 = vmul.f32 %v1293, %v4438
  %v5737 = vmul.f32 %v1294, %v4439
  %v5738 = vmul.f32 %v1295, %v4440
  %v5739 = vmul.f32 %v1296, %v4441
  %v5740 = vmul.f32 %v1297, %v4442
  %v5741 = vmul.f32 %v1298, %v4443
  %v5742 = vmul.f32 %v1299, %v4444
  %v5743 = vmul.f32 %v1300, %v4445
  %v5744 = vmul.f32 %v1301, %v4446
  %v5745 = vmul.f32 %v1302, %v4447
  %v5746 = vmul.f32 %v1303, %v4448
  %v5747 = vmul.f32 %v1304, %v4449
  %v5748 = vmul.f32 %v1305, %v4450
  %v5749 = vmul.f32 %v1306, %v4429
  %v5750 = vmul.f32 %v1307, %v4430
  %v5751 = vmul.f32 %v1308, %v4431
  %v5752 = vmul.f32 %v1309, %v4432
  %v5753 = vmul.f32 %v1310, %v4433
  %v5754 = vmul.f32 %v1311, %v4434
  %v5755 = vmul.f32 %v1312, %v4435
  %v5756 = vmul.f32 %v1313, %v4436
  %v5757 = vmul.f32 %v1314, %v4437
  %v5758 = vmul.f32 %v1315, %v4438
  %v5759 = vmul.f32 %v1316, %v4439
  %v5760 = vmul.f32 %v1317, %v4440
  %v5761 = vmul.f32 %v1318, %v4441
  %v5762 = vmul.f32 %v1319, %v4442
  %v5763 = vmul.f32 %v1320, %v4443
  %v5764 = vmul.f32 %v1321, %v4444
  %v5765 = vmul.f32 %v1322, %v4445
  %v5766 = vmul.f32 %v1323, %v4446
  %v5767 = vmul.f32 %v1324, %v4447
  %v5768 = vmul.f32 %v1325, %v4448
  %v5769 = vmul.f32 %v1326, %v4449
  %v5770 = vmul.f32 %v1327, %v4450
  %v5771 = vmul.f32 %v1328, %v4429
  %v5772 = vmul.f32 %v1329, %v4430
  %v5773 = vmul.f32 %v1330, %v4431
  %v5774 = vmul.f32 %v1331, %v4432
  %v5775 = vmul.f32 %v1332, %v4433
  %v5776 = vmul.f32 %v1333, %v4434
  %v5777 = vmul.f32 %v1334, %v4435
  %v5778 = vmul.f32 %v1335, %v4436
  %v5779 = vmul.f32 %v1336, %v4437
  %v5780 = vmul.f32 %v1337, %v4438
  %v5781 = vmul.f32 %v1338, %v4439
  %v5782 = vmul.f32 %v1339, %v4440
  %v5783 = vmul.f32 %v1340, %v4441
  %v5784 = vmul.f32 %v1341, %v4442
  %v5785 = vmul.f32 %v1342, %v4443
  %v5786 = vmul.f32 %v1343, %v4444
  %v5787 = vmul.f32 %v1344, %v4445
  %v5788 = vmul.f32 %v1345, %v4446
  %v5789 = vmul.f32 %v1346, %v4447
  %v5790 = vmul.f32 %v1347, %v4448
  %v5791 = vmul.f32 %v1348, %v4449
  %v5792 = vmul.f32 %v1349, %v4450
  %v5793 = vmul.f32 %v1350, %v4429
  %v5794 = vmul.f32 %v1351, %v4430
  %v5795 = vmul.f32 %v1352, %v4431
  %v5796 = vmul.f32 %v1353, %v4432
  %v5797 = vmul.f32 %v1354, %v4433
  %v5798 = vmul.f32 %v1355, %v4434
  %v5799 = vmul.f32 %v1356, %v4435
  %v5800 = vmul.f32 %v1357, %v4436
  %v5801 = vmul.f32 %v1358, %v4437
  %v5802 = vmul.f32 %v1359, %v4438
  %v5803 = vmul.f32 %v1360, %v4439
  %v5804 = vmul.f32 %v1361, %v4440
  %v5805 = vmul.f32 %v1362, %v4441
  %v5806 = vmul.f32 %v1363, %v4442
  %v5807 = vmul.f32 %v1364, %v4443
  %v5808 = vmul.f32 %v1365, %v4444
  %v5809 = vmul.f32 %v1366, %v4445
  %v5810 = vmul.f32 %v1367, %v4446
  %v5811 = vmul.f32 %v1368, %v4447
  %v5812 = vmul.f32 %v1369, %v4448
  %v5813 = vmul.f32 %v1370, %v4449
  %v5814 = vmul.f32 %v1371, %v4450
  %v5815 = vmul.f32 %v1372, %v4429
  %v5816 = vmul.f32 %v1373, %v4430
  %v5817 = vmul.f32 %v1374, %v4431
  %v5818 = vmul.f32 %v1375, %v4432
  %v5819 = vmul.f32 %v1376, %v4433
  %v5820 = vmul.f32 %v1377, %v4434
  %v5821 = vmul.f32 %v1378, %v4435
  %v5822 = vmul.f32 %v1379, %v4436
  %v5823 = vmul.f32 %v1380, %v4437
  %v5824 = vmul.f32 %v1381, %v4438
  %v5825 = vmul.f32 %v1382, %v4439
  %v5826 = vmul.f32 %v1383, %v4440
  %v5827 = vmul.f32 %v1384, %v4441
  %v5828 = vmul.f32 %v1385, %v4442
  %v5829 = vmul.f32 %v1386, %v4443
  %v5830 = vmul.f32 %v1387, %v4444
  %v5831 = vmul.f32 %v1388, %v4445
  %v5832 = vmul.f32 %v1389, %v4446
  %v5833 = vmul.f32 %v1390, %v4447
  %v5834 = vmul.f32 %v1391, %v4448
  %v5835 = vmul.f32 %v1392, %v4449
  %v5836 = vmul.f32 %v1393, %v4450
  %v5837 = vmul.f32 %v1394, %v4429
  %v5838 = vmul.f32 %v1395, %v4430
  %v5839 = vmul.f32 %v1396, %v4431
  %v5840 = vmul.f32 %v1397, %v4432
  %v5841 = vmul.f32 %v1398, %v4433
  %v5842 = vmul.f32 %v1399, %v4434
  %v5843 = vmul.f32 %v1400, %v4435
  %v5844 = vmul.f32 %v1401, %v4436
  %v5845 = vmul.f32 %v1402, %v4437
  %v5846 = vmul.f32 %v1403, %v4438
  %v5847 = vmul.f32 %v1404, %v4439
  %v5848 = vmul.f32 %v1405, %v4440
  %v5849 = vmul.f32 %v1406, %v4441
  %v5850 = vmul.f32 %v1407, %v4442
  %v5851 = vmul.f32 %v1408, %v4443
  %v5852 = vmul.f32 %v1409, %v4444
  %v5853 = vmul.f32 %v1410, %v4445
  %v5854 = vmul.f32 %v1411, %v4446
  %v5855 = vmul.f32 %v1412, %v4447
  %v5856 = vmul.f32 %v1413, %v4448
  %v5857 = vmul.f32 %v1414, %v4449
  %v5858 = vmul.f32 %v1415, %v4450
  %v5859 = vpack.c.bf16 %v4473, %v4451
  %v5860 = vpack.c.bf16 %v4474, %v4452
  %v5861 = vpack.c.bf16 %v4475, %v4453
  %v5862 = vpack.c.bf16 %v4476, %v4454
  %v5863 = vpack.c.bf16 %v4477, %v4455
  %v5864 = vpack.c.bf16 %v4478, %v4456
  %v5865 = vpack.c.bf16 %v4479, %v4457
  %v5866 = vpack.c.bf16 %v4480, %v4458
  %v5867 = vpack.c.bf16 %v4481, %v4459
  %v5868 = vpack.c.bf16 %v4482, %v4460
  %v5869 = vpack.c.bf16 %v4483, %v4461
  %v5870 = vpack.c.bf16 %v4484, %v4462
  %v5871 = vpack.c.bf16 %v4485, %v4463
  %v5872 = vpack.c.bf16 %v4486, %v4464
  %v5873 = vpack.c.bf16 %v4487, %v4465
  %v5874 = vpack.c.bf16 %v4488, %v4466
  %v5875 = vpack.c.bf16 %v4489, %v4467
  %v5876 = vpack.c.bf16 %v4490, %v4468
  %v5877 = vpack.c.bf16 %v4491, %v4469
  %v5878 = vpack.c.bf16 %v4492, %v4470
  %v5879 = vpack.c.bf16 %v4493, %v4471
  %v5880 = vpack.c.bf16 %v4494, %v4472
  %v5881 = vpack.c.bf16 %v4517, %v4495
  %v5882 = vpack.c.bf16 %v4518, %v4496
  %v5883 = vpack.c.bf16 %v4519, %v4497
  %v5884 = vpack.c.bf16 %v4520, %v4498
  %v5885 = vpack.c.bf16 %v4521, %v4499
  %v5886 = vpack.c.bf16 %v4522, %v4500
  %v5887 = vpack.c.bf16 %v4523, %v4501
  %v5888 = vpack.c.bf16 %v4524, %v4502
  %v5889 = vpack.c.bf16 %v4525, %v4503
  %v5890 = vpack.c.bf16 %v4526, %v4504
  %v5891 = vpack.c.bf16 %v4527, %v4505
  %v5892 = vpack.c.bf16 %v4528, %v4506
  %v5893 = vpack.c.bf16 %v4529, %v4507
  %v5894 = vpack.c.bf16 %v4530, %v4508
  %v5895 = vpack.c.bf16 %v4531, %v4509
  %v5896 = vpack.c.bf16 %v4532, %v4510
  %v5897 = vpack.c.bf16 %v4533, %v4511
  %v5898 = vpack.c.bf16 %v4534, %v4512
  %v5899 = vpack.c.bf16 %v4535, %v4513
  %v5900 = vpack.c.bf16 %v4536, %v4514
  %v5901 = vpack.c.bf16 %v4537, %v4515
  %v5902 = vpack.c.bf16 %v4538, %v4516
  %v5903 = vpack.c.bf16 %v4561, %v4539
  %v5904 = vpack.c.bf16 %v4562, %v4540
  %v5905 = vpack.c.bf16 %v4563, %v4541
  %v5906 = vpack.c.bf16 %v4564, %v4542
  %v5907 = vpack.c.bf16 %v4565, %v4543
  %v5908 = vpack.c.bf16 %v4566, %v4544
  %v5909 = vpack.c.bf16 %v4567, %v4545
  %v5910 = vpack.c.bf16 %v4568, %v4546
  %v5911 = vpack.c.bf16 %v4569, %v4547
  %v5912 = vpack.c.bf16 %v4570, %v4548
  %v5913 = vpack.c.bf16 %v4571, %v4549
  %v5914 = vpack.c.bf16 %v4572, %v4550
  %v5915 = vpack.c.bf16 %v4573, %v4551
  %v5916 = vpack.c.bf16 %v4574, %v4552
  %v5917 = vpack.c.bf16 %v4575, %v4553
  %v5918 = vpack.c.bf16 %v4576, %v4554
  %v5919 = vpack.c.bf16 %v4577, %v4555
  %v5920 = vpack.c.bf16 %v4578, %v4556
  %v5921 = vpack.c.bf16 %v4579, %v4557
  %v5922 = vpack.c.bf16 %v4580, %v4558
  %v5923 = vpack.c.bf16 %v4581, %v4559
  %v5924 = vpack.c.bf16 %v4582, %v4560
  %v5925 = vpack.c.bf16 %v4605, %v4583
  %v5926 = vpack.c.bf16 %v4606, %v4584
  %v5927 = vpack.c.bf16 %v4607, %v4585
  %v5928 = vpack.c.bf16 %v4608, %v4586
  %v5929 = vpack.c.bf16 %v4609, %v4587
  %v5930 = vpack.c.bf16 %v4610, %v4588
  %v5931 = vpack.c.bf16 %v4611, %v4589
  %v5932 = vpack.c.bf16 %v4612, %v4590
  %v5933 = vpack.c.bf16 %v4613, %v4591
  %v5934 = vpack.c.bf16 %v4614, %v4592
  %v5935 = vpack.c.bf16 %v4615, %v4593
  %v5936 = vpack.c.bf16 %v4616, %v4594
  %v5937 = vpack.c.bf16 %v4617, %v4595
  %v5938 = vpack.c.bf16 %v4618, %v4596
  %v5939 = vpack.c.bf16 %v4619, %v4597
  %v5940 = vpack.c.bf16 %v4620, %v4598
  %v5941 = vpack.c.bf16 %v4621, %v4599
  %v5942 = vpack.c.bf16 %v4622, %v4600
  %v5943 = vpack.c.bf16 %v4623, %v4601
  %v5944 = vpack.c.bf16 %v4624, %v4602
  %v5945 = vpack.c.bf16 %v4625, %v4603
  %v5946 = vpack.c.bf16 %v4626, %v4604
  %v5947 = vpack.c.bf16 %v4649, %v4627
  %v5948 = vpack.c.bf16 %v4650, %v4628
  %v5949 = vpack.c.bf16 %v4651, %v4629
  %v5950 = vpack.c.bf16 %v4652, %v4630
  %v5951 = vpack.c.bf16 %v4653, %v4631
  %v5952 = vpack.c.bf16 %v4654, %v4632
  %v5953 = vpack.c.bf16 %v4655, %v4633
  %v5954 = vpack.c.bf16 %v4656, %v4634
  %v5955 = vpack.c.bf16 %v4657, %v4635
  %v5956 = vpack.c.bf16 %v4658, %v4636
  %v5957 = vpack.c.bf16 %v4659, %v4637
  %v5958 = vpack.c.bf16 %v4660, %v4638
  %v5959 = vpack.c.bf16 %v4661, %v4639
  %v5960 = vpack.c.bf16 %v4662, %v4640
  %v5961 = vpack.c.bf16 %v4663, %v4641
  %v5962 = vpack.c.bf16 %v4664, %v4642
  %v5963 = vpack.c.bf16 %v4665, %v4643
  %v5964 = vpack.c.bf16 %v4666, %v4644
  %v5965 = vpack.c.bf16 %v4667, %v4645
  %v5966 = vpack.c.bf16 %v4668, %v4646
  %v5967 = vpack.c.bf16 %v4669, %v4647
  %v5968 = vpack.c.bf16 %v4670, %v4648
  %v5969 = vpack.c.bf16 %v4693, %v4671
  %v5970 = vpack.c.bf16 %v4694, %v4672
  %v5971 = vpack.c.bf16 %v4695, %v4673
  %v5972 = vpack.c.bf16 %v4696, %v4674
  %v5973 = vpack.c.bf16 %v4697, %v4675
  %v5974 = vpack.c.bf16 %v4698, %v4676
  %v5975 = vpack.c.bf16 %v4699, %v4677
  %v5976 = vpack.c.bf16 %v4700, %v4678
  %v5977 = vpack.c.bf16 %v4701, %v4679
  %v5978 = vpack.c.bf16 %v4702, %v4680
  %v5979 = vpack.c.bf16 %v4703, %v4681
  %v5980 = vpack.c.bf16 %v4704, %v4682
  %v5981 = vpack.c.bf16 %v4705, %v4683
  %v5982 = vpack.c.bf16 %v4706, %v4684
  %v5983 = vpack.c.bf16 %v4707, %v4685
  %v5984 = vpack.c.bf16 %v4708, %v4686
  %v5985 = vpack.c.bf16 %v4709, %v4687
  %v5986 = vpack.c.bf16 %v4710, %v4688
  %v5987 = vpack.c.bf16 %v4711, %v4689
  %v5988 = vpack.c.bf16 %v4712, %v4690
  %v5989 = vpack.c.bf16 %v4713, %v4691
  %v5990 = vpack.c.bf16 %v4714, %v4692
  %v5991 = vpack.c.bf16 %v4737, %v4715
  %v5992 = vpack.c.bf16 %v4738, %v4716
  %v5993 = vpack.c.bf16 %v4739, %v4717
  %v5994 = vpack.c.bf16 %v4740, %v4718
  %v5995 = vpack.c.bf16 %v4741, %v4719
  %v5996 = vpack.c.bf16 %v4742, %v4720
  %v5997 = vpack.c.bf16 %v4743, %v4721
  %v5998 = vpack.c.bf16 %v4744, %v4722
  %v5999 = vpack.c.bf16 %v4745, %v4723
  %v6000 = vpack.c.bf16 %v4746, %v4724
  %v6001 = vpack.c.bf16 %v4747, %v4725
  %v6002 = vpack.c.bf16 %v4748, %v4726
  %v6003 = vpack.c.bf16 %v4749, %v4727
  %v6004 = vpack.c.bf16 %v4750, %v4728
  %v6005 = vpack.c.bf16 %v4751, %v4729
  %v6006 = vpack.c.bf16 %v4752, %v4730
  %v6007 = vpack.c.bf16 %v4753, %v4731
  %v6008 = vpack.c.bf16 %v4754, %v4732
  %v6009 = vpack.c.bf16 %v4755, %v4733
  %v6010 = vpack.c.bf16 %v4756, %v4734
  %v6011 = vpack.c.bf16 %v4757, %v4735
  %v6012 = vpack.c.bf16 %v4758, %v4736
  %v6013 = vpack.c.bf16 %v4781, %v4759
  %v6014 = vpack.c.bf16 %v4782, %v4760
  %v6015 = vpack.c.bf16 %v4783, %v4761
  %v6016 = vpack.c.bf16 %v4784, %v4762
  %v6017 = vpack.c.bf16 %v4785, %v4763
  %v6018 = vpack.c.bf16 %v4786, %v4764
  %v6019 = vpack.c.bf16 %v4787, %v4765
  %v6020 = vpack.c.bf16 %v4788, %v4766
  %v6021 = vpack.c.bf16 %v4789, %v4767
  %v6022 = vpack.c.bf16 %v4790, %v4768
  %v6023 = vpack.c.bf16 %v4791, %v4769
  %v6024 = vpack.c.bf16 %v4792, %v4770
  %v6025 = vpack.c.bf16 %v4793, %v4771
  %v6026 = vpack.c.bf16 %v4794, %v4772
  %v6027 = vpack.c.bf16 %v4795, %v4773
  %v6028 = vpack.c.bf16 %v4796, %v4774
  %v6029 = vpack.c.bf16 %v4797, %v4775
  %v6030 = vpack.c.bf16 %v4798, %v4776
  %v6031 = vpack.c.bf16 %v4799, %v4777
  %v6032 = vpack.c.bf16 %v4800, %v4778
  %v6033 = vpack.c.bf16 %v4801, %v4779
  %v6034 = vpack.c.bf16 %v4802, %v4780
  %v6035 = vpack.c.bf16 %v4825, %v4803
  %v6036 = vpack.c.bf16 %v4826, %v4804
  %v6037 = vpack.c.bf16 %v4827, %v4805
  %v6038 = vpack.c.bf16 %v4828, %v4806
  %v6039 = vpack.c.bf16 %v4829, %v4807
  %v6040 = vpack.c.bf16 %v4830, %v4808
  %v6041 = vpack.c.bf16 %v4831, %v4809
  %v6042 = vpack.c.bf16 %v4832, %v4810
  %v6043 = vpack.c.bf16 %v4833, %v4811
  %v6044 = vpack.c.bf16 %v4834, %v4812
  %v6045 = vpack.c.bf16 %v4835, %v4813
  %v6046 = vpack.c.bf16 %v4836, %v4814
  %v6047 = vpack.c.bf16 %v4837, %v4815
  %v6048 = vpack.c.bf16 %v4838, %v4816
  %v6049 = vpack.c.bf16 %v4839, %v4817
  %v6050 = vpack.c.bf16 %v4840, %v4818
  %v6051 = vpack.c.bf16 %v4841, %v4819
  %v6052 = vpack.c.bf16 %v4842, %v4820
  %v6053 = vpack.c.bf16 %v4843, %v4821
  %v6054 = vpack.c.bf16 %v4844, %v4822
  %v6055 = vpack.c.bf16 %v4845, %v4823
  %v6056 = vpack.c.bf16 %v4846, %v4824
  %v6057 = vpack.c.bf16 %v4869, %v4847
  %v6058 = vpack.c.bf16 %v4870, %v4848
  %v6059 = vpack.c.bf16 %v4871, %v4849
  %v6060 = vpack.c.bf16 %v4872, %v4850
  %v6061 = vpack.c.bf16 %v4873, %v4851
  %v6062 = vpack.c.bf16 %v4874, %v4852
  %v6063 = vpack.c.bf16 %v4875, %v4853
  %v6064 = vpack.c.bf16 %v4876, %v4854
  %v6065 = vpack.c.bf16 %v4877, %v4855
  %v6066 = vpack.c.bf16 %v4878, %v4856
  %v6067 = vpack.c.bf16 %v4879, %v4857
  %v6068 = vpack.c.bf16 %v4880, %v4858
  %v6069 = vpack.c.bf16 %v4881, %v4859
  %v6070 = vpack.c.bf16 %v4882, %v4860
  %v6071 = vpack.c.bf16 %v4883, %v4861
  %v6072 = vpack.c.bf16 %v4884, %v4862
  %v6073 = vpack.c.bf16 %v4885, %v4863
  %v6074 = vpack.c.bf16 %v4886, %v4864
  %v6075 = vpack.c.bf16 %v4887, %v4865
  %v6076 = vpack.c.bf16 %v4888, %v4866
  %v6077 = vpack.c.bf16 %v4889, %v4867
  %v6078 = vpack.c.bf16 %v4890, %v4868
  %v6079 = vpack.c.bf16 %v4913, %v4891
  %v6080 = vpack.c.bf16 %v4914, %v4892
  %v6081 = vpack.c.bf16 %v4915, %v4893
  %v6082 = vpack.c.bf16 %v4916, %v4894
  %v6083 = vpack.c.bf16 %v4917, %v4895
  %v6084 = vpack.c.bf16 %v4918, %v4896
  %v6085 = vpack.c.bf16 %v4919, %v4897
  %v6086 = vpack.c.bf16 %v4920, %v4898
  %v6087 = vpack.c.bf16 %v4921, %v4899
  %v6088 = vpack.c.bf16 %v4922, %v4900
  %v6089 = vpack.c.bf16 %v4923, %v4901
  %v6090 = vpack.c.bf16 %v4924, %v4902
  %v6091 = vpack.c.bf16 %v4925, %v4903
  %v6092 = vpack.c.bf16 %v4926, %v4904
  %v6093 = vpack.c.bf16 %v4927, %v4905
  %v6094 = vpack.c.bf16 %v4928, %v4906
  %v6095 = vpack.c.bf16 %v4929, %v4907
  %v6096 = vpack.c.bf16 %v4930, %v4908
  %v6097 = vpack.c.bf16 %v4931, %v4909
  %v6098 = vpack.c.bf16 %v4932, %v4910
  %v6099 = vpack.c.bf16 %v4933, %v4911
  %v6100 = vpack.c.bf16 %v4934, %v4912
  %v6101 = vpack.c.bf16 %v4957, %v4935
  %v6102 = vpack.c.bf16 %v4958, %v4936
  %v6103 = vpack.c.bf16 %v4959, %v4937
  %v6104 = vpack.c.bf16 %v4960, %v4938
  %v6105 = vpack.c.bf16 %v4961, %v4939
  %v6106 = vpack.c.bf16 %v4962, %v4940
  %v6107 = vpack.c.bf16 %v4963, %v4941
  %v6108 = vpack.c.bf16 %v4964, %v4942
  %v6109 = vpack.c.bf16 %v4965, %v4943
  %v6110 = vpack.c.bf16 %v4966, %v4944
  %v6111 = vpack.c.bf16 %v4967, %v4945
  %v6112 = vpack.c.bf16 %v4968, %v4946
  %v6113 = vpack.c.bf16 %v4969, %v4947
  %v6114 = vpack.c.bf16 %v4970, %v4948
  %v6115 = vpack.c.bf16 %v4971, %v4949
  %v6116 = vpack.c.bf16 %v4972, %v4950
  %v6117 = vpack.c.bf16 %v4973, %v4951
  %v6118 = vpack.c.bf16 %v4974, %v4952
  %v6119 = vpack.c.bf16 %v4975, %v4953
  %v6120 = vpack.c.bf16 %v4976, %v4954
  %v6121 = vpack.c.bf16 %v4977, %v4955
  %v6122 = vpack.c.bf16 %v4978, %v4956
  %v6123 = vpack.c.bf16 %v5001, %v4979
  %v6124 = vpack.c.bf16 %v5002, %v4980
  %v6125 = vpack.c.bf16 %v5003, %v4981
  %v6126 = vpack.c.bf16 %v5004, %v4982
  %v6127 = vpack.c.bf16 %v5005, %v4983
  %v6128 = vpack.c.bf16 %v5006, %v4984
  %v6129 = vpack.c.bf16 %v5007, %v4985
  %v6130 = vpack.c.bf16 %v5008, %v4986
  %v6131 = vpack.c.bf16 %v5009, %v4987
  %v6132 = vpack.c.bf16 %v5010, %v4988
  %v6133 = vpack.c.bf16 %v5011, %v4989
  %v6134 = vpack.c.bf16 %v5012, %v4990
  %v6135 = vpack.c.bf16 %v5013, %v4991
  %v6136 = vpack.c.bf16 %v5014, %v4992
  %v6137 = vpack.c.bf16 %v5015, %v4993
  %v6138 = vpack.c.bf16 %v5016, %v4994
  %v6139 = vpack.c.bf16 %v5017, %v4995
  %v6140 = vpack.c.bf16 %v5018, %v4996
  %v6141 = vpack.c.bf16 %v5019, %v4997
  %v6142 = vpack.c.bf16 %v5020, %v4998
  %v6143 = vpack.c.bf16 %v5021, %v4999
  %v6144 = vpack.c.bf16 %v5022, %v5000
  %v6145 = vpack.c.bf16 %v5045, %v5023
  %v6146 = vpack.c.bf16 %v5046, %v5024
  %v6147 = vpack.c.bf16 %v5047, %v5025
  %v6148 = vpack.c.bf16 %v5048, %v5026
  %v6149 = vpack.c.bf16 %v5049, %v5027
  %v6150 = vpack.c.bf16 %v5050, %v5028
  %v6151 = vpack.c.bf16 %v5051, %v5029
  %v6152 = vpack.c.bf16 %v5052, %v5030
  %v6153 = vpack.c.bf16 %v5053, %v5031
  %v6154 = vpack.c.bf16 %v5054, %v5032
  %v6155 = vpack.c.bf16 %v5055, %v5033
  %v6156 = vpack.c.bf16 %v5056, %v5034
  %v6157 = vpack.c.bf16 %v5057, %v5035
  %v6158 = vpack.c.bf16 %v5058, %v5036
  %v6159 = vpack.c.bf16 %v5059, %v5037
  %v6160 = vpack.c.bf16 %v5060, %v5038
  %v6161 = vpack.c.bf16 %v5061, %v5039
  %v6162 = vpack.c.bf16 %v5062, %v5040
  %v6163 = vpack.c.bf16 %v5063, %v5041
  %v6164 = vpack.c.bf16 %v5064, %v5042
  %v6165 = vpack.c.bf16 %v5065, %v5043
  %v6166 = vpack.c.bf16 %v5066, %v5044
  %v6167 = vpack.c.bf16 %v5089, %v5067
  %v6168 = vpack.c.bf16 %v5090, %v5068
  %v6169 = vpack.c.bf16 %v5091, %v5069
  %v6170 = vpack.c.bf16 %v5092, %v5070
  %v6171 = vpack.c.bf16 %v5093, %v5071
  %v6172 = vpack.c.bf16 %v5094, %v5072
  %v6173 = vpack.c.bf16 %v5095, %v5073
  %v6174 = vpack.c.bf16 %v5096, %v5074
  %v6175 = vpack.c.bf16 %v5097, %v5075
  %v6176 = vpack.c.bf16 %v5098, %v5076
  %v6177 = vpack.c.bf16 %v5099, %v5077
  %v6178 = vpack.c.bf16 %v5100, %v5078
  %v6179 = vpack.c.bf16 %v5101, %v5079
  %v6180 = vpack.c.bf16 %v5102, %v5080
  %v6181 = vpack.c.bf16 %v5103, %v5081
  %v6182 = vpack.c.bf16 %v5104, %v5082
  %v6183 = vpack.c.bf16 %v5105, %v5083
  %v6184 = vpack.c.bf16 %v5106, %v5084
  %v6185 = vpack.c.bf16 %v5107, %v5085
  %v6186 = vpack.c.bf16 %v5108, %v5086
  %v6187 = vpack.c.bf16 %v5109, %v5087
  %v6188 = vpack.c.bf16 %v5110, %v5088
  %v6189 = vpack.c.bf16 %v5133, %v5111
  %v6190 = vpack.c.bf16 %v5134, %v5112
  %v6191 = vpack.c.bf16 %v5135, %v5113
  %v6192 = vpack.c.bf16 %v5136, %v5114
  %v6193 = vpack.c.bf16 %v5137, %v5115
  %v6194 = vpack.c.bf16 %v5138, %v5116
  %v6195 = vpack.c.bf16 %v5139, %v5117
  %v6196 = vpack.c.bf16 %v5140, %v5118
  %v6197 = vpack.c.bf16 %v5141, %v5119
  %v6198 = vpack.c.bf16 %v5142, %v5120
  %v6199 = vpack.c.bf16 %v5143, %v5121
  %v6200 = vpack.c.bf16 %v5144, %v5122
  %v6201 = vpack.c.bf16 %v5145, %v5123
  %v6202 = vpack.c.bf16 %v5146, %v5124
  %v6203 = vpack.c.bf16 %v5147, %v5125
  %v6204 = vpack.c.bf16 %v5148, %v5126
  %v6205 = vpack.c.bf16 %v5149, %v5127
  %v6206 = vpack.c.bf16 %v5150, %v5128
  %v6207 = vpack.c.bf16 %v5151, %v5129
  %v6208 = vpack.c.bf16 %v5152, %v5130
  %v6209 = vpack.c.bf16 %v5153, %v5131
  %v6210 = vpack.c.bf16 %v5154, %v5132
  %v6211 = vpack.c.bf16 %v5177, %v5155
  %v6212 = vpack.c.bf16 %v5178, %v5156
  %v6213 = vpack.c.bf16 %v5179, %v5157
  %v6214 = vpack.c.bf16 %v5180, %v5158
  %v6215 = vpack.c.bf16 %v5181, %v5159
  %v6216 = vpack.c.bf16 %v5182, %v5160
  %v6217 = vpack.c.bf16 %v5183, %v5161
  %v6218 = vpack.c.bf16 %v5184, %v5162
  %v6219 = vpack.c.bf16 %v5185, %v5163
  %v6220 = vpack.c.bf16 %v5186, %v5164
  %v6221 = vpack.c.bf16 %v5187, %v5165
  %v6222 = vpack.c.bf16 %v5188, %v5166
  %v6223 = vpack.c.bf16 %v5189, %v5167
  %v6224 = vpack.c.bf16 %v5190, %v5168
  %v6225 = vpack.c.bf16 %v5191, %v5169
  %v6226 = vpack.c.bf16 %v5192, %v5170
  %v6227 = vpack.c.bf16 %v5193, %v5171
  %v6228 = vpack.c.bf16 %v5194, %v5172
  %v6229 = vpack.c.bf16 %v5195, %v5173
  %v6230 = vpack.c.bf16 %v5196, %v5174
  %v6231 = vpack.c.bf16 %v5197, %v5175
  %v6232 = vpack.c.bf16 %v5198, %v5176
  %v6233 = vpack.c.bf16 %v5221, %v5199
  %v6234 = vpack.c.bf16 %v5222, %v5200
  %v6235 = vpack.c.bf16 %v5223, %v5201
  %v6236 = vpack.c.bf16 %v5224, %v5202
  %v6237 = vpack.c.bf16 %v5225, %v5203
  %v6238 = vpack.c.bf16 %v5226, %v5204
  %v6239 = vpack.c.bf16 %v5227, %v5205
  %v6240 = vpack.c.bf16 %v5228, %v5206
  %v6241 = vpack.c.bf16 %v5229, %v5207
  %v6242 = vpack.c.bf16 %v5230, %v5208
  %v6243 = vpack.c.bf16 %v5231, %v5209
  %v6244 = vpack.c.bf16 %v5232, %v5210
  %v6245 = vpack.c.bf16 %v5233, %v5211
  %v6246 = vpack.c.bf16 %v5234, %v5212
  %v6247 = vpack.c.bf16 %v5235, %v5213
  %v6248 = vpack.c.bf16 %v5236, %v5214
  %v6249 = vpack.c.bf16 %v5237, %v5215
  %v6250 = vpack.c.bf16 %v5238, %v5216
  %v6251 = vpack.c.bf16 %v5239, %v5217
  %v6252 = vpack.c.bf16 %v5240, %v5218
  %v6253 = vpack.c.bf16 %v5241, %v5219
  %v6254 = vpack.c.bf16 %v5242, %v5220
  %v6255 = vpack.c.bf16 %v5265, %v5243
  %v6256 = vpack.c.bf16 %v5266, %v5244
  %v6257 = vpack.c.bf16 %v5267, %v5245
  %v6258 = vpack.c.bf16 %v5268, %v5246
  %v6259 = vpack.c.bf16 %v5269, %v5247
  %v6260 = vpack.c.bf16 %v5270, %v5248
  %v6261 = vpack.c.bf16 %v5271, %v5249
  %v6262 = vpack.c.bf16 %v5272, %v5250
  %v6263 = vpack.c.bf16 %v5273, %v5251
  %v6264 = vpack.c.bf16 %v5274, %v5252
  %v6265 = vpack.c.bf16 %v5275, %v5253
  %v6266 = vpack.c.bf16 %v5276, %v5254
  %v6267 = vpack.c.bf16 %v5277, %v5255
  %v6268 = vpack.c.bf16 %v5278, %v5256
  %v6269 = vpack.c.bf16 %v5279, %v5257
  %v6270 = vpack.c.bf16 %v5280, %v5258
  %v6271 = vpack.c.bf16 %v5281, %v5259
  %v6272 = vpack.c.bf16 %v5282, %v5260
  %v6273 = vpack.c.bf16 %v5283, %v5261
  %v6274 = vpack.c.bf16 %v5284, %v5262
  %v6275 = vpack.c.bf16 %v5285, %v5263
  %v6276 = vpack.c.bf16 %v5286, %v5264
  %v6277 = vpack.c.bf16 %v5309, %v5287
  %v6278 = vpack.c.bf16 %v5310, %v5288
  %v6279 = vpack.c.bf16 %v5311, %v5289
  %v6280 = vpack.c.bf16 %v5312, %v5290
  %v6281 = vpack.c.bf16 %v5313, %v5291
  %v6282 = vpack.c.bf16 %v5314, %v5292
  %v6283 = vpack.c.bf16 %v5315, %v5293
  %v6284 = vpack.c.bf16 %v5316, %v5294
  %v6285 = vpack.c.bf16 %v5317, %v5295
  %v6286 = vpack.c.bf16 %v5318, %v5296
  %v6287 = vpack.c.bf16 %v5319, %v5297
  %v6288 = vpack.c.bf16 %v5320, %v5298
  %v6289 = vpack.c.bf16 %v5321, %v5299
  %v6290 = vpack.c.bf16 %v5322, %v5300
  %v6291 = vpack.c.bf16 %v5323, %v5301
  %v6292 = vpack.c.bf16 %v5324, %v5302
  %v6293 = vpack.c.bf16 %v5325, %v5303
  %v6294 = vpack.c.bf16 %v5326, %v5304
  %v6295 = vpack.c.bf16 %v5327, %v5305
  %v6296 = vpack.c.bf16 %v5328, %v5306
  %v6297 = vpack.c.bf16 %v5329, %v5307
  %v6298 = vpack.c.bf16 %v5330, %v5308
  %v6299 = vpack.c.bf16 %v5353, %v5331
  %v6300 = vpack.c.bf16 %v5354, %v5332
  %v6301 = vpack.c.bf16 %v5355, %v5333
  %v6302 = vpack.c.bf16 %v5356, %v5334
  %v6303 = vpack.c.bf16 %v5357, %v5335
  %v6304 = vpack.c.bf16 %v5358, %v5336
  %v6305 = vpack.c.bf16 %v5359, %v5337
  %v6306 = vpack.c.bf16 %v5360, %v5338
  %v6307 = vpack.c.bf16 %v5361, %v5339
  %v6308 = vpack.c.bf16 %v5362, %v5340
  %v6309 = vpack.c.bf16 %v5363, %v5341
  %v6310 = vpack.c.bf16 %v5364, %v5342
  %v6311 = vpack.c.bf16 %v5365, %v5343
  %v6312 = vpack.c.bf16 %v5366, %v5344
  %v6313 = vpack.c.bf16 %v5367, %v5345
  %v6314 = vpack.c.bf16 %v5368, %v5346
  %v6315 = vpack.c.bf16 %v5369, %v5347
  %v6316 = vpack.c.bf16 %v5370, %v5348
  %v6317 = vpack.c.bf16 %v5371, %v5349
  %v6318 = vpack.c.bf16 %v5372, %v5350
  %v6319 = vpack.c.bf16 %v5373, %v5351
  %v6320 = vpack.c.bf16 %v5374, %v5352
  %v6321 = vpack.c.bf16 %v5397, %v5375
  %v6322 = vpack.c.bf16 %v5398, %v5376
  %v6323 = vpack.c.bf16 %v5399, %v5377
  %v6324 = vpack.c.bf16 %v5400, %v5378
  %v6325 = vpack.c.bf16 %v5401, %v5379
  %v6326 = vpack.c.bf16 %v5402, %v5380
  %v6327 = vpack.c.bf16 %v5403, %v5381
  %v6328 = vpack.c.bf16 %v5404, %v5382
  %v6329 = vpack.c.bf16 %v5405, %v5383
  %v6330 = vpack.c.bf16 %v5406, %v5384
  %v6331 = vpack.c.bf16 %v5407, %v5385
  %v6332 = vpack.c.bf16 %v5408, %v5386
  %v6333 = vpack.c.bf16 %v5409, %v5387
  %v6334 = vpack.c.bf16 %v5410, %v5388
  %v6335 = vpack.c.bf16 %v5411, %v5389
  %v6336 = vpack.c.bf16 %v5412, %v5390
  %v6337 = vpack.c.bf16 %v5413, %v5391
  %v6338 = vpack.c.bf16 %v5414, %v5392
  %v6339 = vpack.c.bf16 %v5415, %v5393
  %v6340 = vpack.c.bf16 %v5416, %v5394
  %v6341 = vpack.c.bf16 %v5417, %v5395
  %v6342 = vpack.c.bf16 %v5418, %v5396
  %v6343 = vpack.c.bf16 %v5441, %v5419
  %v6344 = vpack.c.bf16 %v5442, %v5420
  %v6345 = vpack.c.bf16 %v5443, %v5421
  %v6346 = vpack.c.bf16 %v5444, %v5422
  %v6347 = vpack.c.bf16 %v5445, %v5423
  %v6348 = vpack.c.bf16 %v5446, %v5424
  %v6349 = vpack.c.bf16 %v5447, %v5425
  %v6350 = vpack.c.bf16 %v5448, %v5426
  %v6351 = vpack.c.bf16 %v5449, %v5427
  %v6352 = vpack.c.bf16 %v5450, %v5428
  %v6353 = vpack.c.bf16 %v5451, %v5429
  %v6354 = vpack.c.bf16 %v5452, %v5430
  %v6355 = vpack.c.bf16 %v5453, %v5431
  %v6356 = vpack.c.bf16 %v5454, %v5432
  %v6357 = vpack.c.bf16 %v5455, %v5433
  %v6358 = vpack.c.bf16 %v5456, %v5434
  %v6359 = vpack.c.bf16 %v5457, %v5435
  %v6360 = vpack.c.bf16 %v5458, %v5436
  %v6361 = vpack.c.bf16 %v5459, %v5437
  %v6362 = vpack.c.bf16 %v5460, %v5438
  %v6363 = vpack.c.bf16 %v5461, %v5439
  %v6364 = vpack.c.bf16 %v5462, %v5440
  %v6365 = vpack.c.bf16 %v5485, %v5463
  %v6366 = vpack.c.bf16 %v5486, %v5464
  %v6367 = vpack.c.bf16 %v5487, %v5465
  %v6368 = vpack.c.bf16 %v5488, %v5466
  %v6369 = vpack.c.bf16 %v5489, %v5467
  %v6370 = vpack.c.bf16 %v5490, %v5468
  %v6371 = vpack.c.bf16 %v5491, %v5469
  %v6372 = vpack.c.bf16 %v5492, %v5470
  %v6373 = vpack.c.bf16 %v5493, %v5471
  %v6374 = vpack.c.bf16 %v5494, %v5472
  %v6375 = vpack.c.bf16 %v5495, %v5473
  %v6376 = vpack.c.bf16 %v5496, %v5474
  %v6377 = vpack.c.bf16 %v5497, %v5475
  %v6378 = vpack.c.bf16 %v5498, %v5476
  %v6379 = vpack.c.bf16 %v5499, %v5477
  %v6380 = vpack.c.bf16 %v5500, %v5478
  %v6381 = vpack.c.bf16 %v5501, %v5479
  %v6382 = vpack.c.bf16 %v5502, %v5480
  %v6383 = vpack.c.bf16 %v5503, %v5481
  %v6384 = vpack.c.bf16 %v5504, %v5482
  %v6385 = vpack.c.bf16 %v5505, %v5483
  %v6386 = vpack.c.bf16 %v5506, %v5484
  %v6387 = vpack.c.bf16 %v5529, %v5507
  %v6388 = vpack.c.bf16 %v5530, %v5508
  %v6389 = vpack.c.bf16 %v5531, %v5509
  %v6390 = vpack.c.bf16 %v5532, %v5510
  %v6391 = vpack.c.bf16 %v5533, %v5511
  %v6392 = vpack.c.bf16 %v5534, %v5512
  %v6393 = vpack.c.bf16 %v5535, %v5513
  %v6394 = vpack.c.bf16 %v5536, %v5514
  %v6395 = vpack.c.bf16 %v5537, %v5515
  %v6396 = vpack.c.bf16 %v5538, %v5516
  %v6397 = vpack.c.bf16 %v5539, %v5517
  %v6398 = vpack.c.bf16 %v5540, %v5518
  %v6399 = vpack.c.bf16 %v5541, %v5519
  %v6400 = vpack.c.bf16 %v5542, %v5520
  %v6401 = vpack.c.bf16 %v5543, %v5521
  %v6402 = vpack.c.bf16 %v5544, %v5522
  %v6403 = vpack.c.bf16 %v5545, %v5523
  %v6404 = vpack.c.bf16 %v5546, %v5524
  %v6405 = vpack.c.bf16 %v5547, %v5525
  %v6406 = vpack.c.bf16 %v5548, %v5526
  %v6407 = vpack.c.bf16 %v5549, %v5527
  %v6408 = vpack.c.bf16 %v5550, %v5528
  %v6409 = vpack.c.bf16 %v5573, %v5551
  %v6410 = vpack.c.bf16 %v5574, %v5552
  %v6411 = vpack.c.bf16 %v5575, %v5553
  %v6412 = vpack.c.bf16 %v5576, %v5554
  %v6413 = vpack.c.bf16 %v5577, %v5555
  %v6414 = vpack.c.bf16 %v5578, %v5556
  %v6415 = vpack.c.bf16 %v5579, %v5557
  %v6416 = vpack.c.bf16 %v5580, %v5558
  %v6417 = vpack.c.bf16 %v5581, %v5559
  %v6418 = vpack.c.bf16 %v5582, %v5560
  %v6419 = vpack.c.bf16 %v5583, %v5561
  %v6420 = vpack.c.bf16 %v5584, %v5562
  %v6421 = vpack.c.bf16 %v5585, %v5563
  %v6422 = vpack.c.bf16 %v5586, %v5564
  %v6423 = vpack.c.bf16 %v5587, %v5565
  %v6424 = vpack.c.bf16 %v5588, %v5566
  %v6425 = vpack.c.bf16 %v5589, %v5567
  %v6426 = vpack.c.bf16 %v5590, %v5568
  %v6427 = vpack.c.bf16 %v5591, %v5569
  %v6428 = vpack.c.bf16 %v5592, %v5570
  %v6429 = vpack.c.bf16 %v5593, %v5571
  %v6430 = vpack.c.bf16 %v5594, %v5572
  %v6431 = vpack.c.bf16 %v5617, %v5595
  %v6432 = vpack.c.bf16 %v5618, %v5596
  %v6433 = vpack.c.bf16 %v5619, %v5597
  %v6434 = vpack.c.bf16 %v5620, %v5598
  %v6435 = vpack.c.bf16 %v5621, %v5599
  %v6436 = vpack.c.bf16 %v5622, %v5600
  %v6437 = vpack.c.bf16 %v5623, %v5601
  %v6438 = vpack.c.bf16 %v5624, %v5602
  %v6439 = vpack.c.bf16 %v5625, %v5603
  %v6440 = vpack.c.bf16 %v5626, %v5604
  %v6441 = vpack.c.bf16 %v5627, %v5605
  %v6442 = vpack.c.bf16 %v5628, %v5606
  %v6443 = vpack.c.bf16 %v5629, %v5607
  %v6444 = vpack.c.bf16 %v5630, %v5608
  %v6445 = vpack.c.bf16 %v5631, %v5609
  %v6446 = vpack.c.bf16 %v5632, %v5610
  %v6447 = vpack.c.bf16 %v5633, %v5611
  %v6448 = vpack.c.bf16 %v5634, %v5612
  %v6449 = vpack.c.bf16 %v5635, %v5613
  %v6450 = vpack.c.bf16 %v5636, %v5614
  %v6451 = vpack.c.bf16 %v5637, %v5615
  %v6452 = vpack.c.bf16 %v5638, %v5616
  %v6453 = vpack.c.bf16 %v5661, %v5639
  %v6454 = vpack.c.bf16 %v5662, %v5640
  %v6455 = vpack.c.bf16 %v5663, %v5641
  %v6456 = vpack.c.bf16 %v5664, %v5642
  %v6457 = vpack.c.bf16 %v5665, %v5643
  %v6458 = vpack.c.bf16 %v5666, %v5644
  %v6459 = vpack.c.bf16 %v5667, %v5645
  %v6460 = vpack.c.bf16 %v5668, %v5646
  %v6461 = vpack.c.bf16 %v5669, %v5647
  %v6462 = vpack.c.bf16 %v5670, %v5648
  %v6463 = vpack.c.bf16 %v5671, %v5649
  %v6464 = vpack.c.bf16 %v5672, %v5650
  %v6465 = vpack.c.bf16 %v5673, %v5651
  %v6466 = vpack.c.bf16 %v5674, %v5652
  %v6467 = vpack.c.bf16 %v5675, %v5653
  %v6468 = vpack.c.bf16 %v5676, %v5654
  %v6469 = vpack.c.bf16 %v5677, %v5655
  %v6470 = vpack.c.bf16 %v5678, %v5656
  %v6471 = vpack.c.bf16 %v5679, %v5657
  %v6472 = vpack.c.bf16 %v5680, %v5658
  %v6473 = vpack.c.bf16 %v5681, %v5659
  %v6474 = vpack.c.bf16 %v5682, %v5660
  %v6475 = vpack.c.bf16 %v5705, %v5683
  %v6476 = vpack.c.bf16 %v5706, %v5684
  %v6477 = vpack.c.bf16 %v5707, %v5685
  %v6478 = vpack.c.bf16 %v5708, %v5686
  %v6479 = vpack.c.bf16 %v5709, %v5687
  %v6480 = vpack.c.bf16 %v5710, %v5688
  %v6481 = vpack.c.bf16 %v5711, %v5689
  %v6482 = vpack.c.bf16 %v5712, %v5690
  %v6483 = vpack.c.bf16 %v5713, %v5691
  %v6484 = vpack.c.bf16 %v5714, %v5692
  %v6485 = vpack.c.bf16 %v5715, %v5693
  %v6486 = vpack.c.bf16 %v5716, %v5694
  %v6487 = vpack.c.bf16 %v5717, %v5695
  %v6488 = vpack.c.bf16 %v5718, %v5696
  %v6489 = vpack.c.bf16 %v5719, %v5697
  %v6490 = vpack.c.bf16 %v5720, %v5698
  %v6491 = vpack.c.bf16 %v5721, %v5699
  %v6492 = vpack.c.bf16 %v5722, %v5700
  %v6493 = vpack.c.bf16 %v5723, %v5701
  %v6494 = vpack.c.bf16 %v5724, %v5702
  %v6495 = vpack.c.bf16 %v5725, %v5703
  %v6496 = vpack.c.bf16 %v5726, %v5704
  %v6497 = vpack.c.bf16 %v5749, %v5727
  %v6498 = vpack.c.bf16 %v5750, %v5728
  %v6499 = vpack.c.bf16 %v5751, %v5729
  %v6500 = vpack.c.bf16 %v5752, %v5730
  %v6501 = vpack.c.bf16 %v5753, %v5731
  %v6502 = vpack.c.bf16 %v5754, %v5732
  %v6503 = vpack.c.bf16 %v5755, %v5733
  %v6504 = vpack.c.bf16 %v5756, %v5734
  %v6505 = vpack.c.bf16 %v5757, %v5735
  %v6506 = vpack.c.bf16 %v5758, %v5736
  %v6507 = vpack.c.bf16 %v5759, %v5737
  %v6508 = vpack.c.bf16 %v5760, %v5738
  %v6509 = vpack.c.bf16 %v5761, %v5739
  %v6510 = vpack.c.bf16 %v5762, %v5740
  %v6511 = vpack.c.bf16 %v5763, %v5741
  %v6512 = vpack.c.bf16 %v5764, %v5742
  %v6513 = vpack.c.bf16 %v5765, %v5743
  %v6514 = vpack.c.bf16 %v5766, %v5744
  %v6515 = vpack.c.bf16 %v5767, %v5745
  %v6516 = vpack.c.bf16 %v5768, %v5746
  %v6517 = vpack.c.bf16 %v5769, %v5747
  %v6518 = vpack.c.bf16 %v5770, %v5748
  %v6519 = vpack.c.bf16 %v5793, %v5771
  %v6520 = vpack.c.bf16 %v5794, %v5772
  %v6521 = vpack.c.bf16 %v5795, %v5773
  %v6522 = vpack.c.bf16 %v5796, %v5774
  %v6523 = vpack.c.bf16 %v5797, %v5775
  %v6524 = vpack.c.bf16 %v5798, %v5776
  %v6525 = vpack.c.bf16 %v5799, %v5777
  %v6526 = vpack.c.bf16 %v5800, %v5778
  %v6527 = vpack.c.bf16 %v5801, %v5779
  %v6528 = vpack.c.bf16 %v5802, %v5780
  %v6529 = vpack.c.bf16 %v5803, %v5781
  %v6530 = vpack.c.bf16 %v5804, %v5782
  %v6531 = vpack.c.bf16 %v5805, %v5783
  %v6532 = vpack.c.bf16 %v5806, %v5784
  %v6533 = vpack.c.bf16 %v5807, %v5785
  %v6534 = vpack.c.bf16 %v5808, %v5786
  %v6535 = vpack.c.bf16 %v5809, %v5787
  %v6536 = vpack.c.bf16 %v5810, %v5788
  %v6537 = vpack.c.bf16 %v5811, %v5789
  %v6538 = vpack.c.bf16 %v5812, %v5790
  %v6539 = vpack.c.bf16 %v5813, %v5791
  %v6540 = vpack.c.bf16 %v5814, %v5792
  %v6541 = vpack.c.bf16 %v5837, %v5815
  %v6542 = vpack.c.bf16 %v5838, %v5816
  %v6543 = vpack.c.bf16 %v5839, %v5817
  %v6544 = vpack.c.bf16 %v5840, %v5818
  %v6545 = vpack.c.bf16 %v5841, %v5819
  %v6546 = vpack.c.bf16 %v5842, %v5820
  %v6547 = vpack.c.bf16 %v5843, %v5821
  %v6548 = vpack.c.bf16 %v5844, %v5822
  %v6549 = vpack.c.bf16 %v5845, %v5823
  %v6550 = vpack.c.bf16 %v5846, %v5824
  %v6551 = vpack.c.bf16 %v5847, %v5825
  %v6552 = vpack.c.bf16 %v5848, %v5826
  %v6553 = vpack.c.bf16 %v5849, %v5827
  %v6554 = vpack.c.bf16 %v5850, %v5828
  %v6555 = vpack.c.bf16 %v5851, %v5829
  %v6556 = vpack.c.bf16 %v5852, %v5830
  %v6557 = vpack.c.bf16 %v5853, %v5831
  %v6558 = vpack.c.bf16 %v5854, %v5832
  %v6559 = vpack.c.bf16 %v5855, %v5833
  %v6560 = vpack.c.bf16 %v5856, %v5834
  %v6561 = vpack.c.bf16 %v5857, %v5835
  %v6562 = vpack.c.bf16 %v5858, %v5836
  %v7267 = vunpack.c.l.b16 %v5859
  %v7268 = vunpack.c.l.b16 %v5860
  %v7269 = vunpack.c.l.b16 %v5861
  %v7270 = vunpack.c.l.b16 %v5862
  %v7271 = vunpack.c.l.b16 %v5863
  %v7272 = vunpack.c.l.b16 %v5864
  %v7273 = vunpack.c.l.b16 %v5865
  %v7274 = vunpack.c.l.b16 %v5866
  %v7275 = vunpack.c.l.b16 %v5867
  %v7276 = vunpack.c.l.b16 %v5868
  %v7277 = vunpack.c.l.b16 %v5869
  %v7278 = vunpack.c.l.b16 %v5870
  %v7279 = vunpack.c.l.b16 %v5871
  %v7280 = vunpack.c.l.b16 %v5872
  %v7281 = vunpack.c.l.b16 %v5873
  %v7282 = vunpack.c.l.b16 %v5874
  %v7283 = vunpack.c.l.b16 %v5875
  %v7284 = vunpack.c.l.b16 %v5876
  %v7285 = vunpack.c.l.b16 %v5877
  %v7286 = vunpack.c.l.b16 %v5878
  %v7287 = vunpack.c.l.b16 %v5879
  %v7288 = vunpack.c.l.b16 %v5880
  %v7289 = vunpack.c.h.b16 %v5859
  %v7290 = vunpack.c.h.b16 %v5860
  %v7291 = vunpack.c.h.b16 %v5861
  %v7292 = vunpack.c.h.b16 %v5862
  %v7293 = vunpack.c.h.b16 %v5863
  %v7294 = vunpack.c.h.b16 %v5864
  %v7295 = vunpack.c.h.b16 %v5865
  %v7296 = vunpack.c.h.b16 %v5866
  %v7297 = vunpack.c.h.b16 %v5867
  %v7298 = vunpack.c.h.b16 %v5868
  %v7299 = vunpack.c.h.b16 %v5869
  %v7300 = vunpack.c.h.b16 %v5870
  %v7301 = vunpack.c.h.b16 %v5871
  %v7302 = vunpack.c.h.b16 %v5872
  %v7303 = vunpack.c.h.b16 %v5873
  %v7304 = vunpack.c.h.b16 %v5874
  %v7305 = vunpack.c.h.b16 %v5875
  %v7306 = vunpack.c.h.b16 %v5876
  %v7307 = vunpack.c.h.b16 %v5877
  %v7308 = vunpack.c.h.b16 %v5878
  %v7309 = vunpack.c.h.b16 %v5879
  %v7310 = vunpack.c.h.b16 %v5880
  %v7311 = vunpack.c.l.b16 %v5881
  %v7312 = vunpack.c.l.b16 %v5882
  %v7313 = vunpack.c.l.b16 %v5883
  %v7314 = vunpack.c.l.b16 %v5884
  %v7315 = vunpack.c.l.b16 %v5885
  %v7316 = vunpack.c.l.b16 %v5886
  %v7317 = vunpack.c.l.b16 %v5887
  %v7318 = vunpack.c.l.b16 %v5888
  %v7319 = vunpack.c.l.b16 %v5889
  %v7320 = vunpack.c.l.b16 %v5890
  %v7321 = vunpack.c.l.b16 %v5891
  %v7322 = vunpack.c.l.b16 %v5892
  %v7323 = vunpack.c.l.b16 %v5893
  %v7324 = vunpack.c.l.b16 %v5894
  %v7325 = vunpack.c.l.b16 %v5895
  %v7326 = vunpack.c.l.b16 %v5896
  %v7327 = vunpack.c.l.b16 %v5897
  %v7328 = vunpack.c.l.b16 %v5898
  %v7329 = vunpack.c.l.b16 %v5899
  %v7330 = vunpack.c.l.b16 %v5900
  %v7331 = vunpack.c.l.b16 %v5901
  %v7332 = vunpack.c.l.b16 %v5902
  %v7333 = vunpack.c.h.b16 %v5881
  %v7334 = vunpack.c.h.b16 %v5882
  %v7335 = vunpack.c.h.b16 %v5883
  %v7336 = vunpack.c.h.b16 %v5884
  %v7337 = vunpack.c.h.b16 %v5885
  %v7338 = vunpack.c.h.b16 %v5886
  %v7339 = vunpack.c.h.b16 %v5887
  %v7340 = vunpack.c.h.b16 %v5888
  %v7341 = vunpack.c.h.b16 %v5889
  %v7342 = vunpack.c.h.b16 %v5890
  %v7343 = vunpack.c.h.b16 %v5891
  %v7344 = vunpack.c.h.b16 %v5892
  %v7345 = vunpack.c.h.b16 %v5893
  %v7346 = vunpack.c.h.b16 %v5894
  %v7347 = vunpack.c.h.b16 %v5895
  %v7348 = vunpack.c.h.b16 %v5896
  %v7349 = vunpack.c.h.b16 %v5897
  %v7350 = vunpack.c.h.b16 %v5898
  %v7351 = vunpack.c.h.b16 %v5899
  %v7352 = vunpack.c.h.b16 %v5900
  %v7353 = vunpack.c.h.b16 %v5901
  %v7354 = vunpack.c.h.b16 %v5902
  %v7355 = vunpack.c.l.b16 %v5903
  %v7356 = vunpack.c.l.b16 %v5904
  %v7357 = vunpack.c.l.b16 %v5905
  %v7358 = vunpack.c.l.b16 %v5906
  %v7359 = vunpack.c.l.b16 %v5907
  %v7360 = vunpack.c.l.b16 %v5908
  %v7361 = vunpack.c.l.b16 %v5909
  %v7362 = vunpack.c.l.b16 %v5910
  %v7363 = vunpack.c.l.b16 %v5911
  %v7364 = vunpack.c.l.b16 %v5912
  %v7365 = vunpack.c.l.b16 %v5913
  %v7366 = vunpack.c.l.b16 %v5914
  %v7367 = vunpack.c.l.b16 %v5915
  %v7368 = vunpack.c.l.b16 %v5916
  %v7369 = vunpack.c.l.b16 %v5917
  %v7370 = vunpack.c.l.b16 %v5918
  %v7371 = vunpack.c.l.b16 %v5919
  %v7372 = vunpack.c.l.b16 %v5920
  %v7373 = vunpack.c.l.b16 %v5921
  %v7374 = vunpack.c.l.b16 %v5922
  %v7375 = vunpack.c.l.b16 %v5923
  %v7376 = vunpack.c.l.b16 %v5924
  %v7377 = vunpack.c.h.b16 %v5903
  %v7378 = vunpack.c.h.b16 %v5904
  %v7379 = vunpack.c.h.b16 %v5905
  %v7380 = vunpack.c.h.b16 %v5906
  %v7381 = vunpack.c.h.b16 %v5907
  %v7382 = vunpack.c.h.b16 %v5908
  %v7383 = vunpack.c.h.b16 %v5909
  %v7384 = vunpack.c.h.b16 %v5910
  %v7385 = vunpack.c.h.b16 %v5911
  %v7386 = vunpack.c.h.b16 %v5912
  %v7387 = vunpack.c.h.b16 %v5913
  %v7388 = vunpack.c.h.b16 %v5914
  %v7389 = vunpack.c.h.b16 %v5915
  %v7390 = vunpack.c.h.b16 %v5916
  %v7391 = vunpack.c.h.b16 %v5917
  %v7392 = vunpack.c.h.b16 %v5918
  %v7393 = vunpack.c.h.b16 %v5919
  %v7394 = vunpack.c.h.b16 %v5920
  %v7395 = vunpack.c.h.b16 %v5921
  %v7396 = vunpack.c.h.b16 %v5922
  %v7397 = vunpack.c.h.b16 %v5923
  %v7398 = vunpack.c.h.b16 %v5924
  %v7399 = vunpack.c.l.b16 %v5925
  %v7400 = vunpack.c.l.b16 %v5926
  %v7401 = vunpack.c.l.b16 %v5927
  %v7402 = vunpack.c.l.b16 %v5928
  %v7403 = vunpack.c.l.b16 %v5929
  %v7404 = vunpack.c.l.b16 %v5930
  %v7405 = vunpack.c.l.b16 %v5931
  %v7406 = vunpack.c.l.b16 %v5932
  %v7407 = vunpack.c.l.b16 %v5933
  %v7408 = vunpack.c.l.b16 %v5934
  %v7409 = vunpack.c.l.b16 %v5935
  %v7410 = vunpack.c.l.b16 %v5936
  %v7411 = vunpack.c.l.b16 %v5937
  %v7412 = vunpack.c.l.b16 %v5938
  %v7413 = vunpack.c.l.b16 %v5939
  %v7414 = vunpack.c.l.b16 %v5940
  %v7415 = vunpack.c.l.b16 %v5941
  %v7416 = vunpack.c.l.b16 %v5942
  %v7417 = vunpack.c.l.b16 %v5943
  %v7418 = vunpack.c.l.b16 %v5944
  %v7419 = vunpack.c.l.b16 %v5945
  %v7420 = vunpack.c.l.b16 %v5946
  %v7421 = vunpack.c.h.b16 %v5925
  %v7422 = vunpack.c.h.b16 %v5926
  %v7423 = vunpack.c.h.b16 %v5927
  %v7424 = vunpack.c.h.b16 %v5928
  %v7425 = vunpack.c.h.b16 %v5929
  %v7426 = vunpack.c.h.b16 %v5930
  %v7427 = vunpack.c.h.b16 %v5931
  %v7428 = vunpack.c.h.b16 %v5932
  %v7429 = vunpack.c.h.b16 %v5933
  %v7430 = vunpack.c.h.b16 %v5934
  %v7431 = vunpack.c.h.b16 %v5935
  %v7432 = vunpack.c.h.b16 %v5936
  %v7433 = vunpack.c.h.b16 %v5937
  %v7434 = vunpack.c.h.b16 %v5938
  %v7435 = vunpack.c.h.b16 %v5939
  %v7436 = vunpack.c.h.b16 %v5940
  %v7437 = vunpack.c.h.b16 %v5941
  %v7438 = vunpack.c.h.b16 %v5942
  %v7439 = vunpack.c.h.b16 %v5943
  %v7440 = vunpack.c.h.b16 %v5944
  %v7441 = vunpack.c.h.b16 %v5945
  %v7442 = vunpack.c.h.b16 %v5946
  %v7443 = vunpack.c.l.b16 %v5947
  %v7444 = vunpack.c.l.b16 %v5948
  %v7445 = vunpack.c.l.b16 %v5949
  %v7446 = vunpack.c.l.b16 %v5950
  %v7447 = vunpack.c.l.b16 %v5951
  %v7448 = vunpack.c.l.b16 %v5952
  %v7449 = vunpack.c.l.b16 %v5953
  %v7450 = vunpack.c.l.b16 %v5954
  %v7451 = vunpack.c.l.b16 %v5955
  %v7452 = vunpack.c.l.b16 %v5956
  %v7453 = vunpack.c.l.b16 %v5957
  %v7454 = vunpack.c.l.b16 %v5958
  %v7455 = vunpack.c.l.b16 %v5959
  %v7456 = vunpack.c.l.b16 %v5960
  %v7457 = vunpack.c.l.b16 %v5961
  %v7458 = vunpack.c.l.b16 %v5962
  %v7459 = vunpack.c.l.b16 %v5963
  %v7460 = vunpack.c.l.b16 %v5964
  %v7461 = vunpack.c.l.b16 %v5965
  %v7462 = vunpack.c.l.b16 %v5966
  %v7463 = vunpack.c.l.b16 %v5967
  %v7464 = vunpack.c.l.b16 %v5968
  %v7465 = vunpack.c.h.b16 %v5947
  %v7466 = vunpack.c.h.b16 %v5948
  %v7467 = vunpack.c.h.b16 %v5949
  %v7468 = vunpack.c.h.b16 %v5950
  %v7469 = vunpack.c.h.b16 %v5951
  %v7470 = vunpack.c.h.b16 %v5952
  %v7471 = vunpack.c.h.b16 %v5953
  %v7472 = vunpack.c.h.b16 %v5954
  %v7473 = vunpack.c.h.b16 %v5955
  %v7474 = vunpack.c.h.b16 %v5956
  %v7475 = vunpack.c.h.b16 %v5957
  %v7476 = vunpack.c.h.b16 %v5958
  %v7477 = vunpack.c.h.b16 %v5959
  %v7478 = vunpack.c.h.b16 %v5960
  %v7479 = vunpack.c.h.b16 %v5961
  %v7480 = vunpack.c.h.b16 %v5962
  %v7481 = vunpack.c.h.b16 %v5963
  %v7482 = vunpack.c.h.b16 %v5964
  %v7483 = vunpack.c.h.b16 %v5965
  %v7484 = vunpack.c.h.b16 %v5966
  %v7485 = vunpack.c.h.b16 %v5967
  %v7486 = vunpack.c.h.b16 %v5968
  %v7487 = vunpack.c.l.b16 %v5969
  %v7488 = vunpack.c.l.b16 %v5970
  %v7489 = vunpack.c.l.b16 %v5971
  %v7490 = vunpack.c.l.b16 %v5972
  %v7491 = vunpack.c.l.b16 %v5973
  %v7492 = vunpack.c.l.b16 %v5974
  %v7493 = vunpack.c.l.b16 %v5975
  %v7494 = vunpack.c.l.b16 %v5976
  %v7495 = vunpack.c.l.b16 %v5977
  %v7496 = vunpack.c.l.b16 %v5978
  %v7497 = vunpack.c.l.b16 %v5979
  %v7498 = vunpack.c.l.b16 %v5980
  %v7499 = vunpack.c.l.b16 %v5981
  %v7500 = vunpack.c.l.b16 %v5982
  %v7501 = vunpack.c.l.b16 %v5983
  %v7502 = vunpack.c.l.b16 %v5984
  %v7503 = vunpack.c.l.b16 %v5985
  %v7504 = vunpack.c.l.b16 %v5986
  %v7505 = vunpack.c.l.b16 %v5987
  %v7506 = vunpack.c.l.b16 %v5988
  %v7507 = vunpack.c.l.b16 %v5989
  %v7508 = vunpack.c.l.b16 %v5990
  %v7509 = vunpack.c.h.b16 %v5969
  %v7510 = vunpack.c.h.b16 %v5970
  %v7511 = vunpack.c.h.b16 %v5971
  %v7512 = vunpack.c.h.b16 %v5972
  %v7513 = vunpack.c.h.b16 %v5973
  %v7514 = vunpack.c.h.b16 %v5974
  %v7515 = vunpack.c.h.b16 %v5975
  %v7516 = vunpack.c.h.b16 %v5976
  %v7517 = vunpack.c.h.b16 %v5977
  %v7518 = vunpack.c.h.b16 %v5978
  %v7519 = vunpack.c.h.b16 %v5979
  %v7520 = vunpack.c.h.b16 %v5980
  %v7521 = vunpack.c.h.b16 %v5981
  %v7522 = vunpack.c.h.b16 %v5982
  %v7523 = vunpack.c.h.b16 %v5983
  %v7524 = vunpack.c.h.b16 %v5984
  %v7525 = vunpack.c.h.b16 %v5985
  %v7526 = vunpack.c.h.b16 %v5986
  %v7527 = vunpack.c.h.b16 %v5987
  %v7528 = vunpack.c.h.b16 %v5988
  %v7529 = vunpack.c.h.b16 %v5989
  %v7530 = vunpack.c.h.b16 %v5990
  %v7531 = vunpack.c.l.b16 %v5991
  %v7532 = vunpack.c.l.b16 %v5992
  %v7533 = vunpack.c.l.b16 %v5993
  %v7534 = vunpack.c.l.b16 %v5994
  %v7535 = vunpack.c.l.b16 %v5995
  %v7536 = vunpack.c.l.b16 %v5996
  %v7537 = vunpack.c.l.b16 %v5997
  %v7538 = vunpack.c.l.b16 %v5998
  %v7539 = vunpack.c.l.b16 %v5999
  %v7540 = vunpack.c.l.b16 %v6000
  %v7541 = vunpack.c.l.b16 %v6001
  %v7542 = vunpack.c.l.b16 %v6002
  %v7543 = vunpack.c.l.b16 %v6003
  %v7544 = vunpack.c.l.b16 %v6004
  %v7545 = vunpack.c.l.b16 %v6005
  %v7546 = vunpack.c.l.b16 %v6006
  %v7547 = vunpack.c.l.b16 %v6007
  %v7548 = vunpack.c.l.b16 %v6008
  %v7549 = vunpack.c.l.b16 %v6009
  %v7550 = vunpack.c.l.b16 %v6010
  %v7551 = vunpack.c.l.b16 %v6011
  %v7552 = vunpack.c.l.b16 %v6012
  %v7553 = vunpack.c.h.b16 %v5991
  %v7554 = vunpack.c.h.b16 %v5992
  %v7555 = vunpack.c.h.b16 %v5993
  %v7556 = vunpack.c.h.b16 %v5994
  %v7557 = vunpack.c.h.b16 %v5995
  %v7558 = vunpack.c.h.b16 %v5996
  %v7559 = vunpack.c.h.b16 %v5997
  %v7560 = vunpack.c.h.b16 %v5998
  %v7561 = vunpack.c.h.b16 %v5999
  %v7562 = vunpack.c.h.b16 %v6000
  %v7563 = vunpack.c.h.b16 %v6001
  %v7564 = vunpack.c.h.b16 %v6002
  %v7565 = vunpack.c.h.b16 %v6003
  %v7566 = vunpack.c.h.b16 %v6004
  %v7567 = vunpack.c.h.b16 %v6005
  %v7568 = vunpack.c.h.b16 %v6006
  %v7569 = vunpack.c.h.b16 %v6007
  %v7570 = vunpack.c.h.b16 %v6008
  %v7571 = vunpack.c.h.b16 %v6009
  %v7572 = vunpack.c.h.b16 %v6010
  %v7573 = vunpack.c.h.b16 %v6011
  %v7574 = vunpack.c.h.b16 %v6012
  %v7575 = vunpack.c.l.b16 %v6013
  %v7576 = vunpack.c.l.b16 %v6014
  %v7577 = vunpack.c.l.b16 %v6015
  %v7578 = vunpack.c.l.b16 %v6016
  %v7579 = vunpack.c.l.b16 %v6017
  %v7580 = vunpack.c.l.b16 %v6018
  %v7581 = vunpack.c.l.b16 %v6019
  %v7582 = vunpack.c.l.b16 %v6020
  %v7583 = vunpack.c.l.b16 %v6021
  %v7584 = vunpack.c.l.b16 %v6022
  %v7585 = vunpack.c.l.b16 %v6023
  %v7586 = vunpack.c.l.b16 %v6024
  %v7587 = vunpack.c.l.b16 %v6025
  %v7588 = vunpack.c.l.b16 %v6026
  %v7589 = vunpack.c.l.b16 %v6027
  %v7590 = vunpack.c.l.b16 %v6028
  %v7591 = vunpack.c.l.b16 %v6029
  %v7592 = vunpack.c.l.b16 %v6030
  %v7593 = vunpack.c.l.b16 %v6031
  %v7594 = vunpack.c.l.b16 %v6032
  %v7595 = vunpack.c.l.b16 %v6033
  %v7596 = vunpack.c.l.b16 %v6034
  %v7597 = vunpack.c.h.b16 %v6013
  %v7598 = vunpack.c.h.b16 %v6014
  %v7599 = vunpack.c.h.b16 %v6015
  %v7600 = vunpack.c.h.b16 %v6016
  %v7601 = vunpack.c.h.b16 %v6017
  %v7602 = vunpack.c.h.b16 %v6018
  %v7603 = vunpack.c.h.b16 %v6019
  %v7604 = vunpack.c.h.b16 %v6020
  %v7605 = vunpack.c.h.b16 %v6021
  %v7606 = vunpack.c.h.b16 %v6022
  %v7607 = vunpack.c.h.b16 %v6023
  %v7608 = vunpack.c.h.b16 %v6024
  %v7609 = vunpack.c.h.b16 %v6025
  %v7610 = vunpack.c.h.b16 %v6026
  %v7611 = vunpack.c.h.b16 %v6027
  %v7612 = vunpack.c.h.b16 %v6028
  %v7613 = vunpack.c.h.b16 %v6029
  %v7614 = vunpack.c.h.b16 %v6030
  %v7615 = vunpack.c.h.b16 %v6031
  %v7616 = vunpack.c.h.b16 %v6032
  %v7617 = vunpack.c.h.b16 %v6033
  %v7618 = vunpack.c.h.b16 %v6034
  %v7619 = vunpack.c.l.b16 %v6035
  %v7620 = vunpack.c.l.b16 %v6036
  %v7621 = vunpack.c.l.b16 %v6037
  %v7622 = vunpack.c.l.b16 %v6038
  %v7623 = vunpack.c.l.b16 %v6039
  %v7624 = vunpack.c.l.b16 %v6040
  %v7625 = vunpack.c.l.b16 %v6041
  %v7626 = vunpack.c.l.b16 %v6042
  %v7627 = vunpack.c.l.b16 %v6043
  %v7628 = vunpack.c.l.b16 %v6044
  %v7629 = vunpack.c.l.b16 %v6045
  %v7630 = vunpack.c.l.b16 %v6046
  %v7631 = vunpack.c.l.b16 %v6047
  %v7632 = vunpack.c.l.b16 %v6048
  %v7633 = vunpack.c.l.b16 %v6049
  %v7634 = vunpack.c.l.b16 %v6050
  %v7635 = vunpack.c.l.b16 %v6051
  %v7636 = vunpack.c.l.b16 %v6052
  %v7637 = vunpack.c.l.b16 %v6053
  %v7638 = vunpack.c.l.b16 %v6054
  %v7639 = vunpack.c.l.b16 %v6055
  %v7640 = vunpack.c.l.b16 %v6056
  %v7641 = vunpack.c.h.b16 %v6035
  %v7642 = vunpack.c.h.b16 %v6036
  %v7643 = vunpack.c.h.b16 %v6037
  %v7644 = vunpack.c.h.b16 %v6038
  %v7645 = vunpack.c.h.b16 %v6039
  %v7646 = vunpack.c.h.b16 %v6040
  %v7647 = vunpack.c.h.b16 %v6041
  %v7648 = vunpack.c.h.b16 %v6042
  %v7649 = vunpack.c.h.b16 %v6043
  %v7650 = vunpack.c.h.b16 %v6044
  %v7651 = vunpack.c.h.b16 %v6045
  %v7652 = vunpack.c.h.b16 %v6046
  %v7653 = vunpack.c.h.b16 %v6047
  %v7654 = vunpack.c.h.b16 %v6048
  %v7655 = vunpack.c.h.b16 %v6049
  %v7656 = vunpack.c.h.b16 %v6050
  %v7657 = vunpack.c.h.b16 %v6051
  %v7658 = vunpack.c.h.b16 %v6052
  %v7659 = vunpack.c.h.b16 %v6053
  %v7660 = vunpack.c.h.b16 %v6054
  %v7661 = vunpack.c.h.b16 %v6055
  %v7662 = vunpack.c.h.b16 %v6056
  %v7663 = vunpack.c.l.b16 %v6057
  %v7664 = vunpack.c.l.b16 %v6058
  %v7665 = vunpack.c.l.b16 %v6059
  %v7666 = vunpack.c.l.b16 %v6060
  %v7667 = vunpack.c.l.b16 %v6061
  %v7668 = vunpack.c.l.b16 %v6062
  %v7669 = vunpack.c.l.b16 %v6063
  %v7670 = vunpack.c.l.b16 %v6064
  %v7671 = vunpack.c.l.b16 %v6065
  %v7672 = vunpack.c.l.b16 %v6066
  %v7673 = vunpack.c.l.b16 %v6067
  %v7674 = vunpack.c.l.b16 %v6068
  %v7675 = vunpack.c.l.b16 %v6069
  %v7676 = vunpack.c.l.b16 %v6070
  %v7677 = vunpack.c.l.b16 %v6071
  %v7678 = vunpack.c.l.b16 %v6072
  %v7679 = vunpack.c.l.b16 %v6073
  %v7680 = vunpack.c.l.b16 %v6074
  %v7681 = vunpack.c.l.b16 %v6075
  %v7682 = vunpack.c.l.b16 %v6076
  %v7683 = vunpack.c.l.b16 %v6077
  %v7684 = vunpack.c.l.b16 %v6078
  %v7685 = vunpack.c.h.b16 %v6057
  %v7686 = vunpack.c.h.b16 %v6058
  %v7687 = vunpack.c.h.b16 %v6059
  %v7688 = vunpack.c.h.b16 %v6060
  %v7689 = vunpack.c.h.b16 %v6061
  %v7690 = vunpack.c.h.b16 %v6062
  %v7691 = vunpack.c.h.b16 %v6063
  %v7692 = vunpack.c.h.b16 %v6064
  %v7693 = vunpack.c.h.b16 %v6065
  %v7694 = vunpack.c.h.b16 %v6066
  %v7695 = vunpack.c.h.b16 %v6067
  %v7696 = vunpack.c.h.b16 %v6068
  %v7697 = vunpack.c.h.b16 %v6069
  %v7698 = vunpack.c.h.b16 %v6070
  %v7699 = vunpack.c.h.b16 %v6071
  %v7700 = vunpack.c.h.b16 %v6072
  %v7701 = vunpack.c.h.b16 %v6073
  %v7702 = vunpack.c.h.b16 %v6074
  %v7703 = vunpack.c.h.b16 %v6075
  %v7704 = vunpack.c.h.b16 %v6076
  %v7705 = vunpack.c.h.b16 %v6077
  %v7706 = vunpack.c.h.b16 %v6078
  %v7707 = vunpack.c.l.b16 %v6079
  %v7708 = vunpack.c.l.b16 %v6080
  %v7709 = vunpack.c.l.b16 %v6081
  %v7710 = vunpack.c.l.b16 %v6082
  %v7711 = vunpack.c.l.b16 %v6083
  %v7712 = vunpack.c.l.b16 %v6084
  %v7713 = vunpack.c.l.b16 %v6085
  %v7714 = vunpack.c.l.b16 %v6086
  %v7715 = vunpack.c.l.b16 %v6087
  %v7716 = vunpack.c.l.b16 %v6088
  %v7717 = vunpack.c.l.b16 %v6089
  %v7718 = vunpack.c.l.b16 %v6090
  %v7719 = vunpack.c.l.b16 %v6091
  %v7720 = vunpack.c.l.b16 %v6092
  %v7721 = vunpack.c.l.b16 %v6093
  %v7722 = vunpack.c.l.b16 %v6094
  %v7723 = vunpack.c.l.b16 %v6095
  %v7724 = vunpack.c.l.b16 %v6096
  %v7725 = vunpack.c.l.b16 %v6097
  %v7726 = vunpack.c.l.b16 %v6098
  %v7727 = vunpack.c.l.b16 %v6099
  %v7728 = vunpack.c.l.b16 %v6100
  %v7729 = vunpack.c.h.b16 %v6079
  %v7730 = vunpack.c.h.b16 %v6080
  %v7731 = vunpack.c.h.b16 %v6081
  %v7732 = vunpack.c.h.b16 %v6082
  %v7733 = vunpack.c.h.b16 %v6083
  %v7734 = vunpack.c.h.b16 %v6084
  %v7735 = vunpack.c.h.b16 %v6085
  %v7736 = vunpack.c.h.b16 %v6086
  %v7737 = vunpack.c.h.b16 %v6087
  %v7738 = vunpack.c.h.b16 %v6088
  %v7739 = vunpack.c.h.b16 %v6089
  %v7740 = vunpack.c.h.b16 %v6090
  %v7741 = vunpack.c.h.b16 %v6091
  %v7742 = vunpack.c.h.b16 %v6092
  %v7743 = vunpack.c.h.b16 %v6093
  %v7744 = vunpack.c.h.b16 %v6094
  %v7745 = vunpack.c.h.b16 %v6095
  %v7746 = vunpack.c.h.b16 %v6096
  %v7747 = vunpack.c.h.b16 %v6097
  %v7748 = vunpack.c.h.b16 %v6098
  %v7749 = vunpack.c.h.b16 %v6099
  %v7750 = vunpack.c.h.b16 %v6100
  %v7751 = vunpack.c.l.b16 %v6101
  %v7752 = vunpack.c.l.b16 %v6102
  %v7753 = vunpack.c.l.b16 %v6103
  %v7754 = vunpack.c.l.b16 %v6104
  %v7755 = vunpack.c.l.b16 %v6105
  %v7756 = vunpack.c.l.b16 %v6106
  %v7757 = vunpack.c.l.b16 %v6107
  %v7758 = vunpack.c.l.b16 %v6108
  %v7759 = vunpack.c.l.b16 %v6109
  %v7760 = vunpack.c.l.b16 %v6110
  %v7761 = vunpack.c.l.b16 %v6111
  %v7762 = vunpack.c.l.b16 %v6112
  %v7763 = vunpack.c.l.b16 %v6113
  %v7764 = vunpack.c.l.b16 %v6114
  %v7765 = vunpack.c.l.b16 %v6115
  %v7766 = vunpack.c.l.b16 %v6116
  %v7767 = vunpack.c.l.b16 %v6117
  %v7768 = vunpack.c.l.b16 %v6118
  %v7769 = vunpack.c.l.b16 %v6119
  %v7770 = vunpack.c.l.b16 %v6120
  %v7771 = vunpack.c.l.b16 %v6121
  %v7772 = vunpack.c.l.b16 %v6122
  %v7773 = vunpack.c.h.b16 %v6101
  %v7774 = vunpack.c.h.b16 %v6102
  %v7775 = vunpack.c.h.b16 %v6103
  %v7776 = vunpack.c.h.b16 %v6104
  %v7777 = vunpack.c.h.b16 %v6105
  %v7778 = vunpack.c.h.b16 %v6106
  %v7779 = vunpack.c.h.b16 %v6107
  %v7780 = vunpack.c.h.b16 %v6108
  %v7781 = vunpack.c.h.b16 %v6109
  %v7782 = vunpack.c.h.b16 %v6110
  %v7783 = vunpack.c.h.b16 %v6111
  %v7784 = vunpack.c.h.b16 %v6112
  %v7785 = vunpack.c.h.b16 %v6113
  %v7786 = vunpack.c.h.b16 %v6114
  %v7787 = vunpack.c.h.b16 %v6115
  %v7788 = vunpack.c.h.b16 %v6116
  %v7789 = vunpack.c.h.b16 %v6117
  %v7790 = vunpack.c.h.b16 %v6118
  %v7791 = vunpack.c.h.b16 %v6119
  %v7792 = vunpack.c.h.b16 %v6120
  %v7793 = vunpack.c.h.b16 %v6121
  %v7794 = vunpack.c.h.b16 %v6122
  %v7795 = vunpack.c.l.b16 %v6123
  %v7796 = vunpack.c.l.b16 %v6124
  %v7797 = vunpack.c.l.b16 %v6125
  %v7798 = vunpack.c.l.b16 %v6126
  %v7799 = vunpack.c.l.b16 %v6127
  %v7800 = vunpack.c.l.b16 %v6128
  %v7801 = vunpack.c.l.b16 %v6129
  %v7802 = vunpack.c.l.b16 %v6130
  %v7803 = vunpack.c.l.b16 %v6131
  %v7804 = vunpack.c.l.b16 %v6132
  %v7805 = vunpack.c.l.b16 %v6133
  %v7806 = vunpack.c.l.b16 %v6134
  %v7807 = vunpack.c.l.b16 %v6135
  %v7808 = vunpack.c.l.b16 %v6136
  %v7809 = vunpack.c.l.b16 %v6137
  %v7810 = vunpack.c.l.b16 %v6138
  %v7811 = vunpack.c.l.b16 %v6139
  %v7812 = vunpack.c.l.b16 %v6140
  %v7813 = vunpack.c.l.b16 %v6141
  %v7814 = vunpack.c.l.b16 %v6142
  %v7815 = vunpack.c.l.b16 %v6143
  %v7816 = vunpack.c.l.b16 %v6144
  %v7817 = vunpack.c.h.b16 %v6123
  %v7818 = vunpack.c.h.b16 %v6124
  %v7819 = vunpack.c.h.b16 %v6125
  %v7820 = vunpack.c.h.b16 %v6126
  %v7821 = vunpack.c.h.b16 %v6127
  %v7822 = vunpack.c.h.b16 %v6128
  %v7823 = vunpack.c.h.b16 %v6129
  %v7824 = vunpack.c.h.b16 %v6130
  %v7825 = vunpack.c.h.b16 %v6131
  %v7826 = vunpack.c.h.b16 %v6132
  %v7827 = vunpack.c.h.b16 %v6133
  %v7828 = vunpack.c.h.b16 %v6134
  %v7829 = vunpack.c.h.b16 %v6135
  %v7830 = vunpack.c.h.b16 %v6136
  %v7831 = vunpack.c.h.b16 %v6137
  %v7832 = vunpack.c.h.b16 %v6138
  %v7833 = vunpack.c.h.b16 %v6139
  %v7834 = vunpack.c.h.b16 %v6140
  %v7835 = vunpack.c.h.b16 %v6141
  %v7836 = vunpack.c.h.b16 %v6142
  %v7837 = vunpack.c.h.b16 %v6143
  %v7838 = vunpack.c.h.b16 %v6144
  %v7839 = vunpack.c.l.b16 %v6145
  %v7840 = vunpack.c.l.b16 %v6146
  %v7841 = vunpack.c.l.b16 %v6147
  %v7842 = vunpack.c.l.b16 %v6148
  %v7843 = vunpack.c.l.b16 %v6149
  %v7844 = vunpack.c.l.b16 %v6150
  %v7845 = vunpack.c.l.b16 %v6151
  %v7846 = vunpack.c.l.b16 %v6152
  %v7847 = vunpack.c.l.b16 %v6153
  %v7848 = vunpack.c.l.b16 %v6154
  %v7849 = vunpack.c.l.b16 %v6155
  %v7850 = vunpack.c.l.b16 %v6156
  %v7851 = vunpack.c.l.b16 %v6157
  %v7852 = vunpack.c.l.b16 %v6158
  %v7853 = vunpack.c.l.b16 %v6159
  %v7854 = vunpack.c.l.b16 %v6160
  %v7855 = vunpack.c.l.b16 %v6161
  %v7856 = vunpack.c.l.b16 %v6162
  %v7857 = vunpack.c.l.b16 %v6163
  %v7858 = vunpack.c.l.b16 %v6164
  %v7859 = vunpack.c.l.b16 %v6165
  %v7860 = vunpack.c.l.b16 %v6166
  %v7861 = vunpack.c.h.b16 %v6145
  %v7862 = vunpack.c.h.b16 %v6146
  %v7863 = vunpack.c.h.b16 %v6147
  %v7864 = vunpack.c.h.b16 %v6148
  %v7865 = vunpack.c.h.b16 %v6149
  %v7866 = vunpack.c.h.b16 %v6150
  %v7867 = vunpack.c.h.b16 %v6151
  %v7868 = vunpack.c.h.b16 %v6152
  %v7869 = vunpack.c.h.b16 %v6153
  %v7870 = vunpack.c.h.b16 %v6154
  %v7871 = vunpack.c.h.b16 %v6155
  %v7872 = vunpack.c.h.b16 %v6156
  %v7873 = vunpack.c.h.b16 %v6157
  %v7874 = vunpack.c.h.b16 %v6158
  %v7875 = vunpack.c.h.b16 %v6159
  %v7876 = vunpack.c.h.b16 %v6160
  %v7877 = vunpack.c.h.b16 %v6161
  %v7878 = vunpack.c.h.b16 %v6162
  %v7879 = vunpack.c.h.b16 %v6163
  %v7880 = vunpack.c.h.b16 %v6164
  %v7881 = vunpack.c.h.b16 %v6165
  %v7882 = vunpack.c.h.b16 %v6166
  %v7883 = vunpack.c.l.b16 %v6167
  %v7884 = vunpack.c.l.b16 %v6168
  %v7885 = vunpack.c.l.b16 %v6169
  %v7886 = vunpack.c.l.b16 %v6170
  %v7887 = vunpack.c.l.b16 %v6171
  %v7888 = vunpack.c.l.b16 %v6172
  %v7889 = vunpack.c.l.b16 %v6173
  %v7890 = vunpack.c.l.b16 %v6174
  %v7891 = vunpack.c.l.b16 %v6175
  %v7892 = vunpack.c.l.b16 %v6176
  %v7893 = vunpack.c.l.b16 %v6177
  %v7894 = vunpack.c.l.b16 %v6178
  %v7895 = vunpack.c.l.b16 %v6179
  %v7896 = vunpack.c.l.b16 %v6180
  %v7897 = vunpack.c.l.b16 %v6181
  %v7898 = vunpack.c.l.b16 %v6182
  %v7899 = vunpack.c.l.b16 %v6183
  %v7900 = vunpack.c.l.b16 %v6184
  %v7901 = vunpack.c.l.b16 %v6185
  %v7902 = vunpack.c.l.b16 %v6186
  %v7903 = vunpack.c.l.b16 %v6187
  %v7904 = vunpack.c.l.b16 %v6188
  %v7905 = vunpack.c.h.b16 %v6167
  %v7906 = vunpack.c.h.b16 %v6168
  %v7907 = vunpack.c.h.b16 %v6169
  %v7908 = vunpack.c.h.b16 %v6170
  %v7909 = vunpack.c.h.b16 %v6171
  %v7910 = vunpack.c.h.b16 %v6172
  %v7911 = vunpack.c.h.b16 %v6173
  %v7912 = vunpack.c.h.b16 %v6174
  %v7913 = vunpack.c.h.b16 %v6175
  %v7914 = vunpack.c.h.b16 %v6176
  %v7915 = vunpack.c.h.b16 %v6177
  %v7916 = vunpack.c.h.b16 %v6178
  %v7917 = vunpack.c.h.b16 %v6179
  %v7918 = vunpack.c.h.b16 %v6180
  %v7919 = vunpack.c.h.b16 %v6181
  %v7920 = vunpack.c.h.b16 %v6182
  %v7921 = vunpack.c.h.b16 %v6183
  %v7922 = vunpack.c.h.b16 %v6184
  %v7923 = vunpack.c.h.b16 %v6185
  %v7924 = vunpack.c.h.b16 %v6186
  %v7925 = vunpack.c.h.b16 %v6187
  %v7926 = vunpack.c.h.b16 %v6188
  %v7927 = vunpack.c.l.b16 %v6189
  %v7928 = vunpack.c.l.b16 %v6190
  %v7929 = vunpack.c.l.b16 %v6191
  %v7930 = vunpack.c.l.b16 %v6192
  %v7931 = vunpack.c.l.b16 %v6193
  %v7932 = vunpack.c.l.b16 %v6194
  %v7933 = vunpack.c.l.b16 %v6195
  %v7934 = vunpack.c.l.b16 %v6196
  %v7935 = vunpack.c.l.b16 %v6197
  %v7936 = vunpack.c.l.b16 %v6198
  %v7937 = vunpack.c.l.b16 %v6199
  %v7938 = vunpack.c.l.b16 %v6200
  %v7939 = vunpack.c.l.b16 %v6201
  %v7940 = vunpack.c.l.b16 %v6202
  %v7941 = vunpack.c.l.b16 %v6203
  %v7942 = vunpack.c.l.b16 %v6204
  %v7943 = vunpack.c.l.b16 %v6205
  %v7944 = vunpack.c.l.b16 %v6206
  %v7945 = vunpack.c.l.b16 %v6207
  %v7946 = vunpack.c.l.b16 %v6208
  %v7947 = vunpack.c.l.b16 %v6209
  %v7948 = vunpack.c.l.b16 %v6210
  %v7949 = vunpack.c.h.b16 %v6189
  %v7950 = vunpack.c.h.b16 %v6190
  %v7951 = vunpack.c.h.b16 %v6191
  %v7952 = vunpack.c.h.b16 %v6192
  %v7953 = vunpack.c.h.b16 %v6193
  %v7954 = vunpack.c.h.b16 %v6194
  %v7955 = vunpack.c.h.b16 %v6195
  %v7956 = vunpack.c.h.b16 %v6196
  %v7957 = vunpack.c.h.b16 %v6197
  %v7958 = vunpack.c.h.b16 %v6198
  %v7959 = vunpack.c.h.b16 %v6199
  %v7960 = vunpack.c.h.b16 %v6200
  %v7961 = vunpack.c.h.b16 %v6201
  %v7962 = vunpack.c.h.b16 %v6202
  %v7963 = vunpack.c.h.b16 %v6203
  %v7964 = vunpack.c.h.b16 %v6204
  %v7965 = vunpack.c.h.b16 %v6205
  %v7966 = vunpack.c.h.b16 %v6206
  %v7967 = vunpack.c.h.b16 %v6207
  %v7968 = vunpack.c.h.b16 %v6208
  %v7969 = vunpack.c.h.b16 %v6209
  %v7970 = vunpack.c.h.b16 %v6210
  %v7971 = vunpack.c.l.b16 %v6211
  %v7972 = vunpack.c.l.b16 %v6212
  %v7973 = vunpack.c.l.b16 %v6213
  %v7974 = vunpack.c.l.b16 %v6214
  %v7975 = vunpack.c.l.b16 %v6215
  %v7976 = vunpack.c.l.b16 %v6216
  %v7977 = vunpack.c.l.b16 %v6217
  %v7978 = vunpack.c.l.b16 %v6218
  %v7979 = vunpack.c.l.b16 %v6219
  %v7980 = vunpack.c.l.b16 %v6220
  %v7981 = vunpack.c.l.b16 %v6221
  %v7982 = vunpack.c.l.b16 %v6222
  %v7983 = vunpack.c.l.b16 %v6223
  %v7984 = vunpack.c.l.b16 %v6224
  %v7985 = vunpack.c.l.b16 %v6225
  %v7986 = vunpack.c.l.b16 %v6226
  %v7987 = vunpack.c.l.b16 %v6227
  %v7988 = vunpack.c.l.b16 %v6228
  %v7989 = vunpack.c.l.b16 %v6229
  %v7990 = vunpack.c.l.b16 %v6230
  %v7991 = vunpack.c.l.b16 %v6231
  %v7992 = vunpack.c.l.b16 %v6232
  %v7993 = vunpack.c.h.b16 %v6211
  %v7994 = vunpack.c.h.b16 %v6212
  %v7995 = vunpack.c.h.b16 %v6213
  %v7996 = vunpack.c.h.b16 %v6214
  %v7997 = vunpack.c.h.b16 %v6215
  %v7998 = vunpack.c.h.b16 %v6216
  %v7999 = vunpack.c.h.b16 %v6217
  %v8000 = vunpack.c.h.b16 %v6218
  %v8001 = vunpack.c.h.b16 %v6219
  %v8002 = vunpack.c.h.b16 %v6220
  %v8003 = vunpack.c.h.b16 %v6221
  %v8004 = vunpack.c.h.b16 %v6222
  %v8005 = vunpack.c.h.b16 %v6223
  %v8006 = vunpack.c.h.b16 %v6224
  %v8007 = vunpack.c.h.b16 %v6225
  %v8008 = vunpack.c.h.b16 %v6226
  %v8009 = vunpack.c.h.b16 %v6227
  %v8010 = vunpack.c.h.b16 %v6228
  %v8011 = vunpack.c.h.b16 %v6229
  %v8012 = vunpack.c.h.b16 %v6230
  %v8013 = vunpack.c.h.b16 %v6231
  %v8014 = vunpack.c.h.b16 %v6232
  %v8015 = vunpack.c.l.b16 %v6233
  %v8016 = vunpack.c.l.b16 %v6234
  %v8017 = vunpack.c.l.b16 %v6235
  %v8018 = vunpack.c.l.b16 %v6236
  %v8019 = vunpack.c.l.b16 %v6237
  %v8020 = vunpack.c.l.b16 %v6238
  %v8021 = vunpack.c.l.b16 %v6239
  %v8022 = vunpack.c.l.b16 %v6240
  %v8023 = vunpack.c.l.b16 %v6241
  %v8024 = vunpack.c.l.b16 %v6242
  %v8025 = vunpack.c.l.b16 %v6243
  %v8026 = vunpack.c.l.b16 %v6244
  %v8027 = vunpack.c.l.b16 %v6245
  %v8028 = vunpack.c.l.b16 %v6246
  %v8029 = vunpack.c.l.b16 %v6247
  %v8030 = vunpack.c.l.b16 %v6248
  %v8031 = vunpack.c.l.b16 %v6249
  %v8032 = vunpack.c.l.b16 %v6250
  %v8033 = vunpack.c.l.b16 %v6251
  %v8034 = vunpack.c.l.b16 %v6252
  %v8035 = vunpack.c.l.b16 %v6253
  %v8036 = vunpack.c.l.b16 %v6254
  %v8037 = vunpack.c.h.b16 %v6233
  %v8038 = vunpack.c.h.b16 %v6234
  %v8039 = vunpack.c.h.b16 %v6235
  %v8040 = vunpack.c.h.b16 %v6236
  %v8041 = vunpack.c.h.b16 %v6237
  %v8042 = vunpack.c.h.b16 %v6238
  %v8043 = vunpack.c.h.b16 %v6239
  %v8044 = vunpack.c.h.b16 %v6240
  %v8045 = vunpack.c.h.b16 %v6241
  %v8046 = vunpack.c.h.b16 %v6242
  %v8047 = vunpack.c.h.b16 %v6243
  %v8048 = vunpack.c.h.b16 %v6244
  %v8049 = vunpack.c.h.b16 %v6245
  %v8050 = vunpack.c.h.b16 %v6246
  %v8051 = vunpack.c.h.b16 %v6247
  %v8052 = vunpack.c.h.b16 %v6248
  %v8053 = vunpack.c.h.b16 %v6249
  %v8054 = vunpack.c.h.b16 %v6250
  %v8055 = vunpack.c.h.b16 %v6251
  %v8056 = vunpack.c.h.b16 %v6252
  %v8057 = vunpack.c.h.b16 %v6253
  %v8058 = vunpack.c.h.b16 %v6254
  %v8059 = vunpack.c.l.b16 %v6255
  %v8060 = vunpack.c.l.b16 %v6256
  %v8061 = vunpack.c.l.b16 %v6257
  %v8062 = vunpack.c.l.b16 %v6258
  %v8063 = vunpack.c.l.b16 %v6259
  %v8064 = vunpack.c.l.b16 %v6260
  %v8065 = vunpack.c.l.b16 %v6261
  %v8066 = vunpack.c.l.b16 %v6262
  %v8067 = vunpack.c.l.b16 %v6263
  %v8068 = vunpack.c.l.b16 %v6264
  %v8069 = vunpack.c.l.b16 %v6265
  %v8070 = vunpack.c.l.b16 %v6266
  %v8071 = vunpack.c.l.b16 %v6267
  %v8072 = vunpack.c.l.b16 %v6268
  %v8073 = vunpack.c.l.b16 %v6269
  %v8074 = vunpack.c.l.b16 %v6270
  %v8075 = vunpack.c.l.b16 %v6271
  %v8076 = vunpack.c.l.b16 %v6272
  %v8077 = vunpack.c.l.b16 %v6273
  %v8078 = vunpack.c.l.b16 %v6274
  %v8079 = vunpack.c.l.b16 %v6275
  %v8080 = vunpack.c.l.b16 %v6276
  %v8081 = vunpack.c.h.b16 %v6255
  %v8082 = vunpack.c.h.b16 %v6256
  %v8083 = vunpack.c.h.b16 %v6257
  %v8084 = vunpack.c.h.b16 %v6258
  %v8085 = vunpack.c.h.b16 %v6259
  %v8086 = vunpack.c.h.b16 %v6260
  %v8087 = vunpack.c.h.b16 %v6261
  %v8088 = vunpack.c.h.b16 %v6262
  %v8089 = vunpack.c.h.b16 %v6263
  %v8090 = vunpack.c.h.b16 %v6264
  %v8091 = vunpack.c.h.b16 %v6265
  %v8092 = vunpack.c.h.b16 %v6266
  %v8093 = vunpack.c.h.b16 %v6267
  %v8094 = vunpack.c.h.b16 %v6268
  %v8095 = vunpack.c.h.b16 %v6269
  %v8096 = vunpack.c.h.b16 %v6270
  %v8097 = vunpack.c.h.b16 %v6271
  %v8098 = vunpack.c.h.b16 %v6272
  %v8099 = vunpack.c.h.b16 %v6273
  %v8100 = vunpack.c.h.b16 %v6274
  %v8101 = vunpack.c.h.b16 %v6275
  %v8102 = vunpack.c.h.b16 %v6276
  %v8103 = vunpack.c.l.b16 %v6277
  %v8104 = vunpack.c.l.b16 %v6278
  %v8105 = vunpack.c.l.b16 %v6279
  %v8106 = vunpack.c.l.b16 %v6280
  %v8107 = vunpack.c.l.b16 %v6281
  %v8108 = vunpack.c.l.b16 %v6282
  %v8109 = vunpack.c.l.b16 %v6283
  %v8110 = vunpack.c.l.b16 %v6284
  %v8111 = vunpack.c.l.b16 %v6285
  %v8112 = vunpack.c.l.b16 %v6286
  %v8113 = vunpack.c.l.b16 %v6287
  %v8114 = vunpack.c.l.b16 %v6288
  %v8115 = vunpack.c.l.b16 %v6289
  %v8116 = vunpack.c.l.b16 %v6290
  %v8117 = vunpack.c.l.b16 %v6291
  %v8118 = vunpack.c.l.b16 %v6292
  %v8119 = vunpack.c.l.b16 %v6293
  %v8120 = vunpack.c.l.b16 %v6294
  %v8121 = vunpack.c.l.b16 %v6295
  %v8122 = vunpack.c.l.b16 %v6296
  %v8123 = vunpack.c.l.b16 %v6297
  %v8124 = vunpack.c.l.b16 %v6298
  %v8125 = vunpack.c.h.b16 %v6277
  %v8126 = vunpack.c.h.b16 %v6278
  %v8127 = vunpack.c.h.b16 %v6279
  %v8128 = vunpack.c.h.b16 %v6280
  %v8129 = vunpack.c.h.b16 %v6281
  %v8130 = vunpack.c.h.b16 %v6282
  %v8131 = vunpack.c.h.b16 %v6283
  %v8132 = vunpack.c.h.b16 %v6284
  %v8133 = vunpack.c.h.b16 %v6285
  %v8134 = vunpack.c.h.b16 %v6286
  %v8135 = vunpack.c.h.b16 %v6287
  %v8136 = vunpack.c.h.b16 %v6288
  %v8137 = vunpack.c.h.b16 %v6289
  %v8138 = vunpack.c.h.b16 %v6290
  %v8139 = vunpack.c.h.b16 %v6291
  %v8140 = vunpack.c.h.b16 %v6292
  %v8141 = vunpack.c.h.b16 %v6293
  %v8142 = vunpack.c.h.b16 %v6294
  %v8143 = vunpack.c.h.b16 %v6295
  %v8144 = vunpack.c.h.b16 %v6296
  %v8145 = vunpack.c.h.b16 %v6297
  %v8146 = vunpack.c.h.b16 %v6298
  %v8147 = vunpack.c.l.b16 %v6299
  %v8148 = vunpack.c.l.b16 %v6300
  %v8149 = vunpack.c.l.b16 %v6301
  %v8150 = vunpack.c.l.b16 %v6302
  %v8151 = vunpack.c.l.b16 %v6303
  %v8152 = vunpack.c.l.b16 %v6304
  %v8153 = vunpack.c.l.b16 %v6305
  %v8154 = vunpack.c.l.b16 %v6306
  %v8155 = vunpack.c.l.b16 %v6307
  %v8156 = vunpack.c.l.b16 %v6308
  %v8157 = vunpack.c.l.b16 %v6309
  %v8158 = vunpack.c.l.b16 %v6310
  %v8159 = vunpack.c.l.b16 %v6311
  %v8160 = vunpack.c.l.b16 %v6312
  %v8161 = vunpack.c.l.b16 %v6313
  %v8162 = vunpack.c.l.b16 %v6314
  %v8163 = vunpack.c.l.b16 %v6315
  %v8164 = vunpack.c.l.b16 %v6316
  %v8165 = vunpack.c.l.b16 %v6317
  %v8166 = vunpack.c.l.b16 %v6318
  %v8167 = vunpack.c.l.b16 %v6319
  %v8168 = vunpack.c.l.b16 %v6320
  %v8169 = vunpack.c.h.b16 %v6299
  %v8170 = vunpack.c.h.b16 %v6300
  %v8171 = vunpack.c.h.b16 %v6301
  %v8172 = vunpack.c.h.b16 %v6302
  %v8173 = vunpack.c.h.b16 %v6303
  %v8174 = vunpack.c.h.b16 %v6304
  %v8175 = vunpack.c.h.b16 %v6305
  %v8176 = vunpack.c.h.b16 %v6306
  %v8177 = vunpack.c.h.b16 %v6307
  %v8178 = vunpack.c.h.b16 %v6308
  %v8179 = vunpack.c.h.b16 %v6309
  %v8180 = vunpack.c.h.b16 %v6310
  %v8181 = vunpack.c.h.b16 %v6311
  %v8182 = vunpack.c.h.b16 %v6312
  %v8183 = vunpack.c.h.b16 %v6313
  %v8184 = vunpack.c.h.b16 %v6314
  %v8185 = vunpack.c.h.b16 %v6315
  %v8186 = vunpack.c.h.b16 %v6316
  %v8187 = vunpack.c.h.b16 %v6317
  %v8188 = vunpack.c.h.b16 %v6318
  %v8189 = vunpack.c.h.b16 %v6319
  %v8190 = vunpack.c.h.b16 %v6320
  %v8191 = vunpack.c.l.b16 %v6321
  %v8192 = vunpack.c.l.b16 %v6322
  %v8193 = vunpack.c.l.b16 %v6323
  %v8194 = vunpack.c.l.b16 %v6324
  %v8195 = vunpack.c.l.b16 %v6325
  %v8196 = vunpack.c.l.b16 %v6326
  %v8197 = vunpack.c.l.b16 %v6327
  %v8198 = vunpack.c.l.b16 %v6328
  %v8199 = vunpack.c.l.b16 %v6329
  %v8200 = vunpack.c.l.b16 %v6330
  %v8201 = vunpack.c.l.b16 %v6331
  %v8202 = vunpack.c.l.b16 %v6332
  %v8203 = vunpack.c.l.b16 %v6333
  %v8204 = vunpack.c.l.b16 %v6334
  %v8205 = vunpack.c.l.b16 %v6335
  %v8206 = vunpack.c.l.b16 %v6336
  %v8207 = vunpack.c.l.b16 %v6337
  %v8208 = vunpack.c.l.b16 %v6338
  %v8209 = vunpack.c.l.b16 %v6339
  %v8210 = vunpack.c.l.b16 %v6340
  %v8211 = vunpack.c.l.b16 %v6341
  %v8212 = vunpack.c.l.b16 %v6342
  %v8213 = vunpack.c.h.b16 %v6321
  %v8214 = vunpack.c.h.b16 %v6322
  %v8215 = vunpack.c.h.b16 %v6323
  %v8216 = vunpack.c.h.b16 %v6324
  %v8217 = vunpack.c.h.b16 %v6325
  %v8218 = vunpack.c.h.b16 %v6326
  %v8219 = vunpack.c.h.b16 %v6327
  %v8220 = vunpack.c.h.b16 %v6328
  %v8221 = vunpack.c.h.b16 %v6329
  %v8222 = vunpack.c.h.b16 %v6330
  %v8223 = vunpack.c.h.b16 %v6331
  %v8224 = vunpack.c.h.b16 %v6332
  %v8225 = vunpack.c.h.b16 %v6333
  %v8226 = vunpack.c.h.b16 %v6334
  %v8227 = vunpack.c.h.b16 %v6335
  %v8228 = vunpack.c.h.b16 %v6336
  %v8229 = vunpack.c.h.b16 %v6337
  %v8230 = vunpack.c.h.b16 %v6338
  %v8231 = vunpack.c.h.b16 %v6339
  %v8232 = vunpack.c.h.b16 %v6340
  %v8233 = vunpack.c.h.b16 %v6341
  %v8234 = vunpack.c.h.b16 %v6342
  %v8235 = vunpack.c.l.b16 %v6343
  %v8236 = vunpack.c.l.b16 %v6344
  %v8237 = vunpack.c.l.b16 %v6345
  %v8238 = vunpack.c.l.b16 %v6346
  %v8239 = vunpack.c.l.b16 %v6347
  %v8240 = vunpack.c.l.b16 %v6348
  %v8241 = vunpack.c.l.b16 %v6349
  %v8242 = vunpack.c.l.b16 %v6350
  %v8243 = vunpack.c.l.b16 %v6351
  %v8244 = vunpack.c.l.b16 %v6352
  %v8245 = vunpack.c.l.b16 %v6353
  %v8246 = vunpack.c.l.b16 %v6354
  %v8247 = vunpack.c.l.b16 %v6355
  %v8248 = vunpack.c.l.b16 %v6356
  %v8249 = vunpack.c.l.b16 %v6357
  %v8250 = vunpack.c.l.b16 %v6358
  %v8251 = vunpack.c.l.b16 %v6359
  %v8252 = vunpack.c.l.b16 %v6360
  %v8253 = vunpack.c.l.b16 %v6361
  %v8254 = vunpack.c.l.b16 %v6362
  %v8255 = vunpack.c.l.b16 %v6363
  %v8256 = vunpack.c.l.b16 %v6364
  %v8257 = vunpack.c.h.b16 %v6343
  %v8258 = vunpack.c.h.b16 %v6344
  %v8259 = vunpack.c.h.b16 %v6345
  %v8260 = vunpack.c.h.b16 %v6346
  %v8261 = vunpack.c.h.b16 %v6347
  %v8262 = vunpack.c.h.b16 %v6348
  %v8263 = vunpack.c.h.b16 %v6349
  %v8264 = vunpack.c.h.b16 %v6350
  %v8265 = vunpack.c.h.b16 %v6351
  %v8266 = vunpack.c.h.b16 %v6352
  %v8267 = vunpack.c.h.b16 %v6353
  %v8268 = vunpack.c.h.b16 %v6354
  %v8269 = vunpack.c.h.b16 %v6355
  %v8270 = vunpack.c.h.b16 %v6356
  %v8271 = vunpack.c.h.b16 %v6357
  %v8272 = vunpack.c.h.b16 %v6358
  %v8273 = vunpack.c.h.b16 %v6359
  %v8274 = vunpack.c.h.b16 %v6360
  %v8275 = vunpack.c.h.b16 %v6361
  %v8276 = vunpack.c.h.b16 %v6362
  %v8277 = vunpack.c.h.b16 %v6363
  %v8278 = vunpack.c.h.b16 %v6364
  %v8279 = vunpack.c.l.b16 %v6365
  %v8280 = vunpack.c.l.b16 %v6366
  %v8281 = vunpack.c.l.b16 %v6367
  %v8282 = vunpack.c.l.b16 %v6368
  %v8283 = vunpack.c.l.b16 %v6369
  %v8284 = vunpack.c.l.b16 %v6370
  %v8285 = vunpack.c.l.b16 %v6371
  %v8286 = vunpack.c.l.b16 %v6372
  %v8287 = vunpack.c.l.b16 %v6373
  %v8288 = vunpack.c.l.b16 %v6374
  %v8289 = vunpack.c.l.b16 %v6375
  %v8290 = vunpack.c.l.b16 %v6376
  %v8291 = vunpack.c.l.b16 %v6377
  %v8292 = vunpack.c.l.b16 %v6378
  %v8293 = vunpack.c.l.b16 %v6379
  %v8294 = vunpack.c.l.b16 %v6380
  %v8295 = vunpack.c.l.b16 %v6381
  %v8296 = vunpack.c.l.b16 %v6382
  %v8297 = vunpack.c.l.b16 %v6383
  %v8298 = vunpack.c.l.b16 %v6384
  %v8299 = vunpack.c.l.b16 %v6385
  %v8300 = vunpack.c.l.b16 %v6386
  %v8301 = vunpack.c.h.b16 %v6365
  %v8302 = vunpack.c.h.b16 %v6366
  %v8303 = vunpack.c.h.b16 %v6367
  %v8304 = vunpack.c.h.b16 %v6368
  %v8305 = vunpack.c.h.b16 %v6369
  %v8306 = vunpack.c.h.b16 %v6370
  %v8307 = vunpack.c.h.b16 %v6371
  %v8308 = vunpack.c.h.b16 %v6372
  %v8309 = vunpack.c.h.b16 %v6373
  %v8310 = vunpack.c.h.b16 %v6374
  %v8311 = vunpack.c.h.b16 %v6375
  %v8312 = vunpack.c.h.b16 %v6376
  %v8313 = vunpack.c.h.b16 %v6377
  %v8314 = vunpack.c.h.b16 %v6378
  %v8315 = vunpack.c.h.b16 %v6379
  %v8316 = vunpack.c.h.b16 %v6380
  %v8317 = vunpack.c.h.b16 %v6381
  %v8318 = vunpack.c.h.b16 %v6382
  %v8319 = vunpack.c.h.b16 %v6383
  %v8320 = vunpack.c.h.b16 %v6384
  %v8321 = vunpack.c.h.b16 %v6385
  %v8322 = vunpack.c.h.b16 %v6386
  %v8323 = vunpack.c.l.b16 %v6387
  %v8324 = vunpack.c.l.b16 %v6388
  %v8325 = vunpack.c.l.b16 %v6389
  %v8326 = vunpack.c.l.b16 %v6390
  %v8327 = vunpack.c.l.b16 %v6391
  %v8328 = vunpack.c.l.b16 %v6392
  %v8329 = vunpack.c.l.b16 %v6393
  %v8330 = vunpack.c.l.b16 %v6394
  %v8331 = vunpack.c.l.b16 %v6395
  %v8332 = vunpack.c.l.b16 %v6396
  %v8333 = vunpack.c.l.b16 %v6397
  %v8334 = vunpack.c.l.b16 %v6398
  %v8335 = vunpack.c.l.b16 %v6399
  %v8336 = vunpack.c.l.b16 %v6400
  %v8337 = vunpack.c.l.b16 %v6401
  %v8338 = vunpack.c.l.b16 %v6402
  %v8339 = vunpack.c.l.b16 %v6403
  %v8340 = vunpack.c.l.b16 %v6404
  %v8341 = vunpack.c.l.b16 %v6405
  %v8342 = vunpack.c.l.b16 %v6406
  %v8343 = vunpack.c.l.b16 %v6407
  %v8344 = vunpack.c.l.b16 %v6408
  %v8345 = vunpack.c.h.b16 %v6387
  %v8346 = vunpack.c.h.b16 %v6388
  %v8347 = vunpack.c.h.b16 %v6389
  %v8348 = vunpack.c.h.b16 %v6390
  %v8349 = vunpack.c.h.b16 %v6391
  %v8350 = vunpack.c.h.b16 %v6392
  %v8351 = vunpack.c.h.b16 %v6393
  %v8352 = vunpack.c.h.b16 %v6394
  %v8353 = vunpack.c.h.b16 %v6395
  %v8354 = vunpack.c.h.b16 %v6396
  %v8355 = vunpack.c.h.b16 %v6397
  %v8356 = vunpack.c.h.b16 %v6398
  %v8357 = vunpack.c.h.b16 %v6399
  %v8358 = vunpack.c.h.b16 %v6400
  %v8359 = vunpack.c.h.b16 %v6401
  %v8360 = vunpack.c.h.b16 %v6402
  %v8361 = vunpack.c.h.b16 %v6403
  %v8362 = vunpack.c.h.b16 %v6404
  %v8363 = vunpack.c.h.b16 %v6405
  %v8364 = vunpack.c.h.b16 %v6406
  %v8365 = vunpack.c.h.b16 %v6407
  %v8366 = vunpack.c.h.b16 %v6408
  %v8367 = vunpack.c.l.b16 %v6409
  %v8368 = vunpack.c.l.b16 %v6410
  %v8369 = vunpack.c.l.b16 %v6411
  %v8370 = vunpack.c.l.b16 %v6412
  %v8371 = vunpack.c.l.b16 %v6413
  %v8372 = vunpack.c.l.b16 %v6414
  %v8373 = vunpack.c.l.b16 %v6415
  %v8374 = vunpack.c.l.b16 %v6416
  %v8375 = vunpack.c.l.b16 %v6417
  %v8376 = vunpack.c.l.b16 %v6418
  %v8377 = vunpack.c.l.b16 %v6419
  %v8378 = vunpack.c.l.b16 %v6420
  %v8379 = vunpack.c.l.b16 %v6421
  %v8380 = vunpack.c.l.b16 %v6422
  %v8381 = vunpack.c.l.b16 %v6423
  %v8382 = vunpack.c.l.b16 %v6424
  %v8383 = vunpack.c.l.b16 %v6425
  %v8384 = vunpack.c.l.b16 %v6426
  %v8385 = vunpack.c.l.b16 %v6427
  %v8386 = vunpack.c.l.b16 %v6428
  %v8387 = vunpack.c.l.b16 %v6429
  %v8388 = vunpack.c.l.b16 %v6430
  %v8389 = vunpack.c.h.b16 %v6409
  %v8390 = vunpack.c.h.b16 %v6410
  %v8391 = vunpack.c.h.b16 %v6411
  %v8392 = vunpack.c.h.b16 %v6412
  %v8393 = vunpack.c.h.b16 %v6413
  %v8394 = vunpack.c.h.b16 %v6414
  %v8395 = vunpack.c.h.b16 %v6415
  %v8396 = vunpack.c.h.b16 %v6416
  %v8397 = vunpack.c.h.b16 %v6417
  %v8398 = vunpack.c.h.b16 %v6418
  %v8399 = vunpack.c.h.b16 %v6419
  %v8400 = vunpack.c.h.b16 %v6420
  %v8401 = vunpack.c.h.b16 %v6421
  %v8402 = vunpack.c.h.b16 %v6422
  %v8403 = vunpack.c.h.b16 %v6423
  %v8404 = vunpack.c.h.b16 %v6424
  %v8405 = vunpack.c.h.b16 %v6425
  %v8406 = vunpack.c.h.b16 %v6426
  %v8407 = vunpack.c.h.b16 %v6427
  %v8408 = vunpack.c.h.b16 %v6428
  %v8409 = vunpack.c.h.b16 %v6429
  %v8410 = vunpack.c.h.b16 %v6430
  %v8411 = vunpack.c.l.b16 %v6431
  %v8412 = vunpack.c.l.b16 %v6432
  %v8413 = vunpack.c.l.b16 %v6433
  %v8414 = vunpack.c.l.b16 %v6434
  %v8415 = vunpack.c.l.b16 %v6435
  %v8416 = vunpack.c.l.b16 %v6436
  %v8417 = vunpack.c.l.b16 %v6437
  %v8418 = vunpack.c.l.b16 %v6438
  %v8419 = vunpack.c.l.b16 %v6439
  %v8420 = vunpack.c.l.b16 %v6440
  %v8421 = vunpack.c.l.b16 %v6441
  %v8422 = vunpack.c.l.b16 %v6442
  %v8423 = vunpack.c.l.b16 %v6443
  %v8424 = vunpack.c.l.b16 %v6444
  %v8425 = vunpack.c.l.b16 %v6445
  %v8426 = vunpack.c.l.b16 %v6446
  %v8427 = vunpack.c.l.b16 %v6447
  %v8428 = vunpack.c.l.b16 %v6448
  %v8429 = vunpack.c.l.b16 %v6449
  %v8430 = vunpack.c.l.b16 %v6450
  %v8431 = vunpack.c.l.b16 %v6451
  %v8432 = vunpack.c.l.b16 %v6452
  %v8433 = vunpack.c.h.b16 %v6431
  %v8434 = vunpack.c.h.b16 %v6432
  %v8435 = vunpack.c.h.b16 %v6433
  %v8436 = vunpack.c.h.b16 %v6434
  %v8437 = vunpack.c.h.b16 %v6435
  %v8438 = vunpack.c.h.b16 %v6436
  %v8439 = vunpack.c.h.b16 %v6437
  %v8440 = vunpack.c.h.b16 %v6438
  %v8441 = vunpack.c.h.b16 %v6439
  %v8442 = vunpack.c.h.b16 %v6440
  %v8443 = vunpack.c.h.b16 %v6441
  %v8444 = vunpack.c.h.b16 %v6442
  %v8445 = vunpack.c.h.b16 %v6443
  %v8446 = vunpack.c.h.b16 %v6444
  %v8447 = vunpack.c.h.b16 %v6445
  %v8448 = vunpack.c.h.b16 %v6446
  %v8449 = vunpack.c.h.b16 %v6447
  %v8450 = vunpack.c.h.b16 %v6448
  %v8451 = vunpack.c.h.b16 %v6449
  %v8452 = vunpack.c.h.b16 %v6450
  %v8453 = vunpack.c.h.b16 %v6451
  %v8454 = vunpack.c.h.b16 %v6452
  %v8455 = vunpack.c.l.b16 %v6453
  %v8456 = vunpack.c.l.b16 %v6454
  %v8457 = vunpack.c.l.b16 %v6455
  %v8458 = vunpack.c.l.b16 %v6456
  %v8459 = vunpack.c.l.b16 %v6457
  %v8460 = vunpack.c.l.b16 %v6458
  %v8461 = vunpack.c.l.b16 %v6459
  %v8462 = vunpack.c.l.b16 %v6460
  %v8463 = vunpack.c.l.b16 %v6461
  %v8464 = vunpack.c.l.b16 %v6462
  %v8465 = vunpack.c.l.b16 %v6463
  %v8466 = vunpack.c.l.b16 %v6464
  %v8467 = vunpack.c.l.b16 %v6465
  %v8468 = vunpack.c.l.b16 %v6466
  %v8469 = vunpack.c.l.b16 %v6467
  %v8470 = vunpack.c.l.b16 %v6468
  %v8471 = vunpack.c.l.b16 %v6469
  %v8472 = vunpack.c.l.b16 %v6470
  %v8473 = vunpack.c.l.b16 %v6471
  %v8474 = vunpack.c.l.b16 %v6472
  %v8475 = vunpack.c.l.b16 %v6473
  %v8476 = vunpack.c.l.b16 %v6474
  %v8477 = vunpack.c.h.b16 %v6453
  %v8478 = vunpack.c.h.b16 %v6454
  %v8479 = vunpack.c.h.b16 %v6455
  %v8480 = vunpack.c.h.b16 %v6456
  %v8481 = vunpack.c.h.b16 %v6457
  %v8482 = vunpack.c.h.b16 %v6458
  %v8483 = vunpack.c.h.b16 %v6459
  %v8484 = vunpack.c.h.b16 %v6460
  %v8485 = vunpack.c.h.b16 %v6461
  %v8486 = vunpack.c.h.b16 %v6462
  %v8487 = vunpack.c.h.b16 %v6463
  %v8488 = vunpack.c.h.b16 %v6464
  %v8489 = vunpack.c.h.b16 %v6465
  %v8490 = vunpack.c.h.b16 %v6466
  %v8491 = vunpack.c.h.b16 %v6467
  %v8492 = vunpack.c.h.b16 %v6468
  %v8493 = vunpack.c.h.b16 %v6469
  %v8494 = vunpack.c.h.b16 %v6470
  %v8495 = vunpack.c.h.b16 %v6471
  %v8496 = vunpack.c.h.b16 %v6472
  %v8497 = vunpack.c.h.b16 %v6473
  %v8498 = vunpack.c.h.b16 %v6474
  %v8499 = vunpack.c.l.b16 %v6475
  %v8500 = vunpack.c.l.b16 %v6476
  %v8501 = vunpack.c.l.b16 %v6477
  %v8502 = vunpack.c.l.b16 %v6478
  %v8503 = vunpack.c.l.b16 %v6479
  %v8504 = vunpack.c.l.b16 %v6480
  %v8505 = vunpack.c.l.b16 %v6481
  %v8506 = vunpack.c.l.b16 %v6482
  %v8507 = vunpack.c.l.b16 %v6483
  %v8508 = vunpack.c.l.b16 %v6484
  %v8509 = vunpack.c.l.b16 %v6485
  %v8510 = vunpack.c.l.b16 %v6486
  %v8511 = vunpack.c.l.b16 %v6487
  %v8512 = vunpack.c.l.b16 %v6488
  %v8513 = vunpack.c.l.b16 %v6489
  %v8514 = vunpack.c.l.b16 %v6490
  %v8515 = vunpack.c.l.b16 %v6491
  %v8516 = vunpack.c.l.b16 %v6492
  %v8517 = vunpack.c.l.b16 %v6493
  %v8518 = vunpack.c.l.b16 %v6494
  %v8519 = vunpack.c.l.b16 %v6495
  %v8520 = vunpack.c.l.b16 %v6496
  %v8521 = vunpack.c.h.b16 %v6475
  %v8522 = vunpack.c.h.b16 %v6476
  %v8523 = vunpack.c.h.b16 %v6477
  %v8524 = vunpack.c.h.b16 %v6478
  %v8525 = vunpack.c.h.b16 %v6479
  %v8526 = vunpack.c.h.b16 %v6480
  %v8527 = vunpack.c.h.b16 %v6481
  %v8528 = vunpack.c.h.b16 %v6482
  %v8529 = vunpack.c.h.b16 %v6483
  %v8530 = vunpack.c.h.b16 %v6484
  %v8531 = vunpack.c.h.b16 %v6485
  %v8532 = vunpack.c.h.b16 %v6486
  %v8533 = vunpack.c.h.b16 %v6487
  %v8534 = vunpack.c.h.b16 %v6488
  %v8535 = vunpack.c.h.b16 %v6489
  %v8536 = vunpack.c.h.b16 %v6490
  %v8537 = vunpack.c.h.b16 %v6491
  %v8538 = vunpack.c.h.b16 %v6492
  %v8539 = vunpack.c.h.b16 %v6493
  %v8540 = vunpack.c.h.b16 %v6494
  %v8541 = vunpack.c.h.b16 %v6495
  %v8542 = vunpack.c.h.b16 %v6496
  %v8543 = vunpack.c.l.b16 %v6497
  %v8544 = vunpack.c.l.b16 %v6498
  %v8545 = vunpack.c.l.b16 %v6499
  %v8546 = vunpack.c.l.b16 %v6500
  %v8547 = vunpack.c.l.b16 %v6501
  %v8548 = vunpack.c.l.b16 %v6502
  %v8549 = vunpack.c.l.b16 %v6503
  %v8550 = vunpack.c.l.b16 %v6504
  %v8551 = vunpack.c.l.b16 %v6505
  %v8552 = vunpack.c.l.b16 %v6506
  %v8553 = vunpack.c.l.b16 %v6507
  %v8554 = vunpack.c.l.b16 %v6508
  %v8555 = vunpack.c.l.b16 %v6509
  %v8556 = vunpack.c.l.b16 %v6510
  %v8557 = vunpack.c.l.b16 %v6511
  %v8558 = vunpack.c.l.b16 %v6512
  %v8559 = vunpack.c.l.b16 %v6513
  %v8560 = vunpack.c.l.b16 %v6514
  %v8561 = vunpack.c.l.b16 %v6515
  %v8562 = vunpack.c.l.b16 %v6516
  %v8563 = vunpack.c.l.b16 %v6517
  %v8564 = vunpack.c.l.b16 %v6518
  %v8565 = vunpack.c.h.b16 %v6497
  %v8566 = vunpack.c.h.b16 %v6498
  %v8567 = vunpack.c.h.b16 %v6499
  %v8568 = vunpack.c.h.b16 %v6500
  %v8569 = vunpack.c.h.b16 %v6501
  %v8570 = vunpack.c.h.b16 %v6502
  %v8571 = vunpack.c.h.b16 %v6503
  %v8572 = vunpack.c.h.b16 %v6504
  %v8573 = vunpack.c.h.b16 %v6505
  %v8574 = vunpack.c.h.b16 %v6506
  %v8575 = vunpack.c.h.b16 %v6507
  %v8576 = vunpack.c.h.b16 %v6508
  %v8577 = vunpack.c.h.b16 %v6509
  %v8578 = vunpack.c.h.b16 %v6510
  %v8579 = vunpack.c.h.b16 %v6511
  %v8580 = vunpack.c.h.b16 %v6512
  %v8581 = vunpack.c.h.b16 %v6513
  %v8582 = vunpack.c.h.b16 %v6514
  %v8583 = vunpack.c.h.b16 %v6515
  %v8584 = vunpack.c.h.b16 %v6516
  %v8585 = vunpack.c.h.b16 %v6517
  %v8586 = vunpack.c.h.b16 %v6518
  %v8587 = vunpack.c.l.b16 %v6519
  %v8588 = vunpack.c.l.b16 %v6520
  %v8589 = vunpack.c.l.b16 %v6521
  %v8590 = vunpack.c.l.b16 %v6522
  %v8591 = vunpack.c.l.b16 %v6523
  %v8592 = vunpack.c.l.b16 %v6524
  %v8593 = vunpack.c.l.b16 %v6525
  %v8594 = vunpack.c.l.b16 %v6526
  %v8595 = vunpack.c.l.b16 %v6527
  %v8596 = vunpack.c.l.b16 %v6528
  %v8597 = vunpack.c.l.b16 %v6529
  %v8598 = vunpack.c.l.b16 %v6530
  %v8599 = vunpack.c.l.b16 %v6531
  %v8600 = vunpack.c.l.b16 %v6532
  %v8601 = vunpack.c.l.b16 %v6533
  %v8602 = vunpack.c.l.b16 %v6534
  %v8603 = vunpack.c.l.b16 %v6535
  %v8604 = vunpack.c.l.b16 %v6536
  %v8605 = vunpack.c.l.b16 %v6537
  %v8606 = vunpack.c.l.b16 %v6538
  %v8607 = vunpack.c.l.b16 %v6539
  %v8608 = vunpack.c.l.b16 %v6540
  %v8609 = vunpack.c.h.b16 %v6519
  %v8610 = vunpack.c.h.b16 %v6520
  %v8611 = vunpack.c.h.b16 %v6521
  %v8612 = vunpack.c.h.b16 %v6522
  %v8613 = vunpack.c.h.b16 %v6523
  %v8614 = vunpack.c.h.b16 %v6524
  %v8615 = vunpack.c.h.b16 %v6525
  %v8616 = vunpack.c.h.b16 %v6526
  %v8617 = vunpack.c.h.b16 %v6527
  %v8618 = vunpack.c.h.b16 %v6528
  %v8619 = vunpack.c.h.b16 %v6529
  %v8620 = vunpack.c.h.b16 %v6530
  %v8621 = vunpack.c.h.b16 %v6531
  %v8622 = vunpack.c.h.b16 %v6532
  %v8623 = vunpack.c.h.b16 %v6533
  %v8624 = vunpack.c.h.b16 %v6534
  %v8625 = vunpack.c.h.b16 %v6535
  %v8626 = vunpack.c.h.b16 %v6536
  %v8627 = vunpack.c.h.b16 %v6537
  %v8628 = vunpack.c.h.b16 %v6538
  %v8629 = vunpack.c.h.b16 %v6539
  %v8630 = vunpack.c.h.b16 %v6540
  %v8631 = vunpack.c.l.b16 %v6541
  %v8632 = vunpack.c.l.b16 %v6542
  %v8633 = vunpack.c.l.b16 %v6543
  %v8634 = vunpack.c.l.b16 %v6544
  %v8635 = vunpack.c.l.b16 %v6545
  %v8636 = vunpack.c.l.b16 %v6546
  %v8637 = vunpack.c.l.b16 %v6547
  %v8638 = vunpack.c.l.b16 %v6548
  %v8639 = vunpack.c.l.b16 %v6549
  %v8640 = vunpack.c.l.b16 %v6550
  %v8641 = vunpack.c.l.b16 %v6551
  %v8642 = vunpack.c.l.b16 %v6552
  %v8643 = vunpack.c.l.b16 %v6553
  %v8644 = vunpack.c.l.b16 %v6554
  %v8645 = vunpack.c.l.b16 %v6555
  %v8646 = vunpack.c.l.b16 %v6556
  %v8647 = vunpack.c.l.b16 %v6557
  %v8648 = vunpack.c.l.b16 %v6558
  %v8649 = vunpack.c.l.b16 %v6559
  %v8650 = vunpack.c.l.b16 %v6560
  %v8651 = vunpack.c.l.b16 %v6561
  %v8652 = vunpack.c.l.b16 %v6562
  %v8653 = vunpack.c.h.b16 %v6541
  %v8654 = vunpack.c.h.b16 %v6542
  %v8655 = vunpack.c.h.b16 %v6543
  %v8656 = vunpack.c.h.b16 %v6544
  %v8657 = vunpack.c.h.b16 %v6545
  %v8658 = vunpack.c.h.b16 %v6546
  %v8659 = vunpack.c.h.b16 %v6547
  %v8660 = vunpack.c.h.b16 %v6548
  %v8661 = vunpack.c.h.b16 %v6549
  %v8662 = vunpack.c.h.b16 %v6550
  %v8663 = vunpack.c.h.b16 %v6551
  %v8664 = vunpack.c.h.b16 %v6552
  %v8665 = vunpack.c.h.b16 %v6553
  %v8666 = vunpack.c.h.b16 %v6554
  %v8667 = vunpack.c.h.b16 %v6555
  %v8668 = vunpack.c.h.b16 %v6556
  %v8669 = vunpack.c.h.b16 %v6557
  %v8670 = vunpack.c.h.b16 %v6558
  %v8671 = vunpack.c.h.b16 %v6559
  %v8672 = vunpack.c.h.b16 %v6560
  %v8673 = vunpack.c.h.b16 %v6561
  %v8674 = vunpack.c.h.b16 %v6562
  %v8675 = vpack.c.b16 %v7268, %v7267
  %v8676 = vpack.c.b16 %v7270, %v7269
  %v8677 = vpack.c.b16 %v7272, %v7271
  %v8678 = vpack.c.b16 %v7274, %v7273
  %v8679 = vpack.c.b16 %v7276, %v7275
  %v8680 = vpack.c.b16 %v7278, %v7277
  %v8681 = vpack.c.b16 %v7280, %v7279
  %v8682 = vpack.c.b16 %v7282, %v7281
  %v8683 = vpack.c.b16 %v7284, %v7283
  %v8684 = vpack.c.b16 %v7286, %v7285
  %v8685 = vpack.c.b16 %v7288, %v7287
  %v8686 = vpack.c.b16 %v7290, %v7289
  %v8687 = vpack.c.b16 %v7292, %v7291
  %v8688 = vpack.c.b16 %v7294, %v7293
  %v8689 = vpack.c.b16 %v7296, %v7295
  %v8690 = vpack.c.b16 %v7298, %v7297
  %v8691 = vpack.c.b16 %v7300, %v7299
  %v8692 = vpack.c.b16 %v7302, %v7301
  %v8693 = vpack.c.b16 %v7304, %v7303
  %v8694 = vpack.c.b16 %v7306, %v7305
  %v8695 = vpack.c.b16 %v7308, %v7307
  %v8696 = vpack.c.b16 %v7310, %v7309
  %v8697 = vpack.c.b16 %v7312, %v7311
  %v8698 = vpack.c.b16 %v7314, %v7313
  %v8699 = vpack.c.b16 %v7316, %v7315
  %v8700 = vpack.c.b16 %v7318, %v7317
  %v8701 = vpack.c.b16 %v7320, %v7319
  %v8702 = vpack.c.b16 %v7322, %v7321
  %v8703 = vpack.c.b16 %v7324, %v7323
  %v8704 = vpack.c.b16 %v7326, %v7325
  %v8705 = vpack.c.b16 %v7328, %v7327
  %v8706 = vpack.c.b16 %v7330, %v7329
  %v8707 = vpack.c.b16 %v7332, %v7331
  %v8708 = vpack.c.b16 %v7334, %v7333
  %v8709 = vpack.c.b16 %v7336, %v7335
  %v8710 = vpack.c.b16 %v7338, %v7337
  %v8711 = vpack.c.b16 %v7340, %v7339
  %v8712 = vpack.c.b16 %v7342, %v7341
  %v8713 = vpack.c.b16 %v7344, %v7343
  %v8714 = vpack.c.b16 %v7346, %v7345
  %v8715 = vpack.c.b16 %v7348, %v7347
  %v8716 = vpack.c.b16 %v7350, %v7349
  %v8717 = vpack.c.b16 %v7352, %v7351
  %v8718 = vpack.c.b16 %v7354, %v7353
  %v8719 = vpack.c.b16 %v7356, %v7355
  %v8720 = vpack.c.b16 %v7358, %v7357
  %v8721 = vpack.c.b16 %v7360, %v7359
  %v8722 = vpack.c.b16 %v7362, %v7361
  %v8723 = vpack.c.b16 %v7364, %v7363
  %v8724 = vpack.c.b16 %v7366, %v7365
  %v8725 = vpack.c.b16 %v7368, %v7367
  %v8726 = vpack.c.b16 %v7370, %v7369
  %v8727 = vpack.c.b16 %v7372, %v7371
  %v8728 = vpack.c.b16 %v7374, %v7373
  %v8729 = vpack.c.b16 %v7376, %v7375
  %v8730 = vpack.c.b16 %v7378, %v7377
  %v8731 = vpack.c.b16 %v7380, %v7379
  %v8732 = vpack.c.b16 %v7382, %v7381
  %v8733 = vpack.c.b16 %v7384, %v7383
  %v8734 = vpack.c.b16 %v7386, %v7385
  %v8735 = vpack.c.b16 %v7388, %v7387
  %v8736 = vpack.c.b16 %v7390, %v7389
  %v8737 = vpack.c.b16 %v7392, %v7391
  %v8738 = vpack.c.b16 %v7394, %v7393
  %v8739 = vpack.c.b16 %v7396, %v7395
  %v8740 = vpack.c.b16 %v7398, %v7397
  %v8741 = vpack.c.b16 %v7400, %v7399
  %v8742 = vpack.c.b16 %v7402, %v7401
  %v8743 = vpack.c.b16 %v7404, %v7403
  %v8744 = vpack.c.b16 %v7406, %v7405
  %v8745 = vpack.c.b16 %v7408, %v7407
  %v8746 = vpack.c.b16 %v7410, %v7409
  %v8747 = vpack.c.b16 %v7412, %v7411
  %v8748 = vpack.c.b16 %v7414, %v7413
  %v8749 = vpack.c.b16 %v7416, %v7415
  %v8750 = vpack.c.b16 %v7418, %v7417
  %v8751 = vpack.c.b16 %v7420, %v7419
  %v8752 = vpack.c.b16 %v7422, %v7421
  %v8753 = vpack.c.b16 %v7424, %v7423
  %v8754 = vpack.c.b16 %v7426, %v7425
  %v8755 = vpack.c.b16 %v7428, %v7427
  %v8756 = vpack.c.b16 %v7430, %v7429
  %v8757 = vpack.c.b16 %v7432, %v7431
  %v8758 = vpack.c.b16 %v7434, %v7433
  %v8759 = vpack.c.b16 %v7436, %v7435
  %v8760 = vpack.c.b16 %v7438, %v7437
  %v8761 = vpack.c.b16 %v7440, %v7439
  %v8762 = vpack.c.b16 %v7442, %v7441
  %v8763 = vpack.c.b16 %v7444, %v7443
  %v8764 = vpack.c.b16 %v7446, %v7445
  %v8765 = vpack.c.b16 %v7448, %v7447
  %v8766 = vpack.c.b16 %v7450, %v7449
  %v8767 = vpack.c.b16 %v7452, %v7451
  %v8768 = vpack.c.b16 %v7454, %v7453
  %v8769 = vpack.c.b16 %v7456, %v7455
  %v8770 = vpack.c.b16 %v7458, %v7457
  %v8771 = vpack.c.b16 %v7460, %v7459
  %v8772 = vpack.c.b16 %v7462, %v7461
  %v8773 = vpack.c.b16 %v7464, %v7463
  %v8774 = vpack.c.b16 %v7466, %v7465
  %v8775 = vpack.c.b16 %v7468, %v7467
  %v8776 = vpack.c.b16 %v7470, %v7469
  %v8777 = vpack.c.b16 %v7472, %v7471
  %v8778 = vpack.c.b16 %v7474, %v7473
  %v8779 = vpack.c.b16 %v7476, %v7475
  %v8780 = vpack.c.b16 %v7478, %v7477
  %v8781 = vpack.c.b16 %v7480, %v7479
  %v8782 = vpack.c.b16 %v7482, %v7481
  %v8783 = vpack.c.b16 %v7484, %v7483
  %v8784 = vpack.c.b16 %v7486, %v7485
  %v8785 = vpack.c.b16 %v7488, %v7487
  %v8786 = vpack.c.b16 %v7490, %v7489
  %v8787 = vpack.c.b16 %v7492, %v7491
  %v8788 = vpack.c.b16 %v7494, %v7493
  %v8789 = vpack.c.b16 %v7496, %v7495
  %v8790 = vpack.c.b16 %v7498, %v7497
  %v8791 = vpack.c.b16 %v7500, %v7499
  %v8792 = vpack.c.b16 %v7502, %v7501
  %v8793 = vpack.c.b16 %v7504, %v7503
  %v8794 = vpack.c.b16 %v7506, %v7505
  %v8795 = vpack.c.b16 %v7508, %v7507
  %v8796 = vpack.c.b16 %v7510, %v7509
  %v8797 = vpack.c.b16 %v7512, %v7511
  %v8798 = vpack.c.b16 %v7514, %v7513
  %v8799 = vpack.c.b16 %v7516, %v7515
  %v8800 = vpack.c.b16 %v7518, %v7517
  %v8801 = vpack.c.b16 %v7520, %v7519
  %v8802 = vpack.c.b16 %v7522, %v7521
  %v8803 = vpack.c.b16 %v7524, %v7523
  %v8804 = vpack.c.b16 %v7526, %v7525
  %v8805 = vpack.c.b16 %v7528, %v7527
  %v8806 = vpack.c.b16 %v7530, %v7529
  %v8807 = vpack.c.b16 %v7532, %v7531
  %v8808 = vpack.c.b16 %v7534, %v7533
  %v8809 = vpack.c.b16 %v7536, %v7535
  %v8810 = vpack.c.b16 %v7538, %v7537
  %v8811 = vpack.c.b16 %v7540, %v7539
  %v8812 = vpack.c.b16 %v7542, %v7541
  %v8813 = vpack.c.b16 %v7544, %v7543
  %v8814 = vpack.c.b16 %v7546, %v7545
  %v8815 = vpack.c.b16 %v7548, %v7547
  %v8816 = vpack.c.b16 %v7550, %v7549
  %v8817 = vpack.c.b16 %v7552, %v7551
  %v8818 = vpack.c.b16 %v7554, %v7553
  %v8819 = vpack.c.b16 %v7556, %v7555
  %v8820 = vpack.c.b16 %v7558, %v7557
  %v8821 = vpack.c.b16 %v7560, %v7559
  %v8822 = vpack.c.b16 %v7562, %v7561
  %v8823 = vpack.c.b16 %v7564, %v7563
  %v8824 = vpack.c.b16 %v7566, %v7565
  %v8825 = vpack.c.b16 %v7568, %v7567
  %v8826 = vpack.c.b16 %v7570, %v7569
  %v8827 = vpack.c.b16 %v7572, %v7571
  %v8828 = vpack.c.b16 %v7574, %v7573
  %v8829 = vpack.c.b16 %v7576, %v7575
  %v8830 = vpack.c.b16 %v7578, %v7577
  %v8831 = vpack.c.b16 %v7580, %v7579
  %v8832 = vpack.c.b16 %v7582, %v7581
  %v8833 = vpack.c.b16 %v7584, %v7583
  %v8834 = vpack.c.b16 %v7586, %v7585
  %v8835 = vpack.c.b16 %v7588, %v7587
  %v8836 = vpack.c.b16 %v7590, %v7589
  %v8837 = vpack.c.b16 %v7592, %v7591
  %v8838 = vpack.c.b16 %v7594, %v7593
  %v8839 = vpack.c.b16 %v7596, %v7595
  %v8840 = vpack.c.b16 %v7598, %v7597
  %v8841 = vpack.c.b16 %v7600, %v7599
  %v8842 = vpack.c.b16 %v7602, %v7601
  %v8843 = vpack.c.b16 %v7604, %v7603
  %v8844 = vpack.c.b16 %v7606, %v7605
  %v8845 = vpack.c.b16 %v7608, %v7607
  %v8846 = vpack.c.b16 %v7610, %v7609
  %v8847 = vpack.c.b16 %v7612, %v7611
  %v8848 = vpack.c.b16 %v7614, %v7613
  %v8849 = vpack.c.b16 %v7616, %v7615
  %v8850 = vpack.c.b16 %v7618, %v7617
  %v8851 = vpack.c.b16 %v7620, %v7619
  %v8852 = vpack.c.b16 %v7622, %v7621
  %v8853 = vpack.c.b16 %v7624, %v7623
  %v8854 = vpack.c.b16 %v7626, %v7625
  %v8855 = vpack.c.b16 %v7628, %v7627
  %v8856 = vpack.c.b16 %v7630, %v7629
  %v8857 = vpack.c.b16 %v7632, %v7631
  %v8858 = vpack.c.b16 %v7634, %v7633
  %v8859 = vpack.c.b16 %v7636, %v7635
  %v8860 = vpack.c.b16 %v7638, %v7637
  %v8861 = vpack.c.b16 %v7640, %v7639
  %v8862 = vpack.c.b16 %v7642, %v7641
  %v8863 = vpack.c.b16 %v7644, %v7643
  %v8864 = vpack.c.b16 %v7646, %v7645
  %v8865 = vpack.c.b16 %v7648, %v7647
  %v8866 = vpack.c.b16 %v7650, %v7649
  %v8867 = vpack.c.b16 %v7652, %v7651
  %v8868 = vpack.c.b16 %v7654, %v7653
  %v8869 = vpack.c.b16 %v7656, %v7655
  %v8870 = vpack.c.b16 %v7658, %v7657
  %v8871 = vpack.c.b16 %v7660, %v7659
  %v8872 = vpack.c.b16 %v7662, %v7661
  %v8873 = vpack.c.b16 %v7664, %v7663
  %v8874 = vpack.c.b16 %v7666, %v7665
  %v8875 = vpack.c.b16 %v7668, %v7667
  %v8876 = vpack.c.b16 %v7670, %v7669
  %v8877 = vpack.c.b16 %v7672, %v7671
  %v8878 = vpack.c.b16 %v7674, %v7673
  %v8879 = vpack.c.b16 %v7676, %v7675
  %v8880 = vpack.c.b16 %v7678, %v7677
  %v8881 = vpack.c.b16 %v7680, %v7679
  %v8882 = vpack.c.b16 %v7682, %v7681
  %v8883 = vpack.c.b16 %v7684, %v7683
  %v8884 = vpack.c.b16 %v7686, %v7685
  %v8885 = vpack.c.b16 %v7688, %v7687
  %v8886 = vpack.c.b16 %v7690, %v7689
  %v8887 = vpack.c.b16 %v7692, %v7691
  %v8888 = vpack.c.b16 %v7694, %v7693
  %v8889 = vpack.c.b16 %v7696, %v7695
  %v8890 = vpack.c.b16 %v7698, %v7697
  %v8891 = vpack.c.b16 %v7700, %v7699
  %v8892 = vpack.c.b16 %v7702, %v7701
  %v8893 = vpack.c.b16 %v7704, %v7703
  %v8894 = vpack.c.b16 %v7706, %v7705
  %v8895 = vpack.c.b16 %v7708, %v7707
  %v8896 = vpack.c.b16 %v7710, %v7709
  %v8897 = vpack.c.b16 %v7712, %v7711
  %v8898 = vpack.c.b16 %v7714, %v7713
  %v8899 = vpack.c.b16 %v7716, %v7715
  %v8900 = vpack.c.b16 %v7718, %v7717
  %v8901 = vpack.c.b16 %v7720, %v7719
  %v8902 = vpack.c.b16 %v7722, %v7721
  %v8903 = vpack.c.b16 %v7724, %v7723
  %v8904 = vpack.c.b16 %v7726, %v7725
  %v8905 = vpack.c.b16 %v7728, %v7727
  %v8906 = vpack.c.b16 %v7730, %v7729
  %v8907 = vpack.c.b16 %v7732, %v7731
  %v8908 = vpack.c.b16 %v7734, %v7733
  %v8909 = vpack.c.b16 %v7736, %v7735
  %v8910 = vpack.c.b16 %v7738, %v7737
  %v8911 = vpack.c.b16 %v7740, %v7739
  %v8912 = vpack.c.b16 %v7742, %v7741
  %v8913 = vpack.c.b16 %v7744, %v7743
  %v8914 = vpack.c.b16 %v7746, %v7745
  %v8915 = vpack.c.b16 %v7748, %v7747
  %v8916 = vpack.c.b16 %v7750, %v7749
  %v8917 = vpack.c.b16 %v7752, %v7751
  %v8918 = vpack.c.b16 %v7754, %v7753
  %v8919 = vpack.c.b16 %v7756, %v7755
  %v8920 = vpack.c.b16 %v7758, %v7757
  %v8921 = vpack.c.b16 %v7760, %v7759
  %v8922 = vpack.c.b16 %v7762, %v7761
  %v8923 = vpack.c.b16 %v7764, %v7763
  %v8924 = vpack.c.b16 %v7766, %v7765
  %v8925 = vpack.c.b16 %v7768, %v7767
  %v8926 = vpack.c.b16 %v7770, %v7769
  %v8927 = vpack.c.b16 %v7772, %v7771
  %v8928 = vpack.c.b16 %v7774, %v7773
  %v8929 = vpack.c.b16 %v7776, %v7775
  %v8930 = vpack.c.b16 %v7778, %v7777
  %v8931 = vpack.c.b16 %v7780, %v7779
  %v8932 = vpack.c.b16 %v7782, %v7781
  %v8933 = vpack.c.b16 %v7784, %v7783
  %v8934 = vpack.c.b16 %v7786, %v7785
  %v8935 = vpack.c.b16 %v7788, %v7787
  %v8936 = vpack.c.b16 %v7790, %v7789
  %v8937 = vpack.c.b16 %v7792, %v7791
  %v8938 = vpack.c.b16 %v7794, %v7793
  %v8939 = vpack.c.b16 %v7796, %v7795
  %v8940 = vpack.c.b16 %v7798, %v7797
  %v8941 = vpack.c.b16 %v7800, %v7799
  %v8942 = vpack.c.b16 %v7802, %v7801
  %v8943 = vpack.c.b16 %v7804, %v7803
  %v8944 = vpack.c.b16 %v7806, %v7805
  %v8945 = vpack.c.b16 %v7808, %v7807
  %v8946 = vpack.c.b16 %v7810, %v7809
  %v8947 = vpack.c.b16 %v7812, %v7811
  %v8948 = vpack.c.b16 %v7814, %v7813
  %v8949 = vpack.c.b16 %v7816, %v7815
  %v8950 = vpack.c.b16 %v7818, %v7817
  %v8951 = vpack.c.b16 %v7820, %v7819
  %v8952 = vpack.c.b16 %v7822, %v7821
  %v8953 = vpack.c.b16 %v7824, %v7823
  %v8954 = vpack.c.b16 %v7826, %v7825
  %v8955 = vpack.c.b16 %v7828, %v7827
  %v8956 = vpack.c.b16 %v7830, %v7829
  %v8957 = vpack.c.b16 %v7832, %v7831
  %v8958 = vpack.c.b16 %v7834, %v7833
  %v8959 = vpack.c.b16 %v7836, %v7835
  %v8960 = vpack.c.b16 %v7838, %v7837
  %v8961 = vpack.c.b16 %v7840, %v7839
  %v8962 = vpack.c.b16 %v7842, %v7841
  %v8963 = vpack.c.b16 %v7844, %v7843
  %v8964 = vpack.c.b16 %v7846, %v7845
  %v8965 = vpack.c.b16 %v7848, %v7847
  %v8966 = vpack.c.b16 %v7850, %v7849
  %v8967 = vpack.c.b16 %v7852, %v7851
  %v8968 = vpack.c.b16 %v7854, %v7853
  %v8969 = vpack.c.b16 %v7856, %v7855
  %v8970 = vpack.c.b16 %v7858, %v7857
  %v8971 = vpack.c.b16 %v7860, %v7859
  %v8972 = vpack.c.b16 %v7862, %v7861
  %v8973 = vpack.c.b16 %v7864, %v7863
  %v8974 = vpack.c.b16 %v7866, %v7865
  %v8975 = vpack.c.b16 %v7868, %v7867
  %v8976 = vpack.c.b16 %v7870, %v7869
  %v8977 = vpack.c.b16 %v7872, %v7871
  %v8978 = vpack.c.b16 %v7874, %v7873
  %v8979 = vpack.c.b16 %v7876, %v7875
  %v8980 = vpack.c.b16 %v7878, %v7877
  %v8981 = vpack.c.b16 %v7880, %v7879
  %v8982 = vpack.c.b16 %v7882, %v7881
  %v8983 = vpack.c.b16 %v7884, %v7883
  %v8984 = vpack.c.b16 %v7886, %v7885
  %v8985 = vpack.c.b16 %v7888, %v7887
  %v8986 = vpack.c.b16 %v7890, %v7889
  %v8987 = vpack.c.b16 %v7892, %v7891
  %v8988 = vpack.c.b16 %v7894, %v7893
  %v8989 = vpack.c.b16 %v7896, %v7895
  %v8990 = vpack.c.b16 %v7898, %v7897
  %v8991 = vpack.c.b16 %v7900, %v7899
  %v8992 = vpack.c.b16 %v7902, %v7901
  %v8993 = vpack.c.b16 %v7904, %v7903
  %v8994 = vpack.c.b16 %v7906, %v7905
  %v8995 = vpack.c.b16 %v7908, %v7907
  %v8996 = vpack.c.b16 %v7910, %v7909
  %v8997 = vpack.c.b16 %v7912, %v7911
  %v8998 = vpack.c.b16 %v7914, %v7913
  %v8999 = vpack.c.b16 %v7916, %v7915
  %v9000 = vpack.c.b16 %v7918, %v7917
  %v9001 = vpack.c.b16 %v7920, %v7919
  %v9002 = vpack.c.b16 %v7922, %v7921
  %v9003 = vpack.c.b16 %v7924, %v7923
  %v9004 = vpack.c.b16 %v7926, %v7925
  %v9005 = vpack.c.b16 %v7928, %v7927
  %v9006 = vpack.c.b16 %v7930, %v7929
  %v9007 = vpack.c.b16 %v7932, %v7931
  %v9008 = vpack.c.b16 %v7934, %v7933
  %v9009 = vpack.c.b16 %v7936, %v7935
  %v9010 = vpack.c.b16 %v7938, %v7937
  %v9011 = vpack.c.b16 %v7940, %v7939
  %v9012 = vpack.c.b16 %v7942, %v7941
  %v9013 = vpack.c.b16 %v7944, %v7943
  %v9014 = vpack.c.b16 %v7946, %v7945
  %v9015 = vpack.c.b16 %v7948, %v7947
  %v9016 = vpack.c.b16 %v7950, %v7949
  %v9017 = vpack.c.b16 %v7952, %v7951
  %v9018 = vpack.c.b16 %v7954, %v7953
  %v9019 = vpack.c.b16 %v7956, %v7955
  %v9020 = vpack.c.b16 %v7958, %v7957
  %v9021 = vpack.c.b16 %v7960, %v7959
  %v9022 = vpack.c.b16 %v7962, %v7961
  %v9023 = vpack.c.b16 %v7964, %v7963
  %v9024 = vpack.c.b16 %v7966, %v7965
  %v9025 = vpack.c.b16 %v7968, %v7967
  %v9026 = vpack.c.b16 %v7970, %v7969
  %v9027 = vpack.c.b16 %v7972, %v7971
  %v9028 = vpack.c.b16 %v7974, %v7973
  %v9029 = vpack.c.b16 %v7976, %v7975
  %v9030 = vpack.c.b16 %v7978, %v7977
  %v9031 = vpack.c.b16 %v7980, %v7979
  %v9032 = vpack.c.b16 %v7982, %v7981
  %v9033 = vpack.c.b16 %v7984, %v7983
  %v9034 = vpack.c.b16 %v7986, %v7985
  %v9035 = vpack.c.b16 %v7988, %v7987
  %v9036 = vpack.c.b16 %v7990, %v7989
  %v9037 = vpack.c.b16 %v7992, %v7991
  %v9038 = vpack.c.b16 %v7994, %v7993
  %v9039 = vpack.c.b16 %v7996, %v7995
  %v9040 = vpack.c.b16 %v7998, %v7997
  %v9041 = vpack.c.b16 %v8000, %v7999
  %v9042 = vpack.c.b16 %v8002, %v8001
  %v9043 = vpack.c.b16 %v8004, %v8003
  %v9044 = vpack.c.b16 %v8006, %v8005
  %v9045 = vpack.c.b16 %v8008, %v8007
  %v9046 = vpack.c.b16 %v8010, %v8009
  %v9047 = vpack.c.b16 %v8012, %v8011
  %v9048 = vpack.c.b16 %v8014, %v8013
  %v9049 = vpack.c.b16 %v8016, %v8015
  %v9050 = vpack.c.b16 %v8018, %v8017
  %v9051 = vpack.c.b16 %v8020, %v8019
  %v9052 = vpack.c.b16 %v8022, %v8021
  %v9053 = vpack.c.b16 %v8024, %v8023
  %v9054 = vpack.c.b16 %v8026, %v8025
  %v9055 = vpack.c.b16 %v8028, %v8027
  %v9056 = vpack.c.b16 %v8030, %v8029
  %v9057 = vpack.c.b16 %v8032, %v8031
  %v9058 = vpack.c.b16 %v8034, %v8033
  %v9059 = vpack.c.b16 %v8036, %v8035
  %v9060 = vpack.c.b16 %v8038, %v8037
  %v9061 = vpack.c.b16 %v8040, %v8039
  %v9062 = vpack.c.b16 %v8042, %v8041
  %v9063 = vpack.c.b16 %v8044, %v8043
  %v9064 = vpack.c.b16 %v8046, %v8045
  %v9065 = vpack.c.b16 %v8048, %v8047
  %v9066 = vpack.c.b16 %v8050, %v8049
  %v9067 = vpack.c.b16 %v8052, %v8051
  %v9068 = vpack.c.b16 %v8054, %v8053
  %v9069 = vpack.c.b16 %v8056, %v8055
  %v9070 = vpack.c.b16 %v8058, %v8057
  %v9071 = vpack.c.b16 %v8060, %v8059
  %v9072 = vpack.c.b16 %v8062, %v8061
  %v9073 = vpack.c.b16 %v8064, %v8063
  %v9074 = vpack.c.b16 %v8066, %v8065
  %v9075 = vpack.c.b16 %v8068, %v8067
  %v9076 = vpack.c.b16 %v8070, %v8069
  %v9077 = vpack.c.b16 %v8072, %v8071
  %v9078 = vpack.c.b16 %v8074, %v8073
  %v9079 = vpack.c.b16 %v8076, %v8075
  %v9080 = vpack.c.b16 %v8078, %v8077
  %v9081 = vpack.c.b16 %v8080, %v8079
  %v9082 = vpack.c.b16 %v8082, %v8081
  %v9083 = vpack.c.b16 %v8084, %v8083
  %v9084 = vpack.c.b16 %v8086, %v8085
  %v9085 = vpack.c.b16 %v8088, %v8087
  %v9086 = vpack.c.b16 %v8090, %v8089
  %v9087 = vpack.c.b16 %v8092, %v8091
  %v9088 = vpack.c.b16 %v8094, %v8093
  %v9089 = vpack.c.b16 %v8096, %v8095
  %v9090 = vpack.c.b16 %v8098, %v8097
  %v9091 = vpack.c.b16 %v8100, %v8099
  %v9092 = vpack.c.b16 %v8102, %v8101
  %v9093 = vpack.c.b16 %v8104, %v8103
  %v9094 = vpack.c.b16 %v8106, %v8105
  %v9095 = vpack.c.b16 %v8108, %v8107
  %v9096 = vpack.c.b16 %v8110, %v8109
  %v9097 = vpack.c.b16 %v8112, %v8111
  %v9098 = vpack.c.b16 %v8114, %v8113
  %v9099 = vpack.c.b16 %v8116, %v8115
  %v9100 = vpack.c.b16 %v8118, %v8117
  %v9101 = vpack.c.b16 %v8120, %v8119
  %v9102 = vpack.c.b16 %v8122, %v8121
  %v9103 = vpack.c.b16 %v8124, %v8123
  %v9104 = vpack.c.b16 %v8126, %v8125
  %v9105 = vpack.c.b16 %v8128, %v8127
  %v9106 = vpack.c.b16 %v8130, %v8129
  %v9107 = vpack.c.b16 %v8132, %v8131
  %v9108 = vpack.c.b16 %v8134, %v8133
  %v9109 = vpack.c.b16 %v8136, %v8135
  %v9110 = vpack.c.b16 %v8138, %v8137
  %v9111 = vpack.c.b16 %v8140, %v8139
  %v9112 = vpack.c.b16 %v8142, %v8141
  %v9113 = vpack.c.b16 %v8144, %v8143
  %v9114 = vpack.c.b16 %v8146, %v8145
  %v9115 = vpack.c.b16 %v8148, %v8147
  %v9116 = vpack.c.b16 %v8150, %v8149
  %v9117 = vpack.c.b16 %v8152, %v8151
  %v9118 = vpack.c.b16 %v8154, %v8153
  %v9119 = vpack.c.b16 %v8156, %v8155
  %v9120 = vpack.c.b16 %v8158, %v8157
  %v9121 = vpack.c.b16 %v8160, %v8159
  %v9122 = vpack.c.b16 %v8162, %v8161
  %v9123 = vpack.c.b16 %v8164, %v8163
  %v9124 = vpack.c.b16 %v8166, %v8165
  %v9125 = vpack.c.b16 %v8168, %v8167
  %v9126 = vpack.c.b16 %v8170, %v8169
  %v9127 = vpack.c.b16 %v8172, %v8171
  %v9128 = vpack.c.b16 %v8174, %v8173
  %v9129 = vpack.c.b16 %v8176, %v8175
  %v9130 = vpack.c.b16 %v8178, %v8177
  %v9131 = vpack.c.b16 %v8180, %v8179
  %v9132 = vpack.c.b16 %v8182, %v8181
  %v9133 = vpack.c.b16 %v8184, %v8183
  %v9134 = vpack.c.b16 %v8186, %v8185
  %v9135 = vpack.c.b16 %v8188, %v8187
  %v9136 = vpack.c.b16 %v8190, %v8189
  %v9137 = vpack.c.b16 %v8192, %v8191
  %v9138 = vpack.c.b16 %v8194, %v8193
  %v9139 = vpack.c.b16 %v8196, %v8195
  %v9140 = vpack.c.b16 %v8198, %v8197
  %v9141 = vpack.c.b16 %v8200, %v8199
  %v9142 = vpack.c.b16 %v8202, %v8201
  %v9143 = vpack.c.b16 %v8204, %v8203
  %v9144 = vpack.c.b16 %v8206, %v8205
  %v9145 = vpack.c.b16 %v8208, %v8207
  %v9146 = vpack.c.b16 %v8210, %v8209
  %v9147 = vpack.c.b16 %v8212, %v8211
  %v9148 = vpack.c.b16 %v8214, %v8213
  %v9149 = vpack.c.b16 %v8216, %v8215
  %v9150 = vpack.c.b16 %v8218, %v8217
  %v9151 = vpack.c.b16 %v8220, %v8219
  %v9152 = vpack.c.b16 %v8222, %v8221
  %v9153 = vpack.c.b16 %v8224, %v8223
  %v9154 = vpack.c.b16 %v8226, %v8225
  %v9155 = vpack.c.b16 %v8228, %v8227
  %v9156 = vpack.c.b16 %v8230, %v8229
  %v9157 = vpack.c.b16 %v8232, %v8231
  %v9158 = vpack.c.b16 %v8234, %v8233
  %v9159 = vpack.c.b16 %v8236, %v8235
  %v9160 = vpack.c.b16 %v8238, %v8237
  %v9161 = vpack.c.b16 %v8240, %v8239
  %v9162 = vpack.c.b16 %v8242, %v8241
  %v9163 = vpack.c.b16 %v8244, %v8243
  %v9164 = vpack.c.b16 %v8246, %v8245
  %v9165 = vpack.c.b16 %v8248, %v8247
  %v9166 = vpack.c.b16 %v8250, %v8249
  %v9167 = vpack.c.b16 %v8252, %v8251
  %v9168 = vpack.c.b16 %v8254, %v8253
  %v9169 = vpack.c.b16 %v8256, %v8255
  %v9170 = vpack.c.b16 %v8258, %v8257
  %v9171 = vpack.c.b16 %v8260, %v8259
  %v9172 = vpack.c.b16 %v8262, %v8261
  %v9173 = vpack.c.b16 %v8264, %v8263
  %v9174 = vpack.c.b16 %v8266, %v8265
  %v9175 = vpack.c.b16 %v8268, %v8267
  %v9176 = vpack.c.b16 %v8270, %v8269
  %v9177 = vpack.c.b16 %v8272, %v8271
  %v9178 = vpack.c.b16 %v8274, %v8273
  %v9179 = vpack.c.b16 %v8276, %v8275
  %v9180 = vpack.c.b16 %v8278, %v8277
  %v9181 = vpack.c.b16 %v8280, %v8279
  %v9182 = vpack.c.b16 %v8282, %v8281
  %v9183 = vpack.c.b16 %v8284, %v8283
  %v9184 = vpack.c.b16 %v8286, %v8285
  %v9185 = vpack.c.b16 %v8288, %v8287
  %v9186 = vpack.c.b16 %v8290, %v8289
  %v9187 = vpack.c.b16 %v8292, %v8291
  %v9188 = vpack.c.b16 %v8294, %v8293
  %v9189 = vpack.c.b16 %v8296, %v8295
  %v9190 = vpack.c.b16 %v8298, %v8297
  %v9191 = vpack.c.b16 %v8300, %v8299
  %v9192 = vpack.c.b16 %v8302, %v8301
  %v9193 = vpack.c.b16 %v8304, %v8303
  %v9194 = vpack.c.b16 %v8306, %v8305
  %v9195 = vpack.c.b16 %v8308, %v8307
  %v9196 = vpack.c.b16 %v8310, %v8309
  %v9197 = vpack.c.b16 %v8312, %v8311
  %v9198 = vpack.c.b16 %v8314, %v8313
  %v9199 = vpack.c.b16 %v8316, %v8315
  %v9200 = vpack.c.b16 %v8318, %v8317
  %v9201 = vpack.c.b16 %v8320, %v8319
  %v9202 = vpack.c.b16 %v8322, %v8321
  %v9203 = vpack.c.b16 %v8324, %v8323
  %v9204 = vpack.c.b16 %v8326, %v8325
  %v9205 = vpack.c.b16 %v8328, %v8327
  %v9206 = vpack.c.b16 %v8330, %v8329
  %v9207 = vpack.c.b16 %v8332, %v8331
  %v9208 = vpack.c.b16 %v8334, %v8333
  %v9209 = vpack.c.b16 %v8336, %v8335
  %v9210 = vpack.c.b16 %v8338, %v8337
  %v9211 = vpack.c.b16 %v8340, %v8339
  %v9212 = vpack.c.b16 %v8342, %v8341
  %v9213 = vpack.c.b16 %v8344, %v8343
  %v9214 = vpack.c.b16 %v8346, %v8345
  %v9215 = vpack.c.b16 %v8348, %v8347
  %v9216 = vpack.c.b16 %v8350, %v8349
  %v9217 = vpack.c.b16 %v8352, %v8351
  %v9218 = vpack.c.b16 %v8354, %v8353
  %v9219 = vpack.c.b16 %v8356, %v8355
  %v9220 = vpack.c.b16 %v8358, %v8357
  %v9221 = vpack.c.b16 %v8360, %v8359
  %v9222 = vpack.c.b16 %v8362, %v8361
  %v9223 = vpack.c.b16 %v8364, %v8363
  %v9224 = vpack.c.b16 %v8366, %v8365
  %v9225 = vpack.c.b16 %v8368, %v8367
  %v9226 = vpack.c.b16 %v8370, %v8369
  %v9227 = vpack.c.b16 %v8372, %v8371
  %v9228 = vpack.c.b16 %v8374, %v8373
  %v9229 = vpack.c.b16 %v8376, %v8375
  %v9230 = vpack.c.b16 %v8378, %v8377
  %v9231 = vpack.c.b16 %v8380, %v8379
  %v9232 = vpack.c.b16 %v8382, %v8381
  %v9233 = vpack.c.b16 %v8384, %v8383
  %v9234 = vpack.c.b16 %v8386, %v8385
  %v9235 = vpack.c.b16 %v8388, %v8387
  %v9236 = vpack.c.b16 %v8390, %v8389
  %v9237 = vpack.c.b16 %v8392, %v8391
  %v9238 = vpack.c.b16 %v8394, %v8393
  %v9239 = vpack.c.b16 %v8396, %v8395
  %v9240 = vpack.c.b16 %v8398, %v8397
  %v9241 = vpack.c.b16 %v8400, %v8399
  %v9242 = vpack.c.b16 %v8402, %v8401
  %v9243 = vpack.c.b16 %v8404, %v8403
  %v9244 = vpack.c.b16 %v8406, %v8405
  %v9245 = vpack.c.b16 %v8408, %v8407
  %v9246 = vpack.c.b16 %v8410, %v8409
  %v9247 = vpack.c.b16 %v8412, %v8411
  %v9248 = vpack.c.b16 %v8414, %v8413
  %v9249 = vpack.c.b16 %v8416, %v8415
  %v9250 = vpack.c.b16 %v8418, %v8417
  %v9251 = vpack.c.b16 %v8420, %v8419
  %v9252 = vpack.c.b16 %v8422, %v8421
  %v9253 = vpack.c.b16 %v8424, %v8423
  %v9254 = vpack.c.b16 %v8426, %v8425
  %v9255 = vpack.c.b16 %v8428, %v8427
  %v9256 = vpack.c.b16 %v8430, %v8429
  %v9257 = vpack.c.b16 %v8432, %v8431
  %v9258 = vpack.c.b16 %v8434, %v8433
  %v9259 = vpack.c.b16 %v8436, %v8435
  %v9260 = vpack.c.b16 %v8438, %v8437
  %v9261 = vpack.c.b16 %v8440, %v8439
  %v9262 = vpack.c.b16 %v8442, %v8441
  %v9263 = vpack.c.b16 %v8444, %v8443
  %v9264 = vpack.c.b16 %v8446, %v8445
  %v9265 = vpack.c.b16 %v8448, %v8447
  %v9266 = vpack.c.b16 %v8450, %v8449
  %v9267 = vpack.c.b16 %v8452, %v8451
  %v9268 = vpack.c.b16 %v8454, %v8453
  %v9269 = vpack.c.b16 %v8456, %v8455
  %v9270 = vpack.c.b16 %v8458, %v8457
  %v9271 = vpack.c.b16 %v8460, %v8459
  %v9272 = vpack.c.b16 %v8462, %v8461
  %v9273 = vpack.c.b16 %v8464, %v8463
  %v9274 = vpack.c.b16 %v8466, %v8465
  %v9275 = vpack.c.b16 %v8468, %v8467
  %v9276 = vpack.c.b16 %v8470, %v8469
  %v9277 = vpack.c.b16 %v8472, %v8471
  %v9278 = vpack.c.b16 %v8474, %v8473
  %v9279 = vpack.c.b16 %v8476, %v8475
  %v9280 = vpack.c.b16 %v8478, %v8477
  %v9281 = vpack.c.b16 %v8480, %v8479
  %v9282 = vpack.c.b16 %v8482, %v8481
  %v9283 = vpack.c.b16 %v8484, %v8483
  %v9284 = vpack.c.b16 %v8486, %v8485
  %v9285 = vpack.c.b16 %v8488, %v8487
  %v9286 = vpack.c.b16 %v8490, %v8489
  %v9287 = vpack.c.b16 %v8492, %v8491
  %v9288 = vpack.c.b16 %v8494, %v8493
  %v9289 = vpack.c.b16 %v8496, %v8495
  %v9290 = vpack.c.b16 %v8498, %v8497
  %v9291 = vpack.c.b16 %v8500, %v8499
  %v9292 = vpack.c.b16 %v8502, %v8501
  %v9293 = vpack.c.b16 %v8504, %v8503
  %v9294 = vpack.c.b16 %v8506, %v8505
  %v9295 = vpack.c.b16 %v8508, %v8507
  %v9296 = vpack.c.b16 %v8510, %v8509
  %v9297 = vpack.c.b16 %v8512, %v8511
  %v9298 = vpack.c.b16 %v8514, %v8513
  %v9299 = vpack.c.b16 %v8516, %v8515
  %v9300 = vpack.c.b16 %v8518, %v8517
  %v9301 = vpack.c.b16 %v8520, %v8519
  %v9302 = vpack.c.b16 %v8522, %v8521
  %v9303 = vpack.c.b16 %v8524, %v8523
  %v9304 = vpack.c.b16 %v8526, %v8525
  %v9305 = vpack.c.b16 %v8528, %v8527
  %v9306 = vpack.c.b16 %v8530, %v8529
  %v9307 = vpack.c.b16 %v8532, %v8531
  %v9308 = vpack.c.b16 %v8534, %v8533
  %v9309 = vpack.c.b16 %v8536, %v8535
  %v9310 = vpack.c.b16 %v8538, %v8537
  %v9311 = vpack.c.b16 %v8540, %v8539
  %v9312 = vpack.c.b16 %v8542, %v8541
  %v9313 = vpack.c.b16 %v8544, %v8543
  %v9314 = vpack.c.b16 %v8546, %v8545
  %v9315 = vpack.c.b16 %v8548, %v8547
  %v9316 = vpack.c.b16 %v8550, %v8549
  %v9317 = vpack.c.b16 %v8552, %v8551
  %v9318 = vpack.c.b16 %v8554, %v8553
  %v9319 = vpack.c.b16 %v8556, %v8555
  %v9320 = vpack.c.b16 %v8558, %v8557
  %v9321 = vpack.c.b16 %v8560, %v8559
  %v9322 = vpack.c.b16 %v8562, %v8561
  %v9323 = vpack.c.b16 %v8564, %v8563
  %v9324 = vpack.c.b16 %v8566, %v8565
  %v9325 = vpack.c.b16 %v8568, %v8567
  %v9326 = vpack.c.b16 %v8570, %v8569
  %v9327 = vpack.c.b16 %v8572, %v8571
  %v9328 = vpack.c.b16 %v8574, %v8573
  %v9329 = vpack.c.b16 %v8576, %v8575
  %v9330 = vpack.c.b16 %v8578, %v8577
  %v9331 = vpack.c.b16 %v8580, %v8579
  %v9332 = vpack.c.b16 %v8582, %v8581
  %v9333 = vpack.c.b16 %v8584, %v8583
  %v9334 = vpack.c.b16 %v8586, %v8585
  %v9335 = vpack.c.b16 %v8588, %v8587
  %v9336 = vpack.c.b16 %v8590, %v8589
  %v9337 = vpack.c.b16 %v8592, %v8591
  %v9338 = vpack.c.b16 %v8594, %v8593
  %v9339 = vpack.c.b16 %v8596, %v8595
  %v9340 = vpack.c.b16 %v8598, %v8597
  %v9341 = vpack.c.b16 %v8600, %v8599
  %v9342 = vpack.c.b16 %v8602, %v8601
  %v9343 = vpack.c.b16 %v8604, %v8603
  %v9344 = vpack.c.b16 %v8606, %v8605
  %v9345 = vpack.c.b16 %v8608, %v8607
  %v9346 = vpack.c.b16 %v8610, %v8609
  %v9347 = vpack.c.b16 %v8612, %v8611
  %v9348 = vpack.c.b16 %v8614, %v8613
  %v9349 = vpack.c.b16 %v8616, %v8615
  %v9350 = vpack.c.b16 %v8618, %v8617
  %v9351 = vpack.c.b16 %v8620, %v8619
  %v9352 = vpack.c.b16 %v8622, %v8621
  %v9353 = vpack.c.b16 %v8624, %v8623
  %v9354 = vpack.c.b16 %v8626, %v8625
  %v9355 = vpack.c.b16 %v8628, %v8627
  %v9356 = vpack.c.b16 %v8630, %v8629
  %v9357 = vpack.c.b16 %v8632, %v8631
  %v9358 = vpack.c.b16 %v8634, %v8633
  %v9359 = vpack.c.b16 %v8636, %v8635
  %v9360 = vpack.c.b16 %v8638, %v8637
  %v9361 = vpack.c.b16 %v8640, %v8639
  %v9362 = vpack.c.b16 %v8642, %v8641
  %v9363 = vpack.c.b16 %v8644, %v8643
  %v9364 = vpack.c.b16 %v8646, %v8645
  %v9365 = vpack.c.b16 %v8648, %v8647
  %v9366 = vpack.c.b16 %v8650, %v8649
  %v9367 = vpack.c.b16 %v8652, %v8651
  %v9368 = vpack.c.b16 %v8654, %v8653
  %v9369 = vpack.c.b16 %v8656, %v8655
  %v9370 = vpack.c.b16 %v8658, %v8657
  %v9371 = vpack.c.b16 %v8660, %v8659
  %v9372 = vpack.c.b16 %v8662, %v8661
  %v9373 = vpack.c.b16 %v8664, %v8663
  %v9374 = vpack.c.b16 %v8666, %v8665
  %v9375 = vpack.c.b16 %v8668, %v8667
  %v9376 = vpack.c.b16 %v8670, %v8669
  %v9377 = vpack.c.b16 %v8672, %v8671
  %v9378 = vpack.c.b16 %v8674, %v8673
  %10083 = vst [vmem:[%s1] sm:$0xff] %v8675
  %10084 = vst [vmem:[%s1 + $0x8] sm:$0xff] %v8676
  %10085 = vst [vmem:[%s1 + $0x10] sm:$0xff] %v8677
  %10086 = vst [vmem:[%s1 + $0x18] sm:$0xff] %v8678
  %10087 = vst [vmem:[%s1 + $0x20] sm:$0xff] %v8679
  %10088 = vst [vmem:[%s1 + $0x28] sm:$0xff] %v8680
  %10089 = vst [vmem:[%s1 + $0x30] sm:$0xff] %v8681
  %10090 = vst [vmem:[%s1 + $0x38] sm:$0xff] %v8682
  %10091 = vst [vmem:[%s1 + $0x40] sm:$0xff] %v8683
  %10092 = vst [vmem:[%s1 + $0x48] sm:$0xff] %v8684
  %vm10093 = vcmask 1043456
  %vm10094 = vcmask 916484
  %vm10095 = vmor %vm10094, %vm10093
  %10096 = vst.msk [vmem:[%s1 + $0x50] sm:$0xff] %vm10095, %v8685
  %10097 = vst [vmem:[%s1 + $0x58] sm:$0xff] %v8686
  %10098 = vst [vmem:[%s1 + $0x60] sm:$0xff] %v8687
  %10099 = vst [vmem:[%s1 + $0x68] sm:$0xff] %v8688
  %10100 = vst [vmem:[%s1 + $0x70] sm:$0xff] %v8689
  %10101 = vst [vmem:[%s1 + $0x78] sm:$0xff] %v8690
  %10102 = vst [vmem:[%s1 + $0x80] sm:$0xff] %v8691
  %10103 = vst [vmem:[%s1 + $0x88] sm:$0xff] %v8692
  %10104 = vst [vmem:[%s1 + $0x90] sm:$0xff] %v8693
  %10105 = vst [vmem:[%s1 + $0x98] sm:$0xff] %v8694
  %10106 = vst [vmem:[%s1 + $0xa0] sm:$0xff] %v8695
  %10107 = vst.msk [vmem:[%s1 + $0xa8] sm:$0xff] %vm10095, %v8696
  %10108 = vst [vmem:[%s1 + $0xb0] sm:$0xff] %v8697
  %10109 = vst [vmem:[%s1 + $0xb8] sm:$0xff] %v8698
  %10110 = vst [vmem:[%s1 + $0xc0] sm:$0xff] %v8699
  %10111 = vst [vmem:[%s1 + $0xc8] sm:$0xff] %v8700
  %10112 = vst [vmem:[%s1 + $0xd0] sm:$0xff] %v8701
  %10113 = vst [vmem:[%s1 + $0xd8] sm:$0xff] %v8702
  %10114 = vst [vmem:[%s1 + $0xe0] sm:$0xff] %v8703
  %10115 = vst [vmem:[%s1 + $0xe8] sm:$0xff] %v8704
  %10116 = vst [vmem:[%s1 + $0xf0] sm:$0xff] %v8705
  %10117 = vst [vmem:[%s1 + $0xf8] sm:$0xff] %v8706
  %10118 = vst.msk [vmem:[%s1 + $0x100] sm:$0xff] %vm10095, %v8707
  %10119 = vst [vmem:[%s1 + $0x108] sm:$0xff] %v8708
  %10120 = vst [vmem:[%s1 + $0x110] sm:$0xff] %v8709
  %10121 = vst [vmem:[%s1 + $0x118] sm:$0xff] %v8710
  %10122 = vst [vmem:[%s1 + $0x120] sm:$0xff] %v8711
  %10123 = vst [vmem:[%s1 + $0x128] sm:$0xff] %v8712
  %10124 = vst [vmem:[%s1 + $0x130] sm:$0xff] %v8713
  %10125 = vst [vmem:[%s1 + $0x138] sm:$0xff] %v8714
  %10126 = vst [vmem:[%s1 + $0x140] sm:$0xff] %v8715
  %10127 = vst [vmem:[%s1 + $0x148] sm:$0xff] %v8716
  %10128 = vst [vmem:[%s1 + $0x150] sm:$0xff] %v8717
  %10129 = vst.msk [vmem:[%s1 + $0x158] sm:$0xff] %vm10095, %v8718
  %10130 = vst [vmem:[%s1 + $0x160] sm:$0xff] %v8719
  %10131 = vst [vmem:[%s1 + $0x168] sm:$0xff] %v8720
  %10132 = vst [vmem:[%s1 + $0x170] sm:$0xff] %v8721
  %10133 = vst [vmem:[%s1 + $0x178] sm:$0xff] %v8722
  %10134 = vst [vmem:[%s1 + $0x180] sm:$0xff] %v8723
  %10135 = vst [vmem:[%s1 + $0x188] sm:$0xff] %v8724
  %10136 = vst [vmem:[%s1 + $0x190] sm:$0xff] %v8725
  %10137 = vst [vmem:[%s1 + $0x198] sm:$0xff] %v8726
  %10138 = vst [vmem:[%s1 + $0x1a0] sm:$0xff] %v8727
  %10139 = vst [vmem:[%s1 + $0x1a8] sm:$0xff] %v8728
  %10140 = vst.msk [vmem:[%s1 + $0x1b0] sm:$0xff] %vm10095, %v8729
  %10141 = vst [vmem:[%s1 + $0x1b8] sm:$0xff] %v8730
  %10142 = vst [vmem:[%s1 + $0x1c0] sm:$0xff] %v8731
  %10143 = vst [vmem:[%s1 + $0x1c8] sm:$0xff] %v8732
  %10144 = vst [vmem:[%s1 + $0x1d0] sm:$0xff] %v8733
  %10145 = vst [vmem:[%s1 + $0x1d8] sm:$0xff] %v8734
  %10146 = vst [vmem:[%s1 + $0x1e0] sm:$0xff] %v8735
  %10147 = vst [vmem:[%s1 + $0x1e8] sm:$0xff] %v8736
  %10148 = vst [vmem:[%s1 + $0x1f0] sm:$0xff] %v8737
  %10149 = vst [vmem:[%s1 + $0x1f8] sm:$0xff] %v8738
  %10150 = vst [vmem:[%s1 + $0x200] sm:$0xff] %v8739
  %10151 = vst.msk [vmem:[%s1 + $0x208] sm:$0xff] %vm10095, %v8740
  %10152 = vst [vmem:[%s1 + $0x210] sm:$0xff] %v8741
  %10153 = vst [vmem:[%s1 + $0x218] sm:$0xff] %v8742
  %10154 = vst [vmem:[%s1 + $0x220] sm:$0xff] %v8743
  %10155 = vst [vmem:[%s1 + $0x228] sm:$0xff] %v8744
  %10156 = vst [vmem:[%s1 + $0x230] sm:$0xff] %v8745
  %10157 = vst [vmem:[%s1 + $0x238] sm:$0xff] %v8746
  %10158 = vst [vmem:[%s1 + $0x240] sm:$0xff] %v8747
  %10159 = vst [vmem:[%s1 + $0x248] sm:$0xff] %v8748
  %10160 = vst [vmem:[%s1 + $0x250] sm:$0xff] %v8749
  %10161 = vst [vmem:[%s1 + $0x258] sm:$0xff] %v8750
  %10162 = vst.msk [vmem:[%s1 + $0x260] sm:$0xff] %vm10095, %v8751
  %10163 = vst [vmem:[%s1 + $0x268] sm:$0xff] %v8752
  %10164 = vst [vmem:[%s1 + $0x270] sm:$0xff] %v8753
  %10165 = vst [vmem:[%s1 + $0x278] sm:$0xff] %v8754
  %10166 = vst [vmem:[%s1 + $0x280] sm:$0xff] %v8755
  %10167 = vst [vmem:[%s1 + $0x288] sm:$0xff] %v8756
  %10168 = vst [vmem:[%s1 + $0x290] sm:$0xff] %v8757
  %10169 = vst [vmem:[%s1 + $0x298] sm:$0xff] %v8758
  %10170 = vst [vmem:[%s1 + $0x2a0] sm:$0xff] %v8759
  %10171 = vst [vmem:[%s1 + $0x2a8] sm:$0xff] %v8760
  %10172 = vst [vmem:[%s1 + $0x2b0] sm:$0xff] %v8761
  %10173 = vst.msk [vmem:[%s1 + $0x2b8] sm:$0xff] %vm10095, %v8762
  %10174 = vst [vmem:[%s1 + $0x2c0] sm:$0xff] %v8763
  %10175 = vst [vmem:[%s1 + $0x2c8] sm:$0xff] %v8764
  %10176 = vst [vmem:[%s1 + $0x2d0] sm:$0xff] %v8765
  %10177 = vst [vmem:[%s1 + $0x2d8] sm:$0xff] %v8766
  %10178 = vst [vmem:[%s1 + $0x2e0] sm:$0xff] %v8767
  %10179 = vst [vmem:[%s1 + $0x2e8] sm:$0xff] %v8768
  %10180 = vst [vmem:[%s1 + $0x2f0] sm:$0xff] %v8769
  %10181 = vst [vmem:[%s1 + $0x2f8] sm:$0xff] %v8770
  %10182 = vst [vmem:[%s1 + $0x300] sm:$0xff] %v8771
  %10183 = vst [vmem:[%s1 + $0x308] sm:$0xff] %v8772
  %10184 = vst.msk [vmem:[%s1 + $0x310] sm:$0xff] %vm10095, %v8773
  %10185 = vst [vmem:[%s1 + $0x318] sm:$0xff] %v8774
  %10186 = vst [vmem:[%s1 + $0x320] sm:$0xff] %v8775
  %10187 = vst [vmem:[%s1 + $0x328] sm:$0xff] %v8776
  %10188 = vst [vmem:[%s1 + $0x330] sm:$0xff] %v8777
  %10189 = vst [vmem:[%s1 + $0x338] sm:$0xff] %v8778
  %10190 = vst [vmem:[%s1 + $0x340] sm:$0xff] %v8779
  %10191 = vst [vmem:[%s1 + $0x348] sm:$0xff] %v8780
  %10192 = vst [vmem:[%s1 + $0x350] sm:$0xff] %v8781
  %10193 = vst [vmem:[%s1 + $0x358] sm:$0xff] %v8782
  %10194 = vst [vmem:[%s1 + $0x360] sm:$0xff] %v8783
  %10195 = vst.msk [vmem:[%s1 + $0x368] sm:$0xff] %vm10095, %v8784
  %10196 = vst [vmem:[%s1 + $0x370] sm:$0xff] %v8785
  %10197 = vst [vmem:[%s1 + $0x378] sm:$0xff] %v8786
  %10198 = vst [vmem:[%s1 + $0x380] sm:$0xff] %v8787
  %10199 = vst [vmem:[%s1 + $0x388] sm:$0xff] %v8788
  %10200 = vst [vmem:[%s1 + $0x390] sm:$0xff] %v8789
  %10201 = vst [vmem:[%s1 + $0x398] sm:$0xff] %v8790
  %10202 = vst [vmem:[%s1 + $0x3a0] sm:$0xff] %v8791
  %10203 = vst [vmem:[%s1 + $0x3a8] sm:$0xff] %v8792
  %10204 = vst [vmem:[%s1 + $0x3b0] sm:$0xff] %v8793
  %10205 = vst [vmem:[%s1 + $0x3b8] sm:$0xff] %v8794
  %10206 = vst.msk [vmem:[%s1 + $0x3c0] sm:$0xff] %vm10095, %v8795
  %10207 = vst [vmem:[%s1 + $0x3c8] sm:$0xff] %v8796
  %10208 = vst [vmem:[%s1 + $0x3d0] sm:$0xff] %v8797
  %10209 = vst [vmem:[%s1 + $0x3d8] sm:$0xff] %v8798
  %10210 = vst [vmem:[%s1 + $0x3e0] sm:$0xff] %v8799
  %10211 = vst [vmem:[%s1 + $0x3e8] sm:$0xff] %v8800
  %10212 = vst [vmem:[%s1 + $0x3f0] sm:$0xff] %v8801
  %10213 = vst [vmem:[%s1 + $0x3f8] sm:$0xff] %v8802
  %10214 = vst [vmem:[%s1 + $0x400] sm:$0xff] %v8803
  %10215 = vst [vmem:[%s1 + $0x408] sm:$0xff] %v8804
  %10216 = vst [vmem:[%s1 + $0x410] sm:$0xff] %v8805
  %10217 = vst.msk [vmem:[%s1 + $0x418] sm:$0xff] %vm10095, %v8806
  %10218 = vst [vmem:[%s1 + $0x420] sm:$0xff] %v8807
  %10219 = vst [vmem:[%s1 + $0x428] sm:$0xff] %v8808
  %10220 = vst [vmem:[%s1 + $0x430] sm:$0xff] %v8809
  %10221 = vst [vmem:[%s1 + $0x438] sm:$0xff] %v8810
  %10222 = vst [vmem:[%s1 + $0x440] sm:$0xff] %v8811
  %10223 = vst [vmem:[%s1 + $0x448] sm:$0xff] %v8812
  %10224 = vst [vmem:[%s1 + $0x450] sm:$0xff] %v8813
  %10225 = vst [vmem:[%s1 + $0x458] sm:$0xff] %v8814
  %10226 = vst [vmem:[%s1 + $0x460] sm:$0xff] %v8815
  %10227 = vst [vmem:[%s1 + $0x468] sm:$0xff] %v8816
  %10228 = vst.msk [vmem:[%s1 + $0x470] sm:$0xff] %vm10095, %v8817
  %10229 = vst [vmem:[%s1 + $0x478] sm:$0xff] %v8818
  %10230 = vst [vmem:[%s1 + $0x480] sm:$0xff] %v8819
  %10231 = vst [vmem:[%s1 + $0x488] sm:$0xff] %v8820
  %10232 = vst [vmem:[%s1 + $0x490] sm:$0xff] %v8821
  %10233 = vst [vmem:[%s1 + $0x498] sm:$0xff] %v8822
  %10234 = vst [vmem:[%s1 + $0x4a0] sm:$0xff] %v8823
  %10235 = vst [vmem:[%s1 + $0x4a8] sm:$0xff] %v8824
  %10236 = vst [vmem:[%s1 + $0x4b0] sm:$0xff] %v8825
  %10237 = vst [vmem:[%s1 + $0x4b8] sm:$0xff] %v8826
  %10238 = vst [vmem:[%s1 + $0x4c0] sm:$0xff] %v8827
  %10239 = vst.msk [vmem:[%s1 + $0x4c8] sm:$0xff] %vm10095, %v8828
  %10240 = vst [vmem:[%s1 + $0x4d0] sm:$0xff] %v8829
  %10241 = vst [vmem:[%s1 + $0x4d8] sm:$0xff] %v8830
  %10242 = vst [vmem:[%s1 + $0x4e0] sm:$0xff] %v8831
  %10243 = vst [vmem:[%s1 + $0x4e8] sm:$0xff] %v8832
  %10244 = vst [vmem:[%s1 + $0x4f0] sm:$0xff] %v8833
  %10245 = vst [vmem:[%s1 + $0x4f8] sm:$0xff] %v8834
  %10246 = vst [vmem:[%s1 + $0x500] sm:$0xff] %v8835
  %10247 = vst [vmem:[%s1 + $0x508] sm:$0xff] %v8836
  %10248 = vst [vmem:[%s1 + $0x510] sm:$0xff] %v8837
  %10249 = vst [vmem:[%s1 + $0x518] sm:$0xff] %v8838
  %10250 = vst.msk [vmem:[%s1 + $0x520] sm:$0xff] %vm10095, %v8839
  %10251 = vst [vmem:[%s1 + $0x528] sm:$0xff] %v8840
  %10252 = vst [vmem:[%s1 + $0x530] sm:$0xff] %v8841
  %10253 = vst [vmem:[%s1 + $0x538] sm:$0xff] %v8842
  %10254 = vst [vmem:[%s1 + $0x540] sm:$0xff] %v8843
  %10255 = vst [vmem:[%s1 + $0x548] sm:$0xff] %v8844
  %10256 = vst [vmem:[%s1 + $0x550] sm:$0xff] %v8845
  %10257 = vst [vmem:[%s1 + $0x558] sm:$0xff] %v8846
  %10258 = vst [vmem:[%s1 + $0x560] sm:$0xff] %v8847
  %10259 = vst [vmem:[%s1 + $0x568] sm:$0xff] %v8848
  %10260 = vst [vmem:[%s1 + $0x570] sm:$0xff] %v8849
  %10261 = vst.msk [vmem:[%s1 + $0x578] sm:$0xff] %vm10095, %v8850
  %10262 = vst [vmem:[%s1 + $0x580] sm:$0xff] %v8851
  %10263 = vst [vmem:[%s1 + $0x588] sm:$0xff] %v8852
  %10264 = vst [vmem:[%s1 + $0x590] sm:$0xff] %v8853
  %10265 = vst [vmem:[%s1 + $0x598] sm:$0xff] %v8854
  %10266 = vst [vmem:[%s1 + $0x5a0] sm:$0xff] %v8855
  %10267 = vst [vmem:[%s1 + $0x5a8] sm:$0xff] %v8856
  %10268 = vst [vmem:[%s1 + $0x5b0] sm:$0xff] %v8857
  %10269 = vst [vmem:[%s1 + $0x5b8] sm:$0xff] %v8858
  %10270 = vst [vmem:[%s1 + $0x5c0] sm:$0xff] %v8859
  %10271 = vst [vmem:[%s1 + $0x5c8] sm:$0xff] %v8860
  %10272 = vst.msk [vmem:[%s1 + $0x5d0] sm:$0xff] %vm10095, %v8861
  %10273 = vst [vmem:[%s1 + $0x5d8] sm:$0xff] %v8862
  %10274 = vst [vmem:[%s1 + $0x5e0] sm:$0xff] %v8863
  %10275 = vst [vmem:[%s1 + $0x5e8] sm:$0xff] %v8864
  %10276 = vst [vmem:[%s1 + $0x5f0] sm:$0xff] %v8865
  %10277 = vst [vmem:[%s1 + $0x5f8] sm:$0xff] %v8866
  %10278 = vst [vmem:[%s1 + $0x600] sm:$0xff] %v8867
  %10279 = vst [vmem:[%s1 + $0x608] sm:$0xff] %v8868
  %10280 = vst [vmem:[%s1 + $0x610] sm:$0xff] %v8869
  %10281 = vst [vmem:[%s1 + $0x618] sm:$0xff] %v8870
  %10282 = vst [vmem:[%s1 + $0x620] sm:$0xff] %v8871
  %10283 = vst.msk [vmem:[%s1 + $0x628] sm:$0xff] %vm10095, %v8872
  %10284 = vst [vmem:[%s1 + $0x630] sm:$0xff] %v8873
  %10285 = vst [vmem:[%s1 + $0x638] sm:$0xff] %v8874
  %10286 = vst [vmem:[%s1 + $0x640] sm:$0xff] %v8875
  %10287 = vst [vmem:[%s1 + $0x648] sm:$0xff] %v8876
  %10288 = vst [vmem:[%s1 + $0x650] sm:$0xff] %v8877
  %10289 = vst [vmem:[%s1 + $0x658] sm:$0xff] %v8878
  %10290 = vst [vmem:[%s1 + $0x660] sm:$0xff] %v8879
  %10291 = vst [vmem:[%s1 + $0x668] sm:$0xff] %v8880
  %10292 = vst [vmem:[%s1 + $0x670] sm:$0xff] %v8881
  %10293 = vst [vmem:[%s1 + $0x678] sm:$0xff] %v8882
  %10294 = vst.msk [vmem:[%s1 + $0x680] sm:$0xff] %vm10095, %v8883
  %10295 = vst [vmem:[%s1 + $0x688] sm:$0xff] %v8884
  %10296 = vst [vmem:[%s1 + $0x690] sm:$0xff] %v8885
  %10297 = vst [vmem:[%s1 + $0x698] sm:$0xff] %v8886
  %10298 = vst [vmem:[%s1 + $0x6a0] sm:$0xff] %v8887
  %10299 = vst [vmem:[%s1 + $0x6a8] sm:$0xff] %v8888
  %10300 = vst [vmem:[%s1 + $0x6b0] sm:$0xff] %v8889
  %10301 = vst [vmem:[%s1 + $0x6b8] sm:$0xff] %v8890
  %10302 = vst [vmem:[%s1 + $0x6c0] sm:$0xff] %v8891
  %10303 = vst [vmem:[%s1 + $0x6c8] sm:$0xff] %v8892
  %10304 = vst [vmem:[%s1 + $0x6d0] sm:$0xff] %v8893
  %10305 = vst.msk [vmem:[%s1 + $0x6d8] sm:$0xff] %vm10095, %v8894
  %10306 = vst [vmem:[%s1 + $0x6e0] sm:$0xff] %v8895
  %10307 = vst [vmem:[%s1 + $0x6e8] sm:$0xff] %v8896
  %10308 = vst [vmem:[%s1 + $0x6f0] sm:$0xff] %v8897
  %10309 = vst [vmem:[%s1 + $0x6f8] sm:$0xff] %v8898
  %10310 = vst [vmem:[%s1 + $0x700] sm:$0xff] %v8899
  %10311 = vst [vmem:[%s1 + $0x708] sm:$0xff] %v8900
  %10312 = vst [vmem:[%s1 + $0x710] sm:$0xff] %v8901
  %10313 = vst [vmem:[%s1 + $0x718] sm:$0xff] %v8902
  %10314 = vst [vmem:[%s1 + $0x720] sm:$0xff] %v8903
  %10315 = vst [vmem:[%s1 + $0x728] sm:$0xff] %v8904
  %10316 = vst.msk [vmem:[%s1 + $0x730] sm:$0xff] %vm10095, %v8905
  %10317 = vst [vmem:[%s1 + $0x738] sm:$0xff] %v8906
  %10318 = vst [vmem:[%s1 + $0x740] sm:$0xff] %v8907
  %10319 = vst [vmem:[%s1 + $0x748] sm:$0xff] %v8908
  %10320 = vst [vmem:[%s1 + $0x750] sm:$0xff] %v8909
  %10321 = vst [vmem:[%s1 + $0x758] sm:$0xff] %v8910
  %10322 = vst [vmem:[%s1 + $0x760] sm:$0xff] %v8911
  %10323 = vst [vmem:[%s1 + $0x768] sm:$0xff] %v8912
  %10324 = vst [vmem:[%s1 + $0x770] sm:$0xff] %v8913
  %10325 = vst [vmem:[%s1 + $0x778] sm:$0xff] %v8914
  %10326 = vst [vmem:[%s1 + $0x780] sm:$0xff] %v8915
  %10327 = vst.msk [vmem:[%s1 + $0x788] sm:$0xff] %vm10095, %v8916
  %10328 = vst [vmem:[%s1 + $0x790] sm:$0xff] %v8917
  %10329 = vst [vmem:[%s1 + $0x798] sm:$0xff] %v8918
  %10330 = vst [vmem:[%s1 + $0x7a0] sm:$0xff] %v8919
  %10331 = vst [vmem:[%s1 + $0x7a8] sm:$0xff] %v8920
  %10332 = vst [vmem:[%s1 + $0x7b0] sm:$0xff] %v8921
  %10333 = vst [vmem:[%s1 + $0x7b8] sm:$0xff] %v8922
  %10334 = vst [vmem:[%s1 + $0x7c0] sm:$0xff] %v8923
  %10335 = vst [vmem:[%s1 + $0x7c8] sm:$0xff] %v8924
  %10336 = vst [vmem:[%s1 + $0x7d0] sm:$0xff] %v8925
  %10337 = vst [vmem:[%s1 + $0x7d8] sm:$0xff] %v8926
  %10338 = vst.msk [vmem:[%s1 + $0x7e0] sm:$0xff] %vm10095, %v8927
  %10339 = vst [vmem:[%s1 + $0x7e8] sm:$0xff] %v8928
  %10340 = vst [vmem:[%s1 + $0x7f0] sm:$0xff] %v8929
  %10341 = vst [vmem:[%s1 + $0x7f8] sm:$0xff] %v8930
  %10342 = vst [vmem:[%s1 + $0x800] sm:$0xff] %v8931
  %10343 = vst [vmem:[%s1 + $0x808] sm:$0xff] %v8932
  %10344 = vst [vmem:[%s1 + $0x810] sm:$0xff] %v8933
  %10345 = vst [vmem:[%s1 + $0x818] sm:$0xff] %v8934
  %10346 = vst [vmem:[%s1 + $0x820] sm:$0xff] %v8935
  %10347 = vst [vmem:[%s1 + $0x828] sm:$0xff] %v8936
  %10348 = vst [vmem:[%s1 + $0x830] sm:$0xff] %v8937
  %10349 = vst.msk [vmem:[%s1 + $0x838] sm:$0xff] %vm10095, %v8938
  %10350 = vst [vmem:[%s1 + $0x840] sm:$0xff] %v8939
  %10351 = vst [vmem:[%s1 + $0x848] sm:$0xff] %v8940
  %10352 = vst [vmem:[%s1 + $0x850] sm:$0xff] %v8941
  %10353 = vst [vmem:[%s1 + $0x858] sm:$0xff] %v8942
  %10354 = vst [vmem:[%s1 + $0x860] sm:$0xff] %v8943
  %10355 = vst [vmem:[%s1 + $0x868] sm:$0xff] %v8944
  %10356 = vst [vmem:[%s1 + $0x870] sm:$0xff] %v8945
  %10357 = vst [vmem:[%s1 + $0x878] sm:$0xff] %v8946
  %10358 = vst [vmem:[%s1 + $0x880] sm:$0xff] %v8947
  %10359 = vst [vmem:[%s1 + $0x888] sm:$0xff] %v8948
  %10360 = vst.msk [vmem:[%s1 + $0x890] sm:$0xff] %vm10095, %v8949
  %10361 = vst [vmem:[%s1 + $0x898] sm:$0xff] %v8950
  %10362 = vst [vmem:[%s1 + $0x8a0] sm:$0xff] %v8951
  %10363 = vst [vmem:[%s1 + $0x8a8] sm:$0xff] %v8952
  %10364 = vst [vmem:[%s1 + $0x8b0] sm:$0xff] %v8953
  %10365 = vst [vmem:[%s1 + $0x8b8] sm:$0xff] %v8954
  %10366 = vst [vmem:[%s1 + $0x8c0] sm:$0xff] %v8955
  %10367 = vst [vmem:[%s1 + $0x8c8] sm:$0xff] %v8956
  %10368 = vst [vmem:[%s1 + $0x8d0] sm:$0xff] %v8957
  %10369 = vst [vmem:[%s1 + $0x8d8] sm:$0xff] %v8958
  %10370 = vst [vmem:[%s1 + $0x8e0] sm:$0xff] %v8959
  %10371 = vst.msk [vmem:[%s1 + $0x8e8] sm:$0xff] %vm10095, %v8960
  %10372 = vst [vmem:[%s1 + $0x8f0] sm:$0xff] %v8961
  %10373 = vst [vmem:[%s1 + $0x8f8] sm:$0xff] %v8962
  %10374 = vst [vmem:[%s1 + $0x900] sm:$0xff] %v8963
  %10375 = vst [vmem:[%s1 + $0x908] sm:$0xff] %v8964
  %10376 = vst [vmem:[%s1 + $0x910] sm:$0xff] %v8965
  %10377 = vst [vmem:[%s1 + $0x918] sm:$0xff] %v8966
  %10378 = vst [vmem:[%s1 + $0x920] sm:$0xff] %v8967
  %10379 = vst [vmem:[%s1 + $0x928] sm:$0xff] %v8968
  %10380 = vst [vmem:[%s1 + $0x930] sm:$0xff] %v8969
  %10381 = vst [vmem:[%s1 + $0x938] sm:$0xff] %v8970
  %10382 = vst.msk [vmem:[%s1 + $0x940] sm:$0xff] %vm10095, %v8971
  %10383 = vst [vmem:[%s1 + $0x948] sm:$0xff] %v8972
  %10384 = vst [vmem:[%s1 + $0x950] sm:$0xff] %v8973
  %10385 = vst [vmem:[%s1 + $0x958] sm:$0xff] %v8974
  %10386 = vst [vmem:[%s1 + $0x960] sm:$0xff] %v8975
  %10387 = vst [vmem:[%s1 + $0x968] sm:$0xff] %v8976
  %10388 = vst [vmem:[%s1 + $0x970] sm:$0xff] %v8977
  %10389 = vst [vmem:[%s1 + $0x978] sm:$0xff] %v8978
  %10390 = vst [vmem:[%s1 + $0x980] sm:$0xff] %v8979
  %10391 = vst [vmem:[%s1 + $0x988] sm:$0xff] %v8980
  %10392 = vst [vmem:[%s1 + $0x990] sm:$0xff] %v8981
  %10393 = vst.msk [vmem:[%s1 + $0x998] sm:$0xff] %vm10095, %v8982
  %10394 = vst [vmem:[%s1 + $0x9a0] sm:$0xff] %v8983
  %10395 = vst [vmem:[%s1 + $0x9a8] sm:$0xff] %v8984
  %10396 = vst [vmem:[%s1 + $0x9b0] sm:$0xff] %v8985
  %10397 = vst [vmem:[%s1 + $0x9b8] sm:$0xff] %v8986
  %10398 = vst [vmem:[%s1 + $0x9c0] sm:$0xff] %v8987
  %10399 = vst [vmem:[%s1 + $0x9c8] sm:$0xff] %v8988
  %10400 = vst [vmem:[%s1 + $0x9d0] sm:$0xff] %v8989
  %10401 = vst [vmem:[%s1 + $0x9d8] sm:$0xff] %v8990
  %10402 = vst [vmem:[%s1 + $0x9e0] sm:$0xff] %v8991
  %10403 = vst [vmem:[%s1 + $0x9e8] sm:$0xff] %v8992
  %10404 = vst.msk [vmem:[%s1 + $0x9f0] sm:$0xff] %vm10095, %v8993
  %10405 = vst [vmem:[%s1 + $0x9f8] sm:$0xff] %v8994
  %10406 = vst [vmem:[%s1 + $0xa00] sm:$0xff] %v8995
  %10407 = vst [vmem:[%s1 + $0xa08] sm:$0xff] %v8996
  %10408 = vst [vmem:[%s1 + $0xa10] sm:$0xff] %v8997
  %10409 = vst [vmem:[%s1 + $0xa18] sm:$0xff] %v8998
  %10410 = vst [vmem:[%s1 + $0xa20] sm:$0xff] %v8999
  %10411 = vst [vmem:[%s1 + $0xa28] sm:$0xff] %v9000
  %10412 = vst [vmem:[%s1 + $0xa30] sm:$0xff] %v9001
  %10413 = vst [vmem:[%s1 + $0xa38] sm:$0xff] %v9002
  %10414 = vst [vmem:[%s1 + $0xa40] sm:$0xff] %v9003
  %10415 = vst.msk [vmem:[%s1 + $0xa48] sm:$0xff] %vm10095, %v9004
  %10416 = vst [vmem:[%s1 + $0xa50] sm:$0xff] %v9005
  %10417 = vst [vmem:[%s1 + $0xa58] sm:$0xff] %v9006
  %10418 = vst [vmem:[%s1 + $0xa60] sm:$0xff] %v9007
  %10419 = vst [vmem:[%s1 + $0xa68] sm:$0xff] %v9008
  %10420 = vst [vmem:[%s1 + $0xa70] sm:$0xff] %v9009
  %10421 = vst [vmem:[%s1 + $0xa78] sm:$0xff] %v9010
  %10422 = vst [vmem:[%s1 + $0xa80] sm:$0xff] %v9011
  %10423 = vst [vmem:[%s1 + $0xa88] sm:$0xff] %v9012
  %10424 = vst [vmem:[%s1 + $0xa90] sm:$0xff] %v9013
  %10425 = vst [vmem:[%s1 + $0xa98] sm:$0xff] %v9014
  %10426 = vst.msk [vmem:[%s1 + $0xaa0] sm:$0xff] %vm10095, %v9015
  %10427 = vst [vmem:[%s1 + $0xaa8] sm:$0xff] %v9016
  %10428 = vst [vmem:[%s1 + $0xab0] sm:$0xff] %v9017
  %10429 = vst [vmem:[%s1 + $0xab8] sm:$0xff] %v9018
  %10430 = vst [vmem:[%s1 + $0xac0] sm:$0xff] %v9019
  %10431 = vst [vmem:[%s1 + $0xac8] sm:$0xff] %v9020
  %10432 = vst [vmem:[%s1 + $0xad0] sm:$0xff] %v9021
  %10433 = vst [vmem:[%s1 + $0xad8] sm:$0xff] %v9022
  %10434 = vst [vmem:[%s1 + $0xae0] sm:$0xff] %v9023
  %10435 = vst [vmem:[%s1 + $0xae8] sm:$0xff] %v9024
  %10436 = vst [vmem:[%s1 + $0xaf0] sm:$0xff] %v9025
  %10437 = vst.msk [vmem:[%s1 + $0xaf8] sm:$0xff] %vm10095, %v9026
  %10438 = vst [vmem:[%s1 + $0xb00] sm:$0xff] %v9027
  %10439 = vst [vmem:[%s1 + $0xb08] sm:$0xff] %v9028
  %10440 = vst [vmem:[%s1 + $0xb10] sm:$0xff] %v9029
  %10441 = vst [vmem:[%s1 + $0xb18] sm:$0xff] %v9030
  %10442 = vst [vmem:[%s1 + $0xb20] sm:$0xff] %v9031
  %10443 = vst [vmem:[%s1 + $0xb28] sm:$0xff] %v9032
  %10444 = vst [vmem:[%s1 + $0xb30] sm:$0xff] %v9033
  %10445 = vst [vmem:[%s1 + $0xb38] sm:$0xff] %v9034
  %10446 = vst [vmem:[%s1 + $0xb40] sm:$0xff] %v9035
  %10447 = vst [vmem:[%s1 + $0xb48] sm:$0xff] %v9036
  %10448 = vst.msk [vmem:[%s1 + $0xb50] sm:$0xff] %vm10095, %v9037
  %10449 = vst [vmem:[%s1 + $0xb58] sm:$0xff] %v9038
  %10450 = vst [vmem:[%s1 + $0xb60] sm:$0xff] %v9039
  %10451 = vst [vmem:[%s1 + $0xb68] sm:$0xff] %v9040
  %10452 = vst [vmem:[%s1 + $0xb70] sm:$0xff] %v9041
  %10453 = vst [vmem:[%s1 + $0xb78] sm:$0xff] %v9042
  %10454 = vst [vmem:[%s1 + $0xb80] sm:$0xff] %v9043
  %10455 = vst [vmem:[%s1 + $0xb88] sm:$0xff] %v9044
  %10456 = vst [vmem:[%s1 + $0xb90] sm:$0xff] %v9045
  %10457 = vst [vmem:[%s1 + $0xb98] sm:$0xff] %v9046
  %10458 = vst [vmem:[%s1 + $0xba0] sm:$0xff] %v9047
  %10459 = vst.msk [vmem:[%s1 + $0xba8] sm:$0xff] %vm10095, %v9048
  %10460 = vst [vmem:[%s1 + $0xbb0] sm:$0xff] %v9049
  %10461 = vst [vmem:[%s1 + $0xbb8] sm:$0xff] %v9050
  %10462 = vst [vmem:[%s1 + $0xbc0] sm:$0xff] %v9051
  %10463 = vst [vmem:[%s1 + $0xbc8] sm:$0xff] %v9052
  %10464 = vst [vmem:[%s1 + $0xbd0] sm:$0xff] %v9053
  %10465 = vst [vmem:[%s1 + $0xbd8] sm:$0xff] %v9054
  %10466 = vst [vmem:[%s1 + $0xbe0] sm:$0xff] %v9055
  %10467 = vst [vmem:[%s1 + $0xbe8] sm:$0xff] %v9056
  %10468 = vst [vmem:[%s1 + $0xbf0] sm:$0xff] %v9057
  %10469 = vst [vmem:[%s1 + $0xbf8] sm:$0xff] %v9058
  %10470 = vst.msk [vmem:[%s1 + $0xc00] sm:$0xff] %vm10095, %v9059
  %10471 = vst [vmem:[%s1 + $0xc08] sm:$0xff] %v9060
  %10472 = vst [vmem:[%s1 + $0xc10] sm:$0xff] %v9061
  %10473 = vst [vmem:[%s1 + $0xc18] sm:$0xff] %v9062
  %10474 = vst [vmem:[%s1 + $0xc20] sm:$0xff] %v9063
  %10475 = vst [vmem:[%s1 + $0xc28] sm:$0xff] %v9064
  %10476 = vst [vmem:[%s1 + $0xc30] sm:$0xff] %v9065
  %10477 = vst [vmem:[%s1 + $0xc38] sm:$0xff] %v9066
  %10478 = vst [vmem:[%s1 + $0xc40] sm:$0xff] %v9067
  %10479 = vst [vmem:[%s1 + $0xc48] sm:$0xff] %v9068
  %10480 = vst [vmem:[%s1 + $0xc50] sm:$0xff] %v9069
  %10481 = vst.msk [vmem:[%s1 + $0xc58] sm:$0xff] %vm10095, %v9070
  %10482 = vst [vmem:[%s1 + $0xc60] sm:$0xff] %v9071
  %10483 = vst [vmem:[%s1 + $0xc68] sm:$0xff] %v9072
  %10484 = vst [vmem:[%s1 + $0xc70] sm:$0xff] %v9073
  %10485 = vst [vmem:[%s1 + $0xc78] sm:$0xff] %v9074
  %10486 = vst [vmem:[%s1 + $0xc80] sm:$0xff] %v9075
  %10487 = vst [vmem:[%s1 + $0xc88] sm:$0xff] %v9076
  %10488 = vst [vmem:[%s1 + $0xc90] sm:$0xff] %v9077
  %10489 = vst [vmem:[%s1 + $0xc98] sm:$0xff] %v9078
  %10490 = vst [vmem:[%s1 + $0xca0] sm:$0xff] %v9079
  %10491 = vst [vmem:[%s1 + $0xca8] sm:$0xff] %v9080
  %10492 = vst.msk [vmem:[%s1 + $0xcb0] sm:$0xff] %vm10095, %v9081
  %10493 = vst [vmem:[%s1 + $0xcb8] sm:$0xff] %v9082
  %10494 = vst [vmem:[%s1 + $0xcc0] sm:$0xff] %v9083
  %10495 = vst [vmem:[%s1 + $0xcc8] sm:$0xff] %v9084
  %10496 = vst [vmem:[%s1 + $0xcd0] sm:$0xff] %v9085
  %10497 = vst [vmem:[%s1 + $0xcd8] sm:$0xff] %v9086
  %10498 = vst [vmem:[%s1 + $0xce0] sm:$0xff] %v9087
  %10499 = vst [vmem:[%s1 + $0xce8] sm:$0xff] %v9088
  %10500 = vst [vmem:[%s1 + $0xcf0] sm:$0xff] %v9089
  %10501 = vst [vmem:[%s1 + $0xcf8] sm:$0xff] %v9090
  %10502 = vst [vmem:[%s1 + $0xd00] sm:$0xff] %v9091
  %10503 = vst.msk [vmem:[%s1 + $0xd08] sm:$0xff] %vm10095, %v9092
  %10504 = vst [vmem:[%s1 + $0xd10] sm:$0xff] %v9093
  %10505 = vst [vmem:[%s1 + $0xd18] sm:$0xff] %v9094
  %10506 = vst [vmem:[%s1 + $0xd20] sm:$0xff] %v9095
  %10507 = vst [vmem:[%s1 + $0xd28] sm:$0xff] %v9096
  %10508 = vst [vmem:[%s1 + $0xd30] sm:$0xff] %v9097
  %10509 = vst [vmem:[%s1 + $0xd38] sm:$0xff] %v9098
  %10510 = vst [vmem:[%s1 + $0xd40] sm:$0xff] %v9099
  %10511 = vst [vmem:[%s1 + $0xd48] sm:$0xff] %v9100
  %10512 = vst [vmem:[%s1 + $0xd50] sm:$0xff] %v9101
  %10513 = vst [vmem:[%s1 + $0xd58] sm:$0xff] %v9102
  %10514 = vst.msk [vmem:[%s1 + $0xd60] sm:$0xff] %vm10095, %v9103
  %10515 = vst [vmem:[%s1 + $0xd68] sm:$0xff] %v9104
  %10516 = vst [vmem:[%s1 + $0xd70] sm:$0xff] %v9105
  %10517 = vst [vmem:[%s1 + $0xd78] sm:$0xff] %v9106
  %10518 = vst [vmem:[%s1 + $0xd80] sm:$0xff] %v9107
  %10519 = vst [vmem:[%s1 + $0xd88] sm:$0xff] %v9108
  %10520 = vst [vmem:[%s1 + $0xd90] sm:$0xff] %v9109
  %10521 = vst [vmem:[%s1 + $0xd98] sm:$0xff] %v9110
  %10522 = vst [vmem:[%s1 + $0xda0] sm:$0xff] %v9111
  %10523 = vst [vmem:[%s1 + $0xda8] sm:$0xff] %v9112
  %10524 = vst [vmem:[%s1 + $0xdb0] sm:$0xff] %v9113
  %10525 = vst.msk [vmem:[%s1 + $0xdb8] sm:$0xff] %vm10095, %v9114
  %10526 = vst [vmem:[%s1 + $0xdc0] sm:$0xff] %v9115
  %10527 = vst [vmem:[%s1 + $0xdc8] sm:$0xff] %v9116
  %10528 = vst [vmem:[%s1 + $0xdd0] sm:$0xff] %v9117
  %10529 = vst [vmem:[%s1 + $0xdd8] sm:$0xff] %v9118
  %10530 = vst [vmem:[%s1 + $0xde0] sm:$0xff] %v9119
  %10531 = vst [vmem:[%s1 + $0xde8] sm:$0xff] %v9120
  %10532 = vst [vmem:[%s1 + $0xdf0] sm:$0xff] %v9121
  %10533 = vst [vmem:[%s1 + $0xdf8] sm:$0xff] %v9122
  %10534 = vst [vmem:[%s1 + $0xe00] sm:$0xff] %v9123
  %10535 = vst [vmem:[%s1 + $0xe08] sm:$0xff] %v9124
  %10536 = vst.msk [vmem:[%s1 + $0xe10] sm:$0xff] %vm10095, %v9125
  %10537 = vst [vmem:[%s1 + $0xe18] sm:$0xff] %v9126
  %10538 = vst [vmem:[%s1 + $0xe20] sm:$0xff] %v9127
  %10539 = vst [vmem:[%s1 + $0xe28] sm:$0xff] %v9128
  %10540 = vst [vmem:[%s1 + $0xe30] sm:$0xff] %v9129
  %10541 = vst [vmem:[%s1 + $0xe38] sm:$0xff] %v9130
  %10542 = vst [vmem:[%s1 + $0xe40] sm:$0xff] %v9131
  %10543 = vst [vmem:[%s1 + $0xe48] sm:$0xff] %v9132
  %10544 = vst [vmem:[%s1 + $0xe50] sm:$0xff] %v9133
  %10545 = vst [vmem:[%s1 + $0xe58] sm:$0xff] %v9134
  %10546 = vst [vmem:[%s1 + $0xe60] sm:$0xff] %v9135
  %10547 = vst.msk [vmem:[%s1 + $0xe68] sm:$0xff] %vm10095, %v9136
  %10548 = vst [vmem:[%s1 + $0xe70] sm:$0xff] %v9137
  %10549 = vst [vmem:[%s1 + $0xe78] sm:$0xff] %v9138
  %10550 = vst [vmem:[%s1 + $0xe80] sm:$0xff] %v9139
  %10551 = vst [vmem:[%s1 + $0xe88] sm:$0xff] %v9140
  %10552 = vst [vmem:[%s1 + $0xe90] sm:$0xff] %v9141
  %10553 = vst [vmem:[%s1 + $0xe98] sm:$0xff] %v9142
  %10554 = vst [vmem:[%s1 + $0xea0] sm:$0xff] %v9143
  %10555 = vst [vmem:[%s1 + $0xea8] sm:$0xff] %v9144
  %10556 = vst [vmem:[%s1 + $0xeb0] sm:$0xff] %v9145
  %10557 = vst [vmem:[%s1 + $0xeb8] sm:$0xff] %v9146
  %10558 = vst.msk [vmem:[%s1 + $0xec0] sm:$0xff] %vm10095, %v9147
  %10559 = vst [vmem:[%s1 + $0xec8] sm:$0xff] %v9148
  %10560 = vst [vmem:[%s1 + $0xed0] sm:$0xff] %v9149
  %10561 = vst [vmem:[%s1 + $0xed8] sm:$0xff] %v9150
  %10562 = vst [vmem:[%s1 + $0xee0] sm:$0xff] %v9151
  %10563 = vst [vmem:[%s1 + $0xee8] sm:$0xff] %v9152
  %10564 = vst [vmem:[%s1 + $0xef0] sm:$0xff] %v9153
  %10565 = vst [vmem:[%s1 + $0xef8] sm:$0xff] %v9154
  %10566 = vst [vmem:[%s1 + $0xf00] sm:$0xff] %v9155
  %10567 = vst [vmem:[%s1 + $0xf08] sm:$0xff] %v9156
  %10568 = vst [vmem:[%s1 + $0xf10] sm:$0xff] %v9157
  %10569 = vst.msk [vmem:[%s1 + $0xf18] sm:$0xff] %vm10095, %v9158
  %10570 = vst [vmem:[%s1 + $0xf20] sm:$0xff] %v9159
  %10571 = vst [vmem:[%s1 + $0xf28] sm:$0xff] %v9160
  %10572 = vst [vmem:[%s1 + $0xf30] sm:$0xff] %v9161
  %10573 = vst [vmem:[%s1 + $0xf38] sm:$0xff] %v9162
  %10574 = vst [vmem:[%s1 + $0xf40] sm:$0xff] %v9163
  %10575 = vst [vmem:[%s1 + $0xf48] sm:$0xff] %v9164
  %10576 = vst [vmem:[%s1 + $0xf50] sm:$0xff] %v9165
  %10577 = vst [vmem:[%s1 + $0xf58] sm:$0xff] %v9166
  %10578 = vst [vmem:[%s1 + $0xf60] sm:$0xff] %v9167
  %10579 = vst [vmem:[%s1 + $0xf68] sm:$0xff] %v9168
  %10580 = vst.msk [vmem:[%s1 + $0xf70] sm:$0xff] %vm10095, %v9169
  %10581 = vst [vmem:[%s1 + $0xf78] sm:$0xff] %v9170
  %10582 = vst [vmem:[%s1 + $0xf80] sm:$0xff] %v9171
  %10583 = vst [vmem:[%s1 + $0xf88] sm:$0xff] %v9172
  %10584 = vst [vmem:[%s1 + $0xf90] sm:$0xff] %v9173
  %10585 = vst [vmem:[%s1 + $0xf98] sm:$0xff] %v9174
  %10586 = vst [vmem:[%s1 + $0xfa0] sm:$0xff] %v9175
  %10587 = vst [vmem:[%s1 + $0xfa8] sm:$0xff] %v9176
  %10588 = vst [vmem:[%s1 + $0xfb0] sm:$0xff] %v9177
  %10589 = vst [vmem:[%s1 + $0xfb8] sm:$0xff] %v9178
  %10590 = vst [vmem:[%s1 + $0xfc0] sm:$0xff] %v9179
  %10591 = vst.msk [vmem:[%s1 + $0xfc8] sm:$0xff] %vm10095, %v9180
  %10592 = vst [vmem:[%s1 + $0xfd0] sm:$0xff] %v9181
  %10593 = vst [vmem:[%s1 + $0xfd8] sm:$0xff] %v9182
  %10594 = vst [vmem:[%s1 + $0xfe0] sm:$0xff] %v9183
  %10595 = vst [vmem:[%s1 + $0xfe8] sm:$0xff] %v9184
  %10596 = vst [vmem:[%s1 + $0xff0] sm:$0xff] %v9185
  %10597 = vst [vmem:[%s1 + $0xff8] sm:$0xff] %v9186
  %10598 = vst [vmem:[%s1 + $0x1000] sm:$0xff] %v9187
  %10599 = vst [vmem:[%s1 + $0x1008] sm:$0xff] %v9188
  %10600 = vst [vmem:[%s1 + $0x1010] sm:$0xff] %v9189
  %10601 = vst [vmem:[%s1 + $0x1018] sm:$0xff] %v9190
  %10602 = vst.msk [vmem:[%s1 + $0x1020] sm:$0xff] %vm10095, %v9191
  %10603 = vst [vmem:[%s1 + $0x1028] sm:$0xff] %v9192
  %10604 = vst [vmem:[%s1 + $0x1030] sm:$0xff] %v9193
  %10605 = vst [vmem:[%s1 + $0x1038] sm:$0xff] %v9194
  %10606 = vst [vmem:[%s1 + $0x1040] sm:$0xff] %v9195
  %10607 = vst [vmem:[%s1 + $0x1048] sm:$0xff] %v9196
  %10608 = vst [vmem:[%s1 + $0x1050] sm:$0xff] %v9197
  %10609 = vst [vmem:[%s1 + $0x1058] sm:$0xff] %v9198
  %10610 = vst [vmem:[%s1 + $0x1060] sm:$0xff] %v9199
  %10611 = vst [vmem:[%s1 + $0x1068] sm:$0xff] %v9200
  %10612 = vst [vmem:[%s1 + $0x1070] sm:$0xff] %v9201
  %10613 = vst.msk [vmem:[%s1 + $0x1078] sm:$0xff] %vm10095, %v9202
  %10614 = vst [vmem:[%s1 + $0x1080] sm:$0xff] %v9203
  %10615 = vst [vmem:[%s1 + $0x1088] sm:$0xff] %v9204
  %10616 = vst [vmem:[%s1 + $0x1090] sm:$0xff] %v9205
  %10617 = vst [vmem:[%s1 + $0x1098] sm:$0xff] %v9206
  %10618 = vst [vmem:[%s1 + $0x10a0] sm:$0xff] %v9207
  %10619 = vst [vmem:[%s1 + $0x10a8] sm:$0xff] %v9208
  %10620 = vst [vmem:[%s1 + $0x10b0] sm:$0xff] %v9209
  %10621 = vst [vmem:[%s1 + $0x10b8] sm:$0xff] %v9210
  %10622 = vst [vmem:[%s1 + $0x10c0] sm:$0xff] %v9211
  %10623 = vst [vmem:[%s1 + $0x10c8] sm:$0xff] %v9212
  %10624 = vst.msk [vmem:[%s1 + $0x10d0] sm:$0xff] %vm10095, %v9213
  %10625 = vst [vmem:[%s1 + $0x10d8] sm:$0xff] %v9214
  %10626 = vst [vmem:[%s1 + $0x10e0] sm:$0xff] %v9215
  %10627 = vst [vmem:[%s1 + $0x10e8] sm:$0xff] %v9216
  %10628 = vst [vmem:[%s1 + $0x10f0] sm:$0xff] %v9217
  %10629 = vst [vmem:[%s1 + $0x10f8] sm:$0xff] %v9218
  %10630 = vst [vmem:[%s1 + $0x1100] sm:$0xff] %v9219
  %10631 = vst [vmem:[%s1 + $0x1108] sm:$0xff] %v9220
  %10632 = vst [vmem:[%s1 + $0x1110] sm:$0xff] %v9221
  %10633 = vst [vmem:[%s1 + $0x1118] sm:$0xff] %v9222
  %10634 = vst [vmem:[%s1 + $0x1120] sm:$0xff] %v9223
  %10635 = vst.msk [vmem:[%s1 + $0x1128] sm:$0xff] %vm10095, %v9224
  %10636 = vst [vmem:[%s1 + $0x1130] sm:$0xff] %v9225
  %10637 = vst [vmem:[%s1 + $0x1138] sm:$0xff] %v9226
  %10638 = vst [vmem:[%s1 + $0x1140] sm:$0xff] %v9227
  %10639 = vst [vmem:[%s1 + $0x1148] sm:$0xff] %v9228
  %10640 = vst [vmem:[%s1 + $0x1150] sm:$0xff] %v9229
  %10641 = vst [vmem:[%s1 + $0x1158] sm:$0xff] %v9230
  %10642 = vst [vmem:[%s1 + $0x1160] sm:$0xff] %v9231
  %10643 = vst [vmem:[%s1 + $0x1168] sm:$0xff] %v9232
  %10644 = vst [vmem:[%s1 + $0x1170] sm:$0xff] %v9233
  %10645 = vst [vmem:[%s1 + $0x1178] sm:$0xff] %v9234
  %10646 = vst.msk [vmem:[%s1 + $0x1180] sm:$0xff] %vm10095, %v9235
  %10647 = vst [vmem:[%s1 + $0x1188] sm:$0xff] %v9236
  %10648 = vst [vmem:[%s1 + $0x1190] sm:$0xff] %v9237
  %10649 = vst [vmem:[%s1 + $0x1198] sm:$0xff] %v9238
  %10650 = vst [vmem:[%s1 + $0x11a0] sm:$0xff] %v9239
  %10651 = vst [vmem:[%s1 + $0x11a8] sm:$0xff] %v9240
  %10652 = vst [vmem:[%s1 + $0x11b0] sm:$0xff] %v9241
  %10653 = vst [vmem:[%s1 + $0x11b8] sm:$0xff] %v9242
  %10654 = vst [vmem:[%s1 + $0x11c0] sm:$0xff] %v9243
  %10655 = vst [vmem:[%s1 + $0x11c8] sm:$0xff] %v9244
  %10656 = vst [vmem:[%s1 + $0x11d0] sm:$0xff] %v9245
  %10657 = vst.msk [vmem:[%s1 + $0x11d8] sm:$0xff] %vm10095, %v9246
  %10658 = vst [vmem:[%s1 + $0x11e0] sm:$0xff] %v9247
  %10659 = vst [vmem:[%s1 + $0x11e8] sm:$0xff] %v9248
  %10660 = vst [vmem:[%s1 + $0x11f0] sm:$0xff] %v9249
  %10661 = vst [vmem:[%s1 + $0x11f8] sm:$0xff] %v9250
  %10662 = vst [vmem:[%s1 + $0x1200] sm:$0xff] %v9251
  %10663 = vst [vmem:[%s1 + $0x1208] sm:$0xff] %v9252
  %10664 = vst [vmem:[%s1 + $0x1210] sm:$0xff] %v9253
  %10665 = vst [vmem:[%s1 + $0x1218] sm:$0xff] %v9254
  %10666 = vst [vmem:[%s1 + $0x1220] sm:$0xff] %v9255
  %10667 = vst [vmem:[%s1 + $0x1228] sm:$0xff] %v9256
  %10668 = vst.msk [vmem:[%s1 + $0x1230] sm:$0xff] %vm10095, %v9257
  %10669 = vst [vmem:[%s1 + $0x1238] sm:$0xff] %v9258
  %10670 = vst [vmem:[%s1 + $0x1240] sm:$0xff] %v9259
  %10671 = vst [vmem:[%s1 + $0x1248] sm:$0xff] %v9260
  %10672 = vst [vmem:[%s1 + $0x1250] sm:$0xff] %v9261
  %10673 = vst [vmem:[%s1 + $0x1258] sm:$0xff] %v9262
  %10674 = vst [vmem:[%s1 + $0x1260] sm:$0xff] %v9263
  %10675 = vst [vmem:[%s1 + $0x1268] sm:$0xff] %v9264
  %10676 = vst [vmem:[%s1 + $0x1270] sm:$0xff] %v9265
  %10677 = vst [vmem:[%s1 + $0x1278] sm:$0xff] %v9266
  %10678 = vst [vmem:[%s1 + $0x1280] sm:$0xff] %v9267
  %10679 = vst.msk [vmem:[%s1 + $0x1288] sm:$0xff] %vm10095, %v9268
  %10680 = vst [vmem:[%s1 + $0x1290] sm:$0xff] %v9269
  %10681 = vst [vmem:[%s1 + $0x1298] sm:$0xff] %v9270
  %10682 = vst [vmem:[%s1 + $0x12a0] sm:$0xff] %v9271
  %10683 = vst [vmem:[%s1 + $0x12a8] sm:$0xff] %v9272
  %10684 = vst [vmem:[%s1 + $0x12b0] sm:$0xff] %v9273
  %10685 = vst [vmem:[%s1 + $0x12b8] sm:$0xff] %v9274
  %10686 = vst [vmem:[%s1 + $0x12c0] sm:$0xff] %v9275
  %10687 = vst [vmem:[%s1 + $0x12c8] sm:$0xff] %v9276
  %10688 = vst [vmem:[%s1 + $0x12d0] sm:$0xff] %v9277
  %10689 = vst [vmem:[%s1 + $0x12d8] sm:$0xff] %v9278
  %10690 = vst.msk [vmem:[%s1 + $0x12e0] sm:$0xff] %vm10095, %v9279
  %10691 = vst [vmem:[%s1 + $0x12e8] sm:$0xff] %v9280
  %10692 = vst [vmem:[%s1 + $0x12f0] sm:$0xff] %v9281
  %10693 = vst [vmem:[%s1 + $0x12f8] sm:$0xff] %v9282
  %10694 = vst [vmem:[%s1 + $0x1300] sm:$0xff] %v9283
  %10695 = vst [vmem:[%s1 + $0x1308] sm:$0xff] %v9284
  %10696 = vst [vmem:[%s1 + $0x1310] sm:$0xff] %v9285
  %10697 = vst [vmem:[%s1 + $0x1318] sm:$0xff] %v9286
  %10698 = vst [vmem:[%s1 + $0x1320] sm:$0xff] %v9287
  %10699 = vst [vmem:[%s1 + $0x1328] sm:$0xff] %v9288
  %10700 = vst [vmem:[%s1 + $0x1330] sm:$0xff] %v9289
  %10701 = vst.msk [vmem:[%s1 + $0x1338] sm:$0xff] %vm10095, %v9290
  %10702 = vst [vmem:[%s1 + $0x1340] sm:$0xff] %v9291
  %10703 = vst [vmem:[%s1 + $0x1348] sm:$0xff] %v9292
  %10704 = vst [vmem:[%s1 + $0x1350] sm:$0xff] %v9293
  %10705 = vst [vmem:[%s1 + $0x1358] sm:$0xff] %v9294
  %10706 = vst [vmem:[%s1 + $0x1360] sm:$0xff] %v9295
  %10707 = vst [vmem:[%s1 + $0x1368] sm:$0xff] %v9296
  %10708 = vst [vmem:[%s1 + $0x1370] sm:$0xff] %v9297
  %10709 = vst [vmem:[%s1 + $0x1378] sm:$0xff] %v9298
  %10710 = vst [vmem:[%s1 + $0x1380] sm:$0xff] %v9299
  %10711 = vst [vmem:[%s1 + $0x1388] sm:$0xff] %v9300
  %10712 = vst.msk [vmem:[%s1 + $0x1390] sm:$0xff] %vm10095, %v9301
  %10713 = vst [vmem:[%s1 + $0x1398] sm:$0xff] %v9302
  %10714 = vst [vmem:[%s1 + $0x13a0] sm:$0xff] %v9303
  %10715 = vst [vmem:[%s1 + $0x13a8] sm:$0xff] %v9304
  %10716 = vst [vmem:[%s1 + $0x13b0] sm:$0xff] %v9305
  %10717 = vst [vmem:[%s1 + $0x13b8] sm:$0xff] %v9306
  %10718 = vst [vmem:[%s1 + $0x13c0] sm:$0xff] %v9307
  %10719 = vst [vmem:[%s1 + $0x13c8] sm:$0xff] %v9308
  %10720 = vst [vmem:[%s1 + $0x13d0] sm:$0xff] %v9309
  %10721 = vst [vmem:[%s1 + $0x13d8] sm:$0xff] %v9310
  %10722 = vst [vmem:[%s1 + $0x13e0] sm:$0xff] %v9311
  %10723 = vst.msk [vmem:[%s1 + $0x13e8] sm:$0xff] %vm10095, %v9312
  %10724 = vst [vmem:[%s1 + $0x13f0] sm:$0xff] %v9313
  %10725 = vst [vmem:[%s1 + $0x13f8] sm:$0xff] %v9314
  %10726 = vst [vmem:[%s1 + $0x1400] sm:$0xff] %v9315
  %10727 = vst [vmem:[%s1 + $0x1408] sm:$0xff] %v9316
  %10728 = vst [vmem:[%s1 + $0x1410] sm:$0xff] %v9317
  %10729 = vst [vmem:[%s1 + $0x1418] sm:$0xff] %v9318
  %10730 = vst [vmem:[%s1 + $0x1420] sm:$0xff] %v9319
  %10731 = vst [vmem:[%s1 + $0x1428] sm:$0xff] %v9320
  %10732 = vst [vmem:[%s1 + $0x1430] sm:$0xff] %v9321
  %10733 = vst [vmem:[%s1 + $0x1438] sm:$0xff] %v9322
  %10734 = vst.msk [vmem:[%s1 + $0x1440] sm:$0xff] %vm10095, %v9323
  %10735 = vst [vmem:[%s1 + $0x1448] sm:$0xff] %v9324
  %10736 = vst [vmem:[%s1 + $0x1450] sm:$0xff] %v9325
  %10737 = vst [vmem:[%s1 + $0x1458] sm:$0xff] %v9326
  %10738 = vst [vmem:[%s1 + $0x1460] sm:$0xff] %v9327
  %10739 = vst [vmem:[%s1 + $0x1468] sm:$0xff] %v9328
  %10740 = vst [vmem:[%s1 + $0x1470] sm:$0xff] %v9329
  %10741 = vst [vmem:[%s1 + $0x1478] sm:$0xff] %v9330
  %10742 = vst [vmem:[%s1 + $0x1480] sm:$0xff] %v9331
  %10743 = vst [vmem:[%s1 + $0x1488] sm:$0xff] %v9332
  %10744 = vst [vmem:[%s1 + $0x1490] sm:$0xff] %v9333
  %10745 = vst.msk [vmem:[%s1 + $0x1498] sm:$0xff] %vm10095, %v9334
  %10746 = vst [vmem:[%s1 + $0x14a0] sm:$0xff] %v9335
  %10747 = vst [vmem:[%s1 + $0x14a8] sm:$0xff] %v9336
  %10748 = vst [vmem:[%s1 + $0x14b0] sm:$0xff] %v9337
  %10749 = vst [vmem:[%s1 + $0x14b8] sm:$0xff] %v9338
  %10750 = vst [vmem:[%s1 + $0x14c0] sm:$0xff] %v9339
  %10751 = vst [vmem:[%s1 + $0x14c8] sm:$0xff] %v9340
  %10752 = vst [vmem:[%s1 + $0x14d0] sm:$0xff] %v9341
  %10753 = vst [vmem:[%s1 + $0x14d8] sm:$0xff] %v9342
  %10754 = vst [vmem:[%s1 + $0x14e0] sm:$0xff] %v9343
  %10755 = vst [vmem:[%s1 + $0x14e8] sm:$0xff] %v9344
  %10756 = vst.msk [vmem:[%s1 + $0x14f0] sm:$0xff] %vm10095, %v9345
  %10757 = vst [vmem:[%s1 + $0x14f8] sm:$0xff] %v9346
  %10758 = vst [vmem:[%s1 + $0x1500] sm:$0xff] %v9347
  %10759 = vst [vmem:[%s1 + $0x1508] sm:$0xff] %v9348
  %10760 = vst [vmem:[%s1 + $0x1510] sm:$0xff] %v9349
  %10761 = vst [vmem:[%s1 + $0x1518] sm:$0xff] %v9350
  %10762 = vst [vmem:[%s1 + $0x1520] sm:$0xff] %v9351
  %10763 = vst [vmem:[%s1 + $0x1528] sm:$0xff] %v9352
  %10764 = vst [vmem:[%s1 + $0x1530] sm:$0xff] %v9353
  %10765 = vst [vmem:[%s1 + $0x1538] sm:$0xff] %v9354
  %10766 = vst [vmem:[%s1 + $0x1540] sm:$0xff] %v9355
  %10767 = vst.msk [vmem:[%s1 + $0x1548] sm:$0xff] %vm10095, %v9356
  %10768 = vst [vmem:[%s1 + $0x1550] sm:$0xff] %v9357
  %10769 = vst [vmem:[%s1 + $0x1558] sm:$0xff] %v9358
  %10770 = vst [vmem:[%s1 + $0x1560] sm:$0xff] %v9359
  %10771 = vst [vmem:[%s1 + $0x1568] sm:$0xff] %v9360
  %10772 = vst [vmem:[%s1 + $0x1570] sm:$0xff] %v9361
  %10773 = vst [vmem:[%s1 + $0x1578] sm:$0xff] %v9362
  %10774 = vst [vmem:[%s1 + $0x1580] sm:$0xff] %v9363
  %10775 = vst [vmem:[%s1 + $0x1588] sm:$0xff] %v9364
  %10776 = vst [vmem:[%s1 + $0x1590] sm:$0xff] %v9365
  %10777 = vst [vmem:[%s1 + $0x1598] sm:$0xff] %v9366
  %10778 = vst.msk [vmem:[%s1 + $0x15a0] sm:$0xff] %vm10095, %v9367
  %10779 = vst [vmem:[%s1 + $0x15a8] sm:$0xff] %v9368
  %10780 = vst [vmem:[%s1 + $0x15b0] sm:$0xff] %v9369
  %10781 = vst [vmem:[%s1 + $0x15b8] sm:$0xff] %v9370
  %10782 = vst [vmem:[%s1 + $0x15c0] sm:$0xff] %v9371
  %10783 = vst [vmem:[%s1 + $0x15c8] sm:$0xff] %v9372
  %10784 = vst [vmem:[%s1 + $0x15d0] sm:$0xff] %v9373
  %10785 = vst [vmem:[%s1 + $0x15d8] sm:$0xff] %v9374
  %10786 = vst [vmem:[%s1 + $0x15e0] sm:$0xff] %v9375
  %10787 = vst [vmem:[%s1 + $0x15e8] sm:$0xff] %v9376
  %10788 = vst [vmem:[%s1 + $0x15f0] sm:$0xff] %v9377
  %10789 = vst.msk [vmem:[%s1 + $0x15f8] sm:$0xff] %vm10095, %v9378
  // Predicated region
  $region6: #{tpu_custom_call.1} parent=0 // pred_check
    _
  $region7: #{tpu_custom_call.1} parent=0 // pred_check_branch
    %10791 = sbr.rel (0) target = $region9
  $region8: #{tpu_custom_call.1} parent=0 // pred_region
    _
  $region9: #{tpu_custom_call.1} parent=0 // pred_fallthru
    _
  // Predicated region
  $region10: #{tpu_custom_call.1} parent=0 // pred_check
    _
  $region11: #{tpu_custom_call.1} parent=0 // pred_check_branch
    %10793 = sbr.rel (0) target = $region13
  $region12: #{tpu_custom_call.1} parent=0 // pred_region
    _
  $region13: #{tpu_custom_call.1} parent=0 // pred_fallthru
    _

</llo_original>
